<compile_context>
chip_gen: v6e
topology: v6e:2x2x1
jax: 0.10.0
libtpu: 0.0.40
codegen_flags: <defaults>
</compile_context>

<pallas_src>
import functools
import math

import jax
import jax.numpy as jnp
from jax import lax
from jax.experimental import pallas as pl
from jax.experimental.pallas import tpu as pltpu

TM_CAP, TN_CAP, TK_CAP = 512, 256, 512          # matmul tile caps (MXU friendly)
VMEM_LIMIT = 32 * 1024 * 1024                   # explicit scoped-VMEM cap


def _round_up(x, m):
    return ((x + m - 1) // m) * m


def _pick_tile(d, cap):
    return min(cap, _round_up(d, 128))


# --------------------------- Pallas kernels ---------------------------------

def _mm_stats_kernel(a_ref, b_ref, y_ref, sum_ref, sq_ref, acc_ref):
    """y = a @ b (bf16 in, f32 acc); also emits per-tile column sum / sumsq of
    the f32 accumulator so BN batch stats never re-read y from HBM."""
    k = pl.program_id(2)

    @pl.when(k == 0)
    def _():
        acc_ref[...] = jnp.zeros_like(acc_ref)

    acc_ref[...] += jnp.dot(a_ref[...], b_ref[...],
                            preferred_element_type=jnp.float32)

    @pl.when(k == pl.num_programs(2) - 1)
    def _():
        acc = acc_ref[...]
        y_ref[...] = acc.astype(y_ref.dtype)
        s = jnp.sum(acc, axis=0, keepdims=True)
        sq = jnp.sum(acc * acc, axis=0, keepdims=True)
        sum_ref[...] = jnp.broadcast_to(s, sum_ref.shape)
        sq_ref[...] = jnp.broadcast_to(sq, sq_ref.shape)


def _mm_bias_act_kernel(a_ref, b_ref, bias_ref, o_ref, acc_ref, *, act):
    """y = act(a @ b + bias) fully fused in the matmul epilogue (no-BN layers)."""
    k = pl.program_id(2)

    @pl.when(k == 0)
    def _():
        acc_ref[...] = jnp.zeros_like(acc_ref)

    acc_ref[...] += jnp.dot(a_ref[...], b_ref[...],
                            preferred_element_type=jnp.float32)

    @pl.when(k == pl.num_programs(2) - 1)
    def _():
        y = acc_ref[...] + bias_ref[...]
        if act == "relu":
            y = jnp.maximum(y, 0.0)
        elif act == "tanh":
            y = jnp.tanh(y)
        o_ref[...] = y.astype(o_ref.dtype)


def _affine_act_kernel(*refs, act, has_res):
    """out = act(y * scale + shift [+ residual]); scale/shift are (1, L) blocks."""
    if has_res:
        y_ref, s_ref, t_ref, r_ref, o_ref = refs
    else:
        y_ref, s_ref, t_ref, o_ref = refs
    y = y_ref[...].astype(jnp.float32) * s_ref[...] + t_ref[...]
    if has_res:
        y = y + r_ref[...].astype(jnp.float32)
    if act == "relu":
        y = jnp.maximum(y, 0.0)
    elif act == "tanh":
        y = jnp.tanh(y)
    o_ref[...] = y.astype(o_ref.dtype)


# --------------------------- kernel wrappers ---------------------------------

def matmul_stats(a, b, out_dtype=jnp.bfloat16):
    """(M,K)@(K,N) in bf16 with f32 accumulation; returns (y, colsum, colsumsq).
    Zero padding contributes zero to the stats, so mean/var use the true M."""
    M, K = a.shape
    _, N = b.shape
    tm, tk, tn = _pick_tile(M, TM_CAP), _pick_tile(K, TK_CAP), _pick_tile(N, TN_CAP)
    Mp, Kp, Np = _round_up(M, tm), _round_up(K, tk), _round_up(N, tn)
    a_p = a.astype(jnp.bfloat16)
    b_p = b.astype(jnp.bfloat16)
    if (Mp, Kp) != (M, K):
        a_p = jnp.pad(a_p, ((0, Mp - M), (0, Kp - K)))
    if (Kp, Np) != (K, N):
        b_p = jnp.pad(b_p, ((0, Kp - K), (0, Np - N)))
    mt = Mp // tm
    y, psum, psq = pl.pallas_call(
        _mm_stats_kernel,
        out_shape=(jax.ShapeDtypeStruct((Mp, Np), out_dtype),
                   jax.ShapeDtypeStruct((8 * mt, Np), jnp.float32),
                   jax.ShapeDtypeStruct((8 * mt, Np), jnp.float32)),
        grid_spec=pltpu.PrefetchScalarGridSpec(
            num_scalar_prefetch=0,
            grid=(mt, Np // tn, Kp // tk),
            in_specs=[
                pl.BlockSpec((tm, tk), lambda i, j, k: (i, k)),
                pl.BlockSpec((tk, tn), lambda i, j, k: (k, j)),
            ],
            out_specs=[
                pl.BlockSpec((tm, tn), lambda i, j, k: (i, j)),
                pl.BlockSpec((8, tn), lambda i, j, k: (i, j)),
                pl.BlockSpec((8, tn), lambda i, j, k: (i, j)),
            ],
            scratch_shapes=[pltpu.VMEM((tm, tn), jnp.float32)],
        ),
        compiler_params=pltpu.CompilerParams(
            dimension_semantics=("parallel", "parallel", "arbitrary"),
            vmem_limit_bytes=VMEM_LIMIT),
    )(a_p, b_p)
    col_sum = psum[::8, :N].sum(axis=0)
    col_sq = psq[::8, :N].sum(axis=0)
    if (Mp, Np) != (M, N):
        y = y[:M, :N]
    return y, col_sum, col_sq


def matmul_bias_act(a, b, bias, act, out_dtype=jnp.float32):
    """(M,K)@(K,N) + bias, activation fused in the epilogue (no-BN layers)."""
    M, K = a.shape
    _, N = b.shape
    tm, tk, tn = _pick_tile(M, TM_CAP), _pick_tile(K, TK_CAP), _pick_tile(N, TN_CAP)
    Mp, Kp, Np = _round_up(M, tm), _round_up(K, tk), _round_up(N, tn)
    a_p = a.astype(jnp.bfloat16)
    b_p = b.astype(jnp.bfloat16)
    if (Mp, Kp) != (M, K):
        a_p = jnp.pad(a_p, ((0, Mp - M), (0, Kp - K)))
    if (Kp, Np) != (K, N):
        b_p = jnp.pad(b_p, ((0, Kp - K), (0, Np - N)))
    bias_p = jnp.pad(bias.astype(jnp.float32).reshape(1, N), ((0, 0), (0, Np - N)))
    y = pl.pallas_call(
        functools.partial(_mm_bias_act_kernel, act=act),
        out_shape=jax.ShapeDtypeStruct((Mp, Np), out_dtype),
        grid_spec=pltpu.PrefetchScalarGridSpec(
            num_scalar_prefetch=0,
            grid=(Mp // tm, Np // tn, Kp // tk),
            in_specs=[
                pl.BlockSpec((tm, tk), lambda i, j, k: (i, k)),
                pl.BlockSpec((tk, tn), lambda i, j, k: (k, j)),
                pl.BlockSpec((1, tn), lambda i, j, k: (0, j)),
            ],
            out_specs=pl.BlockSpec((tm, tn), lambda i, j, k: (i, j)),
            scratch_shapes=[pltpu.VMEM((tm, tn), jnp.float32)],
        ),
        compiler_params=pltpu.CompilerParams(
            dimension_semantics=("parallel", "parallel", "arbitrary"),
            vmem_limit_bytes=VMEM_LIMIT),
    )(a_p, b_p, bias_p)
    if (Mp, Np) != (M, N):
        y = y[:M, :N]
    return y


def affine_act(y2d, scale, shift, residual, act, out_dtype=jnp.bfloat16):
    """Per-channel affine (BN apply) + optional residual + activation.
    Gridded over row tiles; scale/shift passed as (1, L); output repacked
    lane-dense (last dim multiple of 128) when channel count allows."""
    M, C = y2d.shape
    Rk, L = 1, C
    if C % 128 != 0:
        k = math.lcm(C, 128) // C
        if M % k == 0 and C * k <= 8192:
            Rk, L = k, C * k
    R = M // Rk
    y = y2d.reshape(R, L)
    res = residual.reshape(R, L) if residual is not None else None
    s = jnp.tile(scale.astype(jnp.float32), Rk).reshape(1, L)
    t = jnp.tile(shift.astype(jnp.float32), Rk).reshape(1, L)

    bytes_per_row = max(L * 2, 1)
    tr_cap = max(8, ((1 << 20) // bytes_per_row) // 8 * 8)
    tr = min(512, tr_cap, _round_up(R, 8))
    Rp = _round_up(R, tr)
    if Rp != R:
        y = jnp.pad(y, ((0, Rp - R), (0, 0)))
        if res is not None:
            res = jnp.pad(res, ((0, Rp - R), (0, 0)))

    has_res = res is not None
    row_spec = pl.BlockSpec((tr, L), lambda i: (i, 0))
    vec_spec = pl.BlockSpec((1, L), lambda i: (0, 0))
    in_specs = [row_spec, vec_spec, vec_spec] + ([row_spec] if has_res else [])
    args = (y, s, t) + ((res,) if has_res else ())

    out = pl.pallas_call(
        functools.partial(_affine_act_kernel, act=act, has_res=has_res),
        out_shape=jax.ShapeDtypeStruct((Rp, L), out_dtype),
        grid_spec=pltpu.PrefetchScalarGridSpec(
            num_scalar_prefetch=0,
            grid=(Rp // tr,),
            in_specs=in_specs,
            out_specs=row_spec),
        compiler_params=pltpu.CompilerParams(
            dimension_semantics=("parallel",),
            vmem_limit_bytes=VMEM_LIMIT),
    )(*args)
    if Rp != R:
        out = out[:R]
    return out.reshape(M, C)


# ------------------------- conv layer wrappers -------------------------------

def _im2col(x, kh, kw, stride):
    # TODO(synk): patches are still materialized by XLA in HBM (kh*kw read
    # amplification); a fully implicit in-kernel im2col needs overlapping-window
    # BlockSpecs (element offsets), which we avoid here for robustness.
    N, H, W, Cin = x.shape
    OH = (H - kh) // stride + 1
    OW = (W - kw) // stride + 1
    cols = [x[:, i:i + stride * OH:stride, j:j + stride * OW:stride, :]
            for i in range(kh) for j in range(kw)]
    patches = jnp.stack(cols, axis=3).reshape(N * OH * OW, kh * kw * Cin)
    return patches, N, OH, OW


def conv_bn_act(x, p, *, stride, pad, pad_mode, act, residual=None):
    """Conv2d -> BatchNorm(train-mode batch stats) -> activation (+residual).
    Conv bias is skipped: train-mode BN cancels any per-channel constant."""
    w = p["w"]                                   # (Cout, Cin, kh, kw)
    if pad > 0:
        mode = "reflect" if pad_mode == "reflect" else "constant"
        x = jnp.pad(x, ((0, 0), (pad, pad), (pad, pad), (0, 0)), mode=mode)
    Cout, Cin, kh, kw = w.shape
    patches, N, OH, OW = _im2col(x, kh, kw, stride)
    w_mat = jnp.transpose(w, (2, 3, 1, 0)).reshape(kh * kw * Cin, Cout)

    y, csum, csq = matmul_stats(patches, w_mat)      # Pallas MXU + fused stats
    Mrows = patches.shape[0]
    mean = csum / Mrows
    var = jnp.maximum(csq / Mrows - mean * mean, 0.0)
    inv = p["gamma"] * lax.rsqrt(var + 1e-5)
    scale, shift = inv, p["beta"] - mean * inv

    res2d = residual.reshape(Mrows, Cout) if residual is not None else None
    out = affine_act(y, scale, shift, res2d, act)    # Pallas elementwise kernel
    return out.reshape(N, OH, OW, Cout)


def conv_bias_act(x, p, *, pad, pad_mode, act):
    """Conv2d + bias + activation, fully fused in the matmul epilogue (no BN)."""
    w, b = p["w"], p["b"]
    if pad > 0:
        mode = "reflect" if pad_mode == "reflect" else "constant"
        x = jnp.pad(x, ((0, 0), (pad, pad), (pad, pad), (0, 0)), mode=mode)
    Cout, Cin, kh, kw = w.shape
    patches, N, OH, OW = _im2col(x, kh, kw, 1)
    w_mat = jnp.transpose(w, (2, 3, 1, 0)).reshape(kh * kw * Cin, Cout)
    y = matmul_bias_act(patches, w_mat, b, act, out_dtype=jnp.float32)
    return y.reshape(N, OH, OW, Cout)


def conv_transpose_bn_act(x, p, *, act):
    """ConvTranspose2d(k=3, s=2, p=1, output_padding=1) -> BN -> act via
    sub-pixel decomposition: one 2x2 stride-1 conv computes all 4 output
    phases (single MXU matmul), which are then interleaved. No zero-dilated
    input is ever built. Bias is cancelled by train-mode BN."""
    w = p["w"]                                   # (Cin, Cout, 3, 3)
    N, H, W, Cin = x.shape
    Cout = w.shape[1]

    xp = jnp.pad(x, ((0, 0), (0, 1), (0, 1), (0, 0)))   # bottom/right halo
    slots = [xp[:, :H, :W, :], xp[:, :H, 1:W + 1, :],
             xp[:, 1:H + 1, :W, :], xp[:, 1:H + 1, 1:W + 1, :]]
    patches = jnp.concatenate(slots, axis=-1).reshape(N * H * W, 4 * Cin)

    # Phase p = a*2 + b gives output pixel (2m+a, 2n+b); taps derived from
    # oh = 2h - 1 + ki, ow = 2w - 1 + kj.
    g = lambda i, j: w[:, :, i, j]               # (Cin, Cout)
    wz = jnp.zeros((4, Cin, 4, Cout), jnp.float32)
    wz = wz.at[0, :, 0, :].set(g(1, 1))
    wz = wz.at[0, :, 1, :].set(g(1, 2))
    wz = wz.at[1, :, 1, :].set(g(1, 0))
    wz = wz.at[0, :, 2, :].set(g(2, 1))
    wz = wz.at[2, :, 2, :].set(g(0, 1))
    wz = wz.at[0, :, 3, :].set(g(2, 2))
    wz = wz.at[1, :, 3, :].set(g(2, 0))
    wz = wz.at[2, :, 3, :].set(g(0, 2))
    wz = wz.at[3, :, 3, :].set(g(0, 0))
    w_mat = wz.reshape(4 * Cin, 4 * Cout)

    y, csum, csq = matmul_stats(patches, w_mat)      # (M, 4*Cout)
    Mrows = N * H * W
    total = 4.0 * Mrows                              # = N * (2H) * (2W)
    mean = csum.reshape(4, Cout).sum(0) / total
    var = jnp.maximum(csq.reshape(4, Cout).sum(0) / total - mean * mean, 0.0)
    inv = p["gamma"] * lax.rsqrt(var + 1e-5)
    scale = jnp.tile(inv, 4)
    shift = jnp.tile(p["beta"] - mean * inv, 4)

    out = affine_act(y, scale, shift, None, act)     # (M, 4*Cout) bf16
    out = out.reshape(N, H, W, 2, 2, Cout)
    out = out.transpose(0, 1, 3, 2, 4, 5).reshape(N, 2 * H, 2 * W, Cout)
    return out


# --------------------------- model definition --------------------------------

def init_params(key, input_nc, output_nc, ngf, n_downsampling, n_blocks):
    def conv_p(k, cin, cout, ksize, bn=True, transpose=False):
        kw_, kb_ = jax.random.split(k)
        shape = (cin, cout, ksize, ksize) if transpose else (cout, cin, ksize, ksize)
        p = {"w": 0.05 * jax.random.normal(kw_, shape, jnp.float32),
             "b": 0.05 * jax.random.normal(kb_, (cout,), jnp.float32)}
        if bn:
            p["gamma"] = jnp.ones((cout,), jnp.float32)
            p["beta"] = jnp.zeros((cout,), jnp.float32)
        return p

    keys = iter(jax.random.split(key, 128))
    params = {"stem": conv_p(next(keys), input_nc, ngf, 7)}
    for i in range(n_downsampling):
        mult = 2 ** i
        params[f"down{i}"] = conv_p(next(keys), ngf * mult, ngf * mult * 2, 3)
    mult = 2 ** n_downsampling
    for i in range(n_blocks):
        params[f"res{i}a"] = conv_p(next(keys), ngf * mult, ngf * mult, 3)
        params[f"res{i}b"] = conv_p(next(keys), ngf * mult, ngf * mult, 3)
    for i in range(n_downsampling):
        mult = 2 ** (n_downsampling - i)
        params[f"up{i}"] = conv_p(next(keys), ngf * mult, ngf * mult // 2, 3,
                                  transpose=True)
    params["head"] = conv_p(next(keys), ngf, output_nc, 7, bn=False)
    return params


def global_generator_forward(x_nchw, params, *, n_downsampling, n_blocks,
                             padding_type="reflect"):
    # NCHW -> NHWC, activations kept in bf16 between layers.
    x = jnp.transpose(x_nchw, (0, 2, 3, 1)).astype(jnp.bfloat16)

    # ReflectionPad2d(3) + Conv(7) + BN + ReLU
    x = conv_bn_act(x, params["stem"], stride=1, pad=3,
                    pad_mode="reflect", act="relu")
    # Downsampling: Conv(3, stride 2, zero pad 1) + BN + ReLU
    for i in range(n_downsampling):
        x = conv_bn_act(x, params[f"down{i}"], stride=2, pad=1,
                        pad_mode="zero", act="relu")
    # ResNet blocks: (pad, conv3, BN, ReLU, pad, conv3, BN) + skip
    for i in range(n_blocks):
        y = conv_bn_act(x, params[f"res{i}a"], stride=1, pad=1,
                        pad_mode=padding_type, act="relu")
        x = conv_bn_act(y, params[f"res{i}b"], stride=1, pad=1,
                        pad_mode=padding_type, act="none", residual=x)
    # Upsampling: ConvTranspose(3, s2, p1, op1) + BN + ReLU (sub-pixel form)
    for i in range(n_downsampling):
        x = conv_transpose_bn_act(x, params[f"up{i}"], act="relu")
    # ReflectionPad2d(3) + Conv(7) + Tanh (bias+tanh fused in matmul epilogue)
    x = conv_bias_act(x, params["head"], pad=3, pad_mode="reflect", act="tanh")
    return jnp.transpose(x, (0, 3, 1, 2))  # NHWC -> NCHW


# ----------------------------------- main -------------------------------------

if __name__ == "__main__":
    INPUT_NC, OUTPUT_NC, NGF = 3, 3, 8
    N_DOWN, N_BLOCKS = 2, 2   # small config for the smoke test

    key = jax.random.PRNGKey(0)
    kx, kp = jax.random.split(key)
    x = jax.random.normal(kx, (2, INPUT_NC, 16, 16), jnp.float32)
    params = init_params(kp, INPUT_NC, OUTPUT_NC, NGF, N_DOWN, N_BLOCKS)

    fwd = jax.jit(functools.partial(global_generator_forward,
                                    n_downsampling=N_DOWN, n_blocks=N_BLOCKS))
    out = jax.block_until_ready(fwd(x, params))

    assert out.shape == (2, OUTPUT_NC, 16, 16), out.shape
    assert bool(jnp.all(jnp.isfinite(out)))
    assert bool(jnp.all(jnp.abs(out) <= 1.0))  # final tanh
    print("KERNEL_OK")
</pallas_src>

<mosaic_0001>
module attributes {stable_mosaic.version = 11 : i64} {
  func.func @_mm_stats_kernel(%arg0: i32, %arg1: i32, %arg2: i32, %arg3: memref<512x256xbf16, #tpu.memory_space<vmem>>, %arg4: memref<256x128xbf16, #tpu.memory_space<vmem>>, %arg5: memref<512x128xbf16, #tpu.memory_space<vmem>>, %arg6: memref<8x128xf32, #tpu.memory_space<vmem>>, %arg7: memref<8x128xf32, #tpu.memory_space<vmem>>, %arg8: memref<512x128xf32, #tpu.memory_space<vmem>>) attributes {dimension_semantics = [#tpu.dimension_semantics<parallel>, #tpu.dimension_semantics<parallel>, #tpu.dimension_semantics<arbitrary>], iteration_bounds = array<i64: 1, 1, 1>, scalar_prefetch = 0 : i64, scratch_operands = 1 : i64, tpu.core_type = #tpu.core_type<tc>, window_params = [{transform_indices = @transform_0, window_bounds = array<i64: 512, 256>}, {transform_indices = @transform_1, window_bounds = array<i64: 256, 128>}, {transform_indices = @transform_2, window_bounds = array<i64: 512, 128>}, {transform_indices = @transform_3, window_bounds = array<i64: 8, 128>}, {transform_indices = @transform_4, window_bounds = array<i64: 8, 128>}]} {
    %c0_i32 = arith.constant 0 : i32
    %0 = arith.cmpi eq, %arg2, %c0_i32 : i32
    %1 = arith.extui %0 : i1 to i32
    %c0_i32_0 = arith.constant 0 : i32
    %2 = arith.cmpi ne, %1, %c0_i32_0 : i32
    scf.if %2 {
      %cst_10 = arith.constant 0.000000e+00 : f32
      %12 = vector.broadcast %cst_10 : f32 to vector<512x128xf32>
      %c0_11 = arith.constant 0 : index
      %c0_12 = arith.constant 0 : index
      %13 = vector.load %arg8[%c0_11, %c0_12] : memref<512x128xf32, #tpu.memory_space<vmem>>, vector<512x128xf32>
      tpu.vector_store %arg8[%c0_11, %c0_12], %12 {strides = array<i32>} : memref<512x128xf32, #tpu.memory_space<vmem>>, vector<512x128xf32>,
    } else {
    }
    %c0 = arith.constant 0 : index
    %c0_1 = arith.constant 0 : index
    %3 = vector.load %arg8[%c0, %c0_1] : memref<512x128xf32, #tpu.memory_space<vmem>>, vector<512x128xf32>
    %c0_2 = arith.constant 0 : index
    %c0_3 = arith.constant 0 : index
    %4 = vector.load %arg3[%c0_2, %c0_3] : memref<512x256xbf16, #tpu.memory_space<vmem>>, vector<512x256xbf16>
    %c0_4 = arith.constant 0 : index
    %c0_5 = arith.constant 0 : index
    %5 = vector.load %arg4[%c0_4, %c0_5] : memref<256x128xbf16, #tpu.memory_space<vmem>>, vector<256x128xbf16>
    %cst = arith.constant dense<0.000000e+00> : vector<512x128xf32>
    %6 = tpu.matmul %4, %5, %cst {dimension_numbers = #tpu.dot_dimension_numbers<[1], [0], [0], [1], [0, 0, 1, 1], [], []>} : vector<512x256xbf16>, vector<256x128xbf16>, vector<512x128xf32> -> vector<512x128xf32>
    %7 = arith.addf %3, %6 : vector<512x128xf32>
    %c0_6 = arith.constant 0 : index
    %c0_7 = arith.constant 0 : index
    %8 = vector.load %arg8[%c0_6, %c0_7] : memref<512x128xf32, #tpu.memory_space<vmem>>, vector<512x128xf32>
    tpu.vector_store %arg8[%c0_6, %c0_7], %7 {strides = array<i32>} : memref<512x128xf32, #tpu.memory_space<vmem>>, vector<512x128xf32>,
    %c0_i32_8 = arith.constant 0 : i32
    %9 = arith.cmpi eq, %arg2, %c0_i32_8 : i32
    %10 = arith.extui %9 : i1 to i32
    %c0_i32_9 = arith.constant 0 : i32
    %11 = arith.cmpi ne, %10, %c0_i32_9 : i32
    scf.if %11 {
      %c0_10 = arith.constant 0 : index
      %c0_11 = arith.constant 0 : index
      %12 = vector.load %arg8[%c0_10, %c0_11] : memref<512x128xf32, #tpu.memory_space<vmem>>, vector<512x128xf32>
      %13 = arith.truncf %12 : vector<512x128xf32> to vector<512x128xbf16>
      %c0_12 = arith.constant 0 : index
      %c0_13 = arith.constant 0 : index
      %14 = vector.load %arg5[%c0_12, %c0_13] : memref<512x128xbf16, #tpu.memory_space<vmem>>, vector<512x128xbf16>
      tpu.vector_store %arg5[%c0_12, %c0_13], %13 {strides = array<i32>} : memref<512x128xbf16, #tpu.memory_space<vmem>>, vector<512x128xbf16>,
      %cst_14 = arith.constant dense<0.000000e+00> : vector<128xf32>
      %15 = vector.multi_reduction <add>, %12, %cst_14 [0] : vector<512x128xf32> to vector<128xf32>
      %16 = vector.shape_cast %15 : vector<128xf32> to vector<1x128xf32>
      %17 = arith.mulf %12, %12 : vector<512x128xf32>
      %cst_15 = arith.constant dense<0.000000e+00> : vector<128xf32>
      %18 = vector.multi_reduction <add>, %17, %cst_15 [0] : vector<512x128xf32> to vector<128xf32>
      %19 = vector.shape_cast %18 : vector<128xf32> to vector<1x128xf32>
      %20 = vector.shape_cast %16 : vector<1x128xf32> to vector<1x128xf32>
      %21 = vector.broadcast %20 : vector<1x128xf32> to vector<8x128xf32>
      %c0_16 = arith.constant 0 : index
      %c0_17 = arith.constant 0 : index
      %22 = vector.load %arg6[%c0_16, %c0_17] : memref<8x128xf32, #tpu.memory_space<vmem>>, vector<8x128xf32>
      tpu.vector_store %arg6[%c0_16, %c0_17], %21 {strides = array<i32>} : memref<8x128xf32, #tpu.memory_space<vmem>>, vector<8x128xf32>,
      %23 = vector.shape_cast %19 : vector<1x128xf32> to vector<1x128xf32>
      %24 = vector.broadcast %23 : vector<1x128xf32> to vector<8x128xf32>
      %c0_18 = arith.constant 0 : index
      %c0_19 = arith.constant 0 : index
      %25 = vector.load %arg7[%c0_18, %c0_19] : memref<8x128xf32, #tpu.memory_space<vmem>>, vector<8x128xf32>
      tpu.vector_store %arg7[%c0_18, %c0_19], %24 {strides = array<i32>} : memref<8x128xf32, #tpu.memory_space<vmem>>, vector<8x128xf32>,
    } else {
    }
    return
  }
  func.func @transform_0(%arg0: i32, %arg1: i32, %arg2: i32) -> (i32, i32) {
    %c0_i32 = arith.constant 0 : i32
    return %arg0, %arg2 : i32, i32
  }
  func.func @transform_1(%arg0: i32, %arg1: i32, %arg2: i32) -> (i32, i32) {
    %c0_i32 = arith.constant 0 : i32
    return %arg2, %arg1 : i32, i32
  }
  func.func @transform_2(%arg0: i32, %arg1: i32, %arg2: i32) -> (i32, i32) {
    %c0_i32 = arith.constant 0 : i32
    return %arg0, %arg1 : i32, i32
  }
  func.func @transform_3(%arg0: i32, %arg1: i32, %arg2: i32) -> (i32, i32) {
    %c0_i32 = arith.constant 0 : i32
    return %arg0, %arg1 : i32, i32
  }
  func.func @transform_4(%arg0: i32, %arg1: i32, %arg2: i32) -> (i32, i32) {
    %c0_i32 = arith.constant 0 : i32
    return %arg0, %arg1 : i32, i32
  }
}

module attributes {stable_mosaic.version = 11 : i64} {
  func.func @_affine_act_kernel(%arg0: i32, %arg1: memref<32x128xbf16, #tpu.memory_space<vmem>>, %arg2: memref<1x128xf32, #tpu.memory_space<vmem>>, %arg3: memref<1x128xf32, #tpu.memory_space<vmem>>, %arg4: memref<32x128xbf16, #tpu.memory_space<vmem>>) attributes {dimension_semantics = [#tpu.dimension_semantics<parallel>], iteration_bounds = array<i64: 1>, scalar_prefetch = 0 : i64, scratch_operands = 0 : i64, tpu.core_type = #tpu.core_type<tc>, window_params = [{transform_indices = @transform_0, window_bounds = array<i64: 32, 128>}, {pipeline_mode = #tpu.pipeline_mode<synchronous>, transform_indices = @transform_1, window_bounds = array<i64: 1, 128>}, {pipeline_mode = #tpu.pipeline_mode<synchronous>, transform_indices = @transform_2, window_bounds = array<i64: 1, 128>}, {transform_indices = @transform_3, window_bounds = array<i64: 32, 128>}]} {
    %c0 = arith.constant 0 : index
    %c0_0 = arith.constant 0 : index
    %0 = vector.load %arg1[%c0, %c0_0] : memref<32x128xbf16, #tpu.memory_space<vmem>>, vector<32x128xbf16>
    %1 = arith.extf %0 : vector<32x128xbf16> to vector<32x128xf32>
    %c0_1 = arith.constant 0 : index
    %c0_2 = arith.constant 0 : index
    %2 = vector.load %arg2[%c0_1, %c0_2] : memref<1x128xf32, #tpu.memory_space<vmem>>, vector<1x128xf32>
    %3 = vector.broadcast %2 : vector<1x128xf32> to vector<32x128xf32>
    %4 = arith.mulf %1, %3 : vector<32x128xf32>
    %c0_3 = arith.constant 0 : index
    %c0_4 = arith.constant 0 : index
    %5 = vector.load %arg3[%c0_3, %c0_4] : memref<1x128xf32, #tpu.memory_space<vmem>>, vector<1x128xf32>
    %6 = vector.broadcast %5 : vector<1x128xf32> to vector<32x128xf32>
    %7 = arith.addf %4, %6 : vector<32x128xf32>
    %cst = arith.constant 0.000000e+00 : f32
    %8 = vector.broadcast %cst : f32 to vector<32x128xf32>
    %9 = arith.maximumf %7, %8 : vector<32x128xf32>
    %10 = arith.truncf %9 : vector<32x128xf32> to vector<32x128xbf16>
    %c0_5 = arith.constant 0 : index
    %c0_6 = arith.constant 0 : index
    %11 = vector.load %arg4[%c0_5, %c0_6] : memref<32x128xbf16, #tpu.memory_space<vmem>>, vector<32x128xbf16>
    tpu.vector_store %arg4[%c0_5, %c0_6], %10 {strides = array<i32>} : memref<32x128xbf16, #tpu.memory_space<vmem>>, vector<32x128xbf16>,
    return
  }
  func.func @transform_0(%arg0: i32) -> (i32, i32) {
    %c0_i32 = arith.constant 0 : i32
    %c0_i32_0 = arith.constant 0 : i32
    return %arg0, %c0_i32 : i32, i32
  }
  func.func @transform_1(%arg0: i32) -> (i32, i32) {
    %c0_i32 = arith.constant 0 : i32
    %c0_i32_0 = arith.constant 0 : i32
    %c0_i32_1 = arith.constant 0 : i32
    return %c0_i32, %c0_i32_0 : i32, i32
  }
  func.func @transform_2(%arg0: i32) -> (i32, i32) {
    %c0_i32 = arith.constant 0 : i32
    %c0_i32_0 = arith.constant 0 : i32
    %c0_i32_1 = arith.constant 0 : i32
    return %c0_i32, %c0_i32_0 : i32, i32
  }
  func.func @transform_3(%arg0: i32) -> (i32, i32) {
    %c0_i32 = arith.constant 0 : i32
    %c0_i32_0 = arith.constant 0 : i32
    return %arg0, %c0_i32 : i32, i32
  }
}

module attributes {stable_mosaic.version = 11 : i64} {
  func.func @_mm_stats_kernel(%arg0: i32, %arg1: i32, %arg2: i32, %arg3: memref<128x128xbf16, #tpu.memory_space<vmem>>, %arg4: memref<128x128xbf16, #tpu.memory_space<vmem>>, %arg5: memref<128x128xbf16, #tpu.memory_space<vmem>>, %arg6: memref<8x128xf32, #tpu.memory_space<vmem>>, %arg7: memref<8x128xf32, #tpu.memory_space<vmem>>, %arg8: memref<128x128xf32, #tpu.memory_space<vmem>>) attributes {dimension_semantics = [#tpu.dimension_semantics<parallel>, #tpu.dimension_semantics<parallel>, #tpu.dimension_semantics<arbitrary>], iteration_bounds = array<i64: 1, 1, 1>, scalar_prefetch = 0 : i64, scratch_operands = 1 : i64, tpu.core_type = #tpu.core_type<tc>, window_params = [{transform_indices = @transform_0, window_bounds = array<i64: 128, 128>}, {transform_indices = @transform_1, window_bounds = array<i64: 128, 128>}, {transform_indices = @transform_2, window_bounds = array<i64: 128, 128>}, {transform_indices = @transform_3, window_bounds = array<i64: 8, 128>}, {transform_indices = @transform_4, window_bounds = array<i64: 8, 128>}]} {
    %c0_i32 = arith.constant 0 : i32
    %0 = arith.cmpi eq, %arg2, %c0_i32 : i32
    %1 = arith.extui %0 : i1 to i32
    %c0_i32_0 = arith.constant 0 : i32
    %2 = arith.cmpi ne, %1, %c0_i32_0 : i32
    scf.if %2 {
      %cst_10 = arith.constant 0.000000e+00 : f32
      %12 = vector.broadcast %cst_10 : f32 to vector<128x128xf32>
      %c0_11 = arith.constant 0 : index
      %c0_12 = arith.constant 0 : index
      %13 = vector.load %arg8[%c0_11, %c0_12] : memref<128x128xf32, #tpu.memory_space<vmem>>, vector<128x128xf32>
      tpu.vector_store %arg8[%c0_11, %c0_12], %12 {strides = array<i32>} : memref<128x128xf32, #tpu.memory_space<vmem>>, vector<128x128xf32>,
    } else {
    }
    %c0 = arith.constant 0 : index
    %c0_1 = arith.constant 0 : index
    %3 = vector.load %arg8[%c0, %c0_1] : memref<128x128xf32, #tpu.memory_space<vmem>>, vector<128x128xf32>
    %c0_2 = arith.constant 0 : index
    %c0_3 = arith.constant 0 : index
    %4 = vector.load %arg3[%c0_2, %c0_3] : memref<128x128xbf16, #tpu.memory_space<vmem>>, vector<128x128xbf16>
    %c0_4 = arith.constant 0 : index
    %c0_5 = arith.constant 0 : index
    %5 = vector.load %arg4[%c0_4, %c0_5] : memref<128x128xbf16, #tpu.memory_space<vmem>>, vector<128x128xbf16>
    %cst = arith.constant dense<0.000000e+00> : vector<128x128xf32>
    %6 = tpu.matmul %4, %5, %cst {dimension_numbers = #tpu.dot_dimension_numbers<[1], [0], [0], [1], [0, 0, 1, 1], [], []>} : vector<128x128xbf16>, vector<128x128xbf16>, vector<128x128xf32> -> vector<128x128xf32>
    %7 = arith.addf %3, %6 : vector<128x128xf32>
    %c0_6 = arith.constant 0 : index
    %c0_7 = arith.constant 0 : index
    %8 = vector.load %arg8[%c0_6, %c0_7] : memref<128x128xf32, #tpu.memory_space<vmem>>, vector<128x128xf32>
    tpu.vector_store %arg8[%c0_6, %c0_7], %7 {strides = array<i32>} : memref<128x128xf32, #tpu.memory_space<vmem>>, vector<128x128xf32>,
    %c0_i32_8 = arith.constant 0 : i32
    %9 = arith.cmpi eq, %arg2, %c0_i32_8 : i32
    %10 = arith.extui %9 : i1 to i32
    %c0_i32_9 = arith.constant 0 : i32
    %11 = arith.cmpi ne, %10, %c0_i32_9 : i32
    scf.if %11 {
      %c0_10 = arith.constant 0 : index
      %c0_11 = arith.constant 0 : index
      %12 = vector.load %arg8[%c0_10, %c0_11] : memref<128x128xf32, #tpu.memory_space<vmem>>, vector<128x128xf32>
      %13 = arith.truncf %12 : vector<128x128xf32> to vector<128x128xbf16>
      %c0_12 = arith.constant 0 : index
      %c0_13 = arith.constant 0 : index
      %14 = vector.load %arg5[%c0_12, %c0_13] : memref<128x128xbf16, #tpu.memory_space<vmem>>, vector<128x128xbf16>
      tpu.vector_store %arg5[%c0_12, %c0_13], %13 {strides = array<i32>} : memref<128x128xbf16, #tpu.memory_space<vmem>>, vector<128x128xbf16>,
      %cst_14 = arith.constant dense<0.000000e+00> : vector<128xf32>
      %15 = vector.multi_reduction <add>, %12, %cst_14 [0] : vector<128x128xf32> to vector<128xf32>
      %16 = vector.shape_cast %15 : vector<128xf32> to vector<1x128xf32>
      %17 = arith.mulf %12, %12 : vector<128x128xf32>
      %cst_15 = arith.constant dense<0.000000e+00> : vector<128xf32>
      %18 = vector.multi_reduction <add>, %17, %cst_15 [0] : vector<128x128xf32> to vector<128xf32>
      %19 = vector.shape_cast %18 : vector<128xf32> to vector<1x128xf32>
      %20 = vector.shape_cast %16 : vector<1x128xf32> to vector<1x128xf32>
      %21 = vector.broadcast %20 : vector<1x128xf32> to vector<8x128xf32>
      %c0_16 = arith.constant 0 : index
      %c0_17 = arith.constant 0 : index
      %22 = vector.load %arg6[%c0_16, %c0_17] : memref<8x128xf32, #tpu.memory_space<vmem>>, vector<8x128xf32>
      tpu.vector_store %arg6[%c0_16, %c0_17], %21 {strides = array<i32>} : memref<8x128xf32, #tpu.memory_space<vmem>>, vector<8x128xf32>,
      %23 = vector.shape_cast %19 : vector<1x128xf32> to vector<1x128xf32>
      %24 = vector.broadcast %23 : vector<1x128xf32> to vector<8x128xf32>
      %c0_18 = arith.constant 0 : index
      %c0_19 = arith.constant 0 : index
      %25 = vector.load %arg7[%c0_18, %c0_19] : memref<8x128xf32, #tpu.memory_space<vmem>>, vector<8x128xf32>
      tpu.vector_store %arg7[%c0_18, %c0_19], %24 {strides = array<i32>} : memref<8x128xf32, #tpu.memory_space<vmem>>, vector<8x128xf32>,
    } else {
    }
    return
  }
  func.func @transform_0(%arg0: i32, %arg1: i32, %arg2: i32) -> (i32, i32) {
    %c0_i32 = arith.constant 0 : i32
    return %arg0, %arg2 : i32, i32
  }
  func.func @transform_1(%arg0: i32, %arg1: i32, %arg2: i32) -> (i32, i32) {
    %c0_i32 = arith.constant 0 : i32
    return %arg2, %arg1 : i32, i32
  }
  func.func @transform_2(%arg0: i32, %arg1: i32, %arg2: i32) -> (i32, i32) {
    %c0_i32 = arith.constant 0 : i32
    return %arg0, %arg1 : i32, i32
  }
  func.func @transform_3(%arg0: i32, %arg1: i32, %arg2: i32) -> (i32, i32) {
    %c0_i32 = arith.constant 0 : i32
    return %arg0, %arg1 : i32, i32
  }
  func.func @transform_4(%arg0: i32, %arg1: i32, %arg2: i32) -> (i32, i32) {
    %c0_i32 = arith.constant 0 : i32
    return %arg0, %arg1 : i32, i32
  }
}

module attributes {stable_mosaic.version = 11 : i64} {
  func.func @_affine_act_kernel(%arg0: i32, %arg1: memref<16x128xbf16, #tpu.memory_space<vmem>>, %arg2: memref<1x128xf32, #tpu.memory_space<vmem>>, %arg3: memref<1x128xf32, #tpu.memory_space<vmem>>, %arg4: memref<16x128xbf16, #tpu.memory_space<vmem>>) attributes {dimension_semantics = [#tpu.dimension_semantics<parallel>], iteration_bounds = array<i64: 1>, scalar_prefetch = 0 : i64, scratch_operands = 0 : i64, tpu.core_type = #tpu.core_type<tc>, window_params = [{transform_indices = @transform_0, window_bounds = array<i64: 16, 128>}, {pipeline_mode = #tpu.pipeline_mode<synchronous>, transform_indices = @transform_1, window_bounds = array<i64: 1, 128>}, {pipeline_mode = #tpu.pipeline_mode<synchronous>, transform_indices = @transform_2, window_bounds = array<i64: 1, 128>}, {transform_indices = @transform_3, window_bounds = array<i64: 16, 128>}]} {
    %c0 = arith.constant 0 : index
    %c0_0 = arith.constant 0 : index
    %0 = vector.load %arg1[%c0, %c0_0] : memref<16x128xbf16, #tpu.memory_space<vmem>>, vector<16x128xbf16>
    %1 = arith.extf %0 : vector<16x128xbf16> to vector<16x128xf32>
    %c0_1 = arith.constant 0 : index
    %c0_2 = arith.constant 0 : index
    %2 = vector.load %arg2[%c0_1, %c0_2] : memref<1x128xf32, #tpu.memory_space<vmem>>, vector<1x128xf32>
    %3 = vector.broadcast %2 : vector<1x128xf32> to vector<16x128xf32>
    %4 = arith.mulf %1, %3 : vector<16x128xf32>
    %c0_3 = arith.constant 0 : index
    %c0_4 = arith.constant 0 : index
    %5 = vector.load %arg3[%c0_3, %c0_4] : memref<1x128xf32, #tpu.memory_space<vmem>>, vector<1x128xf32>
    %6 = vector.broadcast %5 : vector<1x128xf32> to vector<16x128xf32>
    %7 = arith.addf %4, %6 : vector<16x128xf32>
    %cst = arith.constant 0.000000e+00 : f32
    %8 = vector.broadcast %cst : f32 to vector<16x128xf32>
    %9 = arith.maximumf %7, %8 : vector<16x128xf32>
    %10 = arith.truncf %9 : vector<16x128xf32> to vector<16x128xbf16>
    %c0_5 = arith.constant 0 : index
    %c0_6 = arith.constant 0 : index
    %11 = vector.load %arg4[%c0_5, %c0_6] : memref<16x128xbf16, #tpu.memory_space<vmem>>, vector<16x128xbf16>
    tpu.vector_store %arg4[%c0_5, %c0_6], %10 {strides = array<i32>} : memref<16x128xbf16, #tpu.memory_space<vmem>>, vector<16x128xbf16>,
    return
  }
  func.func @transform_0(%arg0: i32) -> (i32, i32) {
    %c0_i32 = arith.constant 0 : i32
    %c0_i32_0 = arith.constant 0 : i32
    return %arg0, %c0_i32 : i32, i32
  }
  func.func @transform_1(%arg0: i32) -> (i32, i32) {
    %c0_i32 = arith.constant 0 : i32
    %c0_i32_0 = arith.constant 0 : i32
    %c0_i32_1 = arith.constant 0 : i32
    return %c0_i32, %c0_i32_0 : i32, i32
  }
  func.func @transform_2(%arg0: i32) -> (i32, i32) {
    %c0_i32 = arith.constant 0 : i32
    %c0_i32_0 = arith.constant 0 : i32
    %c0_i32_1 = arith.constant 0 : i32
    return %c0_i32, %c0_i32_0 : i32, i32
  }
  func.func @transform_3(%arg0: i32) -> (i32, i32) {
    %c0_i32 = arith.constant 0 : i32
    %c0_i32_0 = arith.constant 0 : i32
    return %arg0, %c0_i32 : i32, i32
  }
}

module attributes {stable_mosaic.version = 11 : i64} {
  func.func @_mm_stats_kernel(%arg0: i32, %arg1: i32, %arg2: i32, %arg3: memref<128x256xbf16, #tpu.memory_space<vmem>>, %arg4: memref<256x128xbf16, #tpu.memory_space<vmem>>, %arg5: memref<128x128xbf16, #tpu.memory_space<vmem>>, %arg6: memref<8x128xf32, #tpu.memory_space<vmem>>, %arg7: memref<8x128xf32, #tpu.memory_space<vmem>>, %arg8: memref<128x128xf32, #tpu.memory_space<vmem>>) attributes {dimension_semantics = [#tpu.dimension_semantics<parallel>, #tpu.dimension_semantics<parallel>, #tpu.dimension_semantics<arbitrary>], iteration_bounds = array<i64: 1, 1, 1>, scalar_prefetch = 0 : i64, scratch_operands = 1 : i64, tpu.core_type = #tpu.core_type<tc>, window_params = [{transform_indices = @transform_0, window_bounds = array<i64: 128, 256>}, {transform_indices = @transform_1, window_bounds = array<i64: 256, 128>}, {transform_indices = @transform_2, window_bounds = array<i64: 128, 128>}, {transform_indices = @transform_3, window_bounds = array<i64: 8, 128>}, {transform_indices = @transform_4, window_bounds = array<i64: 8, 128>}]} {
    %c0_i32 = arith.constant 0 : i32
    %0 = arith.cmpi eq, %arg2, %c0_i32 : i32
    %1 = arith.extui %0 : i1 to i32
    %c0_i32_0 = arith.constant 0 : i32
    %2 = arith.cmpi ne, %1, %c0_i32_0 : i32
    scf.if %2 {
      %cst_10 = arith.constant 0.000000e+00 : f32
      %12 = vector.broadcast %cst_10 : f32 to vector<128x128xf32>
      %c0_11 = arith.constant 0 : index
      %c0_12 = arith.constant 0 : index
      %13 = vector.load %arg8[%c0_11, %c0_12] : memref<128x128xf32, #tpu.memory_space<vmem>>, vector<128x128xf32>
      tpu.vector_store %arg8[%c0_11, %c0_12], %12 {strides = array<i32>} : memref<128x128xf32, #tpu.memory_space<vmem>>, vector<128x128xf32>,
    } else {
    }
    %c0 = arith.constant 0 : index
    %c0_1 = arith.constant 0 : index
    %3 = vector.load %arg8[%c0, %c0_1] : memref<128x128xf32, #tpu.memory_space<vmem>>, vector<128x128xf32>
    %c0_2 = arith.constant 0 : index
    %c0_3 = arith.constant 0 : index
    %4 = vector.load %arg3[%c0_2, %c0_3] : memref<128x256xbf16, #tpu.memory_space<vmem>>, vector<128x256xbf16>
    %c0_4 = arith.constant 0 : index
    %c0_5 = arith.constant 0 : index
    %5 = vector.load %arg4[%c0_4, %c0_5] : memref<256x128xbf16, #tpu.memory_space<vmem>>, vector<256x128xbf16>
    %cst = arith.constant dense<0.000000e+00> : vector<128x128xf32>
    %6 = tpu.matmul %4, %5, %cst {dimension_numbers = #tpu.dot_dimension_numbers<[1], [0], [0], [1], [0, 0, 1, 1], [], []>} : vector<128x256xbf16>, vector<256x128xbf16>, vector<128x128xf32> -> vector<128x128xf32>
    %7 = arith.addf %3, %6 : vector<128x128xf32>
    %c0_6 = arith.constant 0 : index
    %c0_7 = arith.constant 0 : index
    %8 = vector.load %arg8[%c0_6, %c0_7] : memref<128x128xf32, #tpu.memory_space<vmem>>, vector<128x128xf32>
    tpu.vector_store %arg8[%c0_6, %c0_7], %7 {strides = array<i32>} : memref<128x128xf32, #tpu.memory_space<vmem>>, vector<128x128xf32>,
    %c0_i32_8 = arith.constant 0 : i32
    %9 = arith.cmpi eq, %arg2, %c0_i32_8 : i32
    %10 = arith.extui %9 : i1 to i32
    %c0_i32_9 = arith.constant 0 : i32
    %11 = arith.cmpi ne, %10, %c0_i32_9 : i32
    scf.if %11 {
      %c0_10 = arith.constant 0 : index
      %c0_11 = arith.constant 0 : index
      %12 = vector.load %arg8[%c0_10, %c0_11] : memref<128x128xf32, #tpu.memory_space<vmem>>, vector<128x128xf32>
      %13 = arith.truncf %12 : vector<128x128xf32> to vector<128x128xbf16>
      %c0_12 = arith.constant 0 : index
      %c0_13 = arith.constant 0 : index
      %14 = vector.load %arg5[%c0_12, %c0_13] : memref<128x128xbf16, #tpu.memory_space<vmem>>, vector<128x128xbf16>
      tpu.vector_store %arg5[%c0_12, %c0_13], %13 {strides = array<i32>} : memref<128x128xbf16, #tpu.memory_space<vmem>>, vector<128x128xbf16>,
      %cst_14 = arith.constant dense<0.000000e+00> : vector<128xf32>
      %15 = vector.multi_reduction <add>, %12, %cst_14 [0] : vector<128x128xf32> to vector<128xf32>
      %16 = vector.shape_cast %15 : vector<128xf32> to vector<1x128xf32>
      %17 = arith.mulf %12, %12 : vector<128x128xf32>
      %cst_15 = arith.constant dense<0.000000e+00> : vector<128xf32>
      %18 = vector.multi_reduction <add>, %17, %cst_15 [0] : vector<128x128xf32> to vector<128xf32>
      %19 = vector.shape_cast %18 : vector<128xf32> to vector<1x128xf32>
      %20 = vector.shape_cast %16 : vector<1x128xf32> to vector<1x128xf32>
      %21 = vector.broadcast %20 : vector<1x128xf32> to vector<8x128xf32>
      %c0_16 = arith.constant 0 : index
      %c0_17 = arith.constant 0 : index
      %22 = vector.load %arg6[%c0_16, %c0_17] : memref<8x128xf32, #tpu.memory_space<vmem>>, vector<8x128xf32>
      tpu.vector_store %arg6[%c0_16, %c0_17], %21 {strides = array<i32>} : memref<8x128xf32, #tpu.memory_space<vmem>>, vector<8x128xf32>,
      %23 = vector.shape_cast %19 : vector<1x128xf32> to vector<1x128xf32>
      %24 = vector.broadcast %23 : vector<1x128xf32> to vector<8x128xf32>
      %c0_18 = arith.constant 0 : index
      %c0_19 = arith.constant 0 : index
      %25 = vector.load %arg7[%c0_18, %c0_19] : memref<8x128xf32, #tpu.memory_space<vmem>>, vector<8x128xf32>
      tpu.vector_store %arg7[%c0_18, %c0_19], %24 {strides = array<i32>} : memref<8x128xf32, #tpu.memory_space<vmem>>, vector<8x128xf32>,
    } else {
    }
    return
  }
  func.func @transform_0(%arg0: i32, %arg1: i32, %arg2: i32) -> (i32, i32) {
    %c0_i32 = arith.constant 0 : i32
    return %arg0, %arg2 : i32, i32
  }
  func.func @transform_1(%arg0: i32, %arg1: i32, %arg2: i32) -> (i32, i32) {
    %c0_i32 = arith.constant 0 : i32
    return %arg2, %arg1 : i32, i32
  }
  func.func @transform_2(%arg0: i32, %arg1: i32, %arg2: i32) -> (i32, i32) {
    %c0_i32 = arith.constant 0 : i32
    return %arg0, %arg1 : i32, i32
  }
  func.func @transform_3(%arg0: i32, %arg1: i32, %arg2: i32) -> (i32, i32) {
    %c0_i32 = arith.constant 0 : i32
    return %arg0, %arg1 : i32, i32
  }
  func.func @transform_4(%arg0: i32, %arg1: i32, %arg2: i32) -> (i32, i32) {
    %c0_i32 = arith.constant 0 : i32
    return %arg0, %arg1 : i32, i32
  }
}

module attributes {stable_mosaic.version = 11 : i64} {
  func.func @_affine_act_kernel(%arg0: i32, %arg1: memref<8x128xbf16, #tpu.memory_space<vmem>>, %arg2: memref<1x128xf32, #tpu.memory_space<vmem>>, %arg3: memref<1x128xf32, #tpu.memory_space<vmem>>, %arg4: memref<8x128xbf16, #tpu.memory_space<vmem>>) attributes {dimension_semantics = [#tpu.dimension_semantics<parallel>], iteration_bounds = array<i64: 1>, scalar_prefetch = 0 : i64, scratch_operands = 0 : i64, tpu.core_type = #tpu.core_type<tc>, window_params = [{transform_indices = @transform_0, window_bounds = array<i64: 8, 128>}, {pipeline_mode = #tpu.pipeline_mode<synchronous>, transform_indices = @transform_1, window_bounds = array<i64: 1, 128>}, {pipeline_mode = #tpu.pipeline_mode<synchronous>, transform_indices = @transform_2, window_bounds = array<i64: 1, 128>}, {transform_indices = @transform_3, window_bounds = array<i64: 8, 128>}]} {
    %c0 = arith.constant 0 : index
    %c0_0 = arith.constant 0 : index
    %0 = vector.load %arg1[%c0, %c0_0] : memref<8x128xbf16, #tpu.memory_space<vmem>>, vector<8x128xbf16>
    %1 = arith.extf %0 : vector<8x128xbf16> to vector<8x128xf32>
    %c0_1 = arith.constant 0 : index
    %c0_2 = arith.constant 0 : index
    %2 = vector.load %arg2[%c0_1, %c0_2] : memref<1x128xf32, #tpu.memory_space<vmem>>, vector<1x128xf32>
    %3 = vector.broadcast %2 : vector<1x128xf32> to vector<8x128xf32>
    %4 = arith.mulf %1, %3 : vector<8x128xf32>
    %c0_3 = arith.constant 0 : index
    %c0_4 = arith.constant 0 : index
    %5 = vector.load %arg3[%c0_3, %c0_4] : memref<1x128xf32, #tpu.memory_space<vmem>>, vector<1x128xf32>
    %6 = vector.broadcast %5 : vector<1x128xf32> to vector<8x128xf32>
    %7 = arith.addf %4, %6 : vector<8x128xf32>
    %cst = arith.constant 0.000000e+00 : f32
    %8 = vector.broadcast %cst : f32 to vector<8x128xf32>
    %9 = arith.maximumf %7, %8 : vector<8x128xf32>
    %10 = arith.truncf %9 : vector<8x128xf32> to vector<8x128xbf16>
    %c0_5 = arith.constant 0 : index
    %c0_6 = arith.constant 0 : index
    %11 = vector.load %arg4[%c0_5, %c0_6] : memref<8x128xbf16, #tpu.memory_space<vmem>>, vector<8x128xbf16>
    tpu.vector_store %arg4[%c0_5, %c0_6], %10 {strides = array<i32>} : memref<8x128xbf16, #tpu.memory_space<vmem>>, vector<8x128xbf16>,
    return
  }
  func.func @transform_0(%arg0: i32) -> (i32, i32) {
    %c0_i32 = arith.constant 0 : i32
    %c0_i32_0 = arith.constant 0 : i32
    return %arg0, %c0_i32 : i32, i32
  }
  func.func @transform_1(%arg0: i32) -> (i32, i32) {
    %c0_i32 = arith.constant 0 : i32
    %c0_i32_0 = arith.constant 0 : i32
    %c0_i32_1 = arith.constant 0 : i32
    return %c0_i32, %c0_i32_0 : i32, i32
  }
  func.func @transform_2(%arg0: i32) -> (i32, i32) {
    %c0_i32 = arith.constant 0 : i32
    %c0_i32_0 = arith.constant 0 : i32
    %c0_i32_1 = arith.constant 0 : i32
    return %c0_i32, %c0_i32_0 : i32, i32
  }
  func.func @transform_3(%arg0: i32) -> (i32, i32) {
    %c0_i32 = arith.constant 0 : i32
    %c0_i32_0 = arith.constant 0 : i32
    return %arg0, %c0_i32 : i32, i32
  }
}

module attributes {stable_mosaic.version = 11 : i64} {
  func.func @_mm_stats_kernel(%arg0: i32, %arg1: i32, %arg2: i32, %arg3: memref<128x384xbf16, #tpu.memory_space<vmem>>, %arg4: memref<384x128xbf16, #tpu.memory_space<vmem>>, %arg5: memref<128x128xbf16, #tpu.memory_space<vmem>>, %arg6: memref<8x128xf32, #tpu.memory_space<vmem>>, %arg7: memref<8x128xf32, #tpu.memory_space<vmem>>, %arg8: memref<128x128xf32, #tpu.memory_space<vmem>>) attributes {dimension_semantics = [#tpu.dimension_semantics<parallel>, #tpu.dimension_semantics<parallel>, #tpu.dimension_semantics<arbitrary>], iteration_bounds = array<i64: 1, 1, 1>, scalar_prefetch = 0 : i64, scratch_operands = 1 : i64, tpu.core_type = #tpu.core_type<tc>, window_params = [{transform_indices = @transform_0, window_bounds = array<i64: 128, 384>}, {transform_indices = @transform_1, window_bounds = array<i64: 384, 128>}, {transform_indices = @transform_2, window_bounds = array<i64: 128, 128>}, {transform_indices = @transform_3, window_bounds = array<i64: 8, 128>}, {transform_indices = @transform_4, window_bounds = array<i64: 8, 128>}]} {
    %c0_i32 = arith.constant 0 : i32
    %0 = arith.cmpi eq, %arg2, %c0_i32 : i32
    %1 = arith.extui %0 : i1 to i32
    %c0_i32_0 = arith.constant 0 : i32
    %2 = arith.cmpi ne, %1, %c0_i32_0 : i32
    scf.if %2 {
      %cst_10 = arith.constant 0.000000e+00 : f32
      %12 = vector.broadcast %cst_10 : f32 to vector<128x128xf32>
      %c0_11 = arith.constant 0 : index
      %c0_12 = arith.constant 0 : index
      %13 = vector.load %arg8[%c0_11, %c0_12] : memref<128x128xf32, #tpu.memory_space<vmem>>, vector<128x128xf32>
      tpu.vector_store %arg8[%c0_11, %c0_12], %12 {strides = array<i32>} : memref<128x128xf32, #tpu.memory_space<vmem>>, vector<128x128xf32>,
    } else {
    }
    %c0 = arith.constant 0 : index
    %c0_1 = arith.constant 0 : index
    %3 = vector.load %arg8[%c0, %c0_1] : memref<128x128xf32, #tpu.memory_space<vmem>>, vector<128x128xf32>
    %c0_2 = arith.constant 0 : index
    %c0_3 = arith.constant 0 : index
    %4 = vector.load %arg3[%c0_2, %c0_3] : memref<128x384xbf16, #tpu.memory_space<vmem>>, vector<128x384xbf16>
    %c0_4 = arith.constant 0 : index
    %c0_5 = arith.constant 0 : index
    %5 = vector.load %arg4[%c0_4, %c0_5] : memref<384x128xbf16, #tpu.memory_space<vmem>>, vector<384x128xbf16>
    %cst = arith.constant dense<0.000000e+00> : vector<128x128xf32>
    %6 = tpu.matmul %4, %5, %cst {dimension_numbers = #tpu.dot_dimension_numbers<[1], [0], [0], [1], [0, 0, 1, 1], [], []>} : vector<128x384xbf16>, vector<384x128xbf16>, vector<128x128xf32> -> vector<128x128xf32>
    %7 = arith.addf %3, %6 : vector<128x128xf32>
    %c0_6 = arith.constant 0 : index
    %c0_7 = arith.constant 0 : index
    %8 = vector.load %arg8[%c0_6, %c0_7] : memref<128x128xf32, #tpu.memory_space<vmem>>, vector<128x128xf32>
    tpu.vector_store %arg8[%c0_6, %c0_7], %7 {strides = array<i32>} : memref<128x128xf32, #tpu.memory_space<vmem>>, vector<128x128xf32>,
    %c0_i32_8 = arith.constant 0 : i32
    %9 = arith.cmpi eq, %arg2, %c0_i32_8 : i32
    %10 = arith.extui %9 : i1 to i32
    %c0_i32_9 = arith.constant 0 : i32
    %11 = arith.cmpi ne, %10, %c0_i32_9 : i32
    scf.if %11 {
      %c0_10 = arith.constant 0 : index
      %c0_11 = arith.constant 0 : index
      %12 = vector.load %arg8[%c0_10, %c0_11] : memref<128x128xf32, #tpu.memory_space<vmem>>, vector<128x128xf32>
      %13 = arith.truncf %12 : vector<128x128xf32> to vector<128x128xbf16>
      %c0_12 = arith.constant 0 : index
      %c0_13 = arith.constant 0 : index
      %14 = vector.load %arg5[%c0_12, %c0_13] : memref<128x128xbf16, #tpu.memory_space<vmem>>, vector<128x128xbf16>
      tpu.vector_store %arg5[%c0_12, %c0_13], %13 {strides = array<i32>} : memref<128x128xbf16, #tpu.memory_space<vmem>>, vector<128x128xbf16>,
      %cst_14 = arith.constant dense<0.000000e+00> : vector<128xf32>
      %15 = vector.multi_reduction <add>, %12, %cst_14 [0] : vector<128x128xf32> to vector<128xf32>
      %16 = vector.shape_cast %15 : vector<128xf32> to vector<1x128xf32>
      %17 = arith.mulf %12, %12 : vector<128x128xf32>
      %cst_15 = arith.constant dense<0.000000e+00> : vector<128xf32>
      %18 = vector.multi_reduction <add>, %17, %cst_15 [0] : vector<128x128xf32> to vector<128xf32>
      %19 = vector.shape_cast %18 : vector<128xf32> to vector<1x128xf32>
      %20 = vector.shape_cast %16 : vector<1x128xf32> to vector<1x128xf32>
      %21 = vector.broadcast %20 : vector<1x128xf32> to vector<8x128xf32>
      %c0_16 = arith.constant 0 : index
      %c0_17 = arith.constant 0 : index
      %22 = vector.load %arg6[%c0_16, %c0_17] : memref<8x128xf32, #tpu.memory_space<vmem>>, vector<8x128xf32>
      tpu.vector_store %arg6[%c0_16, %c0_17], %21 {strides = array<i32>} : memref<8x128xf32, #tpu.memory_space<vmem>>, vector<8x128xf32>,
      %23 = vector.shape_cast %19 : vector<1x128xf32> to vector<1x128xf32>
      %24 = vector.broadcast %23 : vector<1x128xf32> to vector<8x128xf32>
      %c0_18 = arith.constant 0 : index
      %c0_19 = arith.constant 0 : index
      %25 = vector.load %arg7[%c0_18, %c0_19] : memref<8x128xf32, #tpu.memory_space<vmem>>, vector<8x128xf32>
      tpu.vector_store %arg7[%c0_18, %c0_19], %24 {strides = array<i32>} : memref<8x128xf32, #tpu.memory_space<vmem>>, vector<8x128xf32>,
    } else {
    }
    return
  }
  func.func @transform_0(%arg0: i32, %arg1: i32, %arg2: i32) -> (i32, i32) {
    %c0_i32 = arith.constant 0 : i32
    return %arg0, %arg2 : i32, i32
  }
  func.func @transform_1(%arg0: i32, %arg1: i32, %arg2: i32) -> (i32, i32) {
    %c0_i32 = arith.constant 0 : i32
    return %arg2, %arg1 : i32, i32
  }
  func.func @transform_2(%arg0: i32, %arg1: i32, %arg2: i32) -> (i32, i32) {
    %c0_i32 = arith.constant 0 : i32
    return %arg0, %arg1 : i32, i32
  }
  func.func @transform_3(%arg0: i32, %arg1: i32, %arg2: i32) -> (i32, i32) {
    %c0_i32 = arith.constant 0 : i32
    return %arg0, %arg1 : i32, i32
  }
  func.func @transform_4(%arg0: i32, %arg1: i32, %arg2: i32) -> (i32, i32) {
    %c0_i32 = arith.constant 0 : i32
    return %arg0, %arg1 : i32, i32
  }
}

module attributes {stable_mosaic.version = 11 : i64} {
  func.func @_affine_act_kernel(%arg0: i32, %arg1: memref<8x128xbf16, #tpu.memory_space<vmem>>, %arg2: memref<1x128xf32, #tpu.memory_space<vmem>>, %arg3: memref<1x128xf32, #tpu.memory_space<vmem>>, %arg4: memref<8x128xbf16, #tpu.memory_space<vmem>>, %arg5: memref<8x128xbf16, #tpu.memory_space<vmem>>) attributes {dimension_semantics = [#tpu.dimension_semantics<parallel>], iteration_bounds = array<i64: 1>, scalar_prefetch = 0 : i64, scratch_operands = 0 : i64, tpu.core_type = #tpu.core_type<tc>, window_params = [{transform_indices = @transform_0, window_bounds = array<i64: 8, 128>}, {pipeline_mode = #tpu.pipeline_mode<synchronous>, transform_indices = @transform_1, window_bounds = array<i64: 1, 128>}, {pipeline_mode = #tpu.pipeline_mode<synchronous>, transform_indices = @transform_2, window_bounds = array<i64: 1, 128>}, {transform_indices = @transform_3, window_bounds = array<i64: 8, 128>}, {transform_indices = @transform_4, window_bounds = array<i64: 8, 128>}]} {
    %c0 = arith.constant 0 : index
    %c0_0 = arith.constant 0 : index
    %0 = vector.load %arg1[%c0, %c0_0] : memref<8x128xbf16, #tpu.memory_space<vmem>>, vector<8x128xbf16>
    %1 = arith.extf %0 : vector<8x128xbf16> to vector<8x128xf32>
    %c0_1 = arith.constant 0 : index
    %c0_2 = arith.constant 0 : index
    %2 = vector.load %arg2[%c0_1, %c0_2] : memref<1x128xf32, #tpu.memory_space<vmem>>, vector<1x128xf32>
    %3 = vector.broadcast %2 : vector<1x128xf32> to vector<8x128xf32>
    %4 = arith.mulf %1, %3 : vector<8x128xf32>
    %c0_3 = arith.constant 0 : index
    %c0_4 = arith.constant 0 : index
    %5 = vector.load %arg3[%c0_3, %c0_4] : memref<1x128xf32, #tpu.memory_space<vmem>>, vector<1x128xf32>
    %6 = vector.broadcast %5 : vector<1x128xf32> to vector<8x128xf32>
    %7 = arith.addf %4, %6 : vector<8x128xf32>
    %c0_5 = arith.constant 0 : index
    %c0_6 = arith.constant 0 : index
    %8 = vector.load %arg4[%c0_5, %c0_6] : memref<8x128xbf16, #tpu.memory_space<vmem>>, vector<8x128xbf16>
    %9 = arith.extf %8 : vector<8x128xbf16> to vector<8x128xf32>
    %10 = arith.addf %7, %9 : vector<8x128xf32>
    %11 = arith.truncf %10 : vector<8x128xf32> to vector<8x128xbf16>
    %c0_7 = arith.constant 0 : index
    %c0_8 = arith.constant 0 : index
    %12 = vector.load %arg5[%c0_7, %c0_8] : memref<8x128xbf16, #tpu.memory_space<vmem>>, vector<8x128xbf16>
    tpu.vector_store %arg5[%c0_7, %c0_8], %11 {strides = array<i32>} : memref<8x128xbf16, #tpu.memory_space<vmem>>, vector<8x128xbf16>,
    return
  }
  func.func @transform_0(%arg0: i32) -> (i32, i32) {
    %c0_i32 = arith.constant 0 : i32
    %c0_i32_0 = arith.constant 0 : i32
    return %arg0, %c0_i32 : i32, i32
  }
  func.func @transform_1(%arg0: i32) -> (i32, i32) {
    %c0_i32 = arith.constant 0 : i32
    %c0_i32_0 = arith.constant 0 : i32
    %c0_i32_1 = arith.constant 0 : i32
    return %c0_i32, %c0_i32_0 : i32, i32
  }
  func.func @transform_2(%arg0: i32) -> (i32, i32) {
    %c0_i32 = arith.constant 0 : i32
    %c0_i32_0 = arith.constant 0 : i32
    %c0_i32_1 = arith.constant 0 : i32
    return %c0_i32, %c0_i32_0 : i32, i32
  }
  func.func @transform_3(%arg0: i32) -> (i32, i32) {
    %c0_i32 = arith.constant 0 : i32
    %c0_i32_0 = arith.constant 0 : i32
    return %arg0, %c0_i32 : i32, i32
  }
  func.func @transform_4(%arg0: i32) -> (i32, i32) {
    %c0_i32 = arith.constant 0 : i32
    %c0_i32_0 = arith.constant 0 : i32
    return %arg0, %c0_i32 : i32, i32
  }
}

module attributes {stable_mosaic.version = 11 : i64} {
  func.func @_mm_bias_act_kernel(%arg0: i32, %arg1: i32, %arg2: i32, %arg3: memref<512x512xbf16, #tpu.memory_space<vmem>>, %arg4: memref<512x128xbf16, #tpu.memory_space<vmem>>, %arg5: memref<1x128xf32, #tpu.memory_space<vmem>>, %arg6: memref<512x128xf32, #tpu.memory_space<vmem>>, %arg7: memref<512x128xf32, #tpu.memory_space<vmem>>) attributes {dimension_semantics = [#tpu.dimension_semantics<parallel>, #tpu.dimension_semantics<parallel>, #tpu.dimension_semantics<arbitrary>], iteration_bounds = array<i64: 1, 1, 1>, scalar_prefetch = 0 : i64, scratch_operands = 1 : i64, tpu.core_type = #tpu.core_type<tc>, window_params = [{transform_indices = @transform_0, window_bounds = array<i64: 512, 512>}, {transform_indices = @transform_1, window_bounds = array<i64: 512, 128>}, {transform_indices = @transform_2, window_bounds = array<i64: 1, 128>}, {transform_indices = @transform_3, window_bounds = array<i64: 512, 128>}]} {
    %c0_i32 = arith.constant 0 : i32
    %0 = arith.cmpi eq, %arg2, %c0_i32 : i32
    %1 = arith.extui %0 : i1 to i32
    %c0_i32_0 = arith.constant 0 : i32
    %2 = arith.cmpi ne, %1, %c0_i32_0 : i32
    scf.if %2 {
      %cst_10 = arith.constant 0.000000e+00 : f32
      %12 = vector.broadcast %cst_10 : f32 to vector<512x128xf32>
      %c0_11 = arith.constant 0 : index
      %c0_12 = arith.constant 0 : index
      %13 = vector.load %arg7[%c0_11, %c0_12] : memref<512x128xf32, #tpu.memory_space<vmem>>, vector<512x128xf32>
      tpu.vector_store %arg7[%c0_11, %c0_12], %12 {strides = array<i32>} : memref<512x128xf32, #tpu.memory_space<vmem>>, vector<512x128xf32>,
    } else {
    }
    %c0 = arith.constant 0 : index
    %c0_1 = arith.constant 0 : index
    %3 = vector.load %arg7[%c0, %c0_1] : memref<512x128xf32, #tpu.memory_space<vmem>>, vector<512x128xf32>
    %c0_2 = arith.constant 0 : index
    %c0_3 = arith.constant 0 : index
    %4 = vector.load %arg3[%c0_2, %c0_3] : memref<512x512xbf16, #tpu.memory_space<vmem>>, vector<512x512xbf16>
    %c0_4 = arith.constant 0 : index
    %c0_5 = arith.constant 0 : index
    %5 = vector.load %arg4[%c0_4, %c0_5] : memref<512x128xbf16, #tpu.memory_space<vmem>>, vector<512x128xbf16>
    %cst = arith.constant dense<0.000000e+00> : vector<512x128xf32>
    %6 = tpu.matmul %4, %5, %cst {dimension_numbers = #tpu.dot_dimension_numbers<[1], [0], [0], [1], [0, 0, 1, 1], [], []>} : vector<512x512xbf16>, vector<512x128xbf16>, vector<512x128xf32> -> vector<512x128xf32>
    %7 = arith.addf %3, %6 : vector<512x128xf32>
    %c0_6 = arith.constant 0 : index
    %c0_7 = arith.constant 0 : index
    %8 = vector.load %arg7[%c0_6, %c0_7] : memref<512x128xf32, #tpu.memory_space<vmem>>, vector<512x128xf32>
    tpu.vector_store %arg7[%c0_6, %c0_7], %7 {strides = array<i32>} : memref<512x128xf32, #tpu.memory_space<vmem>>, vector<512x128xf32>,
    %c0_i32_8 = arith.constant 0 : i32
    %9 = arith.cmpi eq, %arg2, %c0_i32_8 : i32
    %10 = arith.extui %9 : i1 to i32
    %c0_i32_9 = arith.constant 0 : i32
    %11 = arith.cmpi ne, %10, %c0_i32_9 : i32
    scf.if %11 {
      %c0_10 = arith.constant 0 : index
      %c0_11 = arith.constant 0 : index
      %12 = vector.load %arg7[%c0_10, %c0_11] : memref<512x128xf32, #tpu.memory_space<vmem>>, vector<512x128xf32>
      %c0_12 = arith.constant 0 : index
      %c0_13 = arith.constant 0 : index
      %13 = vector.load %arg5[%c0_12, %c0_13] : memref<1x128xf32, #tpu.memory_space<vmem>>, vector<1x128xf32>
      %14 = vector.broadcast %13 : vector<1x128xf32> to vector<512x128xf32>
      %15 = arith.addf %12, %14 : vector<512x128xf32>
      %16 = math.tanh %15 : vector<512x128xf32>
      %c0_14 = arith.constant 0 : index
      %c0_15 = arith.constant 0 : index
      %17 = vector.load %arg6[%c0_14, %c0_15] : memref<512x128xf32, #tpu.memory_space<vmem>>, vector<512x128xf32>
      tpu.vector_store %arg6[%c0_14, %c0_15], %16 {strides = array<i32>} : memref<512x128xf32, #tpu.memory_space<vmem>>, vector<512x128xf32>,
    } else {
    }
    return
  }
  func.func @transform_0(%arg0: i32, %arg1: i32, %arg2: i32) -> (i32, i32) {
    %c0_i32 = arith.constant 0 : i32
    return %arg0, %arg2 : i32, i32
  }
  func.func @transform_1(%arg0: i32, %arg1: i32, %arg2: i32) -> (i32, i32) {
    %c0_i32 = arith.constant 0 : i32
    return %arg2, %arg1 : i32, i32
  }
  func.func @transform_2(%arg0: i32, %arg1: i32, %arg2: i32) -> (i32, i32) {
    %c0_i32 = arith.constant 0 : i32
    %c0_i32_0 = arith.constant 0 : i32
    return %c0_i32, %arg1 : i32, i32
  }
  func.func @transform_3(%arg0: i32, %arg1: i32, %arg2: i32) -> (i32, i32) {
    %c0_i32 = arith.constant 0 : i32
    return %arg0, %arg1 : i32, i32
  }
}

</mosaic_0001>

<llo_original>
// kernel: tile.109
$region0: #{tile.109}
  #allocation0 [shape = 's32[1]{0}', space=sflag, size = 0x4, scoped, tag = 'scoped memory for tile.109']
  %s0 = inlined_call_operand.vmem [shape: f32[8], index: 0, kind: input, shape index: {}]
  %s1 = inlined_call_operand.vmem [shape: f32[16,8], index: 1, kind: output, shape index: {}]
  // Predicated region
  $region2: #{tile.109} parent=0 // pred_check
    _
  $region3: #{tile.109} parent=0 // pred_check_branch
    %3 = sbr.rel (0) target = $region5
  $region4: #{tile.109} parent=0 // pred_region
    _
  $region5: #{tile.109} parent=0 // pred_fallthru
    _
  %v4 = vld [vmem:[%s0] ss:$0 sm:$0xff]
  %5 = vst [vmem:[%s1] sm:$0xff] %v4
  %s6 = scalar_lea.vmem %s1, 8
  %7 = vst [vmem:[%s6] sm:$0xff] %v4

// kernel: tile.110
$region0: #{tile.110}
  %s0 = inlined_call_operand.vmem [shape: f32[16,8], index: 0, kind: input, shape index: {}]
  %s1 = inlined_call_operand.vmem [shape: f32[1,128], index: 1, kind: output, shape index: {}]
  $region1: #{tile.110} parent=0
    #allocation0 [shape = 'u8[4096]{0}', space=vmem, size = 0x1000, scoped, tag = 'scoped mem for output reshape']
    %v2 = vld [vmem:[%s0] sm:$0x1]
    %vm3 = vcmask 64512
    %4 = vst.msk [vmem:[#allocation0] sm:$0x1] %vm3, %v2
    %s5 = scalar_lea.vmem %s0, 15
    %v6 = vld [vmem:[%s5] sm:$0x1]
    %7 = vrot.lane.b32.xlu0 %v6, 120
    %v8 = vpop.permute.xlu0 %7
    %vm9 = vcmask 1048512
    %10 = vst.msk [vmem:[#allocation0] sm:$0x1] %vm9, %v8
    %s11 = scalar_lea.vmem %s0, 14
    %v12 = vld [vmem:[%s11] sm:$0x1]
    %13 = vrot.lane.b32.xlu0 %v12, 112
    %v14 = vpop.permute.xlu0 %13
    %vm15 = vcmask 982912
    %16 = vst.msk [vmem:[#allocation0] sm:$0x1] %vm15, %v14
    %s17 = scalar_lea.vmem %s0, 13
    %v18 = vld [vmem:[%s17] sm:$0x1]
    %19 = vrot.lane.b32.xlu0 %v18, 104
    %v20 = vpop.permute.xlu0 %19
    %vm21 = vcmask 917312
    %22 = vst.msk [vmem:[#allocation0] sm:$0x1] %vm21, %v20
    %s23 = scalar_lea.vmem %s0, 12
    %v24 = vld [vmem:[%s23] sm:$0x1]
    %25 = vrot.lane.b32.xlu0 %v24, 96
    %v26 = vpop.permute.xlu0 %25
    %vm27 = vcmask 851712
    %28 = vst.msk [vmem:[#allocation0] sm:$0x1] %vm27, %v26
    %s29 = scalar_lea.vmem %s0, 11
    %v30 = vld [vmem:[%s29] sm:$0x1]
    %31 = vrot.lane.b32.xlu0 %v30, 88
    %v32 = vpop.permute.xlu0 %31
    %vm33 = vcmask 786112
    %34 = vst.msk [vmem:[#allocation0] sm:$0x1] %vm33, %v32
    %s35 = scalar_lea.vmem %s0, 10
    %v36 = vld [vmem:[%s35] sm:$0x1]
    %37 = vrot.lane.b32.xlu0 %v36, 80
    %v38 = vpop.permute.xlu0 %37
    %vm39 = vcmask 720512
    %40 = vst.msk [vmem:[#allocation0] sm:$0x1] %vm39, %v38
    %s41 = scalar_lea.vmem %s0, 9
    %v42 = vld [vmem:[%s41] sm:$0x1]
    %43 = vrot.lane.b32.xlu0 %v42, 72
    %v44 = vpop.permute.xlu0 %43
    %vm45 = vcmask 654912
    %46 = vst.msk [vmem:[#allocation0] sm:$0x1] %vm45, %v44
    %s47 = scalar_lea.vmem %s0, 8
    %v48 = vld [vmem:[%s47] sm:$0x1]
    %49 = vrot.lane.b32.xlu0 %v48, 64
    %v50 = vpop.permute.xlu0 %49
    %vm51 = vcmask 589312
    %52 = vst.msk [vmem:[#allocation0] sm:$0x1] %vm51, %v50
    %s53 = scalar_lea.vmem %s0, 7
    %v54 = vld [vmem:[%s53] sm:$0x1]
    %55 = vrot.lane.b32.xlu0 %v54, 56
    %v56 = vpop.permute.xlu0 %55
    %vm57 = vcmask 523712
    %58 = vst.msk [vmem:[#allocation0] sm:$0x1] %vm57, %v56
    %s59 = scalar_lea.vmem %s0, 6
    %v60 = vld [vmem:[%s59] sm:$0x1]
    %61 = vrot.lane.b32.xlu0 %v60, 48
    %v62 = vpop.permute.xlu0 %61
    %vm63 = vcmask 458112
    %64 = vst.msk [vmem:[#allocation0] sm:$0x1] %vm63, %v62
    %s65 = scalar_lea.vmem %s0, 5
    %v66 = vld [vmem:[%s65] sm:$0x1]
    %67 = vrot.lane.b32.xlu0 %v66, 40
    %v68 = vpop.permute.xlu0 %67
    %vm69 = vcmask 392512
    %70 = vst.msk [vmem:[#allocation0] sm:$0x1] %vm69, %v68
    %s71 = scalar_lea.vmem %s0, 4
    %v72 = vld [vmem:[%s71] sm:$0x1]
    %73 = vrot.lane.b32.xlu0 %v72, 32
    %v74 = vpop.permute.xlu0 %73
    %vm75 = vcmask 326912
    %76 = vst.msk [vmem:[#allocation0] sm:$0x1] %vm75, %v74
    %s77 = scalar_lea.vmem %s0, 3
    %v78 = vld [vmem:[%s77] sm:$0x1]
    %79 = vrot.lane.b32.xlu0 %v78, 24
    %v80 = vpop.permute.xlu0 %79
    %vm81 = vcmask 261312
    %82 = vst.msk [vmem:[#allocation0] sm:$0x1] %vm81, %v80
    %s83 = scalar_lea.vmem %s0, 2
    %v84 = vld [vmem:[%s83] sm:$0x1]
    %85 = vrot.lane.b32.xlu0 %v84, 16
    %v86 = vpop.permute.xlu0 %85
    %vm87 = vcmask 195712
    %88 = vst.msk [vmem:[#allocation0] sm:$0x1] %vm87, %v86
    %s89 = scalar_lea.vmem %s0, 1
    %v90 = vld [vmem:[%s89] sm:$0x1]
    %91 = vrot.lane.b32.xlu0 %v90, 8
    %v92 = vpop.permute.xlu0 %91
    %vm93 = vcmask 130112
    %94 = vst.msk [vmem:[#allocation0] sm:$0x1] %vm93, %v92
    %s96 = sshll.u32 1, 1
    %s97 = ssub.s32 %s96, 1
    %v99 = vld [vmem:[#allocation0] sm:%s97]
    %s100 = sshll.u32 1, 1
    %s101 = ssub.s32 %s100, 1
    %102 = vst [vmem:[%s1] sm:%s101] %v99

// kernel: global_generator_forward.20
$region0: #{global_generator_forward.20}
  #allocation0 [shape = 'u32[]', space=smem, size = 0x4, offset = 0x4, fixed_abs, tag = 'smem constant byte address 0x4 - core index']
  #allocation1 [shape = 'u32[144,128]{1,0:T(1,128)}', space=vmem, size = 0x12000, scoped, tag = 'internal scratch']
  %s0 = inlined_call_operand.vmem [shape: bf16[32,128], index: 0, kind: input, shape index: {}]
  %s1 = inlined_call_operand.vmem [shape: f32[1,128], index: 1, kind: input, shape index: {}]
  %s2 = inlined_call_operand.vmem [shape: f32[1,128], index: 2, kind: input, shape index: {}]
  %s3 = inlined_call_operand.vmem [shape: bf16[32,128], index: 3, kind: output, shape index: {}]
  %s4 = sld [smem:[#allocation0]]
  $region22: #{global_generator_forward.20} parent=0
    _
  %s6 = ssub.s32 1, %s4
  %s7 = scalar_select 0, %s6, %s4
  // Predicated region
  $region2: #{global_generator_forward.20} parent=0 // pred_check
    _
  $region3: #{global_generator_forward.20} parent=0 // pred_check_branch
    %9 = sbr.rel (0) target = $region5
  $region4: #{global_generator_forward.20} parent=0 // pred_region
    _
  $region5: #{global_generator_forward.20} parent=0 // pred_fallthru
    _
  // Predicated region
  $region6: #{global_generator_forward.20} parent=0 // pred_check
    _
  $region7: #{global_generator_forward.20} parent=0 // pred_check_branch
    %11 = sbr.rel (0) target = $region9
  $region8: #{global_generator_forward.20} parent=0 // pred_region
    _
  $region9: #{global_generator_forward.20} parent=0 // pred_fallthru
    _
  // Predicated region
  $region10: #{global_generator_forward.20} parent=0 // pred_check
    _
  $region11: #{global_generator_forward.20} parent=0 // pred_check_branch
    %13 = sbr.rel (0) target = $region13
  $region12: #{global_generator_forward.20} parent=0 // pred_region
    _
  $region13: #{global_generator_forward.20} parent=0 // pred_fallthru
    _
  %v14 = vld [vmem:[%s0] sm:$0xf]
  %v15 = vld [vmem:[%s0 + $0x4] sm:$0xf]
  %v16 = vld [vmem:[%s0 + $0x8] sm:$0xf]
  %v17 = vld [vmem:[%s0 + $0xc] sm:$0xf]
  %v18 = vunpack.c.l.bf16 %v14
  %v19 = vunpack.c.l.bf16 %v15
  %v20 = vunpack.c.l.bf16 %v16
  %v21 = vunpack.c.l.bf16 %v17
  %v22 = vld [vmem:[%s1] sm:$0x1]
  %v24 = vlaneseq
  %v25 = vshrl.u32 %v24, 7
  %v26 = vsub.s32 0, %v25
  %v27 = vrot.slane %v22, %v26
  %v29 = vmul.f32 %v18, %v27
  %v30 = vmul.f32 %v19, %v27
  %v31 = vmul.f32 %v20, %v27
  %v32 = vmul.f32 %v21, %v27
  %v33 = vld [vmem:[%s2] sm:$0x1]
  %v35 = vlaneseq
  %v36 = vshrl.u32 %v35, 7
  %v37 = vsub.s32 0, %v36
  %v38 = vrot.slane %v33, %v37
  %v40 = vadd.f32 %v29, %v38
  %v41 = vadd.f32 %v30, %v38
  %v42 = vadd.f32 %v31, %v38
  %v43 = vadd.f32 %v32, %v38
  %v44 = vmax.f32 %v40, 0.0
  %v45 = vmax.f32 %v41, 0.0
  %v46 = vmax.f32 %v42, 0.0
  %v47 = vmax.f32 %v43, 0.0
  %v48 = vpack.c.bf16 %v45, %v44
  %v49 = vpack.c.bf16 %v47, %v46
  %v52 = vunpack.c.l.b16 %v48
  %v53 = vunpack.c.h.b16 %v48
  %v54 = vunpack.c.l.b16 %v49
  %v55 = vunpack.c.h.b16 %v49
  %v56 = vpack.c.b16 %v52, %v52
  %v57 = vpack.c.b16 %v53, %v53
  %v58 = vpack.c.b16 %v54, %v54
  %v59 = vpack.c.b16 %v55, %v55
  %64 = vst [vmem:[%s3] sm:$0xf] %v56
  %65 = vst [vmem:[%s3 + $0x4] sm:$0xf] %v57
  %66 = vst [vmem:[%s3 + $0x8] sm:$0xf] %v58
  %67 = vst [vmem:[%s3 + $0xc] sm:$0xf] %v59
  // Predicated region
  $region14: #{global_generator_forward.20} parent=0 // pred_check
    _
  $region15: #{global_generator_forward.20} parent=0 // pred_check_branch
    %69 = sbr.rel (0) target = $region17
  $region16: #{global_generator_forward.20} parent=0 // pred_region
    _
  $region17: #{global_generator_forward.20} parent=0 // pred_fallthru
    _
  // Predicated region
  $region18: #{global_generator_forward.20} parent=0 // pred_check
    _
  $region19: #{global_generator_forward.20} parent=0 // pred_check_branch
    %71 = sbr.rel (0) target = $region21
  $region20: #{global_generator_forward.20} parent=0 // pred_region
    _
  $region21: #{global_generator_forward.20} parent=0 // pred_fallthru
    _

// kernel: global_generator_forward.19
$region0: #{global_generator_forward.19}
  #allocation0 [shape = 'u32[]', space=smem, size = 0x4, offset = 0x4, fixed_abs, tag = 'smem constant byte address 0x4 - core index']
  #allocation1 [shape = 'u32[144,128]{1,0:T(1,128)}', space=vmem, size = 0x12000, scoped, tag = 'internal scratch']
  #allocation2 [shape = 'f32[512,128]{1,0:T(8,128)}', space=vmem, size = 0x40000, scoped, tag = 'scratch operand']
  %s0 = inlined_call_operand.vmem [shape: bf16[512,256], index: 0, kind: input, shape index: {}]
  %s1 = inlined_call_operand.vmem [shape: bf16[256,128], index: 1, kind: input, shape index: {}]
  %s2 = inlined_call_operand.vmem [shape: bf16[512,128], index: 2, kind: output, shape index: {0}]
  %s3 = inlined_call_operand.vmem [shape: f32[8,128], index: 3, kind: output, shape index: {1}]
  %s4 = inlined_call_operand.vmem [shape: f32[8,128], index: 4, kind: output, shape index: {2}]
  %5 = xla_tuple %s2, %s3, %s4
  %s6 = sld [smem:[#allocation0]]
  $region42: #{global_generator_forward.19} parent=0
    _
  %s8 = ssub.s32 1, %s6
  %s9 = scalar_select 0, %s8, %s6
  // Predicated region
  $region2: #{global_generator_forward.19} parent=0 // pred_check
    _
  $region3: #{global_generator_forward.19} parent=0 // pred_check_branch
    %11 = sbr.rel (0) target = $region5
  $region4: #{global_generator_forward.19} parent=0 // pred_region
    _
  $region5: #{global_generator_forward.19} parent=0 // pred_fallthru
    _
  // Predicated region
  $region6: #{global_generator_forward.19} parent=0 // pred_check
    _
  $region7: #{global_generator_forward.19} parent=0 // pred_check_branch
    %13 = sbr.rel (0) target = $region9
  $region8: #{global_generator_forward.19} parent=0 // pred_region
    _
  $region9: #{global_generator_forward.19} parent=0 // pred_fallthru
    _
  %p15 = scmp.eq.s32.totalorder 0, 0
  // Predicated region
  $region10: #{global_generator_forward.19} parent=0 // pred_check
    %p16 = pneg %p15
  $region11: #{global_generator_forward.19} parent=0 // pred_check_branch
    %18 = sbr.rel (%p16) target = $region13
  $region12: #{global_generator_forward.19} parent=0 // pred_region
    %19 = vst [vmem:[#allocation2] sm:$0xff] 0.0
    %20 = vst [vmem:[#allocation2 + $0x8] sm:$0xff] 0.0
    %21 = vst [vmem:[#allocation2 + $0x10] sm:$0xff] 0.0
    %22 = vst [vmem:[#allocation2 + $0x18] sm:$0xff] 0.0
    %23 = vst [vmem:[#allocation2 + $0x20] sm:$0xff] 0.0
    %24 = vst [vmem:[#allocation2 + $0x28] sm:$0xff] 0.0
    %25 = vst [vmem:[#allocation2 + $0x30] sm:$0xff] 0.0
    %26 = vst [vmem:[#allocation2 + $0x38] sm:$0xff] 0.0
    %27 = vst [vmem:[#allocation2 + $0x40] sm:$0xff] 0.0
    %28 = vst [vmem:[#allocation2 + $0x48] sm:$0xff] 0.0
    %29 = vst [vmem:[#allocation2 + $0x50] sm:$0xff] 0.0
    %30 = vst [vmem:[#allocation2 + $0x58] sm:$0xff] 0.0
    %31 = vst [vmem:[#allocation2 + $0x60] sm:$0xff] 0.0
    %32 = vst [vmem:[#allocation2 + $0x68] sm:$0xff] 0.0
    %33 = vst [vmem:[#allocation2 + $0x70] sm:$0xff] 0.0
    %34 = vst [vmem:[#allocation2 + $0x78] sm:$0xff] 0.0
    %35 = vst [vmem:[#allocation2 + $0x80] sm:$0xff] 0.0
    %36 = vst [vmem:[#allocation2 + $0x88] sm:$0xff] 0.0
    %37 = vst [vmem:[#allocation2 + $0x90] sm:$0xff] 0.0
    %38 = vst [vmem:[#allocation2 + $0x98] sm:$0xff] 0.0
    %39 = vst [vmem:[#allocation2 + $0xa0] sm:$0xff] 0.0
    %40 = vst [vmem:[#allocation2 + $0xa8] sm:$0xff] 0.0
    %41 = vst [vmem:[#allocation2 + $0xb0] sm:$0xff] 0.0
    %42 = vst [vmem:[#allocation2 + $0xb8] sm:$0xff] 0.0
    %43 = vst [vmem:[#allocation2 + $0xc0] sm:$0xff] 0.0
    %44 = vst [vmem:[#allocation2 + $0xc8] sm:$0xff] 0.0
    %45 = vst [vmem:[#allocation2 + $0xd0] sm:$0xff] 0.0
    %46 = vst [vmem:[#allocation2 + $0xd8] sm:$0xff] 0.0
    %47 = vst [vmem:[#allocation2 + $0xe0] sm:$0xff] 0.0
    %48 = vst [vmem:[#allocation2 + $0xe8] sm:$0xff] 0.0
    %49 = vst [vmem:[#allocation2 + $0xf0] sm:$0xff] 0.0
    %50 = vst [vmem:[#allocation2 + $0xf8] sm:$0xff] 0.0
    %51 = vst [vmem:[#allocation2 + $0x100] sm:$0xff] 0.0
    %52 = vst [vmem:[#allocation2 + $0x108] sm:$0xff] 0.0
    %53 = vst [vmem:[#allocation2 + $0x110] sm:$0xff] 0.0
    %54 = vst [vmem:[#allocation2 + $0x118] sm:$0xff] 0.0
    %55 = vst [vmem:[#allocation2 + $0x120] sm:$0xff] 0.0
    %56 = vst [vmem:[#allocation2 + $0x128] sm:$0xff] 0.0
    %57 = vst [vmem:[#allocation2 + $0x130] sm:$0xff] 0.0
    %58 = vst [vmem:[#allocation2 + $0x138] sm:$0xff] 0.0
    %59 = vst [vmem:[#allocation2 + $0x140] sm:$0xff] 0.0
    %60 = vst [vmem:[#allocation2 + $0x148] sm:$0xff] 0.0
    %61 = vst [vmem:[#allocation2 + $0x150] sm:$0xff] 0.0
    %62 = vst [vmem:[#allocation2 + $0x158] sm:$0xff] 0.0
    %63 = vst [vmem:[#allocation2 + $0x160] sm:$0xff] 0.0
    %64 = vst [vmem:[#allocation2 + $0x168] sm:$0xff] 0.0
    %65 = vst [vmem:[#allocation2 + $0x170] sm:$0xff] 0.0
    %66 = vst [vmem:[#allocation2 + $0x178] sm:$0xff] 0.0
    %67 = vst [vmem:[#allocation2 + $0x180] sm:$0xff] 0.0
    %68 = vst [vmem:[#allocation2 + $0x188] sm:$0xff] 0.0
    %69 = vst [vmem:[#allocation2 + $0x190] sm:$0xff] 0.0
    %70 = vst [vmem:[#allocation2 + $0x198] sm:$0xff] 0.0
    %71 = vst [vmem:[#allocation2 + $0x1a0] sm:$0xff] 0.0
    %72 = vst [vmem:[#allocation2 + $0x1a8] sm:$0xff] 0.0
    %73 = vst [vmem:[#allocation2 + $0x1b0] sm:$0xff] 0.0
    %74 = vst [vmem:[#allocation2 + $0x1b8] sm:$0xff] 0.0
    %75 = vst [vmem:[#allocation2 + $0x1c0] sm:$0xff] 0.0
    %76 = vst [vmem:[#allocation2 + $0x1c8] sm:$0xff] 0.0
    %77 = vst [vmem:[#allocation2 + $0x1d0] sm:$0xff] 0.0
    %78 = vst [vmem:[#allocation2 + $0x1d8] sm:$0xff] 0.0
    %79 = vst [vmem:[#allocation2 + $0x1e0] sm:$0xff] 0.0
    %80 = vst [vmem:[#allocation2 + $0x1e8] sm:$0xff] 0.0
    %81 = vst [vmem:[#allocation2 + $0x1f0] sm:$0xff] 0.0
    %82 = vst [vmem:[#allocation2 + $0x1f8] sm:$0xff] 0.0
  $region13: #{global_generator_forward.19} parent=0 // pred_fallthru
    _
  %v83 = vld [vmem:[#allocation2] sm:$0xff]
  %v84 = vld [vmem:[#allocation2 + $0x8] sm:$0xff]
  %v85 = vld [vmem:[#allocation2 + $0x10] sm:$0xff]
  %v86 = vld [vmem:[#allocation2 + $0x18] sm:$0xff]
  %v87 = vld [vmem:[#allocation2 + $0x20] sm:$0xff]
  %v88 = vld [vmem:[#allocation2 + $0x28] sm:$0xff]
  %v89 = vld [vmem:[#allocation2 + $0x30] sm:$0xff]
  %v90 = vld [vmem:[#allocation2 + $0x38] sm:$0xff]
  %v91 = vld [vmem:[#allocation2 + $0x40] sm:$0xff]
  %v92 = vld [vmem:[#allocation2 + $0x48] sm:$0xff]
  %v93 = vld [vmem:[#allocation2 + $0x50] sm:$0xff]
  %v94 = vld [vmem:[#allocation2 + $0x58] sm:$0xff]
  %v95 = vld [vmem:[#allocation2 + $0x60] sm:$0xff]
  %v96 = vld [vmem:[#allocation2 + $0x68] sm:$0xff]
  %v97 = vld [vmem:[#allocation2 + $0x70] sm:$0xff]
  %v98 = vld [vmem:[#allocation2 + $0x78] sm:$0xff]
  %v99 = vld [vmem:[#allocation2 + $0x80] sm:$0xff]
  %v100 = vld [vmem:[#allocation2 + $0x88] sm:$0xff]
  %v101 = vld [vmem:[#allocation2 + $0x90] sm:$0xff]
  %v102 = vld [vmem:[#allocation2 + $0x98] sm:$0xff]
  %v103 = vld [vmem:[#allocation2 + $0xa0] sm:$0xff]
  %v104 = vld [vmem:[#allocation2 + $0xa8] sm:$0xff]
  %v105 = vld [vmem:[#allocation2 + $0xb0] sm:$0xff]
  %v106 = vld [vmem:[#allocation2 + $0xb8] sm:$0xff]
  %v107 = vld [vmem:[#allocation2 + $0xc0] sm:$0xff]
  %v108 = vld [vmem:[#allocation2 + $0xc8] sm:$0xff]
  %v109 = vld [vmem:[#allocation2 + $0xd0] sm:$0xff]
  %v110 = vld [vmem:[#allocation2 + $0xd8] sm:$0xff]
  %v111 = vld [vmem:[#allocation2 + $0xe0] sm:$0xff]
  %v112 = vld [vmem:[#allocation2 + $0xe8] sm:$0xff]
  %v113 = vld [vmem:[#allocation2 + $0xf0] sm:$0xff]
  %v114 = vld [vmem:[#allocation2 + $0xf8] sm:$0xff]
  %v115 = vld [vmem:[#allocation2 + $0x100] sm:$0xff]
  %v116 = vld [vmem:[#allocation2 + $0x108] sm:$0xff]
  %v117 = vld [vmem:[#allocation2 + $0x110] sm:$0xff]
  %v118 = vld [vmem:[#allocation2 + $0x118] sm:$0xff]
  %v119 = vld [vmem:[#allocation2 + $0x120] sm:$0xff]
  %v120 = vld [vmem:[#allocation2 + $0x128] sm:$0xff]
  %v121 = vld [vmem:[#allocation2 + $0x130] sm:$0xff]
  %v122 = vld [vmem:[#allocation2 + $0x138] sm:$0xff]
  %v123 = vld [vmem:[#allocation2 + $0x140] sm:$0xff]
  %v124 = vld [vmem:[#allocation2 + $0x148] sm:$0xff]
  %v125 = vld [vmem:[#allocation2 + $0x150] sm:$0xff]
  %v126 = vld [vmem:[#allocation2 + $0x158] sm:$0xff]
  %v127 = vld [vmem:[#allocation2 + $0x160] sm:$0xff]
  %v128 = vld [vmem:[#allocation2 + $0x168] sm:$0xff]
  %v129 = vld [vmem:[#allocation2 + $0x170] sm:$0xff]
  %v130 = vld [vmem:[#allocation2 + $0x178] sm:$0xff]
  %v131 = vld [vmem:[#allocation2 + $0x180] sm:$0xff]
  %v132 = vld [vmem:[#allocation2 + $0x188] sm:$0xff]
  %v133 = vld [vmem:[#allocation2 + $0x190] sm:$0xff]
  %v134 = vld [vmem:[#allocation2 + $0x198] sm:$0xff]
  %v135 = vld [vmem:[#allocation2 + $0x1a0] sm:$0xff]
  %v136 = vld [vmem:[#allocation2 + $0x1a8] sm:$0xff]
  %v137 = vld [vmem:[#allocation2 + $0x1b0] sm:$0xff]
  %v138 = vld [vmem:[#allocation2 + $0x1b8] sm:$0xff]
  %v139 = vld [vmem:[#allocation2 + $0x1c0] sm:$0xff]
  %v140 = vld [vmem:[#allocation2 + $0x1c8] sm:$0xff]
  %v141 = vld [vmem:[#allocation2 + $0x1d0] sm:$0xff]
  %v142 = vld [vmem:[#allocation2 + $0x1d8] sm:$0xff]
  %v143 = vld [vmem:[#allocation2 + $0x1e0] sm:$0xff]
  %v144 = vld [vmem:[#allocation2 + $0x1e8] sm:$0xff]
  %v145 = vld [vmem:[#allocation2 + $0x1f0] sm:$0xff]
  %v146 = vld [vmem:[#allocation2 + $0x1f8] sm:$0xff]
  %v147 = vld [vmem:[%s0] sm:$0xff]
  %v148 = vld [vmem:[%s0 + $0x8] sm:$0xff]
  %v149 = vld [vmem:[%s0 + $0x10] sm:$0xff]
  %v150 = vld [vmem:[%s0 + $0x18] sm:$0xff]
  %v151 = vld [vmem:[%s0 + $0x20] sm:$0xff]
  %v152 = vld [vmem:[%s0 + $0x28] sm:$0xff]
  %v153 = vld [vmem:[%s0 + $0x30] sm:$0xff]
  %v154 = vld [vmem:[%s0 + $0x38] sm:$0xff]
  %v155 = vld [vmem:[%s0 + $0x40] sm:$0xff]
  %v156 = vld [vmem:[%s0 + $0x48] sm:$0xff]
  %v157 = vld [vmem:[%s0 + $0x50] sm:$0xff]
  %v158 = vld [vmem:[%s0 + $0x58] sm:$0xff]
  %v159 = vld [vmem:[%s0 + $0x60] sm:$0xff]
  %v160 = vld [vmem:[%s0 + $0x68] sm:$0xff]
  %v161 = vld [vmem:[%s0 + $0x70] sm:$0xff]
  %v162 = vld [vmem:[%s0 + $0x78] sm:$0xff]
  %v163 = vld [vmem:[%s0 + $0x80] sm:$0xff]
  %v164 = vld [vmem:[%s0 + $0x88] sm:$0xff]
  %v165 = vld [vmem:[%s0 + $0x90] sm:$0xff]
  %v166 = vld [vmem:[%s0 + $0x98] sm:$0xff]
  %v167 = vld [vmem:[%s0 + $0xa0] sm:$0xff]
  %v168 = vld [vmem:[%s0 + $0xa8] sm:$0xff]
  %v169 = vld [vmem:[%s0 + $0xb0] sm:$0xff]
  %v170 = vld [vmem:[%s0 + $0xb8] sm:$0xff]
  %v171 = vld [vmem:[%s0 + $0xc0] sm:$0xff]
  %v172 = vld [vmem:[%s0 + $0xc8] sm:$0xff]
  %v173 = vld [vmem:[%s0 + $0xd0] sm:$0xff]
  %v174 = vld [vmem:[%s0 + $0xd8] sm:$0xff]
  %v175 = vld [vmem:[%s0 + $0xe0] sm:$0xff]
  %v176 = vld [vmem:[%s0 + $0xe8] sm:$0xff]
  %v177 = vld [vmem:[%s0 + $0xf0] sm:$0xff]
  %v178 = vld [vmem:[%s0 + $0xf8] sm:$0xff]
  %v179 = vld [vmem:[%s0 + $0x100] sm:$0xff]
  %v180 = vld [vmem:[%s0 + $0x108] sm:$0xff]
  %v181 = vld [vmem:[%s0 + $0x110] sm:$0xff]
  %v182 = vld [vmem:[%s0 + $0x118] sm:$0xff]
  %v183 = vld [vmem:[%s0 + $0x120] sm:$0xff]
  %v184 = vld [vmem:[%s0 + $0x128] sm:$0xff]
  %v185 = vld [vmem:[%s0 + $0x130] sm:$0xff]
  %v186 = vld [vmem:[%s0 + $0x138] sm:$0xff]
  %v187 = vld [vmem:[%s0 + $0x140] sm:$0xff]
  %v188 = vld [vmem:[%s0 + $0x148] sm:$0xff]
  %v189 = vld [vmem:[%s0 + $0x150] sm:$0xff]
  %v190 = vld [vmem:[%s0 + $0x158] sm:$0xff]
  %v191 = vld [vmem:[%s0 + $0x160] sm:$0xff]
  %v192 = vld [vmem:[%s0 + $0x168] sm:$0xff]
  %v193 = vld [vmem:[%s0 + $0x170] sm:$0xff]
  %v194 = vld [vmem:[%s0 + $0x178] sm:$0xff]
  %v195 = vld [vmem:[%s0 + $0x180] sm:$0xff]
  %v196 = vld [vmem:[%s0 + $0x188] sm:$0xff]
  %v197 = vld [vmem:[%s0 + $0x190] sm:$0xff]
  %v198 = vld [vmem:[%s0 + $0x198] sm:$0xff]
  %v199 = vld [vmem:[%s0 + $0x1a0] sm:$0xff]
  %v200 = vld [vmem:[%s0 + $0x1a8] sm:$0xff]
  %v201 = vld [vmem:[%s0 + $0x1b0] sm:$0xff]
  %v202 = vld [vmem:[%s0 + $0x1b8] sm:$0xff]
  %v203 = vld [vmem:[%s0 + $0x1c0] sm:$0xff]
  %v204 = vld [vmem:[%s0 + $0x1c8] sm:$0xff]
  %v205 = vld [vmem:[%s0 + $0x1d0] sm:$0xff]
  %v206 = vld [vmem:[%s0 + $0x1d8] sm:$0xff]
  %v207 = vld [vmem:[%s0 + $0x1e0] sm:$0xff]
  %v208 = vld [vmem:[%s0 + $0x1e8] sm:$0xff]
  %v209 = vld [vmem:[%s0 + $0x1f0] sm:$0xff]
  %v210 = vld [vmem:[%s0 + $0x1f8] sm:$0xff]
  %v211 = vld [vmem:[%s1] sm:$0xf]
  %v212 = vld [vmem:[%s1 + $0x4] sm:$0xf]
  %v213 = vld [vmem:[%s1 + $0x8] sm:$0xf]
  %v214 = vld [vmem:[%s1 + $0xc] sm:$0xf]
  %v215 = vld [vmem:[%s1 + $0x10] sm:$0xf]
  %v216 = vld [vmem:[%s1 + $0x14] sm:$0xf]
  %v217 = vld [vmem:[%s1 + $0x18] sm:$0xf]
  %v218 = vld [vmem:[%s1 + $0x1c] sm:$0xf]
  %v219 = vld [vmem:[%s1 + $0x20] sm:$0xf]
  %v220 = vld [vmem:[%s1 + $0x24] sm:$0xf]
  %v221 = vld [vmem:[%s1 + $0x28] sm:$0xf]
  %v222 = vld [vmem:[%s1 + $0x2c] sm:$0xf]
  %v223 = vld [vmem:[%s1 + $0x30] sm:$0xf]
  %v224 = vld [vmem:[%s1 + $0x34] sm:$0xf]
  %v225 = vld [vmem:[%s1 + $0x38] sm:$0xf]
  %v226 = vld [vmem:[%s1 + $0x3c] sm:$0xf]
  %v227 = vld [vmem:[%s1 + $0x40] sm:$0xf]
  %v228 = vld [vmem:[%s1 + $0x44] sm:$0xf]
  %v229 = vld [vmem:[%s1 + $0x48] sm:$0xf]
  %v230 = vld [vmem:[%s1 + $0x4c] sm:$0xf]
  %v231 = vld [vmem:[%s1 + $0x50] sm:$0xf]
  %v232 = vld [vmem:[%s1 + $0x54] sm:$0xf]
  %v233 = vld [vmem:[%s1 + $0x58] sm:$0xf]
  %v234 = vld [vmem:[%s1 + $0x5c] sm:$0xf]
  %v235 = vld [vmem:[%s1 + $0x60] sm:$0xf]
  %v236 = vld [vmem:[%s1 + $0x64] sm:$0xf]
  %v237 = vld [vmem:[%s1 + $0x68] sm:$0xf]
  %v238 = vld [vmem:[%s1 + $0x6c] sm:$0xf]
  %v239 = vld [vmem:[%s1 + $0x70] sm:$0xf]
  %v240 = vld [vmem:[%s1 + $0x74] sm:$0xf]
  %v241 = vld [vmem:[%s1 + $0x78] sm:$0xf]
  %v242 = vld [vmem:[%s1 + $0x7c] sm:$0xf]
  %v307 = vunpack.c.l.b16 %v147
  %v308 = vunpack.c.h.b16 %v147
  %v309 = vunpack.c.l.b16 %v148
  %v310 = vunpack.c.h.b16 %v148
  %v311 = vunpack.c.l.b16 %v149
  %v312 = vunpack.c.h.b16 %v149
  %v313 = vunpack.c.l.b16 %v150
  %v314 = vunpack.c.h.b16 %v150
  %v315 = vunpack.c.l.b16 %v151
  %v316 = vunpack.c.h.b16 %v151
  %v317 = vunpack.c.l.b16 %v152
  %v318 = vunpack.c.h.b16 %v152
  %v319 = vunpack.c.l.b16 %v153
  %v320 = vunpack.c.h.b16 %v153
  %v321 = vunpack.c.l.b16 %v154
  %v322 = vunpack.c.h.b16 %v154
  %v323 = vunpack.c.l.b16 %v155
  %v324 = vunpack.c.h.b16 %v155
  %v325 = vunpack.c.l.b16 %v156
  %v326 = vunpack.c.h.b16 %v156
  %v327 = vunpack.c.l.b16 %v157
  %v328 = vunpack.c.h.b16 %v157
  %v329 = vunpack.c.l.b16 %v158
  %v330 = vunpack.c.h.b16 %v158
  %v331 = vunpack.c.l.b16 %v159
  %v332 = vunpack.c.h.b16 %v159
  %v333 = vunpack.c.l.b16 %v160
  %v334 = vunpack.c.h.b16 %v160
  %v335 = vunpack.c.l.b16 %v161
  %v336 = vunpack.c.h.b16 %v161
  %v337 = vunpack.c.l.b16 %v162
  %v338 = vunpack.c.h.b16 %v162
  %v339 = vunpack.c.l.b16 %v163
  %v340 = vunpack.c.h.b16 %v163
  %v341 = vunpack.c.l.b16 %v164
  %v342 = vunpack.c.h.b16 %v164
  %v343 = vunpack.c.l.b16 %v165
  %v344 = vunpack.c.h.b16 %v165
  %v345 = vunpack.c.l.b16 %v166
  %v346 = vunpack.c.h.b16 %v166
  %v347 = vunpack.c.l.b16 %v167
  %v348 = vunpack.c.h.b16 %v167
  %v349 = vunpack.c.l.b16 %v168
  %v350 = vunpack.c.h.b16 %v168
  %v351 = vunpack.c.l.b16 %v169
  %v352 = vunpack.c.h.b16 %v169
  %v353 = vunpack.c.l.b16 %v170
  %v354 = vunpack.c.h.b16 %v170
  %v355 = vunpack.c.l.b16 %v171
  %v356 = vunpack.c.h.b16 %v171
  %v357 = vunpack.c.l.b16 %v172
  %v358 = vunpack.c.h.b16 %v172
  %v359 = vunpack.c.l.b16 %v173
  %v360 = vunpack.c.h.b16 %v173
  %v361 = vunpack.c.l.b16 %v174
  %v362 = vunpack.c.h.b16 %v174
  %v363 = vunpack.c.l.b16 %v175
  %v364 = vunpack.c.h.b16 %v175
  %v365 = vunpack.c.l.b16 %v176
  %v366 = vunpack.c.h.b16 %v176
  %v367 = vunpack.c.l.b16 %v177
  %v368 = vunpack.c.h.b16 %v177
  %v369 = vunpack.c.l.b16 %v178
  %v370 = vunpack.c.h.b16 %v178
  %v371 = vunpack.c.l.b16 %v179
  %v372 = vunpack.c.h.b16 %v179
  %v373 = vunpack.c.l.b16 %v180
  %v374 = vunpack.c.h.b16 %v180
  %v375 = vunpack.c.l.b16 %v181
  %v376 = vunpack.c.h.b16 %v181
  %v377 = vunpack.c.l.b16 %v182
  %v378 = vunpack.c.h.b16 %v182
  %v379 = vunpack.c.l.b16 %v183
  %v380 = vunpack.c.h.b16 %v183
  %v381 = vunpack.c.l.b16 %v184
  %v382 = vunpack.c.h.b16 %v184
  %v383 = vunpack.c.l.b16 %v185
  %v384 = vunpack.c.h.b16 %v185
  %v385 = vunpack.c.l.b16 %v186
  %v386 = vunpack.c.h.b16 %v186
  %v387 = vunpack.c.l.b16 %v187
  %v388 = vunpack.c.h.b16 %v187
  %v389 = vunpack.c.l.b16 %v188
  %v390 = vunpack.c.h.b16 %v188
  %v391 = vunpack.c.l.b16 %v189
  %v392 = vunpack.c.h.b16 %v189
  %v393 = vunpack.c.l.b16 %v190
  %v394 = vunpack.c.h.b16 %v190
  %v395 = vunpack.c.l.b16 %v191
  %v396 = vunpack.c.h.b16 %v191
  %v397 = vunpack.c.l.b16 %v192
  %v398 = vunpack.c.h.b16 %v192
  %v399 = vunpack.c.l.b16 %v193
  %v400 = vunpack.c.h.b16 %v193
  %v401 = vunpack.c.l.b16 %v194
  %v402 = vunpack.c.h.b16 %v194
  %v403 = vunpack.c.l.b16 %v195
  %v404 = vunpack.c.h.b16 %v195
  %v405 = vunpack.c.l.b16 %v196
  %v406 = vunpack.c.h.b16 %v196
  %v407 = vunpack.c.l.b16 %v197
  %v408 = vunpack.c.h.b16 %v197
  %v409 = vunpack.c.l.b16 %v198
  %v410 = vunpack.c.h.b16 %v198
  %v411 = vunpack.c.l.b16 %v199
  %v412 = vunpack.c.h.b16 %v199
  %v413 = vunpack.c.l.b16 %v200
  %v414 = vunpack.c.h.b16 %v200
  %v415 = vunpack.c.l.b16 %v201
  %v416 = vunpack.c.h.b16 %v201
  %v417 = vunpack.c.l.b16 %v202
  %v418 = vunpack.c.h.b16 %v202
  %v419 = vunpack.c.l.b16 %v203
  %v420 = vunpack.c.h.b16 %v203
  %v421 = vunpack.c.l.b16 %v204
  %v422 = vunpack.c.h.b16 %v204
  %v423 = vunpack.c.l.b16 %v205
  %v424 = vunpack.c.h.b16 %v205
  %v425 = vunpack.c.l.b16 %v206
  %v426 = vunpack.c.h.b16 %v206
  %v427 = vunpack.c.l.b16 %v207
  %v428 = vunpack.c.h.b16 %v207
  %v429 = vunpack.c.l.b16 %v208
  %v430 = vunpack.c.h.b16 %v208
  %v431 = vunpack.c.l.b16 %v209
  %v432 = vunpack.c.h.b16 %v209
  %v433 = vunpack.c.l.b16 %v210
  %v434 = vunpack.c.h.b16 %v210
  %v435 = vpack.c.b16 %v309, %v307
  %v436 = vpack.c.b16 %v310, %v308
  %v437 = vpack.c.b16 %v313, %v311
  %v438 = vpack.c.b16 %v314, %v312
  %v439 = vpack.c.b16 %v317, %v315
  %v440 = vpack.c.b16 %v318, %v316
  %v441 = vpack.c.b16 %v321, %v319
  %v442 = vpack.c.b16 %v322, %v320
  %v443 = vpack.c.b16 %v325, %v323
  %v444 = vpack.c.b16 %v326, %v324
  %v445 = vpack.c.b16 %v329, %v327
  %v446 = vpack.c.b16 %v330, %v328
  %v447 = vpack.c.b16 %v333, %v331
  %v448 = vpack.c.b16 %v334, %v332
  %v449 = vpack.c.b16 %v337, %v335
  %v450 = vpack.c.b16 %v338, %v336
  %v451 = vpack.c.b16 %v341, %v339
  %v452 = vpack.c.b16 %v342, %v340
  %v453 = vpack.c.b16 %v345, %v343
  %v454 = vpack.c.b16 %v346, %v344
  %v455 = vpack.c.b16 %v349, %v347
  %v456 = vpack.c.b16 %v350, %v348
  %v457 = vpack.c.b16 %v353, %v351
  %v458 = vpack.c.b16 %v354, %v352
  %v459 = vpack.c.b16 %v357, %v355
  %v460 = vpack.c.b16 %v358, %v356
  %v461 = vpack.c.b16 %v361, %v359
  %v462 = vpack.c.b16 %v362, %v360
  %v463 = vpack.c.b16 %v365, %v363
  %v464 = vpack.c.b16 %v366, %v364
  %v465 = vpack.c.b16 %v369, %v367
  %v466 = vpack.c.b16 %v370, %v368
  %v467 = vpack.c.b16 %v373, %v371
  %v468 = vpack.c.b16 %v374, %v372
  %v469 = vpack.c.b16 %v377, %v375
  %v470 = vpack.c.b16 %v378, %v376
  %v471 = vpack.c.b16 %v381, %v379
  %v472 = vpack.c.b16 %v382, %v380
  %v473 = vpack.c.b16 %v385, %v383
  %v474 = vpack.c.b16 %v386, %v384
  %v475 = vpack.c.b16 %v389, %v387
  %v476 = vpack.c.b16 %v390, %v388
  %v477 = vpack.c.b16 %v393, %v391
  %v478 = vpack.c.b16 %v394, %v392
  %v479 = vpack.c.b16 %v397, %v395
  %v480 = vpack.c.b16 %v398, %v396
  %v481 = vpack.c.b16 %v401, %v399
  %v482 = vpack.c.b16 %v402, %v400
  %v483 = vpack.c.b16 %v405, %v403
  %v484 = vpack.c.b16 %v406, %v404
  %v485 = vpack.c.b16 %v409, %v407
  %v486 = vpack.c.b16 %v410, %v408
  %v487 = vpack.c.b16 %v413, %v411
  %v488 = vpack.c.b16 %v414, %v412
  %v489 = vpack.c.b16 %v417, %v415
  %v490 = vpack.c.b16 %v418, %v416
  %v491 = vpack.c.b16 %v421, %v419
  %v492 = vpack.c.b16 %v422, %v420
  %v493 = vpack.c.b16 %v425, %v423
  %v494 = vpack.c.b16 %v426, %v424
  %v495 = vpack.c.b16 %v429, %v427
  %v496 = vpack.c.b16 %v430, %v428
  %v497 = vpack.c.b16 %v433, %v431
  %v498 = vpack.c.b16 %v434, %v432
  %v595 = vunpack.c.l.b16 %v211
  %v596 = vunpack.c.l.b16 %v212
  %v597 = vunpack.c.l.b16 %v213
  %v598 = vunpack.c.l.b16 %v214
  %v599 = vunpack.c.l.b16 %v215
  %v600 = vunpack.c.l.b16 %v216
  %v601 = vunpack.c.l.b16 %v217
  %v602 = vunpack.c.l.b16 %v218
  %v603 = vunpack.c.l.b16 %v219
  %v604 = vunpack.c.l.b16 %v220
  %v605 = vunpack.c.l.b16 %v221
  %v606 = vunpack.c.l.b16 %v222
  %v607 = vunpack.c.l.b16 %v223
  %v608 = vunpack.c.l.b16 %v224
  %v609 = vunpack.c.l.b16 %v225
  %v610 = vunpack.c.l.b16 %v226
  %v611 = vunpack.c.l.b16 %v227
  %v612 = vunpack.c.l.b16 %v228
  %v613 = vunpack.c.l.b16 %v229
  %v614 = vunpack.c.l.b16 %v230
  %v615 = vunpack.c.l.b16 %v231
  %v616 = vunpack.c.l.b16 %v232
  %v617 = vunpack.c.l.b16 %v233
  %v618 = vunpack.c.l.b16 %v234
  %v619 = vunpack.c.l.b16 %v235
  %v620 = vunpack.c.l.b16 %v236
  %v621 = vunpack.c.l.b16 %v237
  %v622 = vunpack.c.l.b16 %v238
  %v623 = vunpack.c.l.b16 %v239
  %v624 = vunpack.c.l.b16 %v240
  %v625 = vunpack.c.l.b16 %v241
  %v626 = vunpack.c.l.b16 %v242
  %v627 = vpack.c.b16 %v596, %v595
  %v628 = vpack.c.b16 %v598, %v597
  %v629 = vpack.c.b16 %v600, %v599
  %v630 = vpack.c.b16 %v602, %v601
  %v631 = vpack.c.b16 %v604, %v603
  %v632 = vpack.c.b16 %v606, %v605
  %v633 = vpack.c.b16 %v608, %v607
  %v634 = vpack.c.b16 %v610, %v609
  %v635 = vpack.c.b16 %v612, %v611
  %v636 = vpack.c.b16 %v614, %v613
  %v637 = vpack.c.b16 %v616, %v615
  %v638 = vpack.c.b16 %v618, %v617
  %v639 = vpack.c.b16 %v620, %v619
  %v640 = vpack.c.b16 %v622, %v621
  %v641 = vpack.c.b16 %v624, %v623
  %v642 = vpack.c.b16 %v626, %v625
  %659 = vmatprep.subr.bf16.mxu0 0
  %660 = vmatpush1.bf16.msra.mxu0 %v634
  %661 = vmatprep.subr.bf16.mxu0 0
  %662 = vmatpush1.bf16.msra.mxu0 %v633
  %663 = vmatprep.subr.bf16.mxu0 0
  %664 = vmatpush1.bf16.msra.mxu0 %v632
  %665 = vmatprep.subr.bf16.mxu0 0
  %666 = vmatpush1.bf16.msra.mxu0 %v631
  %667 = vmatprep.subr.bf16.mxu0 0
  %668 = vmatpush1.bf16.msra.mxu0 %v630
  %669 = vmatprep.subr.bf16.mxu0 0
  %670 = vmatpush1.bf16.msra.mxu0 %v629
  %671 = vmatprep.subr.bf16.mxu0 0
  %672 = vmatpush1.bf16.msra.mxu0 %v628
  %673 = vmatprep.subr.bf16.mxu0 0
  %674 = vmatpush1.bf16.msra.mxu0 %v627
  %675 = vmatprep.subr.bf16.mxu0 0
  %676 = vmatpush2.bf16.msra.mxu0 %v642
  %677 = vmatprep.subr.bf16.mxu0 0
  %678 = vmatpush2.bf16.msra.mxu0 %v641
  %679 = vmatprep.subr.bf16.mxu0 0
  %680 = vmatpush2.bf16.msra.mxu0 %v640
  %681 = vmatprep.subr.bf16.mxu0 0
  %682 = vmatpush2.bf16.msra.mxu0 %v639
  %683 = vmatprep.subr.bf16.mxu0 0
  %684 = vmatpush2.bf16.msra.mxu0 %v638
  %685 = vmatprep.subr.bf16.mxu0 0
  %686 = vmatpush2.bf16.msra.mxu0 %v637
  %687 = vmatprep.subr.bf16.mxu0 0
  %688 = vmatpush2.bf16.msra.mxu0 %v636
  %689 = vmatprep.subr.bf16.mxu0 0
  %690 = vmatpush2.bf16.msra.mxu0 %v635
  %691 = vmatprep.mubr.bf16.mxu0 %v436
  %692 = vmatmul.mubr.bf16.gmra.mxu0 %v435
  %v693 = vpop.f32.mrf.mxu0
  %v694 = vadd.f32 0.0, %v693
  %v695 = vpop.f32.mrf.mxu0
  %v696 = vpop.f32.mrf.mxu0
  %v697 = vadd.f32 0.0, %v696
  %v698 = vpop.f32.mrf.mxu0
  %699 = vmatprep.mubr.bf16.mxu0 %v438
  %700 = vmatmul.mubr.bf16.gmra.mxu0 %v437
  %v701 = vpop.f32.mrf.mxu0
  %v702 = vadd.f32 0.0, %v701
  %v703 = vpop.f32.mrf.mxu0
  %v704 = vpop.f32.mrf.mxu0
  %v705 = vadd.f32 0.0, %v704
  %v706 = vpop.f32.mrf.mxu0
  %707 = vmatprep.mubr.bf16.mxu0 %v440
  %708 = vmatmul.mubr.bf16.gmra.mxu0 %v439
  %v709 = vpop.f32.mrf.mxu0
  %v710 = vadd.f32 0.0, %v709
  %v711 = vpop.f32.mrf.mxu0
  %v712 = vpop.f32.mrf.mxu0
  %v713 = vadd.f32 0.0, %v712
  %v714 = vpop.f32.mrf.mxu0
  %715 = vmatprep.mubr.bf16.mxu0 %v442
  %716 = vmatmul.mubr.bf16.gmra.mxu0 %v441
  %v717 = vpop.f32.mrf.mxu0
  %v718 = vadd.f32 0.0, %v717
  %v719 = vpop.f32.mrf.mxu0
  %v720 = vpop.f32.mrf.mxu0
  %v721 = vadd.f32 0.0, %v720
  %v722 = vpop.f32.mrf.mxu0
  %723 = vmatprep.mubr.bf16.mxu0 %v444
  %724 = vmatmul.mubr.bf16.gmra.mxu0 %v443
  %v725 = vpop.f32.mrf.mxu0
  %v726 = vadd.f32 0.0, %v725
  %v727 = vpop.f32.mrf.mxu0
  %v728 = vpop.f32.mrf.mxu0
  %v729 = vadd.f32 0.0, %v728
  %v730 = vpop.f32.mrf.mxu0
  %731 = vmatprep.mubr.bf16.mxu0 %v446
  %732 = vmatmul.mubr.bf16.gmra.mxu0 %v445
  %v733 = vpop.f32.mrf.mxu0
  %v734 = vadd.f32 0.0, %v733
  %v735 = vpop.f32.mrf.mxu0
  %v736 = vpop.f32.mrf.mxu0
  %v737 = vadd.f32 0.0, %v736
  %v738 = vpop.f32.mrf.mxu0
  %739 = vmatprep.mubr.bf16.mxu0 %v448
  %740 = vmatmul.mubr.bf16.gmra.mxu0 %v447
  %v741 = vpop.f32.mrf.mxu0
  %v742 = vadd.f32 0.0, %v741
  %v743 = vpop.f32.mrf.mxu0
  %v744 = vpop.f32.mrf.mxu0
  %v745 = vadd.f32 0.0, %v744
  %v746 = vpop.f32.mrf.mxu0
  %747 = vmatprep.mubr.bf16.mxu0 %v450
  %748 = vmatmul.mubr.bf16.gmra.mxu0 %v449
  %v749 = vpop.f32.mrf.mxu0
  %v750 = vadd.f32 0.0, %v749
  %v751 = vpop.f32.mrf.mxu0
  %v752 = vpop.f32.mrf.mxu0
  %v753 = vadd.f32 0.0, %v752
  %v754 = vpop.f32.mrf.mxu0
  %755 = vmatprep.mubr.bf16.mxu0 %v452
  %756 = vmatmul.mubr.bf16.gmra.mxu0 %v451
  %v757 = vpop.f32.mrf.mxu0
  %v758 = vadd.f32 0.0, %v757
  %v759 = vpop.f32.mrf.mxu0
  %v760 = vpop.f32.mrf.mxu0
  %v761 = vadd.f32 0.0, %v760
  %v762 = vpop.f32.mrf.mxu0
  %763 = vmatprep.mubr.bf16.mxu0 %v454
  %764 = vmatmul.mubr.bf16.gmra.mxu0 %v453
  %v765 = vpop.f32.mrf.mxu0
  %v766 = vadd.f32 0.0, %v765
  %v767 = vpop.f32.mrf.mxu0
  %v768 = vpop.f32.mrf.mxu0
  %v769 = vadd.f32 0.0, %v768
  %v770 = vpop.f32.mrf.mxu0
  %771 = vmatprep.mubr.bf16.mxu0 %v456
  %772 = vmatmul.mubr.bf16.gmra.mxu0 %v455
  %v773 = vpop.f32.mrf.mxu0
  %v774 = vadd.f32 0.0, %v773
  %v775 = vpop.f32.mrf.mxu0
  %v776 = vpop.f32.mrf.mxu0
  %v777 = vadd.f32 0.0, %v776
  %v778 = vpop.f32.mrf.mxu0
  %779 = vmatprep.mubr.bf16.mxu0 %v458
  %780 = vmatmul.mubr.bf16.gmra.mxu0 %v457
  %v781 = vpop.f32.mrf.mxu0
  %v782 = vadd.f32 0.0, %v781
  %v783 = vpop.f32.mrf.mxu0
  %v784 = vpop.f32.mrf.mxu0
  %v785 = vadd.f32 0.0, %v784
  %v786 = vpop.f32.mrf.mxu0
  %787 = vmatprep.mubr.bf16.mxu0 %v460
  %788 = vmatmul.mubr.bf16.gmra.mxu0 %v459
  %v789 = vpop.f32.mrf.mxu0
  %v790 = vadd.f32 0.0, %v789
  %v791 = vpop.f32.mrf.mxu0
  %v792 = vpop.f32.mrf.mxu0
  %v793 = vadd.f32 0.0, %v792
  %v794 = vpop.f32.mrf.mxu0
  %795 = vmatprep.mubr.bf16.mxu0 %v462
  %796 = vmatmul.mubr.bf16.gmra.mxu0 %v461
  %v797 = vpop.f32.mrf.mxu0
  %v798 = vadd.f32 0.0, %v797
  %v799 = vpop.f32.mrf.mxu0
  %v800 = vpop.f32.mrf.mxu0
  %v801 = vadd.f32 0.0, %v800
  %v802 = vpop.f32.mrf.mxu0
  %803 = vmatprep.mubr.bf16.mxu0 %v464
  %804 = vmatmul.mubr.bf16.gmra.mxu0 %v463
  %v805 = vpop.f32.mrf.mxu0
  %v806 = vadd.f32 0.0, %v805
  %v807 = vpop.f32.mrf.mxu0
  %v808 = vpop.f32.mrf.mxu0
  %v809 = vadd.f32 0.0, %v808
  %v810 = vpop.f32.mrf.mxu0
  %811 = vmatprep.mubr.bf16.mxu0 %v466
  %812 = vmatmul.mubr.bf16.gmra.mxu0 %v465
  %v813 = vpop.f32.mrf.mxu0
  %v814 = vadd.f32 0.0, %v813
  %v815 = vpop.f32.mrf.mxu0
  %v816 = vpop.f32.mrf.mxu0
  %v817 = vadd.f32 0.0, %v816
  %v818 = vpop.f32.mrf.mxu0
  %819 = vmatprep.mubr.bf16.mxu0 %v468
  %820 = vmatmul.mubr.bf16.gmra.mxu0 %v467
  %v821 = vpop.f32.mrf.mxu0
  %v822 = vadd.f32 0.0, %v821
  %v823 = vpop.f32.mrf.mxu0
  %v824 = vpop.f32.mrf.mxu0
  %v825 = vadd.f32 0.0, %v824
  %v826 = vpop.f32.mrf.mxu0
  %827 = vmatprep.mubr.bf16.mxu0 %v470
  %828 = vmatmul.mubr.bf16.gmra.mxu0 %v469
  %v829 = vpop.f32.mrf.mxu0
  %v830 = vadd.f32 0.0, %v829
  %v831 = vpop.f32.mrf.mxu0
  %v832 = vpop.f32.mrf.mxu0
  %v833 = vadd.f32 0.0, %v832
  %v834 = vpop.f32.mrf.mxu0
  %835 = vmatprep.mubr.bf16.mxu0 %v472
  %836 = vmatmul.mubr.bf16.gmra.mxu0 %v471
  %v837 = vpop.f32.mrf.mxu0
  %v838 = vadd.f32 0.0, %v837
  %v839 = vpop.f32.mrf.mxu0
  %v840 = vpop.f32.mrf.mxu0
  %v841 = vadd.f32 0.0, %v840
  %v842 = vpop.f32.mrf.mxu0
  %843 = vmatprep.mubr.bf16.mxu0 %v474
  %844 = vmatmul.mubr.bf16.gmra.mxu0 %v473
  %v845 = vpop.f32.mrf.mxu0
  %v846 = vadd.f32 0.0, %v845
  %v847 = vpop.f32.mrf.mxu0
  %v848 = vpop.f32.mrf.mxu0
  %v849 = vadd.f32 0.0, %v848
  %v850 = vpop.f32.mrf.mxu0
  %851 = vmatprep.mubr.bf16.mxu0 %v476
  %852 = vmatmul.mubr.bf16.gmra.mxu0 %v475
  %v853 = vpop.f32.mrf.mxu0
  %v854 = vadd.f32 0.0, %v853
  %v855 = vpop.f32.mrf.mxu0
  %v856 = vpop.f32.mrf.mxu0
  %v857 = vadd.f32 0.0, %v856
  %v858 = vpop.f32.mrf.mxu0
  %859 = vmatprep.mubr.bf16.mxu0 %v478
  %860 = vmatmul.mubr.bf16.gmra.mxu0 %v477
  %v861 = vpop.f32.mrf.mxu0
  %v862 = vadd.f32 0.0, %v861
  %v863 = vpop.f32.mrf.mxu0
  %v864 = vpop.f32.mrf.mxu0
  %v865 = vadd.f32 0.0, %v864
  %v866 = vpop.f32.mrf.mxu0
  %867 = vmatprep.mubr.bf16.mxu0 %v480
  %868 = vmatmul.mubr.bf16.gmra.mxu0 %v479
  %v869 = vpop.f32.mrf.mxu0
  %v870 = vadd.f32 0.0, %v869
  %v871 = vpop.f32.mrf.mxu0
  %v872 = vpop.f32.mrf.mxu0
  %v873 = vadd.f32 0.0, %v872
  %v874 = vpop.f32.mrf.mxu0
  %875 = vmatprep.mubr.bf16.mxu0 %v482
  %876 = vmatmul.mubr.bf16.gmra.mxu0 %v481
  %v877 = vpop.f32.mrf.mxu0
  %v878 = vadd.f32 0.0, %v877
  %v879 = vpop.f32.mrf.mxu0
  %v880 = vpop.f32.mrf.mxu0
  %v881 = vadd.f32 0.0, %v880
  %v882 = vpop.f32.mrf.mxu0
  %883 = vmatprep.mubr.bf16.mxu0 %v484
  %884 = vmatmul.mubr.bf16.gmra.mxu0 %v483
  %v885 = vpop.f32.mrf.mxu0
  %v886 = vadd.f32 0.0, %v885
  %v887 = vpop.f32.mrf.mxu0
  %v888 = vpop.f32.mrf.mxu0
  %v889 = vadd.f32 0.0, %v888
  %v890 = vpop.f32.mrf.mxu0
  %891 = vmatprep.mubr.bf16.mxu0 %v486
  %892 = vmatmul.mubr.bf16.gmra.mxu0 %v485
  %v893 = vpop.f32.mrf.mxu0
  %v894 = vadd.f32 0.0, %v893
  %v895 = vpop.f32.mrf.mxu0
  %v896 = vpop.f32.mrf.mxu0
  %v897 = vadd.f32 0.0, %v896
  %v898 = vpop.f32.mrf.mxu0
  %899 = vmatprep.mubr.bf16.mxu0 %v488
  %900 = vmatmul.mubr.bf16.gmra.mxu0 %v487
  %v901 = vpop.f32.mrf.mxu0
  %v902 = vadd.f32 0.0, %v901
  %v903 = vpop.f32.mrf.mxu0
  %v904 = vpop.f32.mrf.mxu0
  %v905 = vadd.f32 0.0, %v904
  %v906 = vpop.f32.mrf.mxu0
  %907 = vmatprep.mubr.bf16.mxu0 %v490
  %908 = vmatmul.mubr.bf16.gmra.mxu0 %v489
  %v909 = vpop.f32.mrf.mxu0
  %v910 = vadd.f32 0.0, %v909
  %v911 = vpop.f32.mrf.mxu0
  %v912 = vpop.f32.mrf.mxu0
  %v913 = vadd.f32 0.0, %v912
  %v914 = vpop.f32.mrf.mxu0
  %915 = vmatprep.mubr.bf16.mxu0 %v492
  %916 = vmatmul.mubr.bf16.gmra.mxu0 %v491
  %v917 = vpop.f32.mrf.mxu0
  %v918 = vadd.f32 0.0, %v917
  %v919 = vpop.f32.mrf.mxu0
  %v920 = vpop.f32.mrf.mxu0
  %v921 = vadd.f32 0.0, %v920
  %v922 = vpop.f32.mrf.mxu0
  %923 = vmatprep.mubr.bf16.mxu0 %v494
  %924 = vmatmul.mubr.bf16.gmra.mxu0 %v493
  %v925 = vpop.f32.mrf.mxu0
  %v926 = vadd.f32 0.0, %v925
  %v927 = vpop.f32.mrf.mxu0
  %v928 = vpop.f32.mrf.mxu0
  %v929 = vadd.f32 0.0, %v928
  %v930 = vpop.f32.mrf.mxu0
  %931 = vmatprep.mubr.bf16.mxu0 %v496
  %932 = vmatmul.mubr.bf16.gmra.mxu0 %v495
  %v933 = vpop.f32.mrf.mxu0
  %v934 = vadd.f32 0.0, %v933
  %v935 = vpop.f32.mrf.mxu0
  %v936 = vpop.f32.mrf.mxu0
  %v937 = vadd.f32 0.0, %v936
  %v938 = vpop.f32.mrf.mxu0
  %939 = vmatprep.mubr.bf16.mxu0 %v498
  %940 = vmatmul.mubr.bf16.gmra.mxu0 %v497
  %v941 = vpop.f32.mrf.mxu0
  %v942 = vadd.f32 0.0, %v941
  %v943 = vpop.f32.mrf.mxu0
  %v944 = vpop.f32.mrf.mxu0
  %v945 = vadd.f32 0.0, %v944
  %v946 = vpop.f32.mrf.mxu0
  %947 = vdwg.mxu0
  %v948 = vadd.f32 %v83, %v694
  %v949 = vadd.f32 %v84, %v697
  %v950 = vadd.f32 %v85, %v702
  %v951 = vadd.f32 %v86, %v705
  %v952 = vadd.f32 %v87, %v710
  %v953 = vadd.f32 %v88, %v713
  %v954 = vadd.f32 %v89, %v718
  %v955 = vadd.f32 %v90, %v721
  %v956 = vadd.f32 %v91, %v726
  %v957 = vadd.f32 %v92, %v729
  %v958 = vadd.f32 %v93, %v734
  %v959 = vadd.f32 %v94, %v737
  %v960 = vadd.f32 %v95, %v742
  %v961 = vadd.f32 %v96, %v745
  %v962 = vadd.f32 %v97, %v750
  %v963 = vadd.f32 %v98, %v753
  %v964 = vadd.f32 %v99, %v758
  %v965 = vadd.f32 %v100, %v761
  %v966 = vadd.f32 %v101, %v766
  %v967 = vadd.f32 %v102, %v769
  %v968 = vadd.f32 %v103, %v774
  %v969 = vadd.f32 %v104, %v777
  %v970 = vadd.f32 %v105, %v782
  %v971 = vadd.f32 %v106, %v785
  %v972 = vadd.f32 %v107, %v790
  %v973 = vadd.f32 %v108, %v793
  %v974 = vadd.f32 %v109, %v798
  %v975 = vadd.f32 %v110, %v801
  %v976 = vadd.f32 %v111, %v806
  %v977 = vadd.f32 %v112, %v809
  %v978 = vadd.f32 %v113, %v814
  %v979 = vadd.f32 %v114, %v817
  %v980 = vadd.f32 %v115, %v822
  %v981 = vadd.f32 %v116, %v825
  %v982 = vadd.f32 %v117, %v830
  %v983 = vadd.f32 %v118, %v833
  %v984 = vadd.f32 %v119, %v838
  %v985 = vadd.f32 %v120, %v841
  %v986 = vadd.f32 %v121, %v846
  %v987 = vadd.f32 %v122, %v849
  %v988 = vadd.f32 %v123, %v854
  %v989 = vadd.f32 %v124, %v857
  %v990 = vadd.f32 %v125, %v862
  %v991 = vadd.f32 %v126, %v865
  %v992 = vadd.f32 %v127, %v870
  %v993 = vadd.f32 %v128, %v873
  %v994 = vadd.f32 %v129, %v878
  %v995 = vadd.f32 %v130, %v881
  %v996 = vadd.f32 %v131, %v886
  %v997 = vadd.f32 %v132, %v889
  %v998 = vadd.f32 %v133, %v894
  %v999 = vadd.f32 %v134, %v897
  %v1000 = vadd.f32 %v135, %v902
  %v1001 = vadd.f32 %v136, %v905
  %v1002 = vadd.f32 %v137, %v910
  %v1003 = vadd.f32 %v138, %v913
  %v1004 = vadd.f32 %v139, %v918
  %v1005 = vadd.f32 %v140, %v921
  %v1006 = vadd.f32 %v141, %v926
  %v1007 = vadd.f32 %v142, %v929
  %v1008 = vadd.f32 %v143, %v934
  %v1009 = vadd.f32 %v144, %v937
  %v1010 = vadd.f32 %v145, %v942
  %v1011 = vadd.f32 %v146, %v945
  %1012 = vst [vmem:[#allocation2] sm:$0xff] %v948
  %1013 = vst [vmem:[#allocation2 + $0x8] sm:$0xff] %v949
  %1014 = vst [vmem:[#allocation2 + $0x10] sm:$0xff] %v950
  %1015 = vst [vmem:[#allocation2 + $0x18] sm:$0xff] %v951
  %1016 = vst [vmem:[#allocation2 + $0x20] sm:$0xff] %v952
  %1017 = vst [vmem:[#allocation2 + $0x28] sm:$0xff] %v953
  %1018 = vst [vmem:[#allocation2 + $0x30] sm:$0xff] %v954
  %1019 = vst [vmem:[#allocation2 + $0x38] sm:$0xff] %v955
  %1020 = vst [vmem:[#allocation2 + $0x40] sm:$0xff] %v956
  %1021 = vst [vmem:[#allocation2 + $0x48] sm:$0xff] %v957
  %1022 = vst [vmem:[#allocation2 + $0x50] sm:$0xff] %v958
  %1023 = vst [vmem:[#allocation2 + $0x58] sm:$0xff] %v959
  %1024 = vst [vmem:[#allocation2 + $0x60] sm:$0xff] %v960
  %1025 = vst [vmem:[#allocation2 + $0x68] sm:$0xff] %v961
  %1026 = vst [vmem:[#allocation2 + $0x70] sm:$0xff] %v962
  %1027 = vst [vmem:[#allocation2 + $0x78] sm:$0xff] %v963
  %1028 = vst [vmem:[#allocation2 + $0x80] sm:$0xff] %v964
  %1029 = vst [vmem:[#allocation2 + $0x88] sm:$0xff] %v965
  %1030 = vst [vmem:[#allocation2 + $0x90] sm:$0xff] %v966
  %1031 = vst [vmem:[#allocation2 + $0x98] sm:$0xff] %v967
  %1032 = vst [vmem:[#allocation2 + $0xa0] sm:$0xff] %v968
  %1033 = vst [vmem:[#allocation2 + $0xa8] sm:$0xff] %v969
  %1034 = vst [vmem:[#allocation2 + $0xb0] sm:$0xff] %v970
  %1035 = vst [vmem:[#allocation2 + $0xb8] sm:$0xff] %v971
  %1036 = vst [vmem:[#allocation2 + $0xc0] sm:$0xff] %v972
  %1037 = vst [vmem:[#allocation2 + $0xc8] sm:$0xff] %v973
  %1038 = vst [vmem:[#allocation2 + $0xd0] sm:$0xff] %v974
  %1039 = vst [vmem:[#allocation2 + $0xd8] sm:$0xff] %v975
  %1040 = vst [vmem:[#allocation2 + $0xe0] sm:$0xff] %v976
  %1041 = vst [vmem:[#allocation2 + $0xe8] sm:$0xff] %v977
  %1042 = vst [vmem:[#allocation2 + $0xf0] sm:$0xff] %v978
  %1043 = vst [vmem:[#allocation2 + $0xf8] sm:$0xff] %v979
  %1044 = vst [vmem:[#allocation2 + $0x100] sm:$0xff] %v980
  %1045 = vst [vmem:[#allocation2 + $0x108] sm:$0xff] %v981
  %1046 = vst [vmem:[#allocation2 + $0x110] sm:$0xff] %v982
  %1047 = vst [vmem:[#allocation2 + $0x118] sm:$0xff] %v983
  %1048 = vst [vmem:[#allocation2 + $0x120] sm:$0xff] %v984
  %1049 = vst [vmem:[#allocation2 + $0x128] sm:$0xff] %v985
  %1050 = vst [vmem:[#allocation2 + $0x130] sm:$0xff] %v986
  %1051 = vst [vmem:[#allocation2 + $0x138] sm:$0xff] %v987
  %1052 = vst [vmem:[#allocation2 + $0x140] sm:$0xff] %v988
  %1053 = vst [vmem:[#allocation2 + $0x148] sm:$0xff] %v989
  %1054 = vst [vmem:[#allocation2 + $0x150] sm:$0xff] %v990
  %1055 = vst [vmem:[#allocation2 + $0x158] sm:$0xff] %v991
  %1056 = vst [vmem:[#allocation2 + $0x160] sm:$0xff] %v992
  %1057 = vst [vmem:[#allocation2 + $0x168] sm:$0xff] %v993
  %1058 = vst [vmem:[#allocation2 + $0x170] sm:$0xff] %v994
  %1059 = vst [vmem:[#allocation2 + $0x178] sm:$0xff] %v995
  %1060 = vst [vmem:[#allocation2 + $0x180] sm:$0xff] %v996
  %1061 = vst [vmem:[#allocation2 + $0x188] sm:$0xff] %v997
  %1062 = vst [vmem:[#allocation2 + $0x190] sm:$0xff] %v998
  %1063 = vst [vmem:[#allocation2 + $0x198] sm:$0xff] %v999
  %1064 = vst [vmem:[#allocation2 + $0x1a0] sm:$0xff] %v1000
  %1065 = vst [vmem:[#allocation2 + $0x1a8] sm:$0xff] %v1001
  %1066 = vst [vmem:[#allocation2 + $0x1b0] sm:$0xff] %v1002
  %1067 = vst [vmem:[#allocation2 + $0x1b8] sm:$0xff] %v1003
  %1068 = vst [vmem:[#allocation2 + $0x1c0] sm:$0xff] %v1004
  %1069 = vst [vmem:[#allocation2 + $0x1c8] sm:$0xff] %v1005
  %1070 = vst [vmem:[#allocation2 + $0x1d0] sm:$0xff] %v1006
  %1071 = vst [vmem:[#allocation2 + $0x1d8] sm:$0xff] %v1007
  %1072 = vst [vmem:[#allocation2 + $0x1e0] sm:$0xff] %v1008
  %1073 = vst [vmem:[#allocation2 + $0x1e8] sm:$0xff] %v1009
  %1074 = vst [vmem:[#allocation2 + $0x1f0] sm:$0xff] %v1010
  %1075 = vst [vmem:[#allocation2 + $0x1f8] sm:$0xff] %v1011
  // Predicated region
  $region14: #{global_generator_forward.19} parent=0 // pred_check
    %p1076 = pneg %p15
  $region15: #{global_generator_forward.19} parent=0 // pred_check_branch
    %1078 = sbr.rel (%p1076) target = $region17
  $region16: #{global_generator_forward.19} parent=0 // pred_region
    %v1079 = vld [vmem:[#allocation2] sm:$0xff]
    %v1080 = vld [vmem:[#allocation2 + $0x8] sm:$0xff]
    %v1081 = vld [vmem:[#allocation2 + $0x10] sm:$0xff]
    %v1082 = vld [vmem:[#allocation2 + $0x18] sm:$0xff]
    %v1083 = vld [vmem:[#allocation2 + $0x20] sm:$0xff]
    %v1084 = vld [vmem:[#allocation2 + $0x28] sm:$0xff]
    %v1085 = vld [vmem:[#allocation2 + $0x30] sm:$0xff]
    %v1086 = vld [vmem:[#allocation2 + $0x38] sm:$0xff]
    %v1087 = vld [vmem:[#allocation2 + $0x40] sm:$0xff]
    %v1088 = vld [vmem:[#allocation2 + $0x48] sm:$0xff]
    %v1089 = vld [vmem:[#allocation2 + $0x50] sm:$0xff]
    %v1090 = vld [vmem:[#allocation2 + $0x58] sm:$0xff]
    %v1091 = vld [vmem:[#allocation2 + $0x60] sm:$0xff]
    %v1092 = vld [vmem:[#allocation2 + $0x68] sm:$0xff]
    %v1093 = vld [vmem:[#allocation2 + $0x70] sm:$0xff]
    %v1094 = vld [vmem:[#allocation2 + $0x78] sm:$0xff]
    %v1095 = vld [vmem:[#allocation2 + $0x80] sm:$0xff]
    %v1096 = vld [vmem:[#allocation2 + $0x88] sm:$0xff]
    %v1097 = vld [vmem:[#allocation2 + $0x90] sm:$0xff]
    %v1098 = vld [vmem:[#allocation2 + $0x98] sm:$0xff]
    %v1099 = vld [vmem:[#allocation2 + $0xa0] sm:$0xff]
    %v1100 = vld [vmem:[#allocation2 + $0xa8] sm:$0xff]
    %v1101 = vld [vmem:[#allocation2 + $0xb0] sm:$0xff]
    %v1102 = vld [vmem:[#allocation2 + $0xb8] sm:$0xff]
    %v1103 = vld [vmem:[#allocation2 + $0xc0] sm:$0xff]
    %v1104 = vld [vmem:[#allocation2 + $0xc8] sm:$0xff]
    %v1105 = vld [vmem:[#allocation2 + $0xd0] sm:$0xff]
    %v1106 = vld [vmem:[#allocation2 + $0xd8] sm:$0xff]
    %v1107 = vld [vmem:[#allocation2 + $0xe0] sm:$0xff]
    %v1108 = vld [vmem:[#allocation2 + $0xe8] sm:$0xff]
    %v1109 = vld [vmem:[#allocation2 + $0xf0] sm:$0xff]
    %v1110 = vld [vmem:[#allocation2 + $0xf8] sm:$0xff]
    %v1111 = vld [vmem:[#allocation2 + $0x100] sm:$0xff]
    %v1112 = vld [vmem:[#allocation2 + $0x108] sm:$0xff]
    %v1113 = vld [vmem:[#allocation2 + $0x110] sm:$0xff]
    %v1114 = vld [vmem:[#allocation2 + $0x118] sm:$0xff]
    %v1115 = vld [vmem:[#allocation2 + $0x120] sm:$0xff]
    %v1116 = vld [vmem:[#allocation2 + $0x128] sm:$0xff]
    %v1117 = vld [vmem:[#allocation2 + $0x130] sm:$0xff]
    %v1118 = vld [vmem:[#allocation2 + $0x138] sm:$0xff]
    %v1119 = vld [vmem:[#allocation2 + $0x140] sm:$0xff]
    %v1120 = vld [vmem:[#allocation2 + $0x148] sm:$0xff]
    %v1121 = vld [vmem:[#allocation2 + $0x150] sm:$0xff]
    %v1122 = vld [vmem:[#allocation2 + $0x158] sm:$0xff]
    %v1123 = vld [vmem:[#allocation2 + $0x160] sm:$0xff]
    %v1124 = vld [vmem:[#allocation2 + $0x168] sm:$0xff]
    %v1125 = vld [vmem:[#allocation2 + $0x170] sm:$0xff]
    %v1126 = vld [vmem:[#allocation2 + $0x178] sm:$0xff]
    %v1127 = vld [vmem:[#allocation2 + $0x180] sm:$0xff]
    %v1128 = vld [vmem:[#allocation2 + $0x188] sm:$0xff]
    %v1129 = vld [vmem:[#allocation2 + $0x190] sm:$0xff]
    %v1130 = vld [vmem:[#allocation2 + $0x198] sm:$0xff]
    %v1131 = vld [vmem:[#allocation2 + $0x1a0] sm:$0xff]
    %v1132 = vld [vmem:[#allocation2 + $0x1a8] sm:$0xff]
    %v1133 = vld [vmem:[#allocation2 + $0x1b0] sm:$0xff]
    %v1134 = vld [vmem:[#allocation2 + $0x1b8] sm:$0xff]
    %v1135 = vld [vmem:[#allocation2 + $0x1c0] sm:$0xff]
    %v1136 = vld [vmem:[#allocation2 + $0x1c8] sm:$0xff]
    %v1137 = vld [vmem:[#allocation2 + $0x1d0] sm:$0xff]
    %v1138 = vld [vmem:[#allocation2 + $0x1d8] sm:$0xff]
    %v1139 = vld [vmem:[#allocation2 + $0x1e0] sm:$0xff]
    %v1140 = vld [vmem:[#allocation2 + $0x1e8] sm:$0xff]
    %v1141 = vld [vmem:[#allocation2 + $0x1f0] sm:$0xff]
    %v1142 = vld [vmem:[#allocation2 + $0x1f8] sm:$0xff]
    %v1143 = vpack.c.bf16 %v1080, %v1079
    %v1144 = vpack.c.bf16 %v1082, %v1081
    %v1145 = vpack.c.bf16 %v1084, %v1083
    %v1146 = vpack.c.bf16 %v1086, %v1085
    %v1147 = vpack.c.bf16 %v1088, %v1087
    %v1148 = vpack.c.bf16 %v1090, %v1089
    %v1149 = vpack.c.bf16 %v1092, %v1091
    %v1150 = vpack.c.bf16 %v1094, %v1093
    %v1151 = vpack.c.bf16 %v1096, %v1095
    %v1152 = vpack.c.bf16 %v1098, %v1097
    %v1153 = vpack.c.bf16 %v1100, %v1099
    %v1154 = vpack.c.bf16 %v1102, %v1101
    %v1155 = vpack.c.bf16 %v1104, %v1103
    %v1156 = vpack.c.bf16 %v1106, %v1105
    %v1157 = vpack.c.bf16 %v1108, %v1107
    %v1158 = vpack.c.bf16 %v1110, %v1109
    %v1159 = vpack.c.bf16 %v1112, %v1111
    %v1160 = vpack.c.bf16 %v1114, %v1113
    %v1161 = vpack.c.bf16 %v1116, %v1115
    %v1162 = vpack.c.bf16 %v1118, %v1117
    %v1163 = vpack.c.bf16 %v1120, %v1119
    %v1164 = vpack.c.bf16 %v1122, %v1121
    %v1165 = vpack.c.bf16 %v1124, %v1123
    %v1166 = vpack.c.bf16 %v1126, %v1125
    %v1167 = vpack.c.bf16 %v1128, %v1127
    %v1168 = vpack.c.bf16 %v1130, %v1129
    %v1169 = vpack.c.bf16 %v1132, %v1131
    %v1170 = vpack.c.bf16 %v1134, %v1133
    %v1171 = vpack.c.bf16 %v1136, %v1135
    %v1172 = vpack.c.bf16 %v1138, %v1137
    %v1173 = vpack.c.bf16 %v1140, %v1139
    %v1174 = vpack.c.bf16 %v1142, %v1141
    %v1207 = vunpack.c.l.b16 %v1143
    %v1208 = vunpack.c.h.b16 %v1143
    %v1209 = vunpack.c.l.b16 %v1144
    %v1210 = vunpack.c.h.b16 %v1144
    %v1211 = vunpack.c.l.b16 %v1145
    %v1212 = vunpack.c.h.b16 %v1145
    %v1213 = vunpack.c.l.b16 %v1146
    %v1214 = vunpack.c.h.b16 %v1146
    %v1215 = vunpack.c.l.b16 %v1147
    %v1216 = vunpack.c.h.b16 %v1147
    %v1217 = vunpack.c.l.b16 %v1148
    %v1218 = vunpack.c.h.b16 %v1148
    %v1219 = vunpack.c.l.b16 %v1149
    %v1220 = vunpack.c.h.b16 %v1149
    %v1221 = vunpack.c.l.b16 %v1150
    %v1222 = vunpack.c.h.b16 %v1150
    %v1223 = vunpack.c.l.b16 %v1151
    %v1224 = vunpack.c.h.b16 %v1151
    %v1225 = vunpack.c.l.b16 %v1152
    %v1226 = vunpack.c.h.b16 %v1152
    %v1227 = vunpack.c.l.b16 %v1153
    %v1228 = vunpack.c.h.b16 %v1153
    %v1229 = vunpack.c.l.b16 %v1154
    %v1230 = vunpack.c.h.b16 %v1154
    %v1231 = vunpack.c.l.b16 %v1155
    %v1232 = vunpack.c.h.b16 %v1155
    %v1233 = vunpack.c.l.b16 %v1156
    %v1234 = vunpack.c.h.b16 %v1156
    %v1235 = vunpack.c.l.b16 %v1157
    %v1236 = vunpack.c.h.b16 %v1157
    %v1237 = vunpack.c.l.b16 %v1158
    %v1238 = vunpack.c.h.b16 %v1158
    %v1239 = vunpack.c.l.b16 %v1159
    %v1240 = vunpack.c.h.b16 %v1159
    %v1241 = vunpack.c.l.b16 %v1160
    %v1242 = vunpack.c.h.b16 %v1160
    %v1243 = vunpack.c.l.b16 %v1161
    %v1244 = vunpack.c.h.b16 %v1161
    %v1245 = vunpack.c.l.b16 %v1162
    %v1246 = vunpack.c.h.b16 %v1162
    %v1247 = vunpack.c.l.b16 %v1163
    %v1248 = vunpack.c.h.b16 %v1163
    %v1249 = vunpack.c.l.b16 %v1164
    %v1250 = vunpack.c.h.b16 %v1164
    %v1251 = vunpack.c.l.b16 %v1165
    %v1252 = vunpack.c.h.b16 %v1165
    %v1253 = vunpack.c.l.b16 %v1166
    %v1254 = vunpack.c.h.b16 %v1166
    %v1255 = vunpack.c.l.b16 %v1167
    %v1256 = vunpack.c.h.b16 %v1167
    %v1257 = vunpack.c.l.b16 %v1168
    %v1258 = vunpack.c.h.b16 %v1168
    %v1259 = vunpack.c.l.b16 %v1169
    %v1260 = vunpack.c.h.b16 %v1169
    %v1261 = vunpack.c.l.b16 %v1170
    %v1262 = vunpack.c.h.b16 %v1170
    %v1263 = vunpack.c.l.b16 %v1171
    %v1264 = vunpack.c.h.b16 %v1171
    %v1265 = vunpack.c.l.b16 %v1172
    %v1266 = vunpack.c.h.b16 %v1172
    %v1267 = vunpack.c.l.b16 %v1173
    %v1268 = vunpack.c.h.b16 %v1173
    %v1269 = vunpack.c.l.b16 %v1174
    %v1270 = vunpack.c.h.b16 %v1174
    %v1271 = vpack.c.b16 %v1207, %v1207
    %v1272 = vpack.c.b16 %v1208, %v1208
    %v1273 = vpack.c.b16 %v1209, %v1209
    %v1274 = vpack.c.b16 %v1210, %v1210
    %v1275 = vpack.c.b16 %v1211, %v1211
    %v1276 = vpack.c.b16 %v1212, %v1212
    %v1277 = vpack.c.b16 %v1213, %v1213
    %v1278 = vpack.c.b16 %v1214, %v1214
    %v1279 = vpack.c.b16 %v1215, %v1215
    %v1280 = vpack.c.b16 %v1216, %v1216
    %v1281 = vpack.c.b16 %v1217, %v1217
    %v1282 = vpack.c.b16 %v1218, %v1218
    %v1283 = vpack.c.b16 %v1219, %v1219
    %v1284 = vpack.c.b16 %v1220, %v1220
    %v1285 = vpack.c.b16 %v1221, %v1221
    %v1286 = vpack.c.b16 %v1222, %v1222
    %v1287 = vpack.c.b16 %v1223, %v1223
    %v1288 = vpack.c.b16 %v1224, %v1224
    %v1289 = vpack.c.b16 %v1225, %v1225
    %v1290 = vpack.c.b16 %v1226, %v1226
    %v1291 = vpack.c.b16 %v1227, %v1227
    %v1292 = vpack.c.b16 %v1228, %v1228
    %v1293 = vpack.c.b16 %v1229, %v1229
    %v1294 = vpack.c.b16 %v1230, %v1230
    %v1295 = vpack.c.b16 %v1231, %v1231
    %v1296 = vpack.c.b16 %v1232, %v1232
    %v1297 = vpack.c.b16 %v1233, %v1233
    %v1298 = vpack.c.b16 %v1234, %v1234
    %v1299 = vpack.c.b16 %v1235, %v1235
    %v1300 = vpack.c.b16 %v1236, %v1236
    %v1301 = vpack.c.b16 %v1237, %v1237
    %v1302 = vpack.c.b16 %v1238, %v1238
    %v1303 = vpack.c.b16 %v1239, %v1239
    %v1304 = vpack.c.b16 %v1240, %v1240
    %v1305 = vpack.c.b16 %v1241, %v1241
    %v1306 = vpack.c.b16 %v1242, %v1242
    %v1307 = vpack.c.b16 %v1243, %v1243
    %v1308 = vpack.c.b16 %v1244, %v1244
    %v1309 = vpack.c.b16 %v1245, %v1245
    %v1310 = vpack.c.b16 %v1246, %v1246
    %v1311 = vpack.c.b16 %v1247, %v1247
    %v1312 = vpack.c.b16 %v1248, %v1248
    %v1313 = vpack.c.b16 %v1249, %v1249
    %v1314 = vpack.c.b16 %v1250, %v1250
    %v1315 = vpack.c.b16 %v1251, %v1251
    %v1316 = vpack.c.b16 %v1252, %v1252
    %v1317 = vpack.c.b16 %v1253, %v1253
    %v1318 = vpack.c.b16 %v1254, %v1254
    %v1319 = vpack.c.b16 %v1255, %v1255
    %v1320 = vpack.c.b16 %v1256, %v1256
    %v1321 = vpack.c.b16 %v1257, %v1257
    %v1322 = vpack.c.b16 %v1258, %v1258
    %v1323 = vpack.c.b16 %v1259, %v1259
    %v1324 = vpack.c.b16 %v1260, %v1260
    %v1325 = vpack.c.b16 %v1261, %v1261
    %v1326 = vpack.c.b16 %v1262, %v1262
    %v1327 = vpack.c.b16 %v1263, %v1263
    %v1328 = vpack.c.b16 %v1264, %v1264
    %v1329 = vpack.c.b16 %v1265, %v1265
    %v1330 = vpack.c.b16 %v1266, %v1266
    %v1331 = vpack.c.b16 %v1267, %v1267
    %v1332 = vpack.c.b16 %v1268, %v1268
    %v1333 = vpack.c.b16 %v1269, %v1269
    %v1334 = vpack.c.b16 %v1270, %v1270
    %1399 = vst [vmem:[%s2] sm:$0xf] %v1271
    %1400 = vst [vmem:[%s2 + $0x4] sm:$0xf] %v1272
    %1401 = vst [vmem:[%s2 + $0x8] sm:$0xf] %v1273
    %1402 = vst [vmem:[%s2 + $0xc] sm:$0xf] %v1274
    %1403 = vst [vmem:[%s2 + $0x10] sm:$0xf] %v1275
    %1404 = vst [vmem:[%s2 + $0x14] sm:$0xf] %v1276
    %1405 = vst [vmem:[%s2 + $0x18] sm:$0xf] %v1277
    %1406 = vst [vmem:[%s2 + $0x1c] sm:$0xf] %v1278
    %1407 = vst [vmem:[%s2 + $0x20] sm:$0xf] %v1279
    %1408 = vst [vmem:[%s2 + $0x24] sm:$0xf] %v1280
    %1409 = vst [vmem:[%s2 + $0x28] sm:$0xf] %v1281
    %1410 = vst [vmem:[%s2 + $0x2c] sm:$0xf] %v1282
    %1411 = vst [vmem:[%s2 + $0x30] sm:$0xf] %v1283
    %1412 = vst [vmem:[%s2 + $0x34] sm:$0xf] %v1284
    %1413 = vst [vmem:[%s2 + $0x38] sm:$0xf] %v1285
    %1414 = vst [vmem:[%s2 + $0x3c] sm:$0xf] %v1286
    %1415 = vst [vmem:[%s2 + $0x40] sm:$0xf] %v1287
    %1416 = vst [vmem:[%s2 + $0x44] sm:$0xf] %v1288
    %1417 = vst [vmem:[%s2 + $0x48] sm:$0xf] %v1289
    %1418 = vst [vmem:[%s2 + $0x4c] sm:$0xf] %v1290
    %1419 = vst [vmem:[%s2 + $0x50] sm:$0xf] %v1291
    %1420 = vst [vmem:[%s2 + $0x54] sm:$0xf] %v1292
    %1421 = vst [vmem:[%s2 + $0x58] sm:$0xf] %v1293
    %1422 = vst [vmem:[%s2 + $0x5c] sm:$0xf] %v1294
    %1423 = vst [vmem:[%s2 + $0x60] sm:$0xf] %v1295
    %1424 = vst [vmem:[%s2 + $0x64] sm:$0xf] %v1296
    %1425 = vst [vmem:[%s2 + $0x68] sm:$0xf] %v1297
    %1426 = vst [vmem:[%s2 + $0x6c] sm:$0xf] %v1298
    %1427 = vst [vmem:[%s2 + $0x70] sm:$0xf] %v1299
    %1428 = vst [vmem:[%s2 + $0x74] sm:$0xf] %v1300
    %1429 = vst [vmem:[%s2 + $0x78] sm:$0xf] %v1301
    %1430 = vst [vmem:[%s2 + $0x7c] sm:$0xf] %v1302
    %1431 = vst [vmem:[%s2 + $0x80] sm:$0xf] %v1303
    %1432 = vst [vmem:[%s2 + $0x84] sm:$0xf] %v1304
    %1433 = vst [vmem:[%s2 + $0x88] sm:$0xf] %v1305
    %1434 = vst [vmem:[%s2 + $0x8c] sm:$0xf] %v1306
    %1435 = vst [vmem:[%s2 + $0x90] sm:$0xf] %v1307
    %1436 = vst [vmem:[%s2 + $0x94] sm:$0xf] %v1308
    %1437 = vst [vmem:[%s2 + $0x98] sm:$0xf] %v1309
    %1438 = vst [vmem:[%s2 + $0x9c] sm:$0xf] %v1310
    %1439 = vst [vmem:[%s2 + $0xa0] sm:$0xf] %v1311
    %1440 = vst [vmem:[%s2 + $0xa4] sm:$0xf] %v1312
    %1441 = vst [vmem:[%s2 + $0xa8] sm:$0xf] %v1313
    %1442 = vst [vmem:[%s2 + $0xac] sm:$0xf] %v1314
    %1443 = vst [vmem:[%s2 + $0xb0] sm:$0xf] %v1315
    %1444 = vst [vmem:[%s2 + $0xb4] sm:$0xf] %v1316
    %1445 = vst [vmem:[%s2 + $0xb8] sm:$0xf] %v1317
    %1446 = vst [vmem:[%s2 + $0xbc] sm:$0xf] %v1318
    %1447 = vst [vmem:[%s2 + $0xc0] sm:$0xf] %v1319
    %1448 = vst [vmem:[%s2 + $0xc4] sm:$0xf] %v1320
    %1449 = vst [vmem:[%s2 + $0xc8] sm:$0xf] %v1321
    %1450 = vst [vmem:[%s2 + $0xcc] sm:$0xf] %v1322
    %1451 = vst [vmem:[%s2 + $0xd0] sm:$0xf] %v1323
    %1452 = vst [vmem:[%s2 + $0xd4] sm:$0xf] %v1324
    %1453 = vst [vmem:[%s2 + $0xd8] sm:$0xf] %v1325
    %1454 = vst [vmem:[%s2 + $0xdc] sm:$0xf] %v1326
    %1455 = vst [vmem:[%s2 + $0xe0] sm:$0xf] %v1327
    %1456 = vst [vmem:[%s2 + $0xe4] sm:$0xf] %v1328
    %1457 = vst [vmem:[%s2 + $0xe8] sm:$0xf] %v1329
    %1458 = vst [vmem:[%s2 + $0xec] sm:$0xf] %v1330
    %1459 = vst [vmem:[%s2 + $0xf0] sm:$0xf] %v1331
    %1460 = vst [vmem:[%s2 + $0xf4] sm:$0xf] %v1332
    %1461 = vst [vmem:[%s2 + $0xf8] sm:$0xf] %v1333
    %1462 = vst [vmem:[%s2 + $0xfc] sm:$0xf] %v1334
    %v1463 = vadd.f32 %v1079, %v1080
    %v1464 = vadd.f32 %v1463, %v1081
    %v1465 = vadd.f32 %v1464, %v1082
    %v1466 = vadd.f32 %v1465, %v1083
    %v1467 = vadd.f32 %v1466, %v1084
    %v1468 = vadd.f32 %v1467, %v1085
    %v1469 = vadd.f32 %v1468, %v1086
    %v1470 = vadd.f32 %v1469, %v1087
    %v1471 = vadd.f32 %v1470, %v1088
    %v1472 = vadd.f32 %v1471, %v1089
    %v1473 = vadd.f32 %v1472, %v1090
    %v1474 = vadd.f32 %v1473, %v1091
    %v1475 = vadd.f32 %v1474, %v1092
    %v1476 = vadd.f32 %v1475, %v1093
    %v1477 = vadd.f32 %v1476, %v1094
    %v1478 = vadd.f32 %v1477, %v1095
    %v1479 = vadd.f32 %v1478, %v1096
    %v1480 = vadd.f32 %v1479, %v1097
    %v1481 = vadd.f32 %v1480, %v1098
    %v1482 = vadd.f32 %v1481, %v1099
    %v1483 = vadd.f32 %v1482, %v1100
    %v1484 = vadd.f32 %v1483, %v1101
    %v1485 = vadd.f32 %v1484, %v1102
    %v1486 = vadd.f32 %v1485, %v1103
    %v1487 = vadd.f32 %v1486, %v1104
    %v1488 = vadd.f32 %v1487, %v1105
    %v1489 = vadd.f32 %v1488, %v1106
    %v1490 = vadd.f32 %v1489, %v1107
    %v1491 = vadd.f32 %v1490, %v1108
    %v1492 = vadd.f32 %v1491, %v1109
    %v1493 = vadd.f32 %v1492, %v1110
    %v1494 = vadd.f32 %v1493, %v1111
    %v1495 = vadd.f32 %v1494, %v1112
    %v1496 = vadd.f32 %v1495, %v1113
    %v1497 = vadd.f32 %v1496, %v1114
    %v1498 = vadd.f32 %v1497, %v1115
    %v1499 = vadd.f32 %v1498, %v1116
    %v1500 = vadd.f32 %v1499, %v1117
    %v1501 = vadd.f32 %v1500, %v1118
    %v1502 = vadd.f32 %v1501, %v1119
    %v1503 = vadd.f32 %v1502, %v1120
    %v1504 = vadd.f32 %v1503, %v1121
    %v1505 = vadd.f32 %v1504, %v1122
    %v1506 = vadd.f32 %v1505, %v1123
    %v1507 = vadd.f32 %v1506, %v1124
    %v1508 = vadd.f32 %v1507, %v1125
    %v1509 = vadd.f32 %v1508, %v1126
    %v1510 = vadd.f32 %v1509, %v1127
    %v1511 = vadd.f32 %v1510, %v1128
    %v1512 = vadd.f32 %v1511, %v1129
    %v1513 = vadd.f32 %v1512, %v1130
    %v1514 = vadd.f32 %v1513, %v1131
    %v1515 = vadd.f32 %v1514, %v1132
    %v1516 = vadd.f32 %v1515, %v1133
    %v1517 = vadd.f32 %v1516, %v1134
    %v1518 = vadd.f32 %v1517, %v1135
    %v1519 = vadd.f32 %v1518, %v1136
    %v1520 = vadd.f32 %v1519, %v1137
    %v1521 = vadd.f32 %v1520, %v1138
    %v1522 = vadd.f32 %v1521, %v1139
    %v1523 = vadd.f32 %v1522, %v1140
    %v1524 = vadd.f32 %v1523, %v1141
    %v1525 = vadd.f32 %v1524, %v1142
    %v1526 = vrot.slane %v1525, 4
    %v1527 = vadd.f32 %v1525, %v1526
    %v1528 = vrot.slane %v1527, 2
    %v1529 = vadd.f32 %v1527, %v1528
    %v1530 = vrot.slane %v1529, 1
    %v1531 = vadd.f32 %v1529, %v1530
    %v1532 = vmul.f32 %v1079, %v1079
    %v1533 = vmul.f32 %v1080, %v1080
    %v1534 = vmul.f32 %v1081, %v1081
    %v1535 = vmul.f32 %v1082, %v1082
    %v1536 = vmul.f32 %v1083, %v1083
    %v1537 = vmul.f32 %v1084, %v1084
    %v1538 = vmul.f32 %v1085, %v1085
    %v1539 = vmul.f32 %v1086, %v1086
    %v1540 = vmul.f32 %v1087, %v1087
    %v1541 = vmul.f32 %v1088, %v1088
    %v1542 = vmul.f32 %v1089, %v1089
    %v1543 = vmul.f32 %v1090, %v1090
    %v1544 = vmul.f32 %v1091, %v1091
    %v1545 = vmul.f32 %v1092, %v1092
    %v1546 = vmul.f32 %v1093, %v1093
    %v1547 = vmul.f32 %v1094, %v1094
    %v1548 = vmul.f32 %v1095, %v1095
    %v1549 = vmul.f32 %v1096, %v1096
    %v1550 = vmul.f32 %v1097, %v1097
    %v1551 = vmul.f32 %v1098, %v1098
    %v1552 = vmul.f32 %v1099, %v1099
    %v1553 = vmul.f32 %v1100, %v1100
    %v1554 = vmul.f32 %v1101, %v1101
    %v1555 = vmul.f32 %v1102, %v1102
    %v1556 = vmul.f32 %v1103, %v1103
    %v1557 = vmul.f32 %v1104, %v1104
    %v1558 = vmul.f32 %v1105, %v1105
    %v1559 = vmul.f32 %v1106, %v1106
    %v1560 = vmul.f32 %v1107, %v1107
    %v1561 = vmul.f32 %v1108, %v1108
    %v1562 = vmul.f32 %v1109, %v1109
    %v1563 = vmul.f32 %v1110, %v1110
    %v1564 = vmul.f32 %v1111, %v1111
    %v1565 = vmul.f32 %v1112, %v1112
    %v1566 = vmul.f32 %v1113, %v1113
    %v1567 = vmul.f32 %v1114, %v1114
    %v1568 = vmul.f32 %v1115, %v1115
    %v1569 = vmul.f32 %v1116, %v1116
    %v1570 = vmul.f32 %v1117, %v1117
    %v1571 = vmul.f32 %v1118, %v1118
    %v1572 = vmul.f32 %v1119, %v1119
    %v1573 = vmul.f32 %v1120, %v1120
    %v1574 = vmul.f32 %v1121, %v1121
    %v1575 = vmul.f32 %v1122, %v1122
    %v1576 = vmul.f32 %v1123, %v1123
    %v1577 = vmul.f32 %v1124, %v1124
    %v1578 = vmul.f32 %v1125, %v1125
    %v1579 = vmul.f32 %v1126, %v1126
    %v1580 = vmul.f32 %v1127, %v1127
    %v1581 = vmul.f32 %v1128, %v1128
    %v1582 = vmul.f32 %v1129, %v1129
    %v1583 = vmul.f32 %v1130, %v1130
    %v1584 = vmul.f32 %v1131, %v1131
    %v1585 = vmul.f32 %v1132, %v1132
    %v1586 = vmul.f32 %v1133, %v1133
    %v1587 = vmul.f32 %v1134, %v1134
    %v1588 = vmul.f32 %v1135, %v1135
    %v1589 = vmul.f32 %v1136, %v1136
    %v1590 = vmul.f32 %v1137, %v1137
    %v1591 = vmul.f32 %v1138, %v1138
    %v1592 = vmul.f32 %v1139, %v1139
    %v1593 = vmul.f32 %v1140, %v1140
    %v1594 = vmul.f32 %v1141, %v1141
    %v1595 = vmul.f32 %v1142, %v1142
    %v1596 = vadd.f32 %v1532, %v1533
    %v1597 = vadd.f32 %v1596, %v1534
    %v1598 = vadd.f32 %v1597, %v1535
    %v1599 = vadd.f32 %v1598, %v1536
    %v1600 = vadd.f32 %v1599, %v1537
    %v1601 = vadd.f32 %v1600, %v1538
    %v1602 = vadd.f32 %v1601, %v1539
    %v1603 = vadd.f32 %v1602, %v1540
    %v1604 = vadd.f32 %v1603, %v1541
    %v1605 = vadd.f32 %v1604, %v1542
    %v1606 = vadd.f32 %v1605, %v1543
    %v1607 = vadd.f32 %v1606, %v1544
    %v1608 = vadd.f32 %v1607, %v1545
    %v1609 = vadd.f32 %v1608, %v1546
    %v1610 = vadd.f32 %v1609, %v1547
    %v1611 = vadd.f32 %v1610, %v1548
    %v1612 = vadd.f32 %v1611, %v1549
    %v1613 = vadd.f32 %v1612, %v1550
    %v1614 = vadd.f32 %v1613, %v1551
    %v1615 = vadd.f32 %v1614, %v1552
    %v1616 = vadd.f32 %v1615, %v1553
    %v1617 = vadd.f32 %v1616, %v1554
    %v1618 = vadd.f32 %v1617, %v1555
    %v1619 = vadd.f32 %v1618, %v1556
    %v1620 = vadd.f32 %v1619, %v1557
    %v1621 = vadd.f32 %v1620, %v1558
    %v1622 = vadd.f32 %v1621, %v1559
    %v1623 = vadd.f32 %v1622, %v1560
    %v1624 = vadd.f32 %v1623, %v1561
    %v1625 = vadd.f32 %v1624, %v1562
    %v1626 = vadd.f32 %v1625, %v1563
    %v1627 = vadd.f32 %v1626, %v1564
    %v1628 = vadd.f32 %v1627, %v1565
    %v1629 = vadd.f32 %v1628, %v1566
    %v1630 = vadd.f32 %v1629, %v1567
    %v1631 = vadd.f32 %v1630, %v1568
    %v1632 = vadd.f32 %v1631, %v1569
    %v1633 = vadd.f32 %v1632, %v1570
    %v1634 = vadd.f32 %v1633, %v1571
    %v1635 = vadd.f32 %v1634, %v1572
    %v1636 = vadd.f32 %v1635, %v1573
    %v1637 = vadd.f32 %v1636, %v1574
    %v1638 = vadd.f32 %v1637, %v1575
    %v1639 = vadd.f32 %v1638, %v1576
    %v1640 = vadd.f32 %v1639, %v1577
    %v1641 = vadd.f32 %v1640, %v1578
    %v1642 = vadd.f32 %v1641, %v1579
    %v1643 = vadd.f32 %v1642, %v1580
    %v1644 = vadd.f32 %v1643, %v1581
    %v1645 = vadd.f32 %v1644, %v1582
    %v1646 = vadd.f32 %v1645, %v1583
    %v1647 = vadd.f32 %v1646, %v1584
    %v1648 = vadd.f32 %v1647, %v1585
    %v1649 = vadd.f32 %v1648, %v1586
    %v1650 = vadd.f32 %v1649, %v1587
    %v1651 = vadd.f32 %v1650, %v1588
    %v1652 = vadd.f32 %v1651, %v1589
    %v1653 = vadd.f32 %v1652, %v1590
    %v1654 = vadd.f32 %v1653, %v1591
    %v1655 = vadd.f32 %v1654, %v1592
    %v1656 = vadd.f32 %v1655, %v1593
    %v1657 = vadd.f32 %v1656, %v1594
    %v1658 = vadd.f32 %v1657, %v1595
    %v1659 = vrot.slane %v1658, 4
    %v1660 = vadd.f32 %v1658, %v1659
    %v1661 = vrot.slane %v1660, 2
    %v1662 = vadd.f32 %v1660, %v1661
    %v1663 = vrot.slane %v1662, 1
    %v1664 = vadd.f32 %v1662, %v1663
    %1665 = vst [vmem:[%s3] sm:$0xff] %v1531
    %1666 = vst [vmem:[%s4] sm:$0xff] %v1664
  $region17: #{global_generator_forward.19} parent=0 // pred_fallthru
    _
  // Predicated region
  $region18: #{global_generator_forward.19} parent=0 // pred_check
    _
  $region19: #{global_generator_forward.19} parent=0 // pred_check_branch
    %1668 = sbr.rel (0) target = $region21
  $region20: #{global_generator_forward.19} parent=0 // pred_region
    _
  $region21: #{global_generator_forward.19} parent=0 // pred_fallthru
    _
  // Predicated region
  $region22: #{global_generator_forward.19} parent=0 // pred_check
    _
  $region23: #{global_generator_forward.19} parent=0 // pred_check_branch
    %1670 = sbr.rel (0) target = $region25
  $region24: #{global_generator_forward.19} parent=0 // pred_region
    _
  $region25: #{global_generator_forward.19} parent=0 // pred_fallthru
    _
  // Predicated region
  $region26: #{global_generator_forward.19} parent=0 // pred_check
    _
  $region27: #{global_generator_forward.19} parent=0 // pred_check_branch
    %1672 = sbr.rel (0) target = $region29
  $region28: #{global_generator_forward.19} parent=0 // pred_region
    _
  $region29: #{global_generator_forward.19} parent=0 // pred_fallthru
    _
  // Predicated region
  $region30: #{global_generator_forward.19} parent=0 // pred_check
    _
  $region31: #{global_generator_forward.19} parent=0 // pred_check_branch
    %1674 = sbr.rel (0) target = $region33
  $region32: #{global_generator_forward.19} parent=0 // pred_region
    _
  $region33: #{global_generator_forward.19} parent=0 // pred_fallthru
    _
  // Predicated region
  $region34: #{global_generator_forward.19} parent=0 // pred_check
    _
  $region35: #{global_generator_forward.19} parent=0 // pred_check_branch
    %1676 = sbr.rel (0) target = $region37
  $region36: #{global_generator_forward.19} parent=0 // pred_region
    _
  $region37: #{global_generator_forward.19} parent=0 // pred_fallthru
    _
  // Predicated region
  $region38: #{global_generator_forward.19} parent=0 // pred_check
    _
  $region39: #{global_generator_forward.19} parent=0 // pred_check_branch
    %1678 = sbr.rel (0) target = $region41
  $region40: #{global_generator_forward.19} parent=0 // pred_region
    _
  $region41: #{global_generator_forward.19} parent=0 // pred_fallthru
    _

// kernel: global_generator_forward.21
$region0: #{global_generator_forward.21}
  #allocation0 [shape = 'u32[]', space=smem, size = 0x4, offset = 0x4, fixed_abs, tag = 'smem constant byte address 0x4 - core index']
  #allocation1 [shape = 'u32[144,128]{1,0:T(1,128)}', space=vmem, size = 0x12000, scoped, tag = 'internal scratch']
  #allocation2 [shape = 'f32[128,128]{1,0:T(8,128)}', space=vmem, size = 0x10000, scoped, tag = 'scratch operand']
  %s0 = inlined_call_operand.vmem [shape: bf16[128,128], index: 0, kind: input, shape index: {}]
  %s1 = inlined_call_operand.vmem [shape: bf16[128,128], index: 1, kind: input, shape index: {}]
  %s2 = inlined_call_operand.vmem [shape: bf16[128,128], index: 2, kind: output, shape index: {0}]
  %s3 = inlined_call_operand.vmem [shape: f32[8,128], index: 3, kind: output, shape index: {1}]
  %s4 = inlined_call_operand.vmem [shape: f32[8,128], index: 4, kind: output, shape index: {2}]
  %5 = xla_tuple %s2, %s3, %s4
  %s6 = sld [smem:[#allocation0]]
  $region42: #{global_generator_forward.21} parent=0
    _
  %s8 = ssub.s32 1, %s6
  %s9 = scalar_select 0, %s8, %s6
  // Predicated region
  $region2: #{global_generator_forward.21} parent=0 // pred_check
    _
  $region3: #{global_generator_forward.21} parent=0 // pred_check_branch
    %11 = sbr.rel (0) target = $region5
  $region4: #{global_generator_forward.21} parent=0 // pred_region
    _
  $region5: #{global_generator_forward.21} parent=0 // pred_fallthru
    _
  // Predicated region
  $region6: #{global_generator_forward.21} parent=0 // pred_check
    _
  $region7: #{global_generator_forward.21} parent=0 // pred_check_branch
    %13 = sbr.rel (0) target = $region9
  $region8: #{global_generator_forward.21} parent=0 // pred_region
    _
  $region9: #{global_generator_forward.21} parent=0 // pred_fallthru
    _
  %p15 = scmp.eq.s32.totalorder 0, 0
  // Predicated region
  $region10: #{global_generator_forward.21} parent=0 // pred_check
    %p16 = pneg %p15
  $region11: #{global_generator_forward.21} parent=0 // pred_check_branch
    %18 = sbr.rel (%p16) target = $region13
  $region12: #{global_generator_forward.21} parent=0 // pred_region
    %19 = vst [vmem:[#allocation2] sm:$0xff] 0.0
    %20 = vst [vmem:[#allocation2 + $0x8] sm:$0xff] 0.0
    %21 = vst [vmem:[#allocation2 + $0x10] sm:$0xff] 0.0
    %22 = vst [vmem:[#allocation2 + $0x18] sm:$0xff] 0.0
    %23 = vst [vmem:[#allocation2 + $0x20] sm:$0xff] 0.0
    %24 = vst [vmem:[#allocation2 + $0x28] sm:$0xff] 0.0
    %25 = vst [vmem:[#allocation2 + $0x30] sm:$0xff] 0.0
    %26 = vst [vmem:[#allocation2 + $0x38] sm:$0xff] 0.0
    %27 = vst [vmem:[#allocation2 + $0x40] sm:$0xff] 0.0
    %28 = vst [vmem:[#allocation2 + $0x48] sm:$0xff] 0.0
    %29 = vst [vmem:[#allocation2 + $0x50] sm:$0xff] 0.0
    %30 = vst [vmem:[#allocation2 + $0x58] sm:$0xff] 0.0
    %31 = vst [vmem:[#allocation2 + $0x60] sm:$0xff] 0.0
    %32 = vst [vmem:[#allocation2 + $0x68] sm:$0xff] 0.0
    %33 = vst [vmem:[#allocation2 + $0x70] sm:$0xff] 0.0
    %34 = vst [vmem:[#allocation2 + $0x78] sm:$0xff] 0.0
  $region13: #{global_generator_forward.21} parent=0 // pred_fallthru
    _
  %v35 = vld [vmem:[#allocation2] sm:$0xff]
  %v36 = vld [vmem:[#allocation2 + $0x8] sm:$0xff]
  %v37 = vld [vmem:[#allocation2 + $0x10] sm:$0xff]
  %v38 = vld [vmem:[#allocation2 + $0x18] sm:$0xff]
  %v39 = vld [vmem:[#allocation2 + $0x20] sm:$0xff]
  %v40 = vld [vmem:[#allocation2 + $0x28] sm:$0xff]
  %v41 = vld [vmem:[#allocation2 + $0x30] sm:$0xff]
  %v42 = vld [vmem:[#allocation2 + $0x38] sm:$0xff]
  %v43 = vld [vmem:[#allocation2 + $0x40] sm:$0xff]
  %v44 = vld [vmem:[#allocation2 + $0x48] sm:$0xff]
  %v45 = vld [vmem:[#allocation2 + $0x50] sm:$0xff]
  %v46 = vld [vmem:[#allocation2 + $0x58] sm:$0xff]
  %v47 = vld [vmem:[#allocation2 + $0x60] sm:$0xff]
  %v48 = vld [vmem:[#allocation2 + $0x68] sm:$0xff]
  %v49 = vld [vmem:[#allocation2 + $0x70] sm:$0xff]
  %v50 = vld [vmem:[#allocation2 + $0x78] sm:$0xff]
  %v51 = vld [vmem:[%s0] sm:$0xf]
  %v52 = vld [vmem:[%s0 + $0x4] sm:$0xf]
  %v53 = vld [vmem:[%s0 + $0x8] sm:$0xf]
  %v54 = vld [vmem:[%s0 + $0xc] sm:$0xf]
  %v55 = vld [vmem:[%s0 + $0x10] sm:$0xf]
  %v56 = vld [vmem:[%s0 + $0x14] sm:$0xf]
  %v57 = vld [vmem:[%s0 + $0x18] sm:$0xf]
  %v58 = vld [vmem:[%s0 + $0x1c] sm:$0xf]
  %v59 = vld [vmem:[%s0 + $0x20] sm:$0xf]
  %v60 = vld [vmem:[%s0 + $0x24] sm:$0xf]
  %v61 = vld [vmem:[%s0 + $0x28] sm:$0xf]
  %v62 = vld [vmem:[%s0 + $0x2c] sm:$0xf]
  %v63 = vld [vmem:[%s0 + $0x30] sm:$0xf]
  %v64 = vld [vmem:[%s0 + $0x34] sm:$0xf]
  %v65 = vld [vmem:[%s0 + $0x38] sm:$0xf]
  %v66 = vld [vmem:[%s0 + $0x3c] sm:$0xf]
  %v67 = vld [vmem:[%s1] sm:$0xf]
  %v68 = vld [vmem:[%s1 + $0x4] sm:$0xf]
  %v69 = vld [vmem:[%s1 + $0x8] sm:$0xf]
  %v70 = vld [vmem:[%s1 + $0xc] sm:$0xf]
  %v71 = vld [vmem:[%s1 + $0x10] sm:$0xf]
  %v72 = vld [vmem:[%s1 + $0x14] sm:$0xf]
  %v73 = vld [vmem:[%s1 + $0x18] sm:$0xf]
  %v74 = vld [vmem:[%s1 + $0x1c] sm:$0xf]
  %v75 = vld [vmem:[%s1 + $0x20] sm:$0xf]
  %v76 = vld [vmem:[%s1 + $0x24] sm:$0xf]
  %v77 = vld [vmem:[%s1 + $0x28] sm:$0xf]
  %v78 = vld [vmem:[%s1 + $0x2c] sm:$0xf]
  %v79 = vld [vmem:[%s1 + $0x30] sm:$0xf]
  %v80 = vld [vmem:[%s1 + $0x34] sm:$0xf]
  %v81 = vld [vmem:[%s1 + $0x38] sm:$0xf]
  %v82 = vld [vmem:[%s1 + $0x3c] sm:$0xf]
  %v99 = vunpack.c.l.b16 %v51
  %v100 = vunpack.c.l.b16 %v52
  %v101 = vunpack.c.l.b16 %v53
  %v102 = vunpack.c.l.b16 %v54
  %v103 = vunpack.c.l.b16 %v55
  %v104 = vunpack.c.l.b16 %v56
  %v105 = vunpack.c.l.b16 %v57
  %v106 = vunpack.c.l.b16 %v58
  %v107 = vunpack.c.l.b16 %v59
  %v108 = vunpack.c.l.b16 %v60
  %v109 = vunpack.c.l.b16 %v61
  %v110 = vunpack.c.l.b16 %v62
  %v111 = vunpack.c.l.b16 %v63
  %v112 = vunpack.c.l.b16 %v64
  %v113 = vunpack.c.l.b16 %v65
  %v114 = vunpack.c.l.b16 %v66
  %v115 = vpack.c.b16 %v100, %v99
  %v116 = vpack.c.b16 %v102, %v101
  %v117 = vpack.c.b16 %v104, %v103
  %v118 = vpack.c.b16 %v106, %v105
  %v119 = vpack.c.b16 %v108, %v107
  %v120 = vpack.c.b16 %v110, %v109
  %v121 = vpack.c.b16 %v112, %v111
  %v122 = vpack.c.b16 %v114, %v113
  %v147 = vunpack.c.l.b16 %v67
  %v148 = vunpack.c.l.b16 %v68
  %v149 = vunpack.c.l.b16 %v69
  %v150 = vunpack.c.l.b16 %v70
  %v151 = vunpack.c.l.b16 %v71
  %v152 = vunpack.c.l.b16 %v72
  %v153 = vunpack.c.l.b16 %v73
  %v154 = vunpack.c.l.b16 %v74
  %v155 = vunpack.c.l.b16 %v75
  %v156 = vunpack.c.l.b16 %v76
  %v157 = vunpack.c.l.b16 %v77
  %v158 = vunpack.c.l.b16 %v78
  %v159 = vunpack.c.l.b16 %v79
  %v160 = vunpack.c.l.b16 %v80
  %v161 = vunpack.c.l.b16 %v81
  %v162 = vunpack.c.l.b16 %v82
  %v163 = vpack.c.b16 %v148, %v147
  %v164 = vpack.c.b16 %v150, %v149
  %v165 = vpack.c.b16 %v152, %v151
  %v166 = vpack.c.b16 %v154, %v153
  %v167 = vpack.c.b16 %v156, %v155
  %v168 = vpack.c.b16 %v158, %v157
  %v169 = vpack.c.b16 %v160, %v159
  %v170 = vpack.c.b16 %v162, %v161
  %179 = vmatprep.subr.bf16.mxu0 0
  %180 = vmatpush1.bf16.msra.mxu0 %v170
  %181 = vmatprep.subr.bf16.mxu0 0
  %182 = vmatpush1.bf16.msra.mxu0 %v169
  %183 = vmatprep.subr.bf16.mxu0 0
  %184 = vmatpush1.bf16.msra.mxu0 %v168
  %185 = vmatprep.subr.bf16.mxu0 0
  %186 = vmatpush1.bf16.msra.mxu0 %v167
  %187 = vmatprep.subr.bf16.mxu0 0
  %188 = vmatpush1.bf16.msra.mxu0 %v166
  %189 = vmatprep.subr.bf16.mxu0 0
  %190 = vmatpush1.bf16.msra.mxu0 %v165
  %191 = vmatprep.subr.bf16.mxu0 0
  %192 = vmatpush1.bf16.msra.mxu0 %v164
  %193 = vmatprep.subr.bf16.mxu0 0
  %194 = vmatpush1.bf16.msra.mxu0 %v163
  %195 = vmatprep.subr.bf16.mxu0 0
  %196 = vmatpush2.bf16.msra.mxu0 0
  %197 = vmatprep.subr.bf16.mxu0 0
  %198 = vmatpush2.bf16.msra.mxu0 0
  %199 = vmatprep.subr.bf16.mxu0 0
  %200 = vmatpush2.bf16.msra.mxu0 0
  %201 = vmatprep.subr.bf16.mxu0 0
  %202 = vmatpush2.bf16.msra.mxu0 0
  %203 = vmatprep.subr.bf16.mxu0 0
  %204 = vmatpush2.bf16.msra.mxu0 0
  %205 = vmatprep.subr.bf16.mxu0 0
  %206 = vmatpush2.bf16.msra.mxu0 0
  %207 = vmatprep.subr.bf16.mxu0 0
  %208 = vmatpush2.bf16.msra.mxu0 0
  %209 = vmatprep.subr.bf16.mxu0 0
  %210 = vmatpush2.bf16.msra.mxu0 0
  %211 = vmatprep.mubr.bf16.mxu0 0
  %212 = vmatmul.mubr.bf16.gmra.mxu0 %v115
  %v213 = vpop.f32.mrf.mxu0
  %v214 = vadd.f32 0.0, %v213
  %v215 = vpop.f32.mrf.mxu0
  %v216 = vpop.f32.mrf.mxu0
  %v217 = vadd.f32 0.0, %v216
  %v218 = vpop.f32.mrf.mxu0
  %219 = vmatprep.mubr.bf16.mxu0 0
  %220 = vmatmul.mubr.bf16.gmra.mxu0 %v116
  %v221 = vpop.f32.mrf.mxu0
  %v222 = vadd.f32 0.0, %v221
  %v223 = vpop.f32.mrf.mxu0
  %v224 = vpop.f32.mrf.mxu0
  %v225 = vadd.f32 0.0, %v224
  %v226 = vpop.f32.mrf.mxu0
  %227 = vmatprep.mubr.bf16.mxu0 0
  %228 = vmatmul.mubr.bf16.gmra.mxu0 %v117
  %v229 = vpop.f32.mrf.mxu0
  %v230 = vadd.f32 0.0, %v229
  %v231 = vpop.f32.mrf.mxu0
  %v232 = vpop.f32.mrf.mxu0
  %v233 = vadd.f32 0.0, %v232
  %v234 = vpop.f32.mrf.mxu0
  %235 = vmatprep.mubr.bf16.mxu0 0
  %236 = vmatmul.mubr.bf16.gmra.mxu0 %v118
  %v237 = vpop.f32.mrf.mxu0
  %v238 = vadd.f32 0.0, %v237
  %v239 = vpop.f32.mrf.mxu0
  %v240 = vpop.f32.mrf.mxu0
  %v241 = vadd.f32 0.0, %v240
  %v242 = vpop.f32.mrf.mxu0
  %243 = vmatprep.mubr.bf16.mxu0 0
  %244 = vmatmul.mubr.bf16.gmra.mxu0 %v119
  %v245 = vpop.f32.mrf.mxu0
  %v246 = vadd.f32 0.0, %v245
  %v247 = vpop.f32.mrf.mxu0
  %v248 = vpop.f32.mrf.mxu0
  %v249 = vadd.f32 0.0, %v248
  %v250 = vpop.f32.mrf.mxu0
  %251 = vmatprep.mubr.bf16.mxu0 0
  %252 = vmatmul.mubr.bf16.gmra.mxu0 %v120
  %v253 = vpop.f32.mrf.mxu0
  %v254 = vadd.f32 0.0, %v253
  %v255 = vpop.f32.mrf.mxu0
  %v256 = vpop.f32.mrf.mxu0
  %v257 = vadd.f32 0.0, %v256
  %v258 = vpop.f32.mrf.mxu0
  %259 = vmatprep.mubr.bf16.mxu0 0
  %260 = vmatmul.mubr.bf16.gmra.mxu0 %v121
  %v261 = vpop.f32.mrf.mxu0
  %v262 = vadd.f32 0.0, %v261
  %v263 = vpop.f32.mrf.mxu0
  %v264 = vpop.f32.mrf.mxu0
  %v265 = vadd.f32 0.0, %v264
  %v266 = vpop.f32.mrf.mxu0
  %267 = vmatprep.mubr.bf16.mxu0 0
  %268 = vmatmul.mubr.bf16.gmra.mxu0 %v122
  %v269 = vpop.f32.mrf.mxu0
  %v270 = vadd.f32 0.0, %v269
  %v271 = vpop.f32.mrf.mxu0
  %v272 = vpop.f32.mrf.mxu0
  %v273 = vadd.f32 0.0, %v272
  %v274 = vpop.f32.mrf.mxu0
  %275 = vdwg.mxu0
  %v276 = vadd.f32 %v35, %v214
  %v277 = vadd.f32 %v36, %v217
  %v278 = vadd.f32 %v37, %v222
  %v279 = vadd.f32 %v38, %v225
  %v280 = vadd.f32 %v39, %v230
  %v281 = vadd.f32 %v40, %v233
  %v282 = vadd.f32 %v41, %v238
  %v283 = vadd.f32 %v42, %v241
  %v284 = vadd.f32 %v43, %v246
  %v285 = vadd.f32 %v44, %v249
  %v286 = vadd.f32 %v45, %v254
  %v287 = vadd.f32 %v46, %v257
  %v288 = vadd.f32 %v47, %v262
  %v289 = vadd.f32 %v48, %v265
  %v290 = vadd.f32 %v49, %v270
  %v291 = vadd.f32 %v50, %v273
  %292 = vst [vmem:[#allocation2] sm:$0xff] %v276
  %293 = vst [vmem:[#allocation2 + $0x8] sm:$0xff] %v277
  %294 = vst [vmem:[#allocation2 + $0x10] sm:$0xff] %v278
  %295 = vst [vmem:[#allocation2 + $0x18] sm:$0xff] %v279
  %296 = vst [vmem:[#allocation2 + $0x20] sm:$0xff] %v280
  %297 = vst [vmem:[#allocation2 + $0x28] sm:$0xff] %v281
  %298 = vst [vmem:[#allocation2 + $0x30] sm:$0xff] %v282
  %299 = vst [vmem:[#allocation2 + $0x38] sm:$0xff] %v283
  %300 = vst [vmem:[#allocation2 + $0x40] sm:$0xff] %v284
  %301 = vst [vmem:[#allocation2 + $0x48] sm:$0xff] %v285
  %302 = vst [vmem:[#allocation2 + $0x50] sm:$0xff] %v286
  %303 = vst [vmem:[#allocation2 + $0x58] sm:$0xff] %v287
  %304 = vst [vmem:[#allocation2 + $0x60] sm:$0xff] %v288
  %305 = vst [vmem:[#allocation2 + $0x68] sm:$0xff] %v289
  %306 = vst [vmem:[#allocation2 + $0x70] sm:$0xff] %v290
  %307 = vst [vmem:[#allocation2 + $0x78] sm:$0xff] %v291
  // Predicated region
  $region14: #{global_generator_forward.21} parent=0 // pred_check
    %p308 = pneg %p15
  $region15: #{global_generator_forward.21} parent=0 // pred_check_branch
    %310 = sbr.rel (%p308) target = $region17
  $region16: #{global_generator_forward.21} parent=0 // pred_region
    %v311 = vld [vmem:[#allocation2] sm:$0xff]
    %v312 = vld [vmem:[#allocation2 + $0x8] sm:$0xff]
    %v313 = vld [vmem:[#allocation2 + $0x10] sm:$0xff]
    %v314 = vld [vmem:[#allocation2 + $0x18] sm:$0xff]
    %v315 = vld [vmem:[#allocation2 + $0x20] sm:$0xff]
    %v316 = vld [vmem:[#allocation2 + $0x28] sm:$0xff]
    %v317 = vld [vmem:[#allocation2 + $0x30] sm:$0xff]
    %v318 = vld [vmem:[#allocation2 + $0x38] sm:$0xff]
    %v319 = vld [vmem:[#allocation2 + $0x40] sm:$0xff]
    %v320 = vld [vmem:[#allocation2 + $0x48] sm:$0xff]
    %v321 = vld [vmem:[#allocation2 + $0x50] sm:$0xff]
    %v322 = vld [vmem:[#allocation2 + $0x58] sm:$0xff]
    %v323 = vld [vmem:[#allocation2 + $0x60] sm:$0xff]
    %v324 = vld [vmem:[#allocation2 + $0x68] sm:$0xff]
    %v325 = vld [vmem:[#allocation2 + $0x70] sm:$0xff]
    %v326 = vld [vmem:[#allocation2 + $0x78] sm:$0xff]
    %v327 = vpack.c.bf16 %v312, %v311
    %v328 = vpack.c.bf16 %v314, %v313
    %v329 = vpack.c.bf16 %v316, %v315
    %v330 = vpack.c.bf16 %v318, %v317
    %v331 = vpack.c.bf16 %v320, %v319
    %v332 = vpack.c.bf16 %v322, %v321
    %v333 = vpack.c.bf16 %v324, %v323
    %v334 = vpack.c.bf16 %v326, %v325
    %v343 = vunpack.c.l.b16 %v327
    %v344 = vunpack.c.h.b16 %v327
    %v345 = vunpack.c.l.b16 %v328
    %v346 = vunpack.c.h.b16 %v328
    %v347 = vunpack.c.l.b16 %v329
    %v348 = vunpack.c.h.b16 %v329
    %v349 = vunpack.c.l.b16 %v330
    %v350 = vunpack.c.h.b16 %v330
    %v351 = vunpack.c.l.b16 %v331
    %v352 = vunpack.c.h.b16 %v331
    %v353 = vunpack.c.l.b16 %v332
    %v354 = vunpack.c.h.b16 %v332
    %v355 = vunpack.c.l.b16 %v333
    %v356 = vunpack.c.h.b16 %v333
    %v357 = vunpack.c.l.b16 %v334
    %v358 = vunpack.c.h.b16 %v334
    %v359 = vpack.c.b16 %v343, %v343
    %v360 = vpack.c.b16 %v344, %v344
    %v361 = vpack.c.b16 %v345, %v345
    %v362 = vpack.c.b16 %v346, %v346
    %v363 = vpack.c.b16 %v347, %v347
    %v364 = vpack.c.b16 %v348, %v348
    %v365 = vpack.c.b16 %v349, %v349
    %v366 = vpack.c.b16 %v350, %v350
    %v367 = vpack.c.b16 %v351, %v351
    %v368 = vpack.c.b16 %v352, %v352
    %v369 = vpack.c.b16 %v353, %v353
    %v370 = vpack.c.b16 %v354, %v354
    %v371 = vpack.c.b16 %v355, %v355
    %v372 = vpack.c.b16 %v356, %v356
    %v373 = vpack.c.b16 %v357, %v357
    %v374 = vpack.c.b16 %v358, %v358
    %391 = vst [vmem:[%s2] sm:$0xf] %v359
    %392 = vst [vmem:[%s2 + $0x4] sm:$0xf] %v360
    %393 = vst [vmem:[%s2 + $0x8] sm:$0xf] %v361
    %394 = vst [vmem:[%s2 + $0xc] sm:$0xf] %v362
    %395 = vst [vmem:[%s2 + $0x10] sm:$0xf] %v363
    %396 = vst [vmem:[%s2 + $0x14] sm:$0xf] %v364
    %397 = vst [vmem:[%s2 + $0x18] sm:$0xf] %v365
    %398 = vst [vmem:[%s2 + $0x1c] sm:$0xf] %v366
    %399 = vst [vmem:[%s2 + $0x20] sm:$0xf] %v367
    %400 = vst [vmem:[%s2 + $0x24] sm:$0xf] %v368
    %401 = vst [vmem:[%s2 + $0x28] sm:$0xf] %v369
    %402 = vst [vmem:[%s2 + $0x2c] sm:$0xf] %v370
    %403 = vst [vmem:[%s2 + $0x30] sm:$0xf] %v371
    %404 = vst [vmem:[%s2 + $0x34] sm:$0xf] %v372
    %405 = vst [vmem:[%s2 + $0x38] sm:$0xf] %v373
    %406 = vst [vmem:[%s2 + $0x3c] sm:$0xf] %v374
    %v407 = vadd.f32 %v311, %v312
    %v408 = vadd.f32 %v407, %v313
    %v409 = vadd.f32 %v408, %v314
    %v410 = vadd.f32 %v409, %v315
    %v411 = vadd.f32 %v410, %v316
    %v412 = vadd.f32 %v411, %v317
    %v413 = vadd.f32 %v412, %v318
    %v414 = vadd.f32 %v413, %v319
    %v415 = vadd.f32 %v414, %v320
    %v416 = vadd.f32 %v415, %v321
    %v417 = vadd.f32 %v416, %v322
    %v418 = vadd.f32 %v417, %v323
    %v419 = vadd.f32 %v418, %v324
    %v420 = vadd.f32 %v419, %v325
    %v421 = vadd.f32 %v420, %v326
    %v422 = vrot.slane %v421, 4
    %v423 = vadd.f32 %v421, %v422
    %v424 = vrot.slane %v423, 2
    %v425 = vadd.f32 %v423, %v424
    %v426 = vrot.slane %v425, 1
    %v427 = vadd.f32 %v425, %v426
    %v428 = vmul.f32 %v311, %v311
    %v429 = vmul.f32 %v312, %v312
    %v430 = vmul.f32 %v313, %v313
    %v431 = vmul.f32 %v314, %v314
    %v432 = vmul.f32 %v315, %v315
    %v433 = vmul.f32 %v316, %v316
    %v434 = vmul.f32 %v317, %v317
    %v435 = vmul.f32 %v318, %v318
    %v436 = vmul.f32 %v319, %v319
    %v437 = vmul.f32 %v320, %v320
    %v438 = vmul.f32 %v321, %v321
    %v439 = vmul.f32 %v322, %v322
    %v440 = vmul.f32 %v323, %v323
    %v441 = vmul.f32 %v324, %v324
    %v442 = vmul.f32 %v325, %v325
    %v443 = vmul.f32 %v326, %v326
    %v444 = vadd.f32 %v428, %v429
    %v445 = vadd.f32 %v444, %v430
    %v446 = vadd.f32 %v445, %v431
    %v447 = vadd.f32 %v446, %v432
    %v448 = vadd.f32 %v447, %v433
    %v449 = vadd.f32 %v448, %v434
    %v450 = vadd.f32 %v449, %v435
    %v451 = vadd.f32 %v450, %v436
    %v452 = vadd.f32 %v451, %v437
    %v453 = vadd.f32 %v452, %v438
    %v454 = vadd.f32 %v453, %v439
    %v455 = vadd.f32 %v454, %v440
    %v456 = vadd.f32 %v455, %v441
    %v457 = vadd.f32 %v456, %v442
    %v458 = vadd.f32 %v457, %v443
    %v459 = vrot.slane %v458, 4
    %v460 = vadd.f32 %v458, %v459
    %v461 = vrot.slane %v460, 2
    %v462 = vadd.f32 %v460, %v461
    %v463 = vrot.slane %v462, 1
    %v464 = vadd.f32 %v462, %v463
    %465 = vst [vmem:[%s3] sm:$0xff] %v427
    %466 = vst [vmem:[%s4] sm:$0xff] %v464
  $region17: #{global_generator_forward.21} parent=0 // pred_fallthru
    _
  // Predicated region
  $region18: #{global_generator_forward.21} parent=0 // pred_check
    _
  $region19: #{global_generator_forward.21} parent=0 // pred_check_branch
    %468 = sbr.rel (0) target = $region21
  $region20: #{global_generator_forward.21} parent=0 // pred_region
    _
  $region21: #{global_generator_forward.21} parent=0 // pred_fallthru
    _
  // Predicated region
  $region22: #{global_generator_forward.21} parent=0 // pred_check
    _
  $region23: #{global_generator_forward.21} parent=0 // pred_check_branch
    %470 = sbr.rel (0) target = $region25
  $region24: #{global_generator_forward.21} parent=0 // pred_region
    _
  $region25: #{global_generator_forward.21} parent=0 // pred_fallthru
    _
  // Predicated region
  $region26: #{global_generator_forward.21} parent=0 // pred_check
    _
  $region27: #{global_generator_forward.21} parent=0 // pred_check_branch
    %472 = sbr.rel (0) target = $region29
  $region28: #{global_generator_forward.21} parent=0 // pred_region
    _
  $region29: #{global_generator_forward.21} parent=0 // pred_fallthru
    _
  // Predicated region
  $region30: #{global_generator_forward.21} parent=0 // pred_check
    _
  $region31: #{global_generator_forward.21} parent=0 // pred_check_branch
    %474 = sbr.rel (0) target = $region33
  $region32: #{global_generator_forward.21} parent=0 // pred_region
    _
  $region33: #{global_generator_forward.21} parent=0 // pred_fallthru
    _
  // Predicated region
  $region34: #{global_generator_forward.21} parent=0 // pred_check
    _
  $region35: #{global_generator_forward.21} parent=0 // pred_check_branch
    %476 = sbr.rel (0) target = $region37
  $region36: #{global_generator_forward.21} parent=0 // pred_region
    _
  $region37: #{global_generator_forward.21} parent=0 // pred_fallthru
    _
  // Predicated region
  $region38: #{global_generator_forward.21} parent=0 // pred_check
    _
  $region39: #{global_generator_forward.21} parent=0 // pred_check_branch
    %478 = sbr.rel (0) target = $region41
  $region40: #{global_generator_forward.21} parent=0 // pred_region
    _
  $region41: #{global_generator_forward.21} parent=0 // pred_fallthru
    _

// kernel: tile.119
$region0: #{tile.119}
  #allocation0 [shape = 's32[1]{0}', space=sflag, size = 0x4, scoped, tag = 'scoped memory for tile.119']
  %s0 = inlined_call_operand.vmem [shape: f32[16], index: 0, kind: input, shape index: {}]
  %s1 = inlined_call_operand.vmem [shape: f32[8,16], index: 1, kind: output, shape index: {}]
  // Predicated region
  $region2: #{tile.119} parent=0 // pred_check
    _
  $region3: #{tile.119} parent=0 // pred_check_branch
    %3 = sbr.rel (0) target = $region5
  $region4: #{tile.119} parent=0 // pred_region
    _
  $region5: #{tile.119} parent=0 // pred_fallthru
    _
  %v4 = vld [vmem:[%s0] ss:$0 sm:$0xff]
  %5 = vst [vmem:[%s1] sm:$0xff] %v4

// kernel: tile.120
$region0: #{tile.120}
  %s0 = inlined_call_operand.vmem [shape: f32[8,16], index: 0, kind: input, shape index: {}]
  %s1 = inlined_call_operand.vmem [shape: f32[1,128], index: 1, kind: output, shape index: {}]
  $region1: #{tile.120} parent=0
    #allocation0 [shape = 'u8[4096]{0}', space=vmem, size = 0x1000, scoped, tag = 'scoped mem for output reshape']
    %v2 = vld [vmem:[%s0] sm:$0x1]
    %vm3 = vcmask 130048
    %4 = vst.msk [vmem:[#allocation0] sm:$0x1] %vm3, %v2
    %s5 = scalar_lea.vmem %s0, 7
    %v6 = vld [vmem:[%s5] sm:$0x1]
    %7 = vrot.lane.b32.xlu0 %v6, 112
    %v8 = vpop.permute.xlu0 %7
    %vm9 = vcmask 1048448
    %10 = vst.msk [vmem:[#allocation0] sm:$0x1] %vm9, %v8
    %s11 = scalar_lea.vmem %s0, 6
    %v12 = vld [vmem:[%s11] sm:$0x1]
    %13 = vrot.lane.b32.xlu0 %v12, 96
    %v14 = vpop.permute.xlu0 %13
    %vm15 = vcmask 917248
    %16 = vst.msk [vmem:[#allocation0] sm:$0x1] %vm15, %v14
    %s17 = scalar_lea.vmem %s0, 5
    %v18 = vld [vmem:[%s17] sm:$0x1]
    %19 = vrot.lane.b32.xlu0 %v18, 80
    %v20 = vpop.permute.xlu0 %19
    %vm21 = vcmask 786048
    %22 = vst.msk [vmem:[#allocation0] sm:$0x1] %vm21, %v20
    %s23 = scalar_lea.vmem %s0, 4
    %v24 = vld [vmem:[%s23] sm:$0x1]
    %25 = vrot.lane.b32.xlu0 %v24, 64
    %v26 = vpop.permute.xlu0 %25
    %vm27 = vcmask 654848
    %28 = vst.msk [vmem:[#allocation0] sm:$0x1] %vm27, %v26
    %s29 = scalar_lea.vmem %s0, 3
    %v30 = vld [vmem:[%s29] sm:$0x1]
    %31 = vrot.lane.b32.xlu0 %v30, 48
    %v32 = vpop.permute.xlu0 %31
    %vm33 = vcmask 523648
    %34 = vst.msk [vmem:[#allocation0] sm:$0x1] %vm33, %v32
    %s35 = scalar_lea.vmem %s0, 2
    %v36 = vld [vmem:[%s35] sm:$0x1]
    %37 = vrot.lane.b32.xlu0 %v36, 32
    %v38 = vpop.permute.xlu0 %37
    %vm39 = vcmask 392448
    %40 = vst.msk [vmem:[#allocation0] sm:$0x1] %vm39, %v38
    %s41 = scalar_lea.vmem %s0, 1
    %v42 = vld [vmem:[%s41] sm:$0x1]
    %43 = vrot.lane.b32.xlu0 %v42, 16
    %v44 = vpop.permute.xlu0 %43
    %vm45 = vcmask 261248
    %46 = vst.msk [vmem:[#allocation0] sm:$0x1] %vm45, %v44
    %s48 = sshll.u32 1, 1
    %s49 = ssub.s32 %s48, 1
    %v51 = vld [vmem:[#allocation0] sm:%s49]
    %s52 = sshll.u32 1, 1
    %s53 = ssub.s32 %s52, 1
    %54 = vst [vmem:[%s1] sm:%s53] %v51

// kernel: global_generator_forward.22
$region0: #{global_generator_forward.22}
  #allocation0 [shape = 'u32[]', space=smem, size = 0x4, offset = 0x4, fixed_abs, tag = 'smem constant byte address 0x4 - core index']
  #allocation1 [shape = 'u32[144,128]{1,0:T(1,128)}', space=vmem, size = 0x12000, scoped, tag = 'internal scratch']
  %s0 = inlined_call_operand.vmem [shape: bf16[16,128], index: 0, kind: input, shape index: {}]
  %s1 = inlined_call_operand.vmem [shape: f32[1,128], index: 1, kind: input, shape index: {}]
  %s2 = inlined_call_operand.vmem [shape: f32[1,128], index: 2, kind: input, shape index: {}]
  %s3 = inlined_call_operand.vmem [shape: bf16[16,128], index: 3, kind: output, shape index: {}]
  %s4 = sld [smem:[#allocation0]]
  $region22: #{global_generator_forward.22} parent=0
    _
  %s6 = ssub.s32 1, %s4
  %s7 = scalar_select 0, %s6, %s4
  // Predicated region
  $region2: #{global_generator_forward.22} parent=0 // pred_check
    _
  $region3: #{global_generator_forward.22} parent=0 // pred_check_branch
    %9 = sbr.rel (0) target = $region5
  $region4: #{global_generator_forward.22} parent=0 // pred_region
    _
  $region5: #{global_generator_forward.22} parent=0 // pred_fallthru
    _
  // Predicated region
  $region6: #{global_generator_forward.22} parent=0 // pred_check
    _
  $region7: #{global_generator_forward.22} parent=0 // pred_check_branch
    %11 = sbr.rel (0) target = $region9
  $region8: #{global_generator_forward.22} parent=0 // pred_region
    _
  $region9: #{global_generator_forward.22} parent=0 // pred_fallthru
    _
  // Predicated region
  $region10: #{global_generator_forward.22} parent=0 // pred_check
    _
  $region11: #{global_generator_forward.22} parent=0 // pred_check_branch
    %13 = sbr.rel (0) target = $region13
  $region12: #{global_generator_forward.22} parent=0 // pred_region
    _
  $region13: #{global_generator_forward.22} parent=0 // pred_fallthru
    _
  %v14 = vld [vmem:[%s0] sm:$0xf]
  %v15 = vld [vmem:[%s0 + $0x4] sm:$0xf]
  %v16 = vunpack.c.l.bf16 %v14
  %v17 = vunpack.c.l.bf16 %v15
  %v18 = vld [vmem:[%s1] sm:$0x1]
  %v20 = vlaneseq
  %v21 = vshrl.u32 %v20, 7
  %v22 = vsub.s32 0, %v21
  %v23 = vrot.slane %v18, %v22
  %v25 = vmul.f32 %v16, %v23
  %v26 = vmul.f32 %v17, %v23
  %v27 = vld [vmem:[%s2] sm:$0x1]
  %v29 = vlaneseq
  %v30 = vshrl.u32 %v29, 7
  %v31 = vsub.s32 0, %v30
  %v32 = vrot.slane %v27, %v31
  %v34 = vadd.f32 %v25, %v32
  %v35 = vadd.f32 %v26, %v32
  %v36 = vmax.f32 %v34, 0.0
  %v37 = vmax.f32 %v35, 0.0
  %v38 = vpack.c.bf16 %v37, %v36
  %v40 = vunpack.c.l.b16 %v38
  %v41 = vunpack.c.h.b16 %v38
  %v42 = vpack.c.b16 %v40, %v40
  %v43 = vpack.c.b16 %v41, %v41
  %46 = vst [vmem:[%s3] sm:$0xf] %v42
  %47 = vst [vmem:[%s3 + $0x4] sm:$0xf] %v43
  // Predicated region
  $region14: #{global_generator_forward.22} parent=0 // pred_check
    _
  $region15: #{global_generator_forward.22} parent=0 // pred_check_branch
    %49 = sbr.rel (0) target = $region17
  $region16: #{global_generator_forward.22} parent=0 // pred_region
    _
  $region17: #{global_generator_forward.22} parent=0 // pred_fallthru
    _
  // Predicated region
  $region18: #{global_generator_forward.22} parent=0 // pred_check
    _
  $region19: #{global_generator_forward.22} parent=0 // pred_check_branch
    %51 = sbr.rel (0) target = $region21
  $region20: #{global_generator_forward.22} parent=0 // pred_region
    _
  $region21: #{global_generator_forward.22} parent=0 // pred_fallthru
    _

// kernel: tile.129
$region0: #{tile.129}
  #allocation0 [shape = 's32[1]{0}', space=sflag, size = 0x4, scoped, tag = 'scoped memory for tile.129']
  %s0 = inlined_call_operand.vmem [shape: f32[32], index: 0, kind: input, shape index: {}]
  %s1 = inlined_call_operand.vmem [shape: f32[4,32], index: 1, kind: output, shape index: {}]
  // Predicated region
  $region2: #{tile.129} parent=0 // pred_check
    _
  $region3: #{tile.129} parent=0 // pred_check_branch
    %3 = sbr.rel (0) target = $region5
  $region4: #{tile.129} parent=0 // pred_region
    _
  $region5: #{tile.129} parent=0 // pred_fallthru
    _
  %v4 = vld [vmem:[%s0] ss:$0 sm:$0xff]
  %5 = vst [vmem:[%s1] sm:$0xf] %v4

// kernel: tile.130
$region0: #{tile.130}
  %s0 = inlined_call_operand.vmem [shape: f32[4,32], index: 0, kind: input, shape index: {}]
  %s1 = inlined_call_operand.vmem [shape: f32[1,128], index: 1, kind: output, shape index: {}]
  $region1: #{tile.130} parent=0
    #allocation0 [shape = 'u8[4096]{0}', space=vmem, size = 0x1000, scoped, tag = 'scoped mem for output reshape']
    #allocation1 [shape = 'u8[4096]{0}', space=vmem, size = 0x1000, scoped, tag = 'scoped mem for input reshape']
    %s3 = sshll.u32 1, 4
    %s4 = ssub.s32 %s3, 1
    %v5 = vld [vmem:[%s0] sm:%s4]
    %6 = vst [vmem:[#allocation1] sm:%s4] %v5
    %v7 = vld [vmem:[#allocation1] sm:$0x1]
    %vm8 = vcmask 261120
    %9 = vst.msk [vmem:[#allocation0] sm:$0x1] %vm8, %v7
    %s10 = scalar_lea.vmem [#allocation1], 3
    %v11 = vld [vmem:[%s10] sm:$0x1]
    %12 = vrot.lane.b32.xlu0 %v11, 96
    %v13 = vpop.permute.xlu0 %12
    %vm14 = vcmask 1048320
    %15 = vst.msk [vmem:[#allocation0] sm:$0x1] %vm14, %v13
    %s16 = scalar_lea.vmem [#allocation1], 2
    %v17 = vld [vmem:[%s16] sm:$0x1]
    %18 = vrot.lane.b32.xlu0 %v17, 64
    %v19 = vpop.permute.xlu0 %18
    %vm20 = vcmask 785920
    %21 = vst.msk [vmem:[#allocation0] sm:$0x1] %vm20, %v19
    %s22 = scalar_lea.vmem [#allocation1], 1
    %v23 = vld [vmem:[%s22] sm:$0x1]
    %24 = vrot.lane.b32.xlu0 %v23, 32
    %v25 = vpop.permute.xlu0 %24
    %vm26 = vcmask 523520
    %27 = vst.msk [vmem:[#allocation0] sm:$0x1] %vm26, %v25
    %s29 = sshll.u32 1, 1
    %s30 = ssub.s32 %s29, 1
    %v32 = vld [vmem:[#allocation0] sm:%s30]
    %s33 = sshll.u32 1, 1
    %s34 = ssub.s32 %s33, 1
    %35 = vst [vmem:[%s1] sm:%s34] %v32

// kernel: global_generator_forward.24
$region0: #{global_generator_forward.24}
  #allocation0 [shape = 'u32[]', space=smem, size = 0x4, offset = 0x4, fixed_abs, tag = 'smem constant byte address 0x4 - core index']
  #allocation1 [shape = 'u32[144,128]{1,0:T(1,128)}', space=vmem, size = 0x12000, scoped, tag = 'internal scratch']
  %s0 = inlined_call_operand.vmem [shape: bf16[8,128], index: 0, kind: input, shape index: {}]
  %s1 = inlined_call_operand.vmem [shape: f32[1,128], index: 1, kind: input, shape index: {}]
  %s2 = inlined_call_operand.vmem [shape: f32[1,128], index: 2, kind: input, shape index: {}]
  %s3 = inlined_call_operand.vmem [shape: bf16[8,128], index: 3, kind: output, shape index: {}]
  %s4 = sld [smem:[#allocation0]]
  $region22: #{global_generator_forward.24} parent=0
    _
  %s6 = ssub.s32 1, %s4
  %s7 = scalar_select 0, %s6, %s4
  // Predicated region
  $region2: #{global_generator_forward.24} parent=0 // pred_check
    _
  $region3: #{global_generator_forward.24} parent=0 // pred_check_branch
    %9 = sbr.rel (0) target = $region5
  $region4: #{global_generator_forward.24} parent=0 // pred_region
    _
  $region5: #{global_generator_forward.24} parent=0 // pred_fallthru
    _
  // Predicated region
  $region6: #{global_generator_forward.24} parent=0 // pred_check
    _
  $region7: #{global_generator_forward.24} parent=0 // pred_check_branch
    %11 = sbr.rel (0) target = $region9
  $region8: #{global_generator_forward.24} parent=0 // pred_region
    _
  $region9: #{global_generator_forward.24} parent=0 // pred_fallthru
    _
  // Predicated region
  $region10: #{global_generator_forward.24} parent=0 // pred_check
    _
  $region11: #{global_generator_forward.24} parent=0 // pred_check_branch
    %13 = sbr.rel (0) target = $region13
  $region12: #{global_generator_forward.24} parent=0 // pred_region
    _
  $region13: #{global_generator_forward.24} parent=0 // pred_fallthru
    _
  %v14 = vld [vmem:[%s0] sm:$0xf]
  %v15 = vunpack.c.l.bf16 %v14
  %v16 = vld [vmem:[%s1] sm:$0x1]
  %v18 = vlaneseq
  %v19 = vshrl.u32 %v18, 7
  %v20 = vsub.s32 0, %v19
  %v21 = vrot.slane %v16, %v20
  %v23 = vmul.f32 %v15, %v21
  %v24 = vld [vmem:[%s2] sm:$0x1]
  %v26 = vlaneseq
  %v27 = vshrl.u32 %v26, 7
  %v28 = vsub.s32 0, %v27
  %v29 = vrot.slane %v24, %v28
  %v31 = vadd.f32 %v23, %v29
  %v32 = vmax.f32 %v31, 0.0
  %v33 = vpack.c.bf16 %v32, %v32
  %34 = vst [vmem:[%s3] sm:$0xf] %v33
  // Predicated region
  $region14: #{global_generator_forward.24} parent=0 // pred_check
    _
  $region15: #{global_generator_forward.24} parent=0 // pred_check_branch
    %36 = sbr.rel (0) target = $region17
  $region16: #{global_generator_forward.24} parent=0 // pred_region
    _
  $region17: #{global_generator_forward.24} parent=0 // pred_fallthru
    _
  // Predicated region
  $region18: #{global_generator_forward.24} parent=0 // pred_check
    _
  $region19: #{global_generator_forward.24} parent=0 // pred_check_branch
    %38 = sbr.rel (0) target = $region21
  $region20: #{global_generator_forward.24} parent=0 // pred_region
    _
  $region21: #{global_generator_forward.24} parent=0 // pred_fallthru
    _

// kernel: global_generator_forward.23
$region0: #{global_generator_forward.23}
  #allocation0 [shape = 'u32[]', space=smem, size = 0x4, offset = 0x4, fixed_abs, tag = 'smem constant byte address 0x4 - core index']
  #allocation1 [shape = 'u32[144,128]{1,0:T(1,128)}', space=vmem, size = 0x12000, scoped, tag = 'internal scratch']
  #allocation2 [shape = 'f32[128,128]{1,0:T(8,128)}', space=vmem, size = 0x10000, scoped, tag = 'scratch operand']
  %s0 = inlined_call_operand.vmem [shape: bf16[128,256], index: 0, kind: input, shape index: {}]
  %s1 = inlined_call_operand.vmem [shape: bf16[256,128], index: 1, kind: input, shape index: {}]
  %s2 = inlined_call_operand.vmem [shape: bf16[128,128], index: 2, kind: output, shape index: {0}]
  %s3 = inlined_call_operand.vmem [shape: f32[8,128], index: 3, kind: output, shape index: {1}]
  %s4 = inlined_call_operand.vmem [shape: f32[8,128], index: 4, kind: output, shape index: {2}]
  %5 = xla_tuple %s2, %s3, %s4
  %s6 = sld [smem:[#allocation0]]
  $region42: #{global_generator_forward.23} parent=0
    _
  %s8 = ssub.s32 1, %s6
  %s9 = scalar_select 0, %s8, %s6
  // Predicated region
  $region2: #{global_generator_forward.23} parent=0 // pred_check
    _
  $region3: #{global_generator_forward.23} parent=0 // pred_check_branch
    %11 = sbr.rel (0) target = $region5
  $region4: #{global_generator_forward.23} parent=0 // pred_region
    _
  $region5: #{global_generator_forward.23} parent=0 // pred_fallthru
    _
  // Predicated region
  $region6: #{global_generator_forward.23} parent=0 // pred_check
    _
  $region7: #{global_generator_forward.23} parent=0 // pred_check_branch
    %13 = sbr.rel (0) target = $region9
  $region8: #{global_generator_forward.23} parent=0 // pred_region
    _
  $region9: #{global_generator_forward.23} parent=0 // pred_fallthru
    _
  %p15 = scmp.eq.s32.totalorder 0, 0
  // Predicated region
  $region10: #{global_generator_forward.23} parent=0 // pred_check
    %p16 = pneg %p15
  $region11: #{global_generator_forward.23} parent=0 // pred_check_branch
    %18 = sbr.rel (%p16) target = $region13
  $region12: #{global_generator_forward.23} parent=0 // pred_region
    %19 = vst [vmem:[#allocation2] sm:$0xff] 0.0
    %20 = vst [vmem:[#allocation2 + $0x8] sm:$0xff] 0.0
    %21 = vst [vmem:[#allocation2 + $0x10] sm:$0xff] 0.0
    %22 = vst [vmem:[#allocation2 + $0x18] sm:$0xff] 0.0
    %23 = vst [vmem:[#allocation2 + $0x20] sm:$0xff] 0.0
    %24 = vst [vmem:[#allocation2 + $0x28] sm:$0xff] 0.0
    %25 = vst [vmem:[#allocation2 + $0x30] sm:$0xff] 0.0
    %26 = vst [vmem:[#allocation2 + $0x38] sm:$0xff] 0.0
    %27 = vst [vmem:[#allocation2 + $0x40] sm:$0xff] 0.0
    %28 = vst [vmem:[#allocation2 + $0x48] sm:$0xff] 0.0
    %29 = vst [vmem:[#allocation2 + $0x50] sm:$0xff] 0.0
    %30 = vst [vmem:[#allocation2 + $0x58] sm:$0xff] 0.0
    %31 = vst [vmem:[#allocation2 + $0x60] sm:$0xff] 0.0
    %32 = vst [vmem:[#allocation2 + $0x68] sm:$0xff] 0.0
    %33 = vst [vmem:[#allocation2 + $0x70] sm:$0xff] 0.0
    %34 = vst [vmem:[#allocation2 + $0x78] sm:$0xff] 0.0
  $region13: #{global_generator_forward.23} parent=0 // pred_fallthru
    _
  %v35 = vld [vmem:[#allocation2] sm:$0xff]
  %v36 = vld [vmem:[#allocation2 + $0x8] sm:$0xff]
  %v37 = vld [vmem:[#allocation2 + $0x10] sm:$0xff]
  %v38 = vld [vmem:[#allocation2 + $0x18] sm:$0xff]
  %v39 = vld [vmem:[#allocation2 + $0x20] sm:$0xff]
  %v40 = vld [vmem:[#allocation2 + $0x28] sm:$0xff]
  %v41 = vld [vmem:[#allocation2 + $0x30] sm:$0xff]
  %v42 = vld [vmem:[#allocation2 + $0x38] sm:$0xff]
  %v43 = vld [vmem:[#allocation2 + $0x40] sm:$0xff]
  %v44 = vld [vmem:[#allocation2 + $0x48] sm:$0xff]
  %v45 = vld [vmem:[#allocation2 + $0x50] sm:$0xff]
  %v46 = vld [vmem:[#allocation2 + $0x58] sm:$0xff]
  %v47 = vld [vmem:[#allocation2 + $0x60] sm:$0xff]
  %v48 = vld [vmem:[#allocation2 + $0x68] sm:$0xff]
  %v49 = vld [vmem:[#allocation2 + $0x70] sm:$0xff]
  %v50 = vld [vmem:[#allocation2 + $0x78] sm:$0xff]
  %v51 = vld [vmem:[%s0] sm:$0xff]
  %v52 = vld [vmem:[%s0 + $0x8] sm:$0xff]
  %v53 = vld [vmem:[%s0 + $0x10] sm:$0xff]
  %v54 = vld [vmem:[%s0 + $0x18] sm:$0xff]
  %v55 = vld [vmem:[%s0 + $0x20] sm:$0xff]
  %v56 = vld [vmem:[%s0 + $0x28] sm:$0xff]
  %v57 = vld [vmem:[%s0 + $0x30] sm:$0xff]
  %v58 = vld [vmem:[%s0 + $0x38] sm:$0xff]
  %v59 = vld [vmem:[%s0 + $0x40] sm:$0xff]
  %v60 = vld [vmem:[%s0 + $0x48] sm:$0xff]
  %v61 = vld [vmem:[%s0 + $0x50] sm:$0xff]
  %v62 = vld [vmem:[%s0 + $0x58] sm:$0xff]
  %v63 = vld [vmem:[%s0 + $0x60] sm:$0xff]
  %v64 = vld [vmem:[%s0 + $0x68] sm:$0xff]
  %v65 = vld [vmem:[%s0 + $0x70] sm:$0xff]
  %v66 = vld [vmem:[%s0 + $0x78] sm:$0xff]
  %v67 = vld [vmem:[%s1] sm:$0xf]
  %v68 = vld [vmem:[%s1 + $0x4] sm:$0xf]
  %v69 = vld [vmem:[%s1 + $0x8] sm:$0xf]
  %v70 = vld [vmem:[%s1 + $0xc] sm:$0xf]
  %v71 = vld [vmem:[%s1 + $0x10] sm:$0xf]
  %v72 = vld [vmem:[%s1 + $0x14] sm:$0xf]
  %v73 = vld [vmem:[%s1 + $0x18] sm:$0xf]
  %v74 = vld [vmem:[%s1 + $0x1c] sm:$0xf]
  %v75 = vld [vmem:[%s1 + $0x20] sm:$0xf]
  %v76 = vld [vmem:[%s1 + $0x24] sm:$0xf]
  %v77 = vld [vmem:[%s1 + $0x28] sm:$0xf]
  %v78 = vld [vmem:[%s1 + $0x2c] sm:$0xf]
  %v79 = vld [vmem:[%s1 + $0x30] sm:$0xf]
  %v80 = vld [vmem:[%s1 + $0x34] sm:$0xf]
  %v81 = vld [vmem:[%s1 + $0x38] sm:$0xf]
  %v82 = vld [vmem:[%s1 + $0x3c] sm:$0xf]
  %v83 = vld [vmem:[%s1 + $0x40] sm:$0xf]
  %v84 = vld [vmem:[%s1 + $0x44] sm:$0xf]
  %v85 = vld [vmem:[%s1 + $0x48] sm:$0xf]
  %v86 = vld [vmem:[%s1 + $0x4c] sm:$0xf]
  %v87 = vld [vmem:[%s1 + $0x50] sm:$0xf]
  %v88 = vld [vmem:[%s1 + $0x54] sm:$0xf]
  %v89 = vld [vmem:[%s1 + $0x58] sm:$0xf]
  %v90 = vld [vmem:[%s1 + $0x5c] sm:$0xf]
  %v91 = vld [vmem:[%s1 + $0x60] sm:$0xf]
  %v92 = vld [vmem:[%s1 + $0x64] sm:$0xf]
  %v93 = vld [vmem:[%s1 + $0x68] sm:$0xf]
  %v94 = vld [vmem:[%s1 + $0x6c] sm:$0xf]
  %v95 = vld [vmem:[%s1 + $0x70] sm:$0xf]
  %v96 = vld [vmem:[%s1 + $0x74] sm:$0xf]
  %v97 = vld [vmem:[%s1 + $0x78] sm:$0xf]
  %v98 = vld [vmem:[%s1 + $0x7c] sm:$0xf]
  %v115 = vunpack.c.l.b16 %v51
  %v116 = vunpack.c.h.b16 %v51
  %v117 = vunpack.c.l.b16 %v52
  %v118 = vunpack.c.h.b16 %v52
  %v119 = vunpack.c.l.b16 %v53
  %v120 = vunpack.c.h.b16 %v53
  %v121 = vunpack.c.l.b16 %v54
  %v122 = vunpack.c.h.b16 %v54
  %v123 = vunpack.c.l.b16 %v55
  %v124 = vunpack.c.h.b16 %v55
  %v125 = vunpack.c.l.b16 %v56
  %v126 = vunpack.c.h.b16 %v56
  %v127 = vunpack.c.l.b16 %v57
  %v128 = vunpack.c.h.b16 %v57
  %v129 = vunpack.c.l.b16 %v58
  %v130 = vunpack.c.h.b16 %v58
  %v131 = vunpack.c.l.b16 %v59
  %v132 = vunpack.c.h.b16 %v59
  %v133 = vunpack.c.l.b16 %v60
  %v134 = vunpack.c.h.b16 %v60
  %v135 = vunpack.c.l.b16 %v61
  %v136 = vunpack.c.h.b16 %v61
  %v137 = vunpack.c.l.b16 %v62
  %v138 = vunpack.c.h.b16 %v62
  %v139 = vunpack.c.l.b16 %v63
  %v140 = vunpack.c.h.b16 %v63
  %v141 = vunpack.c.l.b16 %v64
  %v142 = vunpack.c.h.b16 %v64
  %v143 = vunpack.c.l.b16 %v65
  %v144 = vunpack.c.h.b16 %v65
  %v145 = vunpack.c.l.b16 %v66
  %v146 = vunpack.c.h.b16 %v66
  %v147 = vpack.c.b16 %v117, %v115
  %v148 = vpack.c.b16 %v118, %v116
  %v149 = vpack.c.b16 %v121, %v119
  %v150 = vpack.c.b16 %v122, %v120
  %v151 = vpack.c.b16 %v125, %v123
  %v152 = vpack.c.b16 %v126, %v124
  %v153 = vpack.c.b16 %v129, %v127
  %v154 = vpack.c.b16 %v130, %v128
  %v155 = vpack.c.b16 %v133, %v131
  %v156 = vpack.c.b16 %v134, %v132
  %v157 = vpack.c.b16 %v137, %v135
  %v158 = vpack.c.b16 %v138, %v136
  %v159 = vpack.c.b16 %v141, %v139
  %v160 = vpack.c.b16 %v142, %v140
  %v161 = vpack.c.b16 %v145, %v143
  %v162 = vpack.c.b16 %v146, %v144
  %v211 = vunpack.c.l.b16 %v67
  %v212 = vunpack.c.l.b16 %v68
  %v213 = vunpack.c.l.b16 %v69
  %v214 = vunpack.c.l.b16 %v70
  %v215 = vunpack.c.l.b16 %v71
  %v216 = vunpack.c.l.b16 %v72
  %v217 = vunpack.c.l.b16 %v73
  %v218 = vunpack.c.l.b16 %v74
  %v219 = vunpack.c.l.b16 %v75
  %v220 = vunpack.c.l.b16 %v76
  %v221 = vunpack.c.l.b16 %v77
  %v222 = vunpack.c.l.b16 %v78
  %v223 = vunpack.c.l.b16 %v79
  %v224 = vunpack.c.l.b16 %v80
  %v225 = vunpack.c.l.b16 %v81
  %v226 = vunpack.c.l.b16 %v82
  %v227 = vunpack.c.l.b16 %v83
  %v228 = vunpack.c.l.b16 %v84
  %v229 = vunpack.c.l.b16 %v85
  %v230 = vunpack.c.l.b16 %v86
  %v231 = vunpack.c.l.b16 %v87
  %v232 = vunpack.c.l.b16 %v88
  %v233 = vunpack.c.l.b16 %v89
  %v234 = vunpack.c.l.b16 %v90
  %v235 = vunpack.c.l.b16 %v91
  %v236 = vunpack.c.l.b16 %v92
  %v237 = vunpack.c.l.b16 %v93
  %v238 = vunpack.c.l.b16 %v94
  %v239 = vunpack.c.l.b16 %v95
  %v240 = vunpack.c.l.b16 %v96
  %v241 = vunpack.c.l.b16 %v97
  %v242 = vunpack.c.l.b16 %v98
  %v243 = vpack.c.b16 %v212, %v211
  %v244 = vpack.c.b16 %v214, %v213
  %v245 = vpack.c.b16 %v216, %v215
  %v246 = vpack.c.b16 %v218, %v217
  %v247 = vpack.c.b16 %v220, %v219
  %v248 = vpack.c.b16 %v222, %v221
  %v249 = vpack.c.b16 %v224, %v223
  %v250 = vpack.c.b16 %v226, %v225
  %v251 = vpack.c.b16 %v228, %v227
  %v252 = vpack.c.b16 %v230, %v229
  %v253 = vpack.c.b16 %v232, %v231
  %v254 = vpack.c.b16 %v234, %v233
  %v255 = vpack.c.b16 %v236, %v235
  %v256 = vpack.c.b16 %v238, %v237
  %v257 = vpack.c.b16 %v240, %v239
  %v258 = vpack.c.b16 %v242, %v241
  %275 = vmatprep.subr.bf16.mxu0 0
  %276 = vmatpush1.bf16.msra.mxu0 %v250
  %277 = vmatprep.subr.bf16.mxu0 0
  %278 = vmatpush1.bf16.msra.mxu0 %v249
  %279 = vmatprep.subr.bf16.mxu0 0
  %280 = vmatpush1.bf16.msra.mxu0 %v248
  %281 = vmatprep.subr.bf16.mxu0 0
  %282 = vmatpush1.bf16.msra.mxu0 %v247
  %283 = vmatprep.subr.bf16.mxu0 0
  %284 = vmatpush1.bf16.msra.mxu0 %v246
  %285 = vmatprep.subr.bf16.mxu0 0
  %286 = vmatpush1.bf16.msra.mxu0 %v245
  %287 = vmatprep.subr.bf16.mxu0 0
  %288 = vmatpush1.bf16.msra.mxu0 %v244
  %289 = vmatprep.subr.bf16.mxu0 0
  %290 = vmatpush1.bf16.msra.mxu0 %v243
  %291 = vmatprep.subr.bf16.mxu0 0
  %292 = vmatpush2.bf16.msra.mxu0 %v258
  %293 = vmatprep.subr.bf16.mxu0 0
  %294 = vmatpush2.bf16.msra.mxu0 %v257
  %295 = vmatprep.subr.bf16.mxu0 0
  %296 = vmatpush2.bf16.msra.mxu0 %v256
  %297 = vmatprep.subr.bf16.mxu0 0
  %298 = vmatpush2.bf16.msra.mxu0 %v255
  %299 = vmatprep.subr.bf16.mxu0 0
  %300 = vmatpush2.bf16.msra.mxu0 %v254
  %301 = vmatprep.subr.bf16.mxu0 0
  %302 = vmatpush2.bf16.msra.mxu0 %v253
  %303 = vmatprep.subr.bf16.mxu0 0
  %304 = vmatpush2.bf16.msra.mxu0 %v252
  %305 = vmatprep.subr.bf16.mxu0 0
  %306 = vmatpush2.bf16.msra.mxu0 %v251
  %307 = vmatprep.mubr.bf16.mxu0 %v148
  %308 = vmatmul.mubr.bf16.gmra.mxu0 %v147
  %v309 = vpop.f32.mrf.mxu0
  %v310 = vadd.f32 0.0, %v309
  %v311 = vpop.f32.mrf.mxu0
  %v312 = vpop.f32.mrf.mxu0
  %v313 = vadd.f32 0.0, %v312
  %v314 = vpop.f32.mrf.mxu0
  %315 = vmatprep.mubr.bf16.mxu0 %v150
  %316 = vmatmul.mubr.bf16.gmra.mxu0 %v149
  %v317 = vpop.f32.mrf.mxu0
  %v318 = vadd.f32 0.0, %v317
  %v319 = vpop.f32.mrf.mxu0
  %v320 = vpop.f32.mrf.mxu0
  %v321 = vadd.f32 0.0, %v320
  %v322 = vpop.f32.mrf.mxu0
  %323 = vmatprep.mubr.bf16.mxu0 %v152
  %324 = vmatmul.mubr.bf16.gmra.mxu0 %v151
  %v325 = vpop.f32.mrf.mxu0
  %v326 = vadd.f32 0.0, %v325
  %v327 = vpop.f32.mrf.mxu0
  %v328 = vpop.f32.mrf.mxu0
  %v329 = vadd.f32 0.0, %v328
  %v330 = vpop.f32.mrf.mxu0
  %331 = vmatprep.mubr.bf16.mxu0 %v154
  %332 = vmatmul.mubr.bf16.gmra.mxu0 %v153
  %v333 = vpop.f32.mrf.mxu0
  %v334 = vadd.f32 0.0, %v333
  %v335 = vpop.f32.mrf.mxu0
  %v336 = vpop.f32.mrf.mxu0
  %v337 = vadd.f32 0.0, %v336
  %v338 = vpop.f32.mrf.mxu0
  %339 = vmatprep.mubr.bf16.mxu0 %v156
  %340 = vmatmul.mubr.bf16.gmra.mxu0 %v155
  %v341 = vpop.f32.mrf.mxu0
  %v342 = vadd.f32 0.0, %v341
  %v343 = vpop.f32.mrf.mxu0
  %v344 = vpop.f32.mrf.mxu0
  %v345 = vadd.f32 0.0, %v344
  %v346 = vpop.f32.mrf.mxu0
  %347 = vmatprep.mubr.bf16.mxu0 %v158
  %348 = vmatmul.mubr.bf16.gmra.mxu0 %v157
  %v349 = vpop.f32.mrf.mxu0
  %v350 = vadd.f32 0.0, %v349
  %v351 = vpop.f32.mrf.mxu0
  %v352 = vpop.f32.mrf.mxu0
  %v353 = vadd.f32 0.0, %v352
  %v354 = vpop.f32.mrf.mxu0
  %355 = vmatprep.mubr.bf16.mxu0 %v160
  %356 = vmatmul.mubr.bf16.gmra.mxu0 %v159
  %v357 = vpop.f32.mrf.mxu0
  %v358 = vadd.f32 0.0, %v357
  %v359 = vpop.f32.mrf.mxu0
  %v360 = vpop.f32.mrf.mxu0
  %v361 = vadd.f32 0.0, %v360
  %v362 = vpop.f32.mrf.mxu0
  %363 = vmatprep.mubr.bf16.mxu0 %v162
  %364 = vmatmul.mubr.bf16.gmra.mxu0 %v161
  %v365 = vpop.f32.mrf.mxu0
  %v366 = vadd.f32 0.0, %v365
  %v367 = vpop.f32.mrf.mxu0
  %v368 = vpop.f32.mrf.mxu0
  %v369 = vadd.f32 0.0, %v368
  %v370 = vpop.f32.mrf.mxu0
  %371 = vdwg.mxu0
  %v372 = vadd.f32 %v35, %v310
  %v373 = vadd.f32 %v36, %v313
  %v374 = vadd.f32 %v37, %v318
  %v375 = vadd.f32 %v38, %v321
  %v376 = vadd.f32 %v39, %v326
  %v377 = vadd.f32 %v40, %v329
  %v378 = vadd.f32 %v41, %v334
  %v379 = vadd.f32 %v42, %v337
  %v380 = vadd.f32 %v43, %v342
  %v381 = vadd.f32 %v44, %v345
  %v382 = vadd.f32 %v45, %v350
  %v383 = vadd.f32 %v46, %v353
  %v384 = vadd.f32 %v47, %v358
  %v385 = vadd.f32 %v48, %v361
  %v386 = vadd.f32 %v49, %v366
  %v387 = vadd.f32 %v50, %v369
  %388 = vst [vmem:[#allocation2] sm:$0xff] %v372
  %389 = vst [vmem:[#allocation2 + $0x8] sm:$0xff] %v373
  %390 = vst [vmem:[#allocation2 + $0x10] sm:$0xff] %v374
  %391 = vst [vmem:[#allocation2 + $0x18] sm:$0xff] %v375
  %392 = vst [vmem:[#allocation2 + $0x20] sm:$0xff] %v376
  %393 = vst [vmem:[#allocation2 + $0x28] sm:$0xff] %v377
  %394 = vst [vmem:[#allocation2 + $0x30] sm:$0xff] %v378
  %395 = vst [vmem:[#allocation2 + $0x38] sm:$0xff] %v379
  %396 = vst [vmem:[#allocation2 + $0x40] sm:$0xff] %v380
  %397 = vst [vmem:[#allocation2 + $0x48] sm:$0xff] %v381
  %398 = vst [vmem:[#allocation2 + $0x50] sm:$0xff] %v382
  %399 = vst [vmem:[#allocation2 + $0x58] sm:$0xff] %v383
  %400 = vst [vmem:[#allocation2 + $0x60] sm:$0xff] %v384
  %401 = vst [vmem:[#allocation2 + $0x68] sm:$0xff] %v385
  %402 = vst [vmem:[#allocation2 + $0x70] sm:$0xff] %v386
  %403 = vst [vmem:[#allocation2 + $0x78] sm:$0xff] %v387
  // Predicated region
  $region14: #{global_generator_forward.23} parent=0 // pred_check
    %p404 = pneg %p15
  $region15: #{global_generator_forward.23} parent=0 // pred_check_branch
    %406 = sbr.rel (%p404) target = $region17
  $region16: #{global_generator_forward.23} parent=0 // pred_region
    %v407 = vld [vmem:[#allocation2] sm:$0xff]
    %v408 = vld [vmem:[#allocation2 + $0x8] sm:$0xff]
    %v409 = vld [vmem:[#allocation2 + $0x10] sm:$0xff]
    %v410 = vld [vmem:[#allocation2 + $0x18] sm:$0xff]
    %v411 = vld [vmem:[#allocation2 + $0x20] sm:$0xff]
    %v412 = vld [vmem:[#allocation2 + $0x28] sm:$0xff]
    %v413 = vld [vmem:[#allocation2 + $0x30] sm:$0xff]
    %v414 = vld [vmem:[#allocation2 + $0x38] sm:$0xff]
    %v415 = vld [vmem:[#allocation2 + $0x40] sm:$0xff]
    %v416 = vld [vmem:[#allocation2 + $0x48] sm:$0xff]
    %v417 = vld [vmem:[#allocation2 + $0x50] sm:$0xff]
    %v418 = vld [vmem:[#allocation2 + $0x58] sm:$0xff]
    %v419 = vld [vmem:[#allocation2 + $0x60] sm:$0xff]
    %v420 = vld [vmem:[#allocation2 + $0x68] sm:$0xff]
    %v421 = vld [vmem:[#allocation2 + $0x70] sm:$0xff]
    %v422 = vld [vmem:[#allocation2 + $0x78] sm:$0xff]
    %v423 = vpack.c.bf16 %v408, %v407
    %v424 = vpack.c.bf16 %v410, %v409
    %v425 = vpack.c.bf16 %v412, %v411
    %v426 = vpack.c.bf16 %v414, %v413
    %v427 = vpack.c.bf16 %v416, %v415
    %v428 = vpack.c.bf16 %v418, %v417
    %v429 = vpack.c.bf16 %v420, %v419
    %v430 = vpack.c.bf16 %v422, %v421
    %v439 = vunpack.c.l.b16 %v423
    %v440 = vunpack.c.h.b16 %v423
    %v441 = vunpack.c.l.b16 %v424
    %v442 = vunpack.c.h.b16 %v424
    %v443 = vunpack.c.l.b16 %v425
    %v444 = vunpack.c.h.b16 %v425
    %v445 = vunpack.c.l.b16 %v426
    %v446 = vunpack.c.h.b16 %v426
    %v447 = vunpack.c.l.b16 %v427
    %v448 = vunpack.c.h.b16 %v427
    %v449 = vunpack.c.l.b16 %v428
    %v450 = vunpack.c.h.b16 %v428
    %v451 = vunpack.c.l.b16 %v429
    %v452 = vunpack.c.h.b16 %v429
    %v453 = vunpack.c.l.b16 %v430
    %v454 = vunpack.c.h.b16 %v430
    %v455 = vpack.c.b16 %v439, %v439
    %v456 = vpack.c.b16 %v440, %v440
    %v457 = vpack.c.b16 %v441, %v441
    %v458 = vpack.c.b16 %v442, %v442
    %v459 = vpack.c.b16 %v443, %v443
    %v460 = vpack.c.b16 %v444, %v444
    %v461 = vpack.c.b16 %v445, %v445
    %v462 = vpack.c.b16 %v446, %v446
    %v463 = vpack.c.b16 %v447, %v447
    %v464 = vpack.c.b16 %v448, %v448
    %v465 = vpack.c.b16 %v449, %v449
    %v466 = vpack.c.b16 %v450, %v450
    %v467 = vpack.c.b16 %v451, %v451
    %v468 = vpack.c.b16 %v452, %v452
    %v469 = vpack.c.b16 %v453, %v453
    %v470 = vpack.c.b16 %v454, %v454
    %487 = vst [vmem:[%s2] sm:$0xf] %v455
    %488 = vst [vmem:[%s2 + $0x4] sm:$0xf] %v456
    %489 = vst [vmem:[%s2 + $0x8] sm:$0xf] %v457
    %490 = vst [vmem:[%s2 + $0xc] sm:$0xf] %v458
    %491 = vst [vmem:[%s2 + $0x10] sm:$0xf] %v459
    %492 = vst [vmem:[%s2 + $0x14] sm:$0xf] %v460
    %493 = vst [vmem:[%s2 + $0x18] sm:$0xf] %v461
    %494 = vst [vmem:[%s2 + $0x1c] sm:$0xf] %v462
    %495 = vst [vmem:[%s2 + $0x20] sm:$0xf] %v463
    %496 = vst [vmem:[%s2 + $0x24] sm:$0xf] %v464
    %497 = vst [vmem:[%s2 + $0x28] sm:$0xf] %v465
    %498 = vst [vmem:[%s2 + $0x2c] sm:$0xf] %v466
    %499 = vst [vmem:[%s2 + $0x30] sm:$0xf] %v467
    %500 = vst [vmem:[%s2 + $0x34] sm:$0xf] %v468
    %501 = vst [vmem:[%s2 + $0x38] sm:$0xf] %v469
    %502 = vst [vmem:[%s2 + $0x3c] sm:$0xf] %v470
    %v503 = vadd.f32 %v407, %v408
    %v504 = vadd.f32 %v503, %v409
    %v505 = vadd.f32 %v504, %v410
    %v506 = vadd.f32 %v505, %v411
    %v507 = vadd.f32 %v506, %v412
    %v508 = vadd.f32 %v507, %v413
    %v509 = vadd.f32 %v508, %v414
    %v510 = vadd.f32 %v509, %v415
    %v511 = vadd.f32 %v510, %v416
    %v512 = vadd.f32 %v511, %v417
    %v513 = vadd.f32 %v512, %v418
    %v514 = vadd.f32 %v513, %v419
    %v515 = vadd.f32 %v514, %v420
    %v516 = vadd.f32 %v515, %v421
    %v517 = vadd.f32 %v516, %v422
    %v518 = vrot.slane %v517, 4
    %v519 = vadd.f32 %v517, %v518
    %v520 = vrot.slane %v519, 2
    %v521 = vadd.f32 %v519, %v520
    %v522 = vrot.slane %v521, 1
    %v523 = vadd.f32 %v521, %v522
    %v524 = vmul.f32 %v407, %v407
    %v525 = vmul.f32 %v408, %v408
    %v526 = vmul.f32 %v409, %v409
    %v527 = vmul.f32 %v410, %v410
    %v528 = vmul.f32 %v411, %v411
    %v529 = vmul.f32 %v412, %v412
    %v530 = vmul.f32 %v413, %v413
    %v531 = vmul.f32 %v414, %v414
    %v532 = vmul.f32 %v415, %v415
    %v533 = vmul.f32 %v416, %v416
    %v534 = vmul.f32 %v417, %v417
    %v535 = vmul.f32 %v418, %v418
    %v536 = vmul.f32 %v419, %v419
    %v537 = vmul.f32 %v420, %v420
    %v538 = vmul.f32 %v421, %v421
    %v539 = vmul.f32 %v422, %v422
    %v540 = vadd.f32 %v524, %v525
    %v541 = vadd.f32 %v540, %v526
    %v542 = vadd.f32 %v541, %v527
    %v543 = vadd.f32 %v542, %v528
    %v544 = vadd.f32 %v543, %v529
    %v545 = vadd.f32 %v544, %v530
    %v546 = vadd.f32 %v545, %v531
    %v547 = vadd.f32 %v546, %v532
    %v548 = vadd.f32 %v547, %v533
    %v549 = vadd.f32 %v548, %v534
    %v550 = vadd.f32 %v549, %v535
    %v551 = vadd.f32 %v550, %v536
    %v552 = vadd.f32 %v551, %v537
    %v553 = vadd.f32 %v552, %v538
    %v554 = vadd.f32 %v553, %v539
    %v555 = vrot.slane %v554, 4
    %v556 = vadd.f32 %v554, %v555
    %v557 = vrot.slane %v556, 2
    %v558 = vadd.f32 %v556, %v557
    %v559 = vrot.slane %v558, 1
    %v560 = vadd.f32 %v558, %v559
    %561 = vst [vmem:[%s3] sm:$0xff] %v523
    %562 = vst [vmem:[%s4] sm:$0xff] %v560
  $region17: #{global_generator_forward.23} parent=0 // pred_fallthru
    _
  // Predicated region
  $region18: #{global_generator_forward.23} parent=0 // pred_check
    _
  $region19: #{global_generator_forward.23} parent=0 // pred_check_branch
    %564 = sbr.rel (0) target = $region21
  $region20: #{global_generator_forward.23} parent=0 // pred_region
    _
  $region21: #{global_generator_forward.23} parent=0 // pred_fallthru
    _
  // Predicated region
  $region22: #{global_generator_forward.23} parent=0 // pred_check
    _
  $region23: #{global_generator_forward.23} parent=0 // pred_check_branch
    %566 = sbr.rel (0) target = $region25
  $region24: #{global_generator_forward.23} parent=0 // pred_region
    _
  $region25: #{global_generator_forward.23} parent=0 // pred_fallthru
    _
  // Predicated region
  $region26: #{global_generator_forward.23} parent=0 // pred_check
    _
  $region27: #{global_generator_forward.23} parent=0 // pred_check_branch
    %568 = sbr.rel (0) target = $region29
  $region28: #{global_generator_forward.23} parent=0 // pred_region
    _
  $region29: #{global_generator_forward.23} parent=0 // pred_fallthru
    _
  // Predicated region
  $region30: #{global_generator_forward.23} parent=0 // pred_check
    _
  $region31: #{global_generator_forward.23} parent=0 // pred_check_branch
    %570 = sbr.rel (0) target = $region33
  $region32: #{global_generator_forward.23} parent=0 // pred_region
    _
  $region33: #{global_generator_forward.23} parent=0 // pred_fallthru
    _
  // Predicated region
  $region34: #{global_generator_forward.23} parent=0 // pred_check
    _
  $region35: #{global_generator_forward.23} parent=0 // pred_check_branch
    %572 = sbr.rel (0) target = $region37
  $region36: #{global_generator_forward.23} parent=0 // pred_region
    _
  $region37: #{global_generator_forward.23} parent=0 // pred_fallthru
    _
  // Predicated region
  $region38: #{global_generator_forward.23} parent=0 // pred_check
    _
  $region39: #{global_generator_forward.23} parent=0 // pred_check_branch
    %574 = sbr.rel (0) target = $region41
  $region40: #{global_generator_forward.23} parent=0 // pred_region
    _
  $region41: #{global_generator_forward.23} parent=0 // pred_fallthru
    _

// kernel: global_generator_forward.28
$region0: #{global_generator_forward.28}
  #allocation0 [shape = 'u32[]', space=smem, size = 0x4, offset = 0x4, fixed_abs, tag = 'smem constant byte address 0x4 - core index']
  #allocation1 [shape = 'u32[144,128]{1,0:T(1,128)}', space=vmem, size = 0x12000, scoped, tag = 'internal scratch']
  %s0 = inlined_call_operand.vmem [shape: bf16[8,128], index: 0, kind: input, shape index: {}]
  %s1 = inlined_call_operand.vmem [shape: f32[1,128], index: 1, kind: input, shape index: {}]
  %s2 = inlined_call_operand.vmem [shape: f32[1,128], index: 2, kind: input, shape index: {}]
  %s3 = inlined_call_operand.vmem [shape: bf16[8,128], index: 3, kind: input, shape index: {}]
  %s4 = inlined_call_operand.vmem [shape: bf16[8,128], index: 4, kind: output, shape index: {}]
  %s5 = sld [smem:[#allocation0]]
  $region26: #{global_generator_forward.28} parent=0
    _
  %s7 = ssub.s32 1, %s5
  %s8 = scalar_select 0, %s7, %s5
  // Predicated region
  $region2: #{global_generator_forward.28} parent=0 // pred_check
    _
  $region3: #{global_generator_forward.28} parent=0 // pred_check_branch
    %10 = sbr.rel (0) target = $region5
  $region4: #{global_generator_forward.28} parent=0 // pred_region
    _
  $region5: #{global_generator_forward.28} parent=0 // pred_fallthru
    _
  // Predicated region
  $region6: #{global_generator_forward.28} parent=0 // pred_check
    _
  $region7: #{global_generator_forward.28} parent=0 // pred_check_branch
    %12 = sbr.rel (0) target = $region9
  $region8: #{global_generator_forward.28} parent=0 // pred_region
    _
  $region9: #{global_generator_forward.28} parent=0 // pred_fallthru
    _
  // Predicated region
  $region10: #{global_generator_forward.28} parent=0 // pred_check
    _
  $region11: #{global_generator_forward.28} parent=0 // pred_check_branch
    %14 = sbr.rel (0) target = $region13
  $region12: #{global_generator_forward.28} parent=0 // pred_region
    _
  $region13: #{global_generator_forward.28} parent=0 // pred_fallthru
    _
  // Predicated region
  $region14: #{global_generator_forward.28} parent=0 // pred_check
    _
  $region15: #{global_generator_forward.28} parent=0 // pred_check_branch
    %16 = sbr.rel (0) target = $region17
  $region16: #{global_generator_forward.28} parent=0 // pred_region
    _
  $region17: #{global_generator_forward.28} parent=0 // pred_fallthru
    _
  %v17 = vld [vmem:[%s0] sm:$0xf]
  %v18 = vunpack.c.l.bf16 %v17
  %v19 = vld [vmem:[%s1] sm:$0x1]
  %v21 = vlaneseq
  %v22 = vshrl.u32 %v21, 7
  %v23 = vsub.s32 0, %v22
  %v24 = vrot.slane %v19, %v23
  %v26 = vmul.f32 %v18, %v24
  %v27 = vld [vmem:[%s2] sm:$0x1]
  %v29 = vlaneseq
  %v30 = vshrl.u32 %v29, 7
  %v31 = vsub.s32 0, %v30
  %v32 = vrot.slane %v27, %v31
  %v34 = vadd.f32 %v26, %v32
  %v35 = vld [vmem:[%s3] sm:$0xf]
  %v36 = vunpack.c.l.bf16 %v35
  %v37 = vadd.f32 %v34, %v36
  %v38 = vpack.c.bf16 %v37, %v37
  %39 = vst [vmem:[%s4] sm:$0xf] %v38
  // Predicated region
  $region18: #{global_generator_forward.28} parent=0 // pred_check
    _
  $region19: #{global_generator_forward.28} parent=0 // pred_check_branch
    %41 = sbr.rel (0) target = $region21
  $region20: #{global_generator_forward.28} parent=0 // pred_region
    _
  $region21: #{global_generator_forward.28} parent=0 // pred_fallthru
    _
  // Predicated region
  $region22: #{global_generator_forward.28} parent=0 // pred_check
    _
  $region23: #{global_generator_forward.28} parent=0 // pred_check_branch
    %43 = sbr.rel (0) target = $region25
  $region24: #{global_generator_forward.28} parent=0 // pred_region
    _
  $region25: #{global_generator_forward.28} parent=0 // pred_fallthru
    _

// kernel: global_generator_forward.25
$region0: #{global_generator_forward.25}
  #allocation0 [shape = 'u32[]', space=smem, size = 0x4, offset = 0x4, fixed_abs, tag = 'smem constant byte address 0x4 - core index']
  #allocation1 [shape = 'u32[144,128]{1,0:T(1,128)}', space=vmem, size = 0x12000, scoped, tag = 'internal scratch']
  #allocation2 [shape = 'f32[128,128]{1,0:T(8,128)}', space=vmem, size = 0x10000, scoped, tag = 'scratch operand']
  %s0 = inlined_call_operand.vmem [shape: bf16[128,384], index: 0, kind: input, shape index: {}]
  %s1 = inlined_call_operand.vmem [shape: bf16[384,128], index: 1, kind: input, shape index: {}]
  %s2 = inlined_call_operand.vmem [shape: bf16[128,128], index: 2, kind: output, shape index: {0}]
  %s3 = inlined_call_operand.vmem [shape: f32[8,128], index: 3, kind: output, shape index: {1}]
  %s4 = inlined_call_operand.vmem [shape: f32[8,128], index: 4, kind: output, shape index: {2}]
  %5 = xla_tuple %s2, %s3, %s4
  %s6 = sld [smem:[#allocation0]]
  $region42: #{global_generator_forward.25} parent=0
    _
  %s8 = ssub.s32 1, %s6
  %s9 = scalar_select 0, %s8, %s6
  // Predicated region
  $region2: #{global_generator_forward.25} parent=0 // pred_check
    _
  $region3: #{global_generator_forward.25} parent=0 // pred_check_branch
    %11 = sbr.rel (0) target = $region5
  $region4: #{global_generator_forward.25} parent=0 // pred_region
    _
  $region5: #{global_generator_forward.25} parent=0 // pred_fallthru
    _
  // Predicated region
  $region6: #{global_generator_forward.25} parent=0 // pred_check
    _
  $region7: #{global_generator_forward.25} parent=0 // pred_check_branch
    %13 = sbr.rel (0) target = $region9
  $region8: #{global_generator_forward.25} parent=0 // pred_region
    _
  $region9: #{global_generator_forward.25} parent=0 // pred_fallthru
    _
  %p15 = scmp.eq.s32.totalorder 0, 0
  // Predicated region
  $region10: #{global_generator_forward.25} parent=0 // pred_check
    %p16 = pneg %p15
  $region11: #{global_generator_forward.25} parent=0 // pred_check_branch
    %18 = sbr.rel (%p16) target = $region13
  $region12: #{global_generator_forward.25} parent=0 // pred_region
    %19 = vst [vmem:[#allocation2] sm:$0xff] 0.0
    %20 = vst [vmem:[#allocation2 + $0x8] sm:$0xff] 0.0
    %21 = vst [vmem:[#allocation2 + $0x10] sm:$0xff] 0.0
    %22 = vst [vmem:[#allocation2 + $0x18] sm:$0xff] 0.0
    %23 = vst [vmem:[#allocation2 + $0x20] sm:$0xff] 0.0
    %24 = vst [vmem:[#allocation2 + $0x28] sm:$0xff] 0.0
    %25 = vst [vmem:[#allocation2 + $0x30] sm:$0xff] 0.0
    %26 = vst [vmem:[#allocation2 + $0x38] sm:$0xff] 0.0
    %27 = vst [vmem:[#allocation2 + $0x40] sm:$0xff] 0.0
    %28 = vst [vmem:[#allocation2 + $0x48] sm:$0xff] 0.0
    %29 = vst [vmem:[#allocation2 + $0x50] sm:$0xff] 0.0
    %30 = vst [vmem:[#allocation2 + $0x58] sm:$0xff] 0.0
    %31 = vst [vmem:[#allocation2 + $0x60] sm:$0xff] 0.0
    %32 = vst [vmem:[#allocation2 + $0x68] sm:$0xff] 0.0
    %33 = vst [vmem:[#allocation2 + $0x70] sm:$0xff] 0.0
    %34 = vst [vmem:[#allocation2 + $0x78] sm:$0xff] 0.0
  $region13: #{global_generator_forward.25} parent=0 // pred_fallthru
    _
  %v35 = vld [vmem:[#allocation2] sm:$0xff]
  %v36 = vld [vmem:[#allocation2 + $0x8] sm:$0xff]
  %v37 = vld [vmem:[#allocation2 + $0x10] sm:$0xff]
  %v38 = vld [vmem:[#allocation2 + $0x18] sm:$0xff]
  %v39 = vld [vmem:[#allocation2 + $0x20] sm:$0xff]
  %v40 = vld [vmem:[#allocation2 + $0x28] sm:$0xff]
  %v41 = vld [vmem:[#allocation2 + $0x30] sm:$0xff]
  %v42 = vld [vmem:[#allocation2 + $0x38] sm:$0xff]
  %v43 = vld [vmem:[#allocation2 + $0x40] sm:$0xff]
  %v44 = vld [vmem:[#allocation2 + $0x48] sm:$0xff]
  %v45 = vld [vmem:[#allocation2 + $0x50] sm:$0xff]
  %v46 = vld [vmem:[#allocation2 + $0x58] sm:$0xff]
  %v47 = vld [vmem:[#allocation2 + $0x60] sm:$0xff]
  %v48 = vld [vmem:[#allocation2 + $0x68] sm:$0xff]
  %v49 = vld [vmem:[#allocation2 + $0x70] sm:$0xff]
  %v50 = vld [vmem:[#allocation2 + $0x78] sm:$0xff]
  %v51 = vld [vmem:[%s0] sm:$0xff]
  %v52 = vld [vmem:[%s0 + $0x8] sm:$0xf]
  %v53 = vld [vmem:[%s0 + $0xc] sm:$0xff]
  %v54 = vld [vmem:[%s0 + $0x14] sm:$0xf]
  %v55 = vld [vmem:[%s0 + $0x18] sm:$0xff]
  %v56 = vld [vmem:[%s0 + $0x20] sm:$0xf]
  %v57 = vld [vmem:[%s0 + $0x24] sm:$0xff]
  %v58 = vld [vmem:[%s0 + $0x2c] sm:$0xf]
  %v59 = vld [vmem:[%s0 + $0x30] sm:$0xff]
  %v60 = vld [vmem:[%s0 + $0x38] sm:$0xf]
  %v61 = vld [vmem:[%s0 + $0x3c] sm:$0xff]
  %v62 = vld [vmem:[%s0 + $0x44] sm:$0xf]
  %v63 = vld [vmem:[%s0 + $0x48] sm:$0xff]
  %v64 = vld [vmem:[%s0 + $0x50] sm:$0xf]
  %v65 = vld [vmem:[%s0 + $0x54] sm:$0xff]
  %v66 = vld [vmem:[%s0 + $0x5c] sm:$0xf]
  %v67 = vld [vmem:[%s0 + $0x60] sm:$0xff]
  %v68 = vld [vmem:[%s0 + $0x68] sm:$0xf]
  %v69 = vld [vmem:[%s0 + $0x6c] sm:$0xff]
  %v70 = vld [vmem:[%s0 + $0x74] sm:$0xf]
  %v71 = vld [vmem:[%s0 + $0x78] sm:$0xff]
  %v72 = vld [vmem:[%s0 + $0x80] sm:$0xf]
  %v73 = vld [vmem:[%s0 + $0x84] sm:$0xff]
  %v74 = vld [vmem:[%s0 + $0x8c] sm:$0xf]
  %v75 = vld [vmem:[%s0 + $0x90] sm:$0xff]
  %v76 = vld [vmem:[%s0 + $0x98] sm:$0xf]
  %v77 = vld [vmem:[%s0 + $0x9c] sm:$0xff]
  %v78 = vld [vmem:[%s0 + $0xa4] sm:$0xf]
  %v79 = vld [vmem:[%s0 + $0xa8] sm:$0xff]
  %v80 = vld [vmem:[%s0 + $0xb0] sm:$0xf]
  %v81 = vld [vmem:[%s0 + $0xb4] sm:$0xff]
  %v82 = vld [vmem:[%s0 + $0xbc] sm:$0xf]
  %v83 = vld [vmem:[%s1] sm:$0xf]
  %v84 = vld [vmem:[%s1 + $0x4] sm:$0xf]
  %v85 = vld [vmem:[%s1 + $0x8] sm:$0xf]
  %v86 = vld [vmem:[%s1 + $0xc] sm:$0xf]
  %v87 = vld [vmem:[%s1 + $0x10] sm:$0xf]
  %v88 = vld [vmem:[%s1 + $0x14] sm:$0xf]
  %v89 = vld [vmem:[%s1 + $0x18] sm:$0xf]
  %v90 = vld [vmem:[%s1 + $0x1c] sm:$0xf]
  %v91 = vld [vmem:[%s1 + $0x20] sm:$0xf]
  %v92 = vld [vmem:[%s1 + $0x24] sm:$0xf]
  %v93 = vld [vmem:[%s1 + $0x28] sm:$0xf]
  %v94 = vld [vmem:[%s1 + $0x2c] sm:$0xf]
  %v95 = vld [vmem:[%s1 + $0x30] sm:$0xf]
  %v96 = vld [vmem:[%s1 + $0x34] sm:$0xf]
  %v97 = vld [vmem:[%s1 + $0x38] sm:$0xf]
  %v98 = vld [vmem:[%s1 + $0x3c] sm:$0xf]
  %v99 = vld [vmem:[%s1 + $0x40] sm:$0xf]
  %v100 = vld [vmem:[%s1 + $0x44] sm:$0xf]
  %v101 = vld [vmem:[%s1 + $0x48] sm:$0xf]
  %v102 = vld [vmem:[%s1 + $0x4c] sm:$0xf]
  %v103 = vld [vmem:[%s1 + $0x50] sm:$0xf]
  %v104 = vld [vmem:[%s1 + $0x54] sm:$0xf]
  %v105 = vld [vmem:[%s1 + $0x58] sm:$0xf]
  %v106 = vld [vmem:[%s1 + $0x5c] sm:$0xf]
  %v107 = vld [vmem:[%s1 + $0x60] sm:$0xf]
  %v108 = vld [vmem:[%s1 + $0x64] sm:$0xf]
  %v109 = vld [vmem:[%s1 + $0x68] sm:$0xf]
  %v110 = vld [vmem:[%s1 + $0x6c] sm:$0xf]
  %v111 = vld [vmem:[%s1 + $0x70] sm:$0xf]
  %v112 = vld [vmem:[%s1 + $0x74] sm:$0xf]
  %v113 = vld [vmem:[%s1 + $0x78] sm:$0xf]
  %v114 = vld [vmem:[%s1 + $0x7c] sm:$0xf]
  %v115 = vld [vmem:[%s1 + $0x80] sm:$0xf]
  %v116 = vld [vmem:[%s1 + $0x84] sm:$0xf]
  %v117 = vld [vmem:[%s1 + $0x88] sm:$0xf]
  %v118 = vld [vmem:[%s1 + $0x8c] sm:$0xf]
  %v119 = vld [vmem:[%s1 + $0x90] sm:$0xf]
  %v120 = vld [vmem:[%s1 + $0x94] sm:$0xf]
  %v121 = vld [vmem:[%s1 + $0x98] sm:$0xf]
  %v122 = vld [vmem:[%s1 + $0x9c] sm:$0xf]
  %v123 = vld [vmem:[%s1 + $0xa0] sm:$0xf]
  %v124 = vld [vmem:[%s1 + $0xa4] sm:$0xf]
  %v125 = vld [vmem:[%s1 + $0xa8] sm:$0xf]
  %v126 = vld [vmem:[%s1 + $0xac] sm:$0xf]
  %v127 = vld [vmem:[%s1 + $0xb0] sm:$0xf]
  %v128 = vld [vmem:[%s1 + $0xb4] sm:$0xf]
  %v129 = vld [vmem:[%s1 + $0xb8] sm:$0xf]
  %v130 = vld [vmem:[%s1 + $0xbc] sm:$0xf]
  %v163 = vunpack.c.l.b16 %v51
  %v164 = vunpack.c.h.b16 %v51
  %v165 = vunpack.c.l.b16 %v52
  %v166 = vunpack.c.l.b16 %v53
  %v167 = vunpack.c.h.b16 %v53
  %v168 = vunpack.c.l.b16 %v54
  %v169 = vunpack.c.l.b16 %v55
  %v170 = vunpack.c.h.b16 %v55
  %v171 = vunpack.c.l.b16 %v56
  %v172 = vunpack.c.l.b16 %v57
  %v173 = vunpack.c.h.b16 %v57
  %v174 = vunpack.c.l.b16 %v58
  %v175 = vunpack.c.l.b16 %v59
  %v176 = vunpack.c.h.b16 %v59
  %v177 = vunpack.c.l.b16 %v60
  %v178 = vunpack.c.l.b16 %v61
  %v179 = vunpack.c.h.b16 %v61
  %v180 = vunpack.c.l.b16 %v62
  %v181 = vunpack.c.l.b16 %v63
  %v182 = vunpack.c.h.b16 %v63
  %v183 = vunpack.c.l.b16 %v64
  %v184 = vunpack.c.l.b16 %v65
  %v185 = vunpack.c.h.b16 %v65
  %v186 = vunpack.c.l.b16 %v66
  %v187 = vunpack.c.l.b16 %v67
  %v188 = vunpack.c.h.b16 %v67
  %v189 = vunpack.c.l.b16 %v68
  %v190 = vunpack.c.l.b16 %v69
  %v191 = vunpack.c.h.b16 %v69
  %v192 = vunpack.c.l.b16 %v70
  %v193 = vunpack.c.l.b16 %v71
  %v194 = vunpack.c.h.b16 %v71
  %v195 = vunpack.c.l.b16 %v72
  %v196 = vunpack.c.l.b16 %v73
  %v197 = vunpack.c.h.b16 %v73
  %v198 = vunpack.c.l.b16 %v74
  %v199 = vunpack.c.l.b16 %v75
  %v200 = vunpack.c.h.b16 %v75
  %v201 = vunpack.c.l.b16 %v76
  %v202 = vunpack.c.l.b16 %v77
  %v203 = vunpack.c.h.b16 %v77
  %v204 = vunpack.c.l.b16 %v78
  %v205 = vunpack.c.l.b16 %v79
  %v206 = vunpack.c.h.b16 %v79
  %v207 = vunpack.c.l.b16 %v80
  %v208 = vunpack.c.l.b16 %v81
  %v209 = vunpack.c.h.b16 %v81
  %v210 = vunpack.c.l.b16 %v82
  %v211 = vpack.c.b16 %v166, %v163
  %v212 = vpack.c.b16 %v167, %v164
  %v213 = vpack.c.b16 %v168, %v165
  %v214 = vpack.c.b16 %v172, %v169
  %v215 = vpack.c.b16 %v173, %v170
  %v216 = vpack.c.b16 %v174, %v171
  %v217 = vpack.c.b16 %v178, %v175
  %v218 = vpack.c.b16 %v179, %v176
  %v219 = vpack.c.b16 %v180, %v177
  %v220 = vpack.c.b16 %v184, %v181
  %v221 = vpack.c.b16 %v185, %v182
  %v222 = vpack.c.b16 %v186, %v183
  %v223 = vpack.c.b16 %v190, %v187
  %v224 = vpack.c.b16 %v191, %v188
  %v225 = vpack.c.b16 %v192, %v189
  %v226 = vpack.c.b16 %v196, %v193
  %v227 = vpack.c.b16 %v197, %v194
  %v228 = vpack.c.b16 %v198, %v195
  %v229 = vpack.c.b16 %v202, %v199
  %v230 = vpack.c.b16 %v203, %v200
  %v231 = vpack.c.b16 %v204, %v201
  %v232 = vpack.c.b16 %v208, %v205
  %v233 = vpack.c.b16 %v209, %v206
  %v234 = vpack.c.b16 %v210, %v207
  %v307 = vunpack.c.l.b16 %v83
  %v308 = vunpack.c.l.b16 %v84
  %v309 = vunpack.c.l.b16 %v85
  %v310 = vunpack.c.l.b16 %v86
  %v311 = vunpack.c.l.b16 %v87
  %v312 = vunpack.c.l.b16 %v88
  %v313 = vunpack.c.l.b16 %v89
  %v314 = vunpack.c.l.b16 %v90
  %v315 = vunpack.c.l.b16 %v91
  %v316 = vunpack.c.l.b16 %v92
  %v317 = vunpack.c.l.b16 %v93
  %v318 = vunpack.c.l.b16 %v94
  %v319 = vunpack.c.l.b16 %v95
  %v320 = vunpack.c.l.b16 %v96
  %v321 = vunpack.c.l.b16 %v97
  %v322 = vunpack.c.l.b16 %v98
  %v323 = vunpack.c.l.b16 %v99
  %v324 = vunpack.c.l.b16 %v100
  %v325 = vunpack.c.l.b16 %v101
  %v326 = vunpack.c.l.b16 %v102
  %v327 = vunpack.c.l.b16 %v103
  %v328 = vunpack.c.l.b16 %v104
  %v329 = vunpack.c.l.b16 %v105
  %v330 = vunpack.c.l.b16 %v106
  %v331 = vunpack.c.l.b16 %v107
  %v332 = vunpack.c.l.b16 %v108
  %v333 = vunpack.c.l.b16 %v109
  %v334 = vunpack.c.l.b16 %v110
  %v335 = vunpack.c.l.b16 %v111
  %v336 = vunpack.c.l.b16 %v112
  %v337 = vunpack.c.l.b16 %v113
  %v338 = vunpack.c.l.b16 %v114
  %v339 = vunpack.c.l.b16 %v115
  %v340 = vunpack.c.l.b16 %v116
  %v341 = vunpack.c.l.b16 %v117
  %v342 = vunpack.c.l.b16 %v118
  %v343 = vunpack.c.l.b16 %v119
  %v344 = vunpack.c.l.b16 %v120
  %v345 = vunpack.c.l.b16 %v121
  %v346 = vunpack.c.l.b16 %v122
  %v347 = vunpack.c.l.b16 %v123
  %v348 = vunpack.c.l.b16 %v124
  %v349 = vunpack.c.l.b16 %v125
  %v350 = vunpack.c.l.b16 %v126
  %v351 = vunpack.c.l.b16 %v127
  %v352 = vunpack.c.l.b16 %v128
  %v353 = vunpack.c.l.b16 %v129
  %v354 = vunpack.c.l.b16 %v130
  %v355 = vpack.c.b16 %v308, %v307
  %v356 = vpack.c.b16 %v310, %v309
  %v357 = vpack.c.b16 %v312, %v311
  %v358 = vpack.c.b16 %v314, %v313
  %v359 = vpack.c.b16 %v316, %v315
  %v360 = vpack.c.b16 %v318, %v317
  %v361 = vpack.c.b16 %v320, %v319
  %v362 = vpack.c.b16 %v322, %v321
  %v363 = vpack.c.b16 %v324, %v323
  %v364 = vpack.c.b16 %v326, %v325
  %v365 = vpack.c.b16 %v328, %v327
  %v366 = vpack.c.b16 %v330, %v329
  %v367 = vpack.c.b16 %v332, %v331
  %v368 = vpack.c.b16 %v334, %v333
  %v369 = vpack.c.b16 %v336, %v335
  %v370 = vpack.c.b16 %v338, %v337
  %v371 = vpack.c.b16 %v340, %v339
  %v372 = vpack.c.b16 %v342, %v341
  %v373 = vpack.c.b16 %v344, %v343
  %v374 = vpack.c.b16 %v346, %v345
  %v375 = vpack.c.b16 %v348, %v347
  %v376 = vpack.c.b16 %v350, %v349
  %v377 = vpack.c.b16 %v352, %v351
  %v378 = vpack.c.b16 %v354, %v353
  %403 = vmatprep.subr.bf16.mxu0 0
  %404 = vmatpush1.bf16.msra.mxu0 %v362
  %405 = vmatprep.subr.bf16.mxu0 0
  %406 = vmatpush1.bf16.msra.mxu0 %v361
  %407 = vmatprep.subr.bf16.mxu0 0
  %408 = vmatpush1.bf16.msra.mxu0 %v360
  %409 = vmatprep.subr.bf16.mxu0 0
  %410 = vmatpush1.bf16.msra.mxu0 %v359
  %411 = vmatprep.subr.bf16.mxu0 0
  %412 = vmatpush1.bf16.msra.mxu0 %v358
  %413 = vmatprep.subr.bf16.mxu0 0
  %414 = vmatpush1.bf16.msra.mxu0 %v357
  %415 = vmatprep.subr.bf16.mxu0 0
  %416 = vmatpush1.bf16.msra.mxu0 %v356
  %417 = vmatprep.subr.bf16.mxu0 0
  %418 = vmatpush1.bf16.msra.mxu0 %v355
  %419 = vmatprep.subr.bf16.mxu0 0
  %420 = vmatpush2.bf16.msra.mxu0 %v370
  %421 = vmatprep.subr.bf16.mxu0 0
  %422 = vmatpush2.bf16.msra.mxu0 %v369
  %423 = vmatprep.subr.bf16.mxu0 0
  %424 = vmatpush2.bf16.msra.mxu0 %v368
  %425 = vmatprep.subr.bf16.mxu0 0
  %426 = vmatpush2.bf16.msra.mxu0 %v367
  %427 = vmatprep.subr.bf16.mxu0 0
  %428 = vmatpush2.bf16.msra.mxu0 %v366
  %429 = vmatprep.subr.bf16.mxu0 0
  %430 = vmatpush2.bf16.msra.mxu0 %v365
  %431 = vmatprep.subr.bf16.mxu0 0
  %432 = vmatpush2.bf16.msra.mxu0 %v364
  %433 = vmatprep.subr.bf16.mxu0 0
  %434 = vmatpush2.bf16.msra.mxu0 %v363
  %435 = vmatprep.mubr.bf16.mxu0 %v212
  %436 = vmatmul.mubr.bf16.gmra.mxu0 %v211
  %v437 = vpop.f32.mrf.mxu0
  %v438 = vadd.f32 0.0, %v437
  %v439 = vpop.f32.mrf.mxu0
  %v440 = vpop.f32.mrf.mxu0
  %v441 = vadd.f32 0.0, %v440
  %v442 = vpop.f32.mrf.mxu0
  %443 = vmatprep.mubr.bf16.mxu0 %v215
  %444 = vmatmul.mubr.bf16.gmra.mxu0 %v214
  %v445 = vpop.f32.mrf.mxu0
  %v446 = vadd.f32 0.0, %v445
  %v447 = vpop.f32.mrf.mxu0
  %v448 = vpop.f32.mrf.mxu0
  %v449 = vadd.f32 0.0, %v448
  %v450 = vpop.f32.mrf.mxu0
  %451 = vmatprep.mubr.bf16.mxu0 %v218
  %452 = vmatmul.mubr.bf16.gmra.mxu0 %v217
  %v453 = vpop.f32.mrf.mxu0
  %v454 = vadd.f32 0.0, %v453
  %v455 = vpop.f32.mrf.mxu0
  %v456 = vpop.f32.mrf.mxu0
  %v457 = vadd.f32 0.0, %v456
  %v458 = vpop.f32.mrf.mxu0
  %459 = vmatprep.mubr.bf16.mxu0 %v221
  %460 = vmatmul.mubr.bf16.gmra.mxu0 %v220
  %v461 = vpop.f32.mrf.mxu0
  %v462 = vadd.f32 0.0, %v461
  %v463 = vpop.f32.mrf.mxu0
  %v464 = vpop.f32.mrf.mxu0
  %v465 = vadd.f32 0.0, %v464
  %v466 = vpop.f32.mrf.mxu0
  %467 = vmatprep.mubr.bf16.mxu0 %v224
  %468 = vmatmul.mubr.bf16.gmra.mxu0 %v223
  %v469 = vpop.f32.mrf.mxu0
  %v470 = vadd.f32 0.0, %v469
  %v471 = vpop.f32.mrf.mxu0
  %v472 = vpop.f32.mrf.mxu0
  %v473 = vadd.f32 0.0, %v472
  %v474 = vpop.f32.mrf.mxu0
  %475 = vmatprep.mubr.bf16.mxu0 %v227
  %476 = vmatmul.mubr.bf16.gmra.mxu0 %v226
  %v477 = vpop.f32.mrf.mxu0
  %v478 = vadd.f32 0.0, %v477
  %v479 = vpop.f32.mrf.mxu0
  %v480 = vpop.f32.mrf.mxu0
  %v481 = vadd.f32 0.0, %v480
  %v482 = vpop.f32.mrf.mxu0
  %483 = vmatprep.mubr.bf16.mxu0 %v230
  %484 = vmatmul.mubr.bf16.gmra.mxu0 %v229
  %v485 = vpop.f32.mrf.mxu0
  %v486 = vadd.f32 0.0, %v485
  %v487 = vpop.f32.mrf.mxu0
  %v488 = vpop.f32.mrf.mxu0
  %v489 = vadd.f32 0.0, %v488
  %v490 = vpop.f32.mrf.mxu0
  %491 = vmatprep.mubr.bf16.mxu0 %v233
  %492 = vmatmul.mubr.bf16.gmra.mxu0 %v232
  %v493 = vpop.f32.mrf.mxu0
  %v494 = vadd.f32 0.0, %v493
  %v495 = vpop.f32.mrf.mxu0
  %v496 = vpop.f32.mrf.mxu0
  %v497 = vadd.f32 0.0, %v496
  %v498 = vpop.f32.mrf.mxu0
  %499 = vdwg.mxu0
  %500 = vmatprep.subr.bf16.mxu0 0
  %501 = vmatpush1.bf16.msra.mxu0 %v378
  %502 = vmatprep.subr.bf16.mxu0 0
  %503 = vmatpush1.bf16.msra.mxu0 %v377
  %504 = vmatprep.subr.bf16.mxu0 0
  %505 = vmatpush1.bf16.msra.mxu0 %v376
  %506 = vmatprep.subr.bf16.mxu0 0
  %507 = vmatpush1.bf16.msra.mxu0 %v375
  %508 = vmatprep.subr.bf16.mxu0 0
  %509 = vmatpush1.bf16.msra.mxu0 %v374
  %510 = vmatprep.subr.bf16.mxu0 0
  %511 = vmatpush1.bf16.msra.mxu0 %v373
  %512 = vmatprep.subr.bf16.mxu0 0
  %513 = vmatpush1.bf16.msra.mxu0 %v372
  %514 = vmatprep.subr.bf16.mxu0 0
  %515 = vmatpush1.bf16.msra.mxu0 %v371
  %516 = vmatprep.subr.bf16.mxu0 0
  %517 = vmatpush2.bf16.msra.mxu0 0
  %518 = vmatprep.subr.bf16.mxu0 0
  %519 = vmatpush2.bf16.msra.mxu0 0
  %520 = vmatprep.subr.bf16.mxu0 0
  %521 = vmatpush2.bf16.msra.mxu0 0
  %522 = vmatprep.subr.bf16.mxu0 0
  %523 = vmatpush2.bf16.msra.mxu0 0
  %524 = vmatprep.subr.bf16.mxu0 0
  %525 = vmatpush2.bf16.msra.mxu0 0
  %526 = vmatprep.subr.bf16.mxu0 0
  %527 = vmatpush2.bf16.msra.mxu0 0
  %528 = vmatprep.subr.bf16.mxu0 0
  %529 = vmatpush2.bf16.msra.mxu0 0
  %530 = vmatprep.subr.bf16.mxu0 0
  %531 = vmatpush2.bf16.msra.mxu0 0
  %532 = vmatprep.mubr.bf16.mxu0 0
  %533 = vmatmul.mubr.bf16.gmra.mxu0 %v213
  %v534 = vpop.f32.mrf.mxu0
  %v535 = vadd.f32 %v438, %v534
  %v536 = vpop.f32.mrf.mxu0
  %v537 = vpop.f32.mrf.mxu0
  %v538 = vadd.f32 %v441, %v537
  %v539 = vpop.f32.mrf.mxu0
  %540 = vmatprep.mubr.bf16.mxu0 0
  %541 = vmatmul.mubr.bf16.gmra.mxu0 %v216
  %v542 = vpop.f32.mrf.mxu0
  %v543 = vadd.f32 %v446, %v542
  %v544 = vpop.f32.mrf.mxu0
  %v545 = vpop.f32.mrf.mxu0
  %v546 = vadd.f32 %v449, %v545
  %v547 = vpop.f32.mrf.mxu0
  %548 = vmatprep.mubr.bf16.mxu0 0
  %549 = vmatmul.mubr.bf16.gmra.mxu0 %v219
  %v550 = vpop.f32.mrf.mxu0
  %v551 = vadd.f32 %v454, %v550
  %v552 = vpop.f32.mrf.mxu0
  %v553 = vpop.f32.mrf.mxu0
  %v554 = vadd.f32 %v457, %v553
  %v555 = vpop.f32.mrf.mxu0
  %556 = vmatprep.mubr.bf16.mxu0 0
  %557 = vmatmul.mubr.bf16.gmra.mxu0 %v222
  %v558 = vpop.f32.mrf.mxu0
  %v559 = vadd.f32 %v462, %v558
  %v560 = vpop.f32.mrf.mxu0
  %v561 = vpop.f32.mrf.mxu0
  %v562 = vadd.f32 %v465, %v561
  %v563 = vpop.f32.mrf.mxu0
  %564 = vmatprep.mubr.bf16.mxu0 0
  %565 = vmatmul.mubr.bf16.gmra.mxu0 %v225
  %v566 = vpop.f32.mrf.mxu0
  %v567 = vadd.f32 %v470, %v566
  %v568 = vpop.f32.mrf.mxu0
  %v569 = vpop.f32.mrf.mxu0
  %v570 = vadd.f32 %v473, %v569
  %v571 = vpop.f32.mrf.mxu0
  %572 = vmatprep.mubr.bf16.mxu0 0
  %573 = vmatmul.mubr.bf16.gmra.mxu0 %v228
  %v574 = vpop.f32.mrf.mxu0
  %v575 = vadd.f32 %v478, %v574
  %v576 = vpop.f32.mrf.mxu0
  %v577 = vpop.f32.mrf.mxu0
  %v578 = vadd.f32 %v481, %v577
  %v579 = vpop.f32.mrf.mxu0
  %580 = vmatprep.mubr.bf16.mxu0 0
  %581 = vmatmul.mubr.bf16.gmra.mxu0 %v231
  %v582 = vpop.f32.mrf.mxu0
  %v583 = vadd.f32 %v486, %v582
  %v584 = vpop.f32.mrf.mxu0
  %v585 = vpop.f32.mrf.mxu0
  %v586 = vadd.f32 %v489, %v585
  %v587 = vpop.f32.mrf.mxu0
  %588 = vmatprep.mubr.bf16.mxu0 0
  %589 = vmatmul.mubr.bf16.gmra.mxu0 %v234
  %v590 = vpop.f32.mrf.mxu0
  %v591 = vadd.f32 %v494, %v590
  %v592 = vpop.f32.mrf.mxu0
  %v593 = vpop.f32.mrf.mxu0
  %v594 = vadd.f32 %v497, %v593
  %v595 = vpop.f32.mrf.mxu0
  %596 = vdwg.mxu0
  %v597 = vadd.f32 %v35, %v535
  %v598 = vadd.f32 %v36, %v538
  %v599 = vadd.f32 %v37, %v543
  %v600 = vadd.f32 %v38, %v546
  %v601 = vadd.f32 %v39, %v551
  %v602 = vadd.f32 %v40, %v554
  %v603 = vadd.f32 %v41, %v559
  %v604 = vadd.f32 %v42, %v562
  %v605 = vadd.f32 %v43, %v567
  %v606 = vadd.f32 %v44, %v570
  %v607 = vadd.f32 %v45, %v575
  %v608 = vadd.f32 %v46, %v578
  %v609 = vadd.f32 %v47, %v583
  %v610 = vadd.f32 %v48, %v586
  %v611 = vadd.f32 %v49, %v591
  %v612 = vadd.f32 %v50, %v594
  %613 = vst [vmem:[#allocation2] sm:$0xff] %v597
  %614 = vst [vmem:[#allocation2 + $0x8] sm:$0xff] %v598
  %615 = vst [vmem:[#allocation2 + $0x10] sm:$0xff] %v599
  %616 = vst [vmem:[#allocation2 + $0x18] sm:$0xff] %v600
  %617 = vst [vmem:[#allocation2 + $0x20] sm:$0xff] %v601
  %618 = vst [vmem:[#allocation2 + $0x28] sm:$0xff] %v602
  %619 = vst [vmem:[#allocation2 + $0x30] sm:$0xff] %v603
  %620 = vst [vmem:[#allocation2 + $0x38] sm:$0xff] %v604
  %621 = vst [vmem:[#allocation2 + $0x40] sm:$0xff] %v605
  %622 = vst [vmem:[#allocation2 + $0x48] sm:$0xff] %v606
  %623 = vst [vmem:[#allocation2 + $0x50] sm:$0xff] %v607
  %624 = vst [vmem:[#allocation2 + $0x58] sm:$0xff] %v608
  %625 = vst [vmem:[#allocation2 + $0x60] sm:$0xff] %v609
  %626 = vst [vmem:[#allocation2 + $0x68] sm:$0xff] %v610
  %627 = vst [vmem:[#allocation2 + $0x70] sm:$0xff] %v611
  %628 = vst [vmem:[#allocation2 + $0x78] sm:$0xff] %v612
  // Predicated region
  $region14: #{global_generator_forward.25} parent=0 // pred_check
    %p629 = pneg %p15
  $region15: #{global_generator_forward.25} parent=0 // pred_check_branch
    %631 = sbr.rel (%p629) target = $region17
  $region16: #{global_generator_forward.25} parent=0 // pred_region
    %v632 = vld [vmem:[#allocation2] sm:$0xff]
    %v633 = vld [vmem:[#allocation2 + $0x8] sm:$0xff]
    %v634 = vld [vmem:[#allocation2 + $0x10] sm:$0xff]
    %v635 = vld [vmem:[#allocation2 + $0x18] sm:$0xff]
    %v636 = vld [vmem:[#allocation2 + $0x20] sm:$0xff]
    %v637 = vld [vmem:[#allocation2 + $0x28] sm:$0xff]
    %v638 = vld [vmem:[#allocation2 + $0x30] sm:$0xff]
    %v639 = vld [vmem:[#allocation2 + $0x38] sm:$0xff]
    %v640 = vld [vmem:[#allocation2 + $0x40] sm:$0xff]
    %v641 = vld [vmem:[#allocation2 + $0x48] sm:$0xff]
    %v642 = vld [vmem:[#allocation2 + $0x50] sm:$0xff]
    %v643 = vld [vmem:[#allocation2 + $0x58] sm:$0xff]
    %v644 = vld [vmem:[#allocation2 + $0x60] sm:$0xff]
    %v645 = vld [vmem:[#allocation2 + $0x68] sm:$0xff]
    %v646 = vld [vmem:[#allocation2 + $0x70] sm:$0xff]
    %v647 = vld [vmem:[#allocation2 + $0x78] sm:$0xff]
    %v648 = vpack.c.bf16 %v633, %v632
    %v649 = vpack.c.bf16 %v635, %v634
    %v650 = vpack.c.bf16 %v637, %v636
    %v651 = vpack.c.bf16 %v639, %v638
    %v652 = vpack.c.bf16 %v641, %v640
    %v653 = vpack.c.bf16 %v643, %v642
    %v654 = vpack.c.bf16 %v645, %v644
    %v655 = vpack.c.bf16 %v647, %v646
    %v664 = vunpack.c.l.b16 %v648
    %v665 = vunpack.c.h.b16 %v648
    %v666 = vunpack.c.l.b16 %v649
    %v667 = vunpack.c.h.b16 %v649
    %v668 = vunpack.c.l.b16 %v650
    %v669 = vunpack.c.h.b16 %v650
    %v670 = vunpack.c.l.b16 %v651
    %v671 = vunpack.c.h.b16 %v651
    %v672 = vunpack.c.l.b16 %v652
    %v673 = vunpack.c.h.b16 %v652
    %v674 = vunpack.c.l.b16 %v653
    %v675 = vunpack.c.h.b16 %v653
    %v676 = vunpack.c.l.b16 %v654
    %v677 = vunpack.c.h.b16 %v654
    %v678 = vunpack.c.l.b16 %v655
    %v679 = vunpack.c.h.b16 %v655
    %v680 = vpack.c.b16 %v664, %v664
    %v681 = vpack.c.b16 %v665, %v665
    %v682 = vpack.c.b16 %v666, %v666
    %v683 = vpack.c.b16 %v667, %v667
    %v684 = vpack.c.b16 %v668, %v668
    %v685 = vpack.c.b16 %v669, %v669
    %v686 = vpack.c.b16 %v670, %v670
    %v687 = vpack.c.b16 %v671, %v671
    %v688 = vpack.c.b16 %v672, %v672
    %v689 = vpack.c.b16 %v673, %v673
    %v690 = vpack.c.b16 %v674, %v674
    %v691 = vpack.c.b16 %v675, %v675
    %v692 = vpack.c.b16 %v676, %v676
    %v693 = vpack.c.b16 %v677, %v677
    %v694 = vpack.c.b16 %v678, %v678
    %v695 = vpack.c.b16 %v679, %v679
    %712 = vst [vmem:[%s2] sm:$0xf] %v680
    %713 = vst [vmem:[%s2 + $0x4] sm:$0xf] %v681
    %714 = vst [vmem:[%s2 + $0x8] sm:$0xf] %v682
    %715 = vst [vmem:[%s2 + $0xc] sm:$0xf] %v683
    %716 = vst [vmem:[%s2 + $0x10] sm:$0xf] %v684
    %717 = vst [vmem:[%s2 + $0x14] sm:$0xf] %v685
    %718 = vst [vmem:[%s2 + $0x18] sm:$0xf] %v686
    %719 = vst [vmem:[%s2 + $0x1c] sm:$0xf] %v687
    %720 = vst [vmem:[%s2 + $0x20] sm:$0xf] %v688
    %721 = vst [vmem:[%s2 + $0x24] sm:$0xf] %v689
    %722 = vst [vmem:[%s2 + $0x28] sm:$0xf] %v690
    %723 = vst [vmem:[%s2 + $0x2c] sm:$0xf] %v691
    %724 = vst [vmem:[%s2 + $0x30] sm:$0xf] %v692
    %725 = vst [vmem:[%s2 + $0x34] sm:$0xf] %v693
    %726 = vst [vmem:[%s2 + $0x38] sm:$0xf] %v694
    %727 = vst [vmem:[%s2 + $0x3c] sm:$0xf] %v695
    %v728 = vadd.f32 %v632, %v633
    %v729 = vadd.f32 %v728, %v634
    %v730 = vadd.f32 %v729, %v635
    %v731 = vadd.f32 %v730, %v636
    %v732 = vadd.f32 %v731, %v637
    %v733 = vadd.f32 %v732, %v638
    %v734 = vadd.f32 %v733, %v639
    %v735 = vadd.f32 %v734, %v640
    %v736 = vadd.f32 %v735, %v641
    %v737 = vadd.f32 %v736, %v642
    %v738 = vadd.f32 %v737, %v643
    %v739 = vadd.f32 %v738, %v644
    %v740 = vadd.f32 %v739, %v645
    %v741 = vadd.f32 %v740, %v646
    %v742 = vadd.f32 %v741, %v647
    %v743 = vrot.slane %v742, 4
    %v744 = vadd.f32 %v742, %v743
    %v745 = vrot.slane %v744, 2
    %v746 = vadd.f32 %v744, %v745
    %v747 = vrot.slane %v746, 1
    %v748 = vadd.f32 %v746, %v747
    %v749 = vmul.f32 %v632, %v632
    %v750 = vmul.f32 %v633, %v633
    %v751 = vmul.f32 %v634, %v634
    %v752 = vmul.f32 %v635, %v635
    %v753 = vmul.f32 %v636, %v636
    %v754 = vmul.f32 %v637, %v637
    %v755 = vmul.f32 %v638, %v638
    %v756 = vmul.f32 %v639, %v639
    %v757 = vmul.f32 %v640, %v640
    %v758 = vmul.f32 %v641, %v641
    %v759 = vmul.f32 %v642, %v642
    %v760 = vmul.f32 %v643, %v643
    %v761 = vmul.f32 %v644, %v644
    %v762 = vmul.f32 %v645, %v645
    %v763 = vmul.f32 %v646, %v646
    %v764 = vmul.f32 %v647, %v647
    %v765 = vadd.f32 %v749, %v750
    %v766 = vadd.f32 %v765, %v751
    %v767 = vadd.f32 %v766, %v752
    %v768 = vadd.f32 %v767, %v753
    %v769 = vadd.f32 %v768, %v754
    %v770 = vadd.f32 %v769, %v755
    %v771 = vadd.f32 %v770, %v756
    %v772 = vadd.f32 %v771, %v757
    %v773 = vadd.f32 %v772, %v758
    %v774 = vadd.f32 %v773, %v759
    %v775 = vadd.f32 %v774, %v760
    %v776 = vadd.f32 %v775, %v761
    %v777 = vadd.f32 %v776, %v762
    %v778 = vadd.f32 %v777, %v763
    %v779 = vadd.f32 %v778, %v764
    %v780 = vrot.slane %v779, 4
    %v781 = vadd.f32 %v779, %v780
    %v782 = vrot.slane %v781, 2
    %v783 = vadd.f32 %v781, %v782
    %v784 = vrot.slane %v783, 1
    %v785 = vadd.f32 %v783, %v784
    %786 = vst [vmem:[%s3] sm:$0xff] %v748
    %787 = vst [vmem:[%s4] sm:$0xff] %v785
  $region17: #{global_generator_forward.25} parent=0 // pred_fallthru
    _
  // Predicated region
  $region18: #{global_generator_forward.25} parent=0 // pred_check
    _
  $region19: #{global_generator_forward.25} parent=0 // pred_check_branch
    %789 = sbr.rel (0) target = $region21
  $region20: #{global_generator_forward.25} parent=0 // pred_region
    _
  $region21: #{global_generator_forward.25} parent=0 // pred_fallthru
    _
  // Predicated region
  $region22: #{global_generator_forward.25} parent=0 // pred_check
    _
  $region23: #{global_generator_forward.25} parent=0 // pred_check_branch
    %791 = sbr.rel (0) target = $region25
  $region24: #{global_generator_forward.25} parent=0 // pred_region
    _
  $region25: #{global_generator_forward.25} parent=0 // pred_fallthru
    _
  // Predicated region
  $region26: #{global_generator_forward.25} parent=0 // pred_check
    _
  $region27: #{global_generator_forward.25} parent=0 // pred_check_branch
    %793 = sbr.rel (0) target = $region29
  $region28: #{global_generator_forward.25} parent=0 // pred_region
    _
  $region29: #{global_generator_forward.25} parent=0 // pred_fallthru
    _
  // Predicated region
  $region30: #{global_generator_forward.25} parent=0 // pred_check
    _
  $region31: #{global_generator_forward.25} parent=0 // pred_check_branch
    %795 = sbr.rel (0) target = $region33
  $region32: #{global_generator_forward.25} parent=0 // pred_region
    _
  $region33: #{global_generator_forward.25} parent=0 // pred_fallthru
    _
  // Predicated region
  $region34: #{global_generator_forward.25} parent=0 // pred_check
    _
  $region35: #{global_generator_forward.25} parent=0 // pred_check_branch
    %797 = sbr.rel (0) target = $region37
  $region36: #{global_generator_forward.25} parent=0 // pred_region
    _
  $region37: #{global_generator_forward.25} parent=0 // pred_fallthru
    _
  // Predicated region
  $region38: #{global_generator_forward.25} parent=0 // pred_check
    _
  $region39: #{global_generator_forward.25} parent=0 // pred_check_branch
    %799 = sbr.rel (0) target = $region41
  $region40: #{global_generator_forward.25} parent=0 // pred_region
    _
  $region41: #{global_generator_forward.25} parent=0 // pred_fallthru
    _

// kernel: tile.179
$region0: #{tile.179}
  #allocation0 [shape = 's32[1]{0}', space=sflag, size = 0x4, scoped, tag = 'scoped memory for tile.179']
  %s0 = inlined_call_operand.vmem [shape: f32[16], index: 0, kind: input, shape index: {}]
  %s1 = inlined_call_operand.vmem [shape: f32[4,16], index: 1, kind: output, shape index: {}]
  // Predicated region
  $region2: #{tile.179} parent=0 // pred_check
    _
  $region3: #{tile.179} parent=0 // pred_check_branch
    %3 = sbr.rel (0) target = $region5
  $region4: #{tile.179} parent=0 // pred_region
    _
  $region5: #{tile.179} parent=0 // pred_fallthru
    _
  %v4 = vld [vmem:[%s0] ss:$0 sm:$0xff]
  %5 = vst [vmem:[%s1] sm:$0xf] %v4

// kernel: tile.186
$region0: #{tile.186}
  %s0 = inlined_call_operand.vmem [shape: f32[4,16], index: 0, kind: input, shape index: {}]
  %s1 = inlined_call_operand.vmem [shape: f32[64], index: 1, kind: output, shape index: {}]
  $region1: #{tile.186} parent=0
    #allocation0 [shape = 'u8[4096]{0}', space=vmem, size = 0x1000, scoped, tag = 'scoped mem for output reshape']
    #allocation1 [shape = 'u8[4096]{0}', space=vmem, size = 0x1000, scoped, tag = 'scoped mem for input reshape']
    %s3 = sshll.u32 1, 4
    %s4 = ssub.s32 %s3, 1
    %v5 = vld [vmem:[%s0] sm:%s4]
    %6 = vst [vmem:[#allocation1] sm:%s4] %v5
    %v7 = vld [vmem:[#allocation1] sm:$0x1]
    %vm8 = vcmask 130048
    %9 = vst.msk [vmem:[#allocation0] sm:$0x1] %vm8, %v7
    %s10 = scalar_lea.vmem [#allocation1], 3
    %v11 = vld [vmem:[%s10] sm:$0x1]
    %12 = vrot.lane.b32.xlu0 %v11, 48
    %v13 = vpop.permute.xlu0 %12
    %vm14 = vcmask 523648
    %15 = vst.msk [vmem:[#allocation0] sm:$0x1] %vm14, %v13
    %s16 = scalar_lea.vmem [#allocation1], 2
    %v17 = vld [vmem:[%s16] sm:$0x1]
    %18 = vrot.lane.b32.xlu0 %v17, 32
    %v19 = vpop.permute.xlu0 %18
    %vm20 = vcmask 392448
    %21 = vst.msk [vmem:[#allocation0] sm:$0x1] %vm20, %v19
    %s22 = scalar_lea.vmem [#allocation1], 1
    %v23 = vld [vmem:[%s22] sm:$0x1]
    %24 = vrot.lane.b32.xlu0 %v23, 16
    %v25 = vpop.permute.xlu0 %24
    %vm26 = vcmask 261248
    %27 = vst.msk [vmem:[#allocation0] sm:$0x1] %vm26, %v25
    %s29 = sshll.u32 1, 1
    %s30 = ssub.s32 %s29, 1
    %v32 = vld [vmem:[#allocation0] sm:%s30]
    %s33 = sshll.u32 1, 1
    %s34 = ssub.s32 %s33, 1
    %35 = vst [vmem:[%s1] sm:%s34] %v32

// kernel: tile.188
$region0: #{tile.188}
  %s0 = inlined_call_operand.vmem [shape: f32[2,64], index: 0, kind: input, shape index: {}]
  %s1 = inlined_call_operand.vmem [shape: f32[1,128], index: 1, kind: output, shape index: {}]
  $region1: #{tile.188} parent=0
    #allocation0 [shape = 'u8[4096]{0}', space=vmem, size = 0x1000, scoped, tag = 'scoped mem for output reshape']
    #allocation1 [shape = 'u8[4096]{0}', space=vmem, size = 0x1000, scoped, tag = 'scoped mem for input reshape']
    %s3 = sshll.u32 1, 2
    %s4 = ssub.s32 %s3, 1
    %v5 = vld [vmem:[%s0] sm:%s4]
    %6 = vst [vmem:[#allocation1] sm:%s4] %v5
    %v7 = vld [vmem:[#allocation1] sm:$0x1]
    %vm8 = vcmask 523264
    %9 = vst.msk [vmem:[#allocation0] sm:$0x1] %vm8, %v7
    %s10 = scalar_lea.vmem [#allocation1], 1
    %v11 = vld [vmem:[%s10] sm:$0x1]
    %12 = vrot.lane.b32.xlu0 %v11, 64
    %v13 = vpop.permute.xlu0 %12
    %vm14 = vcmask 1048064
    %15 = vst.msk [vmem:[#allocation0] sm:$0x1] %vm14, %v13
    %s17 = sshll.u32 1, 1
    %s18 = ssub.s32 %s17, 1
    %v20 = vld [vmem:[#allocation0] sm:%s18]
    %s21 = sshll.u32 1, 1
    %s22 = ssub.s32 %s21, 1
    %23 = vst [vmem:[%s1] sm:%s22] %v20

// kernel: tile.187
$region0: #{tile.187}
  #allocation0 [shape = 's32[1]{0}', space=sflag, size = 0x4, scoped, tag = 'scoped memory for tile.187']
  %s0 = inlined_call_operand.vmem [shape: f32[64], index: 0, kind: input, shape index: {}]
  %s1 = inlined_call_operand.vmem [shape: f32[2,64], index: 1, kind: output, shape index: {}]
  // Predicated region
  $region2: #{tile.187} parent=0 // pred_check
    _
  $region3: #{tile.187} parent=0 // pred_check_branch
    %3 = sbr.rel (0) target = $region5
  $region4: #{tile.187} parent=0 // pred_region
    _
  $region5: #{tile.187} parent=0 // pred_fallthru
    _
  %v4 = vld [vmem:[%s0] ss:$0 sm:$0xff]
  %5 = vst [vmem:[%s1] sm:$0x3] %v4

// kernel: tile.197
$region0: #{tile.197}
  #allocation0 [shape = 's32[1]{0}', space=sflag, size = 0x4, scoped, tag = 'scoped memory for tile.197']
  %s0 = inlined_call_operand.vmem [shape: f32[8], index: 0, kind: input, shape index: {}]
  %s1 = inlined_call_operand.vmem [shape: f32[4,8], index: 1, kind: output, shape index: {}]
  // Predicated region
  $region2: #{tile.197} parent=0 // pred_check
    _
  $region3: #{tile.197} parent=0 // pred_check_branch
    %3 = sbr.rel (0) target = $region5
  $region4: #{tile.197} parent=0 // pred_region
    _
  $region5: #{tile.197} parent=0 // pred_fallthru
    _
  %v4 = vld [vmem:[%s0] ss:$0 sm:$0xff]
  %5 = vst [vmem:[%s1] sm:$0xf] %v4

// kernel: tile.204
$region0: #{tile.204}
  %s0 = inlined_call_operand.vmem [shape: f32[4,8], index: 0, kind: input, shape index: {}]
  %s1 = inlined_call_operand.vmem [shape: f32[32], index: 1, kind: output, shape index: {}]
  $region1: #{tile.204} parent=0
    #allocation0 [shape = 'u8[4096]{0}', space=vmem, size = 0x1000, scoped, tag = 'scoped mem for output reshape']
    #allocation1 [shape = 'u8[4096]{0}', space=vmem, size = 0x1000, scoped, tag = 'scoped mem for input reshape']
    %s3 = sshll.u32 1, 4
    %s4 = ssub.s32 %s3, 1
    %v5 = vld [vmem:[%s0] sm:%s4]
    %6 = vst [vmem:[#allocation1] sm:%s4] %v5
    %v7 = vld [vmem:[#allocation1] sm:$0x1]
    %vm8 = vcmask 64512
    %9 = vst.msk [vmem:[#allocation0] sm:$0x1] %vm8, %v7
    %s10 = scalar_lea.vmem [#allocation1], 3
    %v11 = vld [vmem:[%s10] sm:$0x1]
    %12 = vrot.lane.b32.xlu0 %v11, 24
    %v13 = vpop.permute.xlu0 %12
    %vm14 = vcmask 261312
    %15 = vst.msk [vmem:[#allocation0] sm:$0x1] %vm14, %v13
    %s16 = scalar_lea.vmem [#allocation1], 2
    %v17 = vld [vmem:[%s16] sm:$0x1]
    %18 = vrot.lane.b32.xlu0 %v17, 16
    %v19 = vpop.permute.xlu0 %18
    %vm20 = vcmask 195712
    %21 = vst.msk [vmem:[#allocation0] sm:$0x1] %vm20, %v19
    %s22 = scalar_lea.vmem [#allocation1], 1
    %v23 = vld [vmem:[%s22] sm:$0x1]
    %24 = vrot.lane.b32.xlu0 %v23, 8
    %v25 = vpop.permute.xlu0 %24
    %vm26 = vcmask 130112
    %27 = vst.msk [vmem:[#allocation0] sm:$0x1] %vm26, %v25
    %s29 = sshll.u32 1, 1
    %s30 = ssub.s32 %s29, 1
    %v32 = vld [vmem:[#allocation0] sm:%s30]
    %s33 = sshll.u32 1, 1
    %s34 = ssub.s32 %s33, 1
    %35 = vst [vmem:[%s1] sm:%s34] %v32

// kernel: global_generator_forward.37
$region0: #{global_generator_forward.37}
  #allocation0 [shape = 'u32[]', space=smem, size = 0x4, offset = 0x4, fixed_abs, tag = 'smem constant byte address 0x4 - core index']
  #allocation1 [shape = 'u32[144,128]{1,0:T(1,128)}', space=vmem, size = 0x12000, scoped, tag = 'internal scratch']
  #allocation2 [shape = 'f32[512,128]{1,0:T(8,128)}', space=vmem, size = 0x40000, scoped, tag = 'scratch operand']
  %s0 = inlined_call_operand.vmem [shape: bf16[512,512], index: 0, kind: input, shape index: {}]
  %s1 = inlined_call_operand.vmem [shape: bf16[512,128], index: 1, kind: input, shape index: {}]
  %s2 = inlined_call_operand.vmem [shape: f32[1,128], index: 2, kind: input, shape index: {}]
  %s3 = inlined_call_operand.vmem [shape: f32[512,128], index: 3, kind: output, shape index: {}]
  %s4 = sld [smem:[#allocation0]]
  $region30: #{global_generator_forward.37} parent=0
    _
  %s6 = ssub.s32 1, %s4
  %s7 = scalar_select 0, %s6, %s4
  // Predicated region
  $region2: #{global_generator_forward.37} parent=0 // pred_check
    _
  $region3: #{global_generator_forward.37} parent=0 // pred_check_branch
    %9 = sbr.rel (0) target = $region5
  $region4: #{global_generator_forward.37} parent=0 // pred_region
    _
  $region5: #{global_generator_forward.37} parent=0 // pred_fallthru
    _
  // Predicated region
  $region6: #{global_generator_forward.37} parent=0 // pred_check
    _
  $region7: #{global_generator_forward.37} parent=0 // pred_check_branch
    %11 = sbr.rel (0) target = $region9
  $region8: #{global_generator_forward.37} parent=0 // pred_region
    _
  $region9: #{global_generator_forward.37} parent=0 // pred_fallthru
    _
  // Predicated region
  $region10: #{global_generator_forward.37} parent=0 // pred_check
    _
  $region11: #{global_generator_forward.37} parent=0 // pred_check_branch
    %13 = sbr.rel (0) target = $region13
  $region12: #{global_generator_forward.37} parent=0 // pred_region
    _
  $region13: #{global_generator_forward.37} parent=0 // pred_fallthru
    _
  %p15 = scmp.eq.s32.totalorder 0, 0
  // Predicated region
  $region14: #{global_generator_forward.37} parent=0 // pred_check
    %p16 = pneg %p15
  $region15: #{global_generator_forward.37} parent=0 // pred_check_branch
    %18 = sbr.rel (%p16) target = $region17
  $region16: #{global_generator_forward.37} parent=0 // pred_region
    %19 = vst [vmem:[#allocation2] sm:$0xff] 0.0
    %20 = vst [vmem:[#allocation2 + $0x8] sm:$0xff] 0.0
    %21 = vst [vmem:[#allocation2 + $0x10] sm:$0xff] 0.0
    %22 = vst [vmem:[#allocation2 + $0x18] sm:$0xff] 0.0
    %23 = vst [vmem:[#allocation2 + $0x20] sm:$0xff] 0.0
    %24 = vst [vmem:[#allocation2 + $0x28] sm:$0xff] 0.0
    %25 = vst [vmem:[#allocation2 + $0x30] sm:$0xff] 0.0
    %26 = vst [vmem:[#allocation2 + $0x38] sm:$0xff] 0.0
    %27 = vst [vmem:[#allocation2 + $0x40] sm:$0xff] 0.0
    %28 = vst [vmem:[#allocation2 + $0x48] sm:$0xff] 0.0
    %29 = vst [vmem:[#allocation2 + $0x50] sm:$0xff] 0.0
    %30 = vst [vmem:[#allocation2 + $0x58] sm:$0xff] 0.0
    %31 = vst [vmem:[#allocation2 + $0x60] sm:$0xff] 0.0
    %32 = vst [vmem:[#allocation2 + $0x68] sm:$0xff] 0.0
    %33 = vst [vmem:[#allocation2 + $0x70] sm:$0xff] 0.0
    %34 = vst [vmem:[#allocation2 + $0x78] sm:$0xff] 0.0
    %35 = vst [vmem:[#allocation2 + $0x80] sm:$0xff] 0.0
    %36 = vst [vmem:[#allocation2 + $0x88] sm:$0xff] 0.0
    %37 = vst [vmem:[#allocation2 + $0x90] sm:$0xff] 0.0
    %38 = vst [vmem:[#allocation2 + $0x98] sm:$0xff] 0.0
    %39 = vst [vmem:[#allocation2 + $0xa0] sm:$0xff] 0.0
    %40 = vst [vmem:[#allocation2 + $0xa8] sm:$0xff] 0.0
    %41 = vst [vmem:[#allocation2 + $0xb0] sm:$0xff] 0.0
    %42 = vst [vmem:[#allocation2 + $0xb8] sm:$0xff] 0.0
    %43 = vst [vmem:[#allocation2 + $0xc0] sm:$0xff] 0.0
    %44 = vst [vmem:[#allocation2 + $0xc8] sm:$0xff] 0.0
    %45 = vst [vmem:[#allocation2 + $0xd0] sm:$0xff] 0.0
    %46 = vst [vmem:[#allocation2 + $0xd8] sm:$0xff] 0.0
    %47 = vst [vmem:[#allocation2 + $0xe0] sm:$0xff] 0.0
    %48 = vst [vmem:[#allocation2 + $0xe8] sm:$0xff] 0.0
    %49 = vst [vmem:[#allocation2 + $0xf0] sm:$0xff] 0.0
    %50 = vst [vmem:[#allocation2 + $0xf8] sm:$0xff] 0.0
    %51 = vst [vmem:[#allocation2 + $0x100] sm:$0xff] 0.0
    %52 = vst [vmem:[#allocation2 + $0x108] sm:$0xff] 0.0
    %53 = vst [vmem:[#allocation2 + $0x110] sm:$0xff] 0.0
    %54 = vst [vmem:[#allocation2 + $0x118] sm:$0xff] 0.0
    %55 = vst [vmem:[#allocation2 + $0x120] sm:$0xff] 0.0
    %56 = vst [vmem:[#allocation2 + $0x128] sm:$0xff] 0.0
    %57 = vst [vmem:[#allocation2 + $0x130] sm:$0xff] 0.0
    %58 = vst [vmem:[#allocation2 + $0x138] sm:$0xff] 0.0
    %59 = vst [vmem:[#allocation2 + $0x140] sm:$0xff] 0.0
    %60 = vst [vmem:[#allocation2 + $0x148] sm:$0xff] 0.0
    %61 = vst [vmem:[#allocation2 + $0x150] sm:$0xff] 0.0
    %62 = vst [vmem:[#allocation2 + $0x158] sm:$0xff] 0.0
    %63 = vst [vmem:[#allocation2 + $0x160] sm:$0xff] 0.0
    %64 = vst [vmem:[#allocation2 + $0x168] sm:$0xff] 0.0
    %65 = vst [vmem:[#allocation2 + $0x170] sm:$0xff] 0.0
    %66 = vst [vmem:[#allocation2 + $0x178] sm:$0xff] 0.0
    %67 = vst [vmem:[#allocation2 + $0x180] sm:$0xff] 0.0
    %68 = vst [vmem:[#allocation2 + $0x188] sm:$0xff] 0.0
    %69 = vst [vmem:[#allocation2 + $0x190] sm:$0xff] 0.0
    %70 = vst [vmem:[#allocation2 + $0x198] sm:$0xff] 0.0
    %71 = vst [vmem:[#allocation2 + $0x1a0] sm:$0xff] 0.0
    %72 = vst [vmem:[#allocation2 + $0x1a8] sm:$0xff] 0.0
    %73 = vst [vmem:[#allocation2 + $0x1b0] sm:$0xff] 0.0
    %74 = vst [vmem:[#allocation2 + $0x1b8] sm:$0xff] 0.0
    %75 = vst [vmem:[#allocation2 + $0x1c0] sm:$0xff] 0.0
    %76 = vst [vmem:[#allocation2 + $0x1c8] sm:$0xff] 0.0
    %77 = vst [vmem:[#allocation2 + $0x1d0] sm:$0xff] 0.0
    %78 = vst [vmem:[#allocation2 + $0x1d8] sm:$0xff] 0.0
    %79 = vst [vmem:[#allocation2 + $0x1e0] sm:$0xff] 0.0
    %80 = vst [vmem:[#allocation2 + $0x1e8] sm:$0xff] 0.0
    %81 = vst [vmem:[#allocation2 + $0x1f0] sm:$0xff] 0.0
    %82 = vst [vmem:[#allocation2 + $0x1f8] sm:$0xff] 0.0
  $region17: #{global_generator_forward.37} parent=0 // pred_fallthru
    _
  %v83 = vld [vmem:[#allocation2] sm:$0xff]
  %v84 = vld [vmem:[#allocation2 + $0x8] sm:$0xff]
  %v85 = vld [vmem:[#allocation2 + $0x10] sm:$0xff]
  %v86 = vld [vmem:[#allocation2 + $0x18] sm:$0xff]
  %v87 = vld [vmem:[#allocation2 + $0x20] sm:$0xff]
  %v88 = vld [vmem:[#allocation2 + $0x28] sm:$0xff]
  %v89 = vld [vmem:[#allocation2 + $0x30] sm:$0xff]
  %v90 = vld [vmem:[#allocation2 + $0x38] sm:$0xff]
  %v91 = vld [vmem:[#allocation2 + $0x40] sm:$0xff]
  %v92 = vld [vmem:[#allocation2 + $0x48] sm:$0xff]
  %v93 = vld [vmem:[#allocation2 + $0x50] sm:$0xff]
  %v94 = vld [vmem:[#allocation2 + $0x58] sm:$0xff]
  %v95 = vld [vmem:[#allocation2 + $0x60] sm:$0xff]
  %v96 = vld [vmem:[#allocation2 + $0x68] sm:$0xff]
  %v97 = vld [vmem:[#allocation2 + $0x70] sm:$0xff]
  %v98 = vld [vmem:[#allocation2 + $0x78] sm:$0xff]
  %v99 = vld [vmem:[#allocation2 + $0x80] sm:$0xff]
  %v100 = vld [vmem:[#allocation2 + $0x88] sm:$0xff]
  %v101 = vld [vmem:[#allocation2 + $0x90] sm:$0xff]
  %v102 = vld [vmem:[#allocation2 + $0x98] sm:$0xff]
  %v103 = vld [vmem:[#allocation2 + $0xa0] sm:$0xff]
  %v104 = vld [vmem:[#allocation2 + $0xa8] sm:$0xff]
  %v105 = vld [vmem:[#allocation2 + $0xb0] sm:$0xff]
  %v106 = vld [vmem:[#allocation2 + $0xb8] sm:$0xff]
  %v107 = vld [vmem:[#allocation2 + $0xc0] sm:$0xff]
  %v108 = vld [vmem:[#allocation2 + $0xc8] sm:$0xff]
  %v109 = vld [vmem:[#allocation2 + $0xd0] sm:$0xff]
  %v110 = vld [vmem:[#allocation2 + $0xd8] sm:$0xff]
  %v111 = vld [vmem:[#allocation2 + $0xe0] sm:$0xff]
  %v112 = vld [vmem:[#allocation2 + $0xe8] sm:$0xff]
  %v113 = vld [vmem:[#allocation2 + $0xf0] sm:$0xff]
  %v114 = vld [vmem:[#allocation2 + $0xf8] sm:$0xff]
  %v115 = vld [vmem:[#allocation2 + $0x100] sm:$0xff]
  %v116 = vld [vmem:[#allocation2 + $0x108] sm:$0xff]
  %v117 = vld [vmem:[#allocation2 + $0x110] sm:$0xff]
  %v118 = vld [vmem:[#allocation2 + $0x118] sm:$0xff]
  %v119 = vld [vmem:[#allocation2 + $0x120] sm:$0xff]
  %v120 = vld [vmem:[#allocation2 + $0x128] sm:$0xff]
  %v121 = vld [vmem:[#allocation2 + $0x130] sm:$0xff]
  %v122 = vld [vmem:[#allocation2 + $0x138] sm:$0xff]
  %v123 = vld [vmem:[#allocation2 + $0x140] sm:$0xff]
  %v124 = vld [vmem:[#allocation2 + $0x148] sm:$0xff]
  %v125 = vld [vmem:[#allocation2 + $0x150] sm:$0xff]
  %v126 = vld [vmem:[#allocation2 + $0x158] sm:$0xff]
  %v127 = vld [vmem:[#allocation2 + $0x160] sm:$0xff]
  %v128 = vld [vmem:[#allocation2 + $0x168] sm:$0xff]
  %v129 = vld [vmem:[#allocation2 + $0x170] sm:$0xff]
  %v130 = vld [vmem:[#allocation2 + $0x178] sm:$0xff]
  %v131 = vld [vmem:[#allocation2 + $0x180] sm:$0xff]
  %v132 = vld [vmem:[#allocation2 + $0x188] sm:$0xff]
  %v133 = vld [vmem:[#allocation2 + $0x190] sm:$0xff]
  %v134 = vld [vmem:[#allocation2 + $0x198] sm:$0xff]
  %v135 = vld [vmem:[#allocation2 + $0x1a0] sm:$0xff]
  %v136 = vld [vmem:[#allocation2 + $0x1a8] sm:$0xff]
  %v137 = vld [vmem:[#allocation2 + $0x1b0] sm:$0xff]
  %v138 = vld [vmem:[#allocation2 + $0x1b8] sm:$0xff]
  %v139 = vld [vmem:[#allocation2 + $0x1c0] sm:$0xff]
  %v140 = vld [vmem:[#allocation2 + $0x1c8] sm:$0xff]
  %v141 = vld [vmem:[#allocation2 + $0x1d0] sm:$0xff]
  %v142 = vld [vmem:[#allocation2 + $0x1d8] sm:$0xff]
  %v143 = vld [vmem:[#allocation2 + $0x1e0] sm:$0xff]
  %v144 = vld [vmem:[#allocation2 + $0x1e8] sm:$0xff]
  %v145 = vld [vmem:[#allocation2 + $0x1f0] sm:$0xff]
  %v146 = vld [vmem:[#allocation2 + $0x1f8] sm:$0xff]
  %v147 = vld [vmem:[%s0] sm:$0xff]
  %v148 = vld [vmem:[%s0 + $0x8] sm:$0xff]
  %v149 = vld [vmem:[%s0 + $0x10] sm:$0xff]
  %v150 = vld [vmem:[%s0 + $0x18] sm:$0xff]
  %v151 = vld [vmem:[%s0 + $0x20] sm:$0xff]
  %v152 = vld [vmem:[%s0 + $0x28] sm:$0xff]
  %v153 = vld [vmem:[%s0 + $0x30] sm:$0xff]
  %v154 = vld [vmem:[%s0 + $0x38] sm:$0xff]
  %v155 = vld [vmem:[%s0 + $0x40] sm:$0xff]
  %v156 = vld [vmem:[%s0 + $0x48] sm:$0xff]
  %v157 = vld [vmem:[%s0 + $0x50] sm:$0xff]
  %v158 = vld [vmem:[%s0 + $0x58] sm:$0xff]
  %v159 = vld [vmem:[%s0 + $0x60] sm:$0xff]
  %v160 = vld [vmem:[%s0 + $0x68] sm:$0xff]
  %v161 = vld [vmem:[%s0 + $0x70] sm:$0xff]
  %v162 = vld [vmem:[%s0 + $0x78] sm:$0xff]
  %v163 = vld [vmem:[%s0 + $0x80] sm:$0xff]
  %v164 = vld [vmem:[%s0 + $0x88] sm:$0xff]
  %v165 = vld [vmem:[%s0 + $0x90] sm:$0xff]
  %v166 = vld [vmem:[%s0 + $0x98] sm:$0xff]
  %v167 = vld [vmem:[%s0 + $0xa0] sm:$0xff]
  %v168 = vld [vmem:[%s0 + $0xa8] sm:$0xff]
  %v169 = vld [vmem:[%s0 + $0xb0] sm:$0xff]
  %v170 = vld [vmem:[%s0 + $0xb8] sm:$0xff]
  %v171 = vld [vmem:[%s0 + $0xc0] sm:$0xff]
  %v172 = vld [vmem:[%s0 + $0xc8] sm:$0xff]
  %v173 = vld [vmem:[%s0 + $0xd0] sm:$0xff]
  %v174 = vld [vmem:[%s0 + $0xd8] sm:$0xff]
  %v175 = vld [vmem:[%s0 + $0xe0] sm:$0xff]
  %v176 = vld [vmem:[%s0 + $0xe8] sm:$0xff]
  %v177 = vld [vmem:[%s0 + $0xf0] sm:$0xff]
  %v178 = vld [vmem:[%s0 + $0xf8] sm:$0xff]
  %v179 = vld [vmem:[%s0 + $0x100] sm:$0xff]
  %v180 = vld [vmem:[%s0 + $0x108] sm:$0xff]
  %v181 = vld [vmem:[%s0 + $0x110] sm:$0xff]
  %v182 = vld [vmem:[%s0 + $0x118] sm:$0xff]
  %v183 = vld [vmem:[%s0 + $0x120] sm:$0xff]
  %v184 = vld [vmem:[%s0 + $0x128] sm:$0xff]
  %v185 = vld [vmem:[%s0 + $0x130] sm:$0xff]
  %v186 = vld [vmem:[%s0 + $0x138] sm:$0xff]
  %v187 = vld [vmem:[%s0 + $0x140] sm:$0xff]
  %v188 = vld [vmem:[%s0 + $0x148] sm:$0xff]
  %v189 = vld [vmem:[%s0 + $0x150] sm:$0xff]
  %v190 = vld [vmem:[%s0 + $0x158] sm:$0xff]
  %v191 = vld [vmem:[%s0 + $0x160] sm:$0xff]
  %v192 = vld [vmem:[%s0 + $0x168] sm:$0xff]
  %v193 = vld [vmem:[%s0 + $0x170] sm:$0xff]
  %v194 = vld [vmem:[%s0 + $0x178] sm:$0xff]
  %v195 = vld [vmem:[%s0 + $0x180] sm:$0xff]
  %v196 = vld [vmem:[%s0 + $0x188] sm:$0xff]
  %v197 = vld [vmem:[%s0 + $0x190] sm:$0xff]
  %v198 = vld [vmem:[%s0 + $0x198] sm:$0xff]
  %v199 = vld [vmem:[%s0 + $0x1a0] sm:$0xff]
  %v200 = vld [vmem:[%s0 + $0x1a8] sm:$0xff]
  %v201 = vld [vmem:[%s0 + $0x1b0] sm:$0xff]
  %v202 = vld [vmem:[%s0 + $0x1b8] sm:$0xff]
  %v203 = vld [vmem:[%s0 + $0x1c0] sm:$0xff]
  %v204 = vld [vmem:[%s0 + $0x1c8] sm:$0xff]
  %v205 = vld [vmem:[%s0 + $0x1d0] sm:$0xff]
  %v206 = vld [vmem:[%s0 + $0x1d8] sm:$0xff]
  %v207 = vld [vmem:[%s0 + $0x1e0] sm:$0xff]
  %v208 = vld [vmem:[%s0 + $0x1e8] sm:$0xff]
  %v209 = vld [vmem:[%s0 + $0x1f0] sm:$0xff]
  %v210 = vld [vmem:[%s0 + $0x1f8] sm:$0xff]
  %v211 = vld [vmem:[%s0 + $0x200] sm:$0xff]
  %v212 = vld [vmem:[%s0 + $0x208] sm:$0xff]
  %v213 = vld [vmem:[%s0 + $0x210] sm:$0xff]
  %v214 = vld [vmem:[%s0 + $0x218] sm:$0xff]
  %v215 = vld [vmem:[%s0 + $0x220] sm:$0xff]
  %v216 = vld [vmem:[%s0 + $0x228] sm:$0xff]
  %v217 = vld [vmem:[%s0 + $0x230] sm:$0xff]
  %v218 = vld [vmem:[%s0 + $0x238] sm:$0xff]
  %v219 = vld [vmem:[%s0 + $0x240] sm:$0xff]
  %v220 = vld [vmem:[%s0 + $0x248] sm:$0xff]
  %v221 = vld [vmem:[%s0 + $0x250] sm:$0xff]
  %v222 = vld [vmem:[%s0 + $0x258] sm:$0xff]
  %v223 = vld [vmem:[%s0 + $0x260] sm:$0xff]
  %v224 = vld [vmem:[%s0 + $0x268] sm:$0xff]
  %v225 = vld [vmem:[%s0 + $0x270] sm:$0xff]
  %v226 = vld [vmem:[%s0 + $0x278] sm:$0xff]
  %v227 = vld [vmem:[%s0 + $0x280] sm:$0xff]
  %v228 = vld [vmem:[%s0 + $0x288] sm:$0xff]
  %v229 = vld [vmem:[%s0 + $0x290] sm:$0xff]
  %v230 = vld [vmem:[%s0 + $0x298] sm:$0xff]
  %v231 = vld [vmem:[%s0 + $0x2a0] sm:$0xff]
  %v232 = vld [vmem:[%s0 + $0x2a8] sm:$0xff]
  %v233 = vld [vmem:[%s0 + $0x2b0] sm:$0xff]
  %v234 = vld [vmem:[%s0 + $0x2b8] sm:$0xff]
  %v235 = vld [vmem:[%s0 + $0x2c0] sm:$0xff]
  %v236 = vld [vmem:[%s0 + $0x2c8] sm:$0xff]
  %v237 = vld [vmem:[%s0 + $0x2d0] sm:$0xff]
  %v238 = vld [vmem:[%s0 + $0x2d8] sm:$0xff]
  %v239 = vld [vmem:[%s0 + $0x2e0] sm:$0xff]
  %v240 = vld [vmem:[%s0 + $0x2e8] sm:$0xff]
  %v241 = vld [vmem:[%s0 + $0x2f0] sm:$0xff]
  %v242 = vld [vmem:[%s0 + $0x2f8] sm:$0xff]
  %v243 = vld [vmem:[%s0 + $0x300] sm:$0xff]
  %v244 = vld [vmem:[%s0 + $0x308] sm:$0xff]
  %v245 = vld [vmem:[%s0 + $0x310] sm:$0xff]
  %v246 = vld [vmem:[%s0 + $0x318] sm:$0xff]
  %v247 = vld [vmem:[%s0 + $0x320] sm:$0xff]
  %v248 = vld [vmem:[%s0 + $0x328] sm:$0xff]
  %v249 = vld [vmem:[%s0 + $0x330] sm:$0xff]
  %v250 = vld [vmem:[%s0 + $0x338] sm:$0xff]
  %v251 = vld [vmem:[%s0 + $0x340] sm:$0xff]
  %v252 = vld [vmem:[%s0 + $0x348] sm:$0xff]
  %v253 = vld [vmem:[%s0 + $0x350] sm:$0xff]
  %v254 = vld [vmem:[%s0 + $0x358] sm:$0xff]
  %v255 = vld [vmem:[%s0 + $0x360] sm:$0xff]
  %v256 = vld [vmem:[%s0 + $0x368] sm:$0xff]
  %v257 = vld [vmem:[%s0 + $0x370] sm:$0xff]
  %v258 = vld [vmem:[%s0 + $0x378] sm:$0xff]
  %v259 = vld [vmem:[%s0 + $0x380] sm:$0xff]
  %v260 = vld [vmem:[%s0 + $0x388] sm:$0xff]
  %v261 = vld [vmem:[%s0 + $0x390] sm:$0xff]
  %v262 = vld [vmem:[%s0 + $0x398] sm:$0xff]
  %v263 = vld [vmem:[%s0 + $0x3a0] sm:$0xff]
  %v264 = vld [vmem:[%s0 + $0x3a8] sm:$0xff]
  %v265 = vld [vmem:[%s0 + $0x3b0] sm:$0xff]
  %v266 = vld [vmem:[%s0 + $0x3b8] sm:$0xff]
  %v267 = vld [vmem:[%s0 + $0x3c0] sm:$0xff]
  %v268 = vld [vmem:[%s0 + $0x3c8] sm:$0xff]
  %v269 = vld [vmem:[%s0 + $0x3d0] sm:$0xff]
  %v270 = vld [vmem:[%s0 + $0x3d8] sm:$0xff]
  %v271 = vld [vmem:[%s0 + $0x3e0] sm:$0xff]
  %v272 = vld [vmem:[%s0 + $0x3e8] sm:$0xff]
  %v273 = vld [vmem:[%s0 + $0x3f0] sm:$0xff]
  %v274 = vld [vmem:[%s0 + $0x3f8] sm:$0xff]
  %v275 = vld [vmem:[%s1] sm:$0xf]
  %v276 = vld [vmem:[%s1 + $0x4] sm:$0xf]
  %v277 = vld [vmem:[%s1 + $0x8] sm:$0xf]
  %v278 = vld [vmem:[%s1 + $0xc] sm:$0xf]
  %v279 = vld [vmem:[%s1 + $0x10] sm:$0xf]
  %v280 = vld [vmem:[%s1 + $0x14] sm:$0xf]
  %v281 = vld [vmem:[%s1 + $0x18] sm:$0xf]
  %v282 = vld [vmem:[%s1 + $0x1c] sm:$0xf]
  %v283 = vld [vmem:[%s1 + $0x20] sm:$0xf]
  %v284 = vld [vmem:[%s1 + $0x24] sm:$0xf]
  %v285 = vld [vmem:[%s1 + $0x28] sm:$0xf]
  %v286 = vld [vmem:[%s1 + $0x2c] sm:$0xf]
  %v287 = vld [vmem:[%s1 + $0x30] sm:$0xf]
  %v288 = vld [vmem:[%s1 + $0x34] sm:$0xf]
  %v289 = vld [vmem:[%s1 + $0x38] sm:$0xf]
  %v290 = vld [vmem:[%s1 + $0x3c] sm:$0xf]
  %v291 = vld [vmem:[%s1 + $0x40] sm:$0xf]
  %v292 = vld [vmem:[%s1 + $0x44] sm:$0xf]
  %v293 = vld [vmem:[%s1 + $0x48] sm:$0xf]
  %v294 = vld [vmem:[%s1 + $0x4c] sm:$0xf]
  %v295 = vld [vmem:[%s1 + $0x50] sm:$0xf]
  %v296 = vld [vmem:[%s1 + $0x54] sm:$0xf]
  %v297 = vld [vmem:[%s1 + $0x58] sm:$0xf]
  %v298 = vld [vmem:[%s1 + $0x5c] sm:$0xf]
  %v299 = vld [vmem:[%s1 + $0x60] sm:$0xf]
  %v300 = vld [vmem:[%s1 + $0x64] sm:$0xf]
  %v301 = vld [vmem:[%s1 + $0x68] sm:$0xf]
  %v302 = vld [vmem:[%s1 + $0x6c] sm:$0xf]
  %v303 = vld [vmem:[%s1 + $0x70] sm:$0xf]
  %v304 = vld [vmem:[%s1 + $0x74] sm:$0xf]
  %v305 = vld [vmem:[%s1 + $0x78] sm:$0xf]
  %v306 = vld [vmem:[%s1 + $0x7c] sm:$0xf]
  %v307 = vld [vmem:[%s1 + $0x80] sm:$0xf]
  %v308 = vld [vmem:[%s1 + $0x84] sm:$0xf]
  %v309 = vld [vmem:[%s1 + $0x88] sm:$0xf]
  %v310 = vld [vmem:[%s1 + $0x8c] sm:$0xf]
  %v311 = vld [vmem:[%s1 + $0x90] sm:$0xf]
  %v312 = vld [vmem:[%s1 + $0x94] sm:$0xf]
  %v313 = vld [vmem:[%s1 + $0x98] sm:$0xf]
  %v314 = vld [vmem:[%s1 + $0x9c] sm:$0xf]
  %v315 = vld [vmem:[%s1 + $0xa0] sm:$0xf]
  %v316 = vld [vmem:[%s1 + $0xa4] sm:$0xf]
  %v317 = vld [vmem:[%s1 + $0xa8] sm:$0xf]
  %v318 = vld [vmem:[%s1 + $0xac] sm:$0xf]
  %v319 = vld [vmem:[%s1 + $0xb0] sm:$0xf]
  %v320 = vld [vmem:[%s1 + $0xb4] sm:$0xf]
  %v321 = vld [vmem:[%s1 + $0xb8] sm:$0xf]
  %v322 = vld [vmem:[%s1 + $0xbc] sm:$0xf]
  %v323 = vld [vmem:[%s1 + $0xc0] sm:$0xf]
  %v324 = vld [vmem:[%s1 + $0xc4] sm:$0xf]
  %v325 = vld [vmem:[%s1 + $0xc8] sm:$0xf]
  %v326 = vld [vmem:[%s1 + $0xcc] sm:$0xf]
  %v327 = vld [vmem:[%s1 + $0xd0] sm:$0xf]
  %v328 = vld [vmem:[%s1 + $0xd4] sm:$0xf]
  %v329 = vld [vmem:[%s1 + $0xd8] sm:$0xf]
  %v330 = vld [vmem:[%s1 + $0xdc] sm:$0xf]
  %v331 = vld [vmem:[%s1 + $0xe0] sm:$0xf]
  %v332 = vld [vmem:[%s1 + $0xe4] sm:$0xf]
  %v333 = vld [vmem:[%s1 + $0xe8] sm:$0xf]
  %v334 = vld [vmem:[%s1 + $0xec] sm:$0xf]
  %v335 = vld [vmem:[%s1 + $0xf0] sm:$0xf]
  %v336 = vld [vmem:[%s1 + $0xf4] sm:$0xf]
  %v337 = vld [vmem:[%s1 + $0xf8] sm:$0xf]
  %v338 = vld [vmem:[%s1 + $0xfc] sm:$0xf]
  %v467 = vunpack.c.l.b16 %v147
  %v468 = vunpack.c.h.b16 %v147
  %v469 = vunpack.c.l.b16 %v148
  %v470 = vunpack.c.h.b16 %v148
  %v471 = vunpack.c.l.b16 %v149
  %v472 = vunpack.c.h.b16 %v149
  %v473 = vunpack.c.l.b16 %v150
  %v474 = vunpack.c.h.b16 %v150
  %v475 = vunpack.c.l.b16 %v151
  %v476 = vunpack.c.h.b16 %v151
  %v477 = vunpack.c.l.b16 %v152
  %v478 = vunpack.c.h.b16 %v152
  %v479 = vunpack.c.l.b16 %v153
  %v480 = vunpack.c.h.b16 %v153
  %v481 = vunpack.c.l.b16 %v154
  %v482 = vunpack.c.h.b16 %v154
  %v483 = vunpack.c.l.b16 %v155
  %v484 = vunpack.c.h.b16 %v155
  %v485 = vunpack.c.l.b16 %v156
  %v486 = vunpack.c.h.b16 %v156
  %v487 = vunpack.c.l.b16 %v157
  %v488 = vunpack.c.h.b16 %v157
  %v489 = vunpack.c.l.b16 %v158
  %v490 = vunpack.c.h.b16 %v158
  %v491 = vunpack.c.l.b16 %v159
  %v492 = vunpack.c.h.b16 %v159
  %v493 = vunpack.c.l.b16 %v160
  %v494 = vunpack.c.h.b16 %v160
  %v495 = vunpack.c.l.b16 %v161
  %v496 = vunpack.c.h.b16 %v161
  %v497 = vunpack.c.l.b16 %v162
  %v498 = vunpack.c.h.b16 %v162
  %v499 = vunpack.c.l.b16 %v163
  %v500 = vunpack.c.h.b16 %v163
  %v501 = vunpack.c.l.b16 %v164
  %v502 = vunpack.c.h.b16 %v164
  %v503 = vunpack.c.l.b16 %v165
  %v504 = vunpack.c.h.b16 %v165
  %v505 = vunpack.c.l.b16 %v166
  %v506 = vunpack.c.h.b16 %v166
  %v507 = vunpack.c.l.b16 %v167
  %v508 = vunpack.c.h.b16 %v167
  %v509 = vunpack.c.l.b16 %v168
  %v510 = vunpack.c.h.b16 %v168
  %v511 = vunpack.c.l.b16 %v169
  %v512 = vunpack.c.h.b16 %v169
  %v513 = vunpack.c.l.b16 %v170
  %v514 = vunpack.c.h.b16 %v170
  %v515 = vunpack.c.l.b16 %v171
  %v516 = vunpack.c.h.b16 %v171
  %v517 = vunpack.c.l.b16 %v172
  %v518 = vunpack.c.h.b16 %v172
  %v519 = vunpack.c.l.b16 %v173
  %v520 = vunpack.c.h.b16 %v173
  %v521 = vunpack.c.l.b16 %v174
  %v522 = vunpack.c.h.b16 %v174
  %v523 = vunpack.c.l.b16 %v175
  %v524 = vunpack.c.h.b16 %v175
  %v525 = vunpack.c.l.b16 %v176
  %v526 = vunpack.c.h.b16 %v176
  %v527 = vunpack.c.l.b16 %v177
  %v528 = vunpack.c.h.b16 %v177
  %v529 = vunpack.c.l.b16 %v178
  %v530 = vunpack.c.h.b16 %v178
  %v531 = vunpack.c.l.b16 %v179
  %v532 = vunpack.c.h.b16 %v179
  %v533 = vunpack.c.l.b16 %v180
  %v534 = vunpack.c.h.b16 %v180
  %v535 = vunpack.c.l.b16 %v181
  %v536 = vunpack.c.h.b16 %v181
  %v537 = vunpack.c.l.b16 %v182
  %v538 = vunpack.c.h.b16 %v182
  %v539 = vunpack.c.l.b16 %v183
  %v540 = vunpack.c.h.b16 %v183
  %v541 = vunpack.c.l.b16 %v184
  %v542 = vunpack.c.h.b16 %v184
  %v543 = vunpack.c.l.b16 %v185
  %v544 = vunpack.c.h.b16 %v185
  %v545 = vunpack.c.l.b16 %v186
  %v546 = vunpack.c.h.b16 %v186
  %v547 = vunpack.c.l.b16 %v187
  %v548 = vunpack.c.h.b16 %v187
  %v549 = vunpack.c.l.b16 %v188
  %v550 = vunpack.c.h.b16 %v188
  %v551 = vunpack.c.l.b16 %v189
  %v552 = vunpack.c.h.b16 %v189
  %v553 = vunpack.c.l.b16 %v190
  %v554 = vunpack.c.h.b16 %v190
  %v555 = vunpack.c.l.b16 %v191
  %v556 = vunpack.c.h.b16 %v191
  %v557 = vunpack.c.l.b16 %v192
  %v558 = vunpack.c.h.b16 %v192
  %v559 = vunpack.c.l.b16 %v193
  %v560 = vunpack.c.h.b16 %v193
  %v561 = vunpack.c.l.b16 %v194
  %v562 = vunpack.c.h.b16 %v194
  %v563 = vunpack.c.l.b16 %v195
  %v564 = vunpack.c.h.b16 %v195
  %v565 = vunpack.c.l.b16 %v196
  %v566 = vunpack.c.h.b16 %v196
  %v567 = vunpack.c.l.b16 %v197
  %v568 = vunpack.c.h.b16 %v197
  %v569 = vunpack.c.l.b16 %v198
  %v570 = vunpack.c.h.b16 %v198
  %v571 = vunpack.c.l.b16 %v199
  %v572 = vunpack.c.h.b16 %v199
  %v573 = vunpack.c.l.b16 %v200
  %v574 = vunpack.c.h.b16 %v200
  %v575 = vunpack.c.l.b16 %v201
  %v576 = vunpack.c.h.b16 %v201
  %v577 = vunpack.c.l.b16 %v202
  %v578 = vunpack.c.h.b16 %v202
  %v579 = vunpack.c.l.b16 %v203
  %v580 = vunpack.c.h.b16 %v203
  %v581 = vunpack.c.l.b16 %v204
  %v582 = vunpack.c.h.b16 %v204
  %v583 = vunpack.c.l.b16 %v205
  %v584 = vunpack.c.h.b16 %v205
  %v585 = vunpack.c.l.b16 %v206
  %v586 = vunpack.c.h.b16 %v206
  %v587 = vunpack.c.l.b16 %v207
  %v588 = vunpack.c.h.b16 %v207
  %v589 = vunpack.c.l.b16 %v208
  %v590 = vunpack.c.h.b16 %v208
  %v591 = vunpack.c.l.b16 %v209
  %v592 = vunpack.c.h.b16 %v209
  %v593 = vunpack.c.l.b16 %v210
  %v594 = vunpack.c.h.b16 %v210
  %v595 = vunpack.c.l.b16 %v211
  %v596 = vunpack.c.h.b16 %v211
  %v597 = vunpack.c.l.b16 %v212
  %v598 = vunpack.c.h.b16 %v212
  %v599 = vunpack.c.l.b16 %v213
  %v600 = vunpack.c.h.b16 %v213
  %v601 = vunpack.c.l.b16 %v214
  %v602 = vunpack.c.h.b16 %v214
  %v603 = vunpack.c.l.b16 %v215
  %v604 = vunpack.c.h.b16 %v215
  %v605 = vunpack.c.l.b16 %v216
  %v606 = vunpack.c.h.b16 %v216
  %v607 = vunpack.c.l.b16 %v217
  %v608 = vunpack.c.h.b16 %v217
  %v609 = vunpack.c.l.b16 %v218
  %v610 = vunpack.c.h.b16 %v218
  %v611 = vunpack.c.l.b16 %v219
  %v612 = vunpack.c.h.b16 %v219
  %v613 = vunpack.c.l.b16 %v220
  %v614 = vunpack.c.h.b16 %v220
  %v615 = vunpack.c.l.b16 %v221
  %v616 = vunpack.c.h.b16 %v221
  %v617 = vunpack.c.l.b16 %v222
  %v618 = vunpack.c.h.b16 %v222
  %v619 = vunpack.c.l.b16 %v223
  %v620 = vunpack.c.h.b16 %v223
  %v621 = vunpack.c.l.b16 %v224
  %v622 = vunpack.c.h.b16 %v224
  %v623 = vunpack.c.l.b16 %v225
  %v624 = vunpack.c.h.b16 %v225
  %v625 = vunpack.c.l.b16 %v226
  %v626 = vunpack.c.h.b16 %v226
  %v627 = vunpack.c.l.b16 %v227
  %v628 = vunpack.c.h.b16 %v227
  %v629 = vunpack.c.l.b16 %v228
  %v630 = vunpack.c.h.b16 %v228
  %v631 = vunpack.c.l.b16 %v229
  %v632 = vunpack.c.h.b16 %v229
  %v633 = vunpack.c.l.b16 %v230
  %v634 = vunpack.c.h.b16 %v230
  %v635 = vunpack.c.l.b16 %v231
  %v636 = vunpack.c.h.b16 %v231
  %v637 = vunpack.c.l.b16 %v232
  %v638 = vunpack.c.h.b16 %v232
  %v639 = vunpack.c.l.b16 %v233
  %v640 = vunpack.c.h.b16 %v233
  %v641 = vunpack.c.l.b16 %v234
  %v642 = vunpack.c.h.b16 %v234
  %v643 = vunpack.c.l.b16 %v235
  %v644 = vunpack.c.h.b16 %v235
  %v645 = vunpack.c.l.b16 %v236
  %v646 = vunpack.c.h.b16 %v236
  %v647 = vunpack.c.l.b16 %v237
  %v648 = vunpack.c.h.b16 %v237
  %v649 = vunpack.c.l.b16 %v238
  %v650 = vunpack.c.h.b16 %v238
  %v651 = vunpack.c.l.b16 %v239
  %v652 = vunpack.c.h.b16 %v239
  %v653 = vunpack.c.l.b16 %v240
  %v654 = vunpack.c.h.b16 %v240
  %v655 = vunpack.c.l.b16 %v241
  %v656 = vunpack.c.h.b16 %v241
  %v657 = vunpack.c.l.b16 %v242
  %v658 = vunpack.c.h.b16 %v242
  %v659 = vunpack.c.l.b16 %v243
  %v660 = vunpack.c.h.b16 %v243
  %v661 = vunpack.c.l.b16 %v244
  %v662 = vunpack.c.h.b16 %v244
  %v663 = vunpack.c.l.b16 %v245
  %v664 = vunpack.c.h.b16 %v245
  %v665 = vunpack.c.l.b16 %v246
  %v666 = vunpack.c.h.b16 %v246
  %v667 = vunpack.c.l.b16 %v247
  %v668 = vunpack.c.h.b16 %v247
  %v669 = vunpack.c.l.b16 %v248
  %v670 = vunpack.c.h.b16 %v248
  %v671 = vunpack.c.l.b16 %v249
  %v672 = vunpack.c.h.b16 %v249
  %v673 = vunpack.c.l.b16 %v250
  %v674 = vunpack.c.h.b16 %v250
  %v675 = vunpack.c.l.b16 %v251
  %v676 = vunpack.c.h.b16 %v251
  %v677 = vunpack.c.l.b16 %v252
  %v678 = vunpack.c.h.b16 %v252
  %v679 = vunpack.c.l.b16 %v253
  %v680 = vunpack.c.h.b16 %v253
  %v681 = vunpack.c.l.b16 %v254
  %v682 = vunpack.c.h.b16 %v254
  %v683 = vunpack.c.l.b16 %v255
  %v684 = vunpack.c.h.b16 %v255
  %v685 = vunpack.c.l.b16 %v256
  %v686 = vunpack.c.h.b16 %v256
  %v687 = vunpack.c.l.b16 %v257
  %v688 = vunpack.c.h.b16 %v257
  %v689 = vunpack.c.l.b16 %v258
  %v690 = vunpack.c.h.b16 %v258
  %v691 = vunpack.c.l.b16 %v259
  %v692 = vunpack.c.h.b16 %v259
  %v693 = vunpack.c.l.b16 %v260
  %v694 = vunpack.c.h.b16 %v260
  %v695 = vunpack.c.l.b16 %v261
  %v696 = vunpack.c.h.b16 %v261
  %v697 = vunpack.c.l.b16 %v262
  %v698 = vunpack.c.h.b16 %v262
  %v699 = vunpack.c.l.b16 %v263
  %v700 = vunpack.c.h.b16 %v263
  %v701 = vunpack.c.l.b16 %v264
  %v702 = vunpack.c.h.b16 %v264
  %v703 = vunpack.c.l.b16 %v265
  %v704 = vunpack.c.h.b16 %v265
  %v705 = vunpack.c.l.b16 %v266
  %v706 = vunpack.c.h.b16 %v266
  %v707 = vunpack.c.l.b16 %v267
  %v708 = vunpack.c.h.b16 %v267
  %v709 = vunpack.c.l.b16 %v268
  %v710 = vunpack.c.h.b16 %v268
  %v711 = vunpack.c.l.b16 %v269
  %v712 = vunpack.c.h.b16 %v269
  %v713 = vunpack.c.l.b16 %v270
  %v714 = vunpack.c.h.b16 %v270
  %v715 = vunpack.c.l.b16 %v271
  %v716 = vunpack.c.h.b16 %v271
  %v717 = vunpack.c.l.b16 %v272
  %v718 = vunpack.c.h.b16 %v272
  %v719 = vunpack.c.l.b16 %v273
  %v720 = vunpack.c.h.b16 %v273
  %v721 = vunpack.c.l.b16 %v274
  %v722 = vunpack.c.h.b16 %v274
  %v723 = vpack.c.b16 %v471, %v467
  %v724 = vpack.c.b16 %v472, %v468
  %v725 = vpack.c.b16 %v473, %v469
  %v726 = vpack.c.b16 %v474, %v470
  %v727 = vpack.c.b16 %v479, %v475
  %v728 = vpack.c.b16 %v480, %v476
  %v729 = vpack.c.b16 %v481, %v477
  %v730 = vpack.c.b16 %v482, %v478
  %v731 = vpack.c.b16 %v487, %v483
  %v732 = vpack.c.b16 %v488, %v484
  %v733 = vpack.c.b16 %v489, %v485
  %v734 = vpack.c.b16 %v490, %v486
  %v735 = vpack.c.b16 %v495, %v491
  %v736 = vpack.c.b16 %v496, %v492
  %v737 = vpack.c.b16 %v497, %v493
  %v738 = vpack.c.b16 %v498, %v494
  %v739 = vpack.c.b16 %v503, %v499
  %v740 = vpack.c.b16 %v504, %v500
  %v741 = vpack.c.b16 %v505, %v501
  %v742 = vpack.c.b16 %v506, %v502
  %v743 = vpack.c.b16 %v511, %v507
  %v744 = vpack.c.b16 %v512, %v508
  %v745 = vpack.c.b16 %v513, %v509
  %v746 = vpack.c.b16 %v514, %v510
  %v747 = vpack.c.b16 %v519, %v515
  %v748 = vpack.c.b16 %v520, %v516
  %v749 = vpack.c.b16 %v521, %v517
  %v750 = vpack.c.b16 %v522, %v518
  %v751 = vpack.c.b16 %v527, %v523
  %v752 = vpack.c.b16 %v528, %v524
  %v753 = vpack.c.b16 %v529, %v525
  %v754 = vpack.c.b16 %v530, %v526
  %v755 = vpack.c.b16 %v535, %v531
  %v756 = vpack.c.b16 %v536, %v532
  %v757 = vpack.c.b16 %v537, %v533
  %v758 = vpack.c.b16 %v538, %v534
  %v759 = vpack.c.b16 %v543, %v539
  %v760 = vpack.c.b16 %v544, %v540
  %v761 = vpack.c.b16 %v545, %v541
  %v762 = vpack.c.b16 %v546, %v542
  %v763 = vpack.c.b16 %v551, %v547
  %v764 = vpack.c.b16 %v552, %v548
  %v765 = vpack.c.b16 %v553, %v549
  %v766 = vpack.c.b16 %v554, %v550
  %v767 = vpack.c.b16 %v559, %v555
  %v768 = vpack.c.b16 %v560, %v556
  %v769 = vpack.c.b16 %v561, %v557
  %v770 = vpack.c.b16 %v562, %v558
  %v771 = vpack.c.b16 %v567, %v563
  %v772 = vpack.c.b16 %v568, %v564
  %v773 = vpack.c.b16 %v569, %v565
  %v774 = vpack.c.b16 %v570, %v566
  %v775 = vpack.c.b16 %v575, %v571
  %v776 = vpack.c.b16 %v576, %v572
  %v777 = vpack.c.b16 %v577, %v573
  %v778 = vpack.c.b16 %v578, %v574
  %v779 = vpack.c.b16 %v583, %v579
  %v780 = vpack.c.b16 %v584, %v580
  %v781 = vpack.c.b16 %v585, %v581
  %v782 = vpack.c.b16 %v586, %v582
  %v783 = vpack.c.b16 %v591, %v587
  %v784 = vpack.c.b16 %v592, %v588
  %v785 = vpack.c.b16 %v593, %v589
  %v786 = vpack.c.b16 %v594, %v590
  %v787 = vpack.c.b16 %v599, %v595
  %v788 = vpack.c.b16 %v600, %v596
  %v789 = vpack.c.b16 %v601, %v597
  %v790 = vpack.c.b16 %v602, %v598
  %v791 = vpack.c.b16 %v607, %v603
  %v792 = vpack.c.b16 %v608, %v604
  %v793 = vpack.c.b16 %v609, %v605
  %v794 = vpack.c.b16 %v610, %v606
  %v795 = vpack.c.b16 %v615, %v611
  %v796 = vpack.c.b16 %v616, %v612
  %v797 = vpack.c.b16 %v617, %v613
  %v798 = vpack.c.b16 %v618, %v614
  %v799 = vpack.c.b16 %v623, %v619
  %v800 = vpack.c.b16 %v624, %v620
  %v801 = vpack.c.b16 %v625, %v621
  %v802 = vpack.c.b16 %v626, %v622
  %v803 = vpack.c.b16 %v631, %v627
  %v804 = vpack.c.b16 %v632, %v628
  %v805 = vpack.c.b16 %v633, %v629
  %v806 = vpack.c.b16 %v634, %v630
  %v807 = vpack.c.b16 %v639, %v635
  %v808 = vpack.c.b16 %v640, %v636
  %v809 = vpack.c.b16 %v641, %v637
  %v810 = vpack.c.b16 %v642, %v638
  %v811 = vpack.c.b16 %v647, %v643
  %v812 = vpack.c.b16 %v648, %v644
  %v813 = vpack.c.b16 %v649, %v645
  %v814 = vpack.c.b16 %v650, %v646
  %v815 = vpack.c.b16 %v655, %v651
  %v816 = vpack.c.b16 %v656, %v652
  %v817 = vpack.c.b16 %v657, %v653
  %v818 = vpack.c.b16 %v658, %v654
  %v819 = vpack.c.b16 %v663, %v659
  %v820 = vpack.c.b16 %v664, %v660
  %v821 = vpack.c.b16 %v665, %v661
  %v822 = vpack.c.b16 %v666, %v662
  %v823 = vpack.c.b16 %v671, %v667
  %v824 = vpack.c.b16 %v672, %v668
  %v825 = vpack.c.b16 %v673, %v669
  %v826 = vpack.c.b16 %v674, %v670
  %v827 = vpack.c.b16 %v679, %v675
  %v828 = vpack.c.b16 %v680, %v676
  %v829 = vpack.c.b16 %v681, %v677
  %v830 = vpack.c.b16 %v682, %v678
  %v831 = vpack.c.b16 %v687, %v683
  %v832 = vpack.c.b16 %v688, %v684
  %v833 = vpack.c.b16 %v689, %v685
  %v834 = vpack.c.b16 %v690, %v686
  %v835 = vpack.c.b16 %v695, %v691
  %v836 = vpack.c.b16 %v696, %v692
  %v837 = vpack.c.b16 %v697, %v693
  %v838 = vpack.c.b16 %v698, %v694
  %v839 = vpack.c.b16 %v703, %v699
  %v840 = vpack.c.b16 %v704, %v700
  %v841 = vpack.c.b16 %v705, %v701
  %v842 = vpack.c.b16 %v706, %v702
  %v843 = vpack.c.b16 %v711, %v707
  %v844 = vpack.c.b16 %v712, %v708
  %v845 = vpack.c.b16 %v713, %v709
  %v846 = vpack.c.b16 %v714, %v710
  %v847 = vpack.c.b16 %v719, %v715
  %v848 = vpack.c.b16 %v720, %v716
  %v849 = vpack.c.b16 %v721, %v717
  %v850 = vpack.c.b16 %v722, %v718
  %v1043 = vunpack.c.l.b16 %v275
  %v1044 = vunpack.c.l.b16 %v276
  %v1045 = vunpack.c.l.b16 %v277
  %v1046 = vunpack.c.l.b16 %v278
  %v1047 = vunpack.c.l.b16 %v279
  %v1048 = vunpack.c.l.b16 %v280
  %v1049 = vunpack.c.l.b16 %v281
  %v1050 = vunpack.c.l.b16 %v282
  %v1051 = vunpack.c.l.b16 %v283
  %v1052 = vunpack.c.l.b16 %v284
  %v1053 = vunpack.c.l.b16 %v285
  %v1054 = vunpack.c.l.b16 %v286
  %v1055 = vunpack.c.l.b16 %v287
  %v1056 = vunpack.c.l.b16 %v288
  %v1057 = vunpack.c.l.b16 %v289
  %v1058 = vunpack.c.l.b16 %v290
  %v1059 = vunpack.c.l.b16 %v291
  %v1060 = vunpack.c.l.b16 %v292
  %v1061 = vunpack.c.l.b16 %v293
  %v1062 = vunpack.c.l.b16 %v294
  %v1063 = vunpack.c.l.b16 %v295
  %v1064 = vunpack.c.l.b16 %v296
  %v1065 = vunpack.c.l.b16 %v297
  %v1066 = vunpack.c.l.b16 %v298
  %v1067 = vunpack.c.l.b16 %v299
  %v1068 = vunpack.c.l.b16 %v300
  %v1069 = vunpack.c.l.b16 %v301
  %v1070 = vunpack.c.l.b16 %v302
  %v1071 = vunpack.c.l.b16 %v303
  %v1072 = vunpack.c.l.b16 %v304
  %v1073 = vunpack.c.l.b16 %v305
  %v1074 = vunpack.c.l.b16 %v306
  %v1075 = vunpack.c.l.b16 %v307
  %v1076 = vunpack.c.l.b16 %v308
  %v1077 = vunpack.c.l.b16 %v309
  %v1078 = vunpack.c.l.b16 %v310
  %v1079 = vunpack.c.l.b16 %v311
  %v1080 = vunpack.c.l.b16 %v312
  %v1081 = vunpack.c.l.b16 %v313
  %v1082 = vunpack.c.l.b16 %v314
  %v1083 = vunpack.c.l.b16 %v315
  %v1084 = vunpack.c.l.b16 %v316
  %v1085 = vunpack.c.l.b16 %v317
  %v1086 = vunpack.c.l.b16 %v318
  %v1087 = vunpack.c.l.b16 %v319
  %v1088 = vunpack.c.l.b16 %v320
  %v1089 = vunpack.c.l.b16 %v321
  %v1090 = vunpack.c.l.b16 %v322
  %v1091 = vunpack.c.l.b16 %v323
  %v1092 = vunpack.c.l.b16 %v324
  %v1093 = vunpack.c.l.b16 %v325
  %v1094 = vunpack.c.l.b16 %v326
  %v1095 = vunpack.c.l.b16 %v327
  %v1096 = vunpack.c.l.b16 %v328
  %v1097 = vunpack.c.l.b16 %v329
  %v1098 = vunpack.c.l.b16 %v330
  %v1099 = vunpack.c.l.b16 %v331
  %v1100 = vunpack.c.l.b16 %v332
  %v1101 = vunpack.c.l.b16 %v333
  %v1102 = vunpack.c.l.b16 %v334
  %v1103 = vunpack.c.l.b16 %v335
  %v1104 = vunpack.c.l.b16 %v336
  %v1105 = vunpack.c.l.b16 %v337
  %v1106 = vunpack.c.l.b16 %v338
  %v1107 = vpack.c.b16 %v1044, %v1043
  %v1108 = vpack.c.b16 %v1046, %v1045
  %v1109 = vpack.c.b16 %v1048, %v1047
  %v1110 = vpack.c.b16 %v1050, %v1049
  %v1111 = vpack.c.b16 %v1052, %v1051
  %v1112 = vpack.c.b16 %v1054, %v1053
  %v1113 = vpack.c.b16 %v1056, %v1055
  %v1114 = vpack.c.b16 %v1058, %v1057
  %v1115 = vpack.c.b16 %v1060, %v1059
  %v1116 = vpack.c.b16 %v1062, %v1061
  %v1117 = vpack.c.b16 %v1064, %v1063
  %v1118 = vpack.c.b16 %v1066, %v1065
  %v1119 = vpack.c.b16 %v1068, %v1067
  %v1120 = vpack.c.b16 %v1070, %v1069
  %v1121 = vpack.c.b16 %v1072, %v1071
  %v1122 = vpack.c.b16 %v1074, %v1073
  %v1123 = vpack.c.b16 %v1076, %v1075
  %v1124 = vpack.c.b16 %v1078, %v1077
  %v1125 = vpack.c.b16 %v1080, %v1079
  %v1126 = vpack.c.b16 %v1082, %v1081
  %v1127 = vpack.c.b16 %v1084, %v1083
  %v1128 = vpack.c.b16 %v1086, %v1085
  %v1129 = vpack.c.b16 %v1088, %v1087
  %v1130 = vpack.c.b16 %v1090, %v1089
  %v1131 = vpack.c.b16 %v1092, %v1091
  %v1132 = vpack.c.b16 %v1094, %v1093
  %v1133 = vpack.c.b16 %v1096, %v1095
  %v1134 = vpack.c.b16 %v1098, %v1097
  %v1135 = vpack.c.b16 %v1100, %v1099
  %v1136 = vpack.c.b16 %v1102, %v1101
  %v1137 = vpack.c.b16 %v1104, %v1103
  %v1138 = vpack.c.b16 %v1106, %v1105
  %1171 = vmatprep.subr.bf16.mxu0 0
  %1172 = vmatpush1.bf16.msra.mxu0 %v1114
  %1173 = vmatprep.subr.bf16.mxu0 0
  %1174 = vmatpush1.bf16.msra.mxu0 %v1113
  %1175 = vmatprep.subr.bf16.mxu0 0
  %1176 = vmatpush1.bf16.msra.mxu0 %v1112
  %1177 = vmatprep.subr.bf16.mxu0 0
  %1178 = vmatpush1.bf16.msra.mxu0 %v1111
  %1179 = vmatprep.subr.bf16.mxu0 0
  %1180 = vmatpush1.bf16.msra.mxu0 %v1110
  %1181 = vmatprep.subr.bf16.mxu0 0
  %1182 = vmatpush1.bf16.msra.mxu0 %v1109
  %1183 = vmatprep.subr.bf16.mxu0 0
  %1184 = vmatpush1.bf16.msra.mxu0 %v1108
  %1185 = vmatprep.subr.bf16.mxu0 0
  %1186 = vmatpush1.bf16.msra.mxu0 %v1107
  %1187 = vmatprep.subr.bf16.mxu0 0
  %1188 = vmatpush2.bf16.msra.mxu0 %v1122
  %1189 = vmatprep.subr.bf16.mxu0 0
  %1190 = vmatpush2.bf16.msra.mxu0 %v1121
  %1191 = vmatprep.subr.bf16.mxu0 0
  %1192 = vmatpush2.bf16.msra.mxu0 %v1120
  %1193 = vmatprep.subr.bf16.mxu0 0
  %1194 = vmatpush2.bf16.msra.mxu0 %v1119
  %1195 = vmatprep.subr.bf16.mxu0 0
  %1196 = vmatpush2.bf16.msra.mxu0 %v1118
  %1197 = vmatprep.subr.bf16.mxu0 0
  %1198 = vmatpush2.bf16.msra.mxu0 %v1117
  %1199 = vmatprep.subr.bf16.mxu0 0
  %1200 = vmatpush2.bf16.msra.mxu0 %v1116
  %1201 = vmatprep.subr.bf16.mxu0 0
  %1202 = vmatpush2.bf16.msra.mxu0 %v1115
  %1203 = vmatprep.mubr.bf16.mxu0 %v724
  %1204 = vmatmul.mubr.bf16.gmra.mxu0 %v723
  %v1205 = vpop.f32.mrf.mxu0
  %v1206 = vadd.f32 0.0, %v1205
  %v1207 = vpop.f32.mrf.mxu0
  %v1208 = vpop.f32.mrf.mxu0
  %v1209 = vadd.f32 0.0, %v1208
  %v1210 = vpop.f32.mrf.mxu0
  %1211 = vmatprep.mubr.bf16.mxu0 %v728
  %1212 = vmatmul.mubr.bf16.gmra.mxu0 %v727
  %v1213 = vpop.f32.mrf.mxu0
  %v1214 = vadd.f32 0.0, %v1213
  %v1215 = vpop.f32.mrf.mxu0
  %v1216 = vpop.f32.mrf.mxu0
  %v1217 = vadd.f32 0.0, %v1216
  %v1218 = vpop.f32.mrf.mxu0
  %1219 = vmatprep.mubr.bf16.mxu0 %v732
  %1220 = vmatmul.mubr.bf16.gmra.mxu0 %v731
  %v1221 = vpop.f32.mrf.mxu0
  %v1222 = vadd.f32 0.0, %v1221
  %v1223 = vpop.f32.mrf.mxu0
  %v1224 = vpop.f32.mrf.mxu0
  %v1225 = vadd.f32 0.0, %v1224
  %v1226 = vpop.f32.mrf.mxu0
  %1227 = vmatprep.mubr.bf16.mxu0 %v736
  %1228 = vmatmul.mubr.bf16.gmra.mxu0 %v735
  %v1229 = vpop.f32.mrf.mxu0
  %v1230 = vadd.f32 0.0, %v1229
  %v1231 = vpop.f32.mrf.mxu0
  %v1232 = vpop.f32.mrf.mxu0
  %v1233 = vadd.f32 0.0, %v1232
  %v1234 = vpop.f32.mrf.mxu0
  %1235 = vmatprep.mubr.bf16.mxu0 %v740
  %1236 = vmatmul.mubr.bf16.gmra.mxu0 %v739
  %v1237 = vpop.f32.mrf.mxu0
  %v1238 = vadd.f32 0.0, %v1237
  %v1239 = vpop.f32.mrf.mxu0
  %v1240 = vpop.f32.mrf.mxu0
  %v1241 = vadd.f32 0.0, %v1240
  %v1242 = vpop.f32.mrf.mxu0
  %1243 = vmatprep.mubr.bf16.mxu0 %v744
  %1244 = vmatmul.mubr.bf16.gmra.mxu0 %v743
  %v1245 = vpop.f32.mrf.mxu0
  %v1246 = vadd.f32 0.0, %v1245
  %v1247 = vpop.f32.mrf.mxu0
  %v1248 = vpop.f32.mrf.mxu0
  %v1249 = vadd.f32 0.0, %v1248
  %v1250 = vpop.f32.mrf.mxu0
  %1251 = vmatprep.mubr.bf16.mxu0 %v748
  %1252 = vmatmul.mubr.bf16.gmra.mxu0 %v747
  %v1253 = vpop.f32.mrf.mxu0
  %v1254 = vadd.f32 0.0, %v1253
  %v1255 = vpop.f32.mrf.mxu0
  %v1256 = vpop.f32.mrf.mxu0
  %v1257 = vadd.f32 0.0, %v1256
  %v1258 = vpop.f32.mrf.mxu0
  %1259 = vmatprep.mubr.bf16.mxu0 %v752
  %1260 = vmatmul.mubr.bf16.gmra.mxu0 %v751
  %v1261 = vpop.f32.mrf.mxu0
  %v1262 = vadd.f32 0.0, %v1261
  %v1263 = vpop.f32.mrf.mxu0
  %v1264 = vpop.f32.mrf.mxu0
  %v1265 = vadd.f32 0.0, %v1264
  %v1266 = vpop.f32.mrf.mxu0
  %1267 = vmatprep.mubr.bf16.mxu0 %v756
  %1268 = vmatmul.mubr.bf16.gmra.mxu0 %v755
  %v1269 = vpop.f32.mrf.mxu0
  %v1270 = vadd.f32 0.0, %v1269
  %v1271 = vpop.f32.mrf.mxu0
  %v1272 = vpop.f32.mrf.mxu0
  %v1273 = vadd.f32 0.0, %v1272
  %v1274 = vpop.f32.mrf.mxu0
  %1275 = vmatprep.mubr.bf16.mxu0 %v760
  %1276 = vmatmul.mubr.bf16.gmra.mxu0 %v759
  %v1277 = vpop.f32.mrf.mxu0
  %v1278 = vadd.f32 0.0, %v1277
  %v1279 = vpop.f32.mrf.mxu0
  %v1280 = vpop.f32.mrf.mxu0
  %v1281 = vadd.f32 0.0, %v1280
  %v1282 = vpop.f32.mrf.mxu0
  %1283 = vmatprep.mubr.bf16.mxu0 %v764
  %1284 = vmatmul.mubr.bf16.gmra.mxu0 %v763
  %v1285 = vpop.f32.mrf.mxu0
  %v1286 = vadd.f32 0.0, %v1285
  %v1287 = vpop.f32.mrf.mxu0
  %v1288 = vpop.f32.mrf.mxu0
  %v1289 = vadd.f32 0.0, %v1288
  %v1290 = vpop.f32.mrf.mxu0
  %1291 = vmatprep.mubr.bf16.mxu0 %v768
  %1292 = vmatmul.mubr.bf16.gmra.mxu0 %v767
  %v1293 = vpop.f32.mrf.mxu0
  %v1294 = vadd.f32 0.0, %v1293
  %v1295 = vpop.f32.mrf.mxu0
  %v1296 = vpop.f32.mrf.mxu0
  %v1297 = vadd.f32 0.0, %v1296
  %v1298 = vpop.f32.mrf.mxu0
  %1299 = vmatprep.mubr.bf16.mxu0 %v772
  %1300 = vmatmul.mubr.bf16.gmra.mxu0 %v771
  %v1301 = vpop.f32.mrf.mxu0
  %v1302 = vadd.f32 0.0, %v1301
  %v1303 = vpop.f32.mrf.mxu0
  %v1304 = vpop.f32.mrf.mxu0
  %v1305 = vadd.f32 0.0, %v1304
  %v1306 = vpop.f32.mrf.mxu0
  %1307 = vmatprep.mubr.bf16.mxu0 %v776
  %1308 = vmatmul.mubr.bf16.gmra.mxu0 %v775
  %v1309 = vpop.f32.mrf.mxu0
  %v1310 = vadd.f32 0.0, %v1309
  %v1311 = vpop.f32.mrf.mxu0
  %v1312 = vpop.f32.mrf.mxu0
  %v1313 = vadd.f32 0.0, %v1312
  %v1314 = vpop.f32.mrf.mxu0
  %1315 = vmatprep.mubr.bf16.mxu0 %v780
  %1316 = vmatmul.mubr.bf16.gmra.mxu0 %v779
  %v1317 = vpop.f32.mrf.mxu0
  %v1318 = vadd.f32 0.0, %v1317
  %v1319 = vpop.f32.mrf.mxu0
  %v1320 = vpop.f32.mrf.mxu0
  %v1321 = vadd.f32 0.0, %v1320
  %v1322 = vpop.f32.mrf.mxu0
  %1323 = vmatprep.mubr.bf16.mxu0 %v784
  %1324 = vmatmul.mubr.bf16.gmra.mxu0 %v783
  %v1325 = vpop.f32.mrf.mxu0
  %v1326 = vadd.f32 0.0, %v1325
  %v1327 = vpop.f32.mrf.mxu0
  %v1328 = vpop.f32.mrf.mxu0
  %v1329 = vadd.f32 0.0, %v1328
  %v1330 = vpop.f32.mrf.mxu0
  %1331 = vmatprep.mubr.bf16.mxu0 %v788
  %1332 = vmatmul.mubr.bf16.gmra.mxu0 %v787
  %v1333 = vpop.f32.mrf.mxu0
  %v1334 = vadd.f32 0.0, %v1333
  %v1335 = vpop.f32.mrf.mxu0
  %v1336 = vpop.f32.mrf.mxu0
  %v1337 = vadd.f32 0.0, %v1336
  %v1338 = vpop.f32.mrf.mxu0
  %1339 = vmatprep.mubr.bf16.mxu0 %v792
  %1340 = vmatmul.mubr.bf16.gmra.mxu0 %v791
  %v1341 = vpop.f32.mrf.mxu0
  %v1342 = vadd.f32 0.0, %v1341
  %v1343 = vpop.f32.mrf.mxu0
  %v1344 = vpop.f32.mrf.mxu0
  %v1345 = vadd.f32 0.0, %v1344
  %v1346 = vpop.f32.mrf.mxu0
  %1347 = vmatprep.mubr.bf16.mxu0 %v796
  %1348 = vmatmul.mubr.bf16.gmra.mxu0 %v795
  %v1349 = vpop.f32.mrf.mxu0
  %v1350 = vadd.f32 0.0, %v1349
  %v1351 = vpop.f32.mrf.mxu0
  %v1352 = vpop.f32.mrf.mxu0
  %v1353 = vadd.f32 0.0, %v1352
  %v1354 = vpop.f32.mrf.mxu0
  %1355 = vmatprep.mubr.bf16.mxu0 %v800
  %1356 = vmatmul.mubr.bf16.gmra.mxu0 %v799
  %v1357 = vpop.f32.mrf.mxu0
  %v1358 = vadd.f32 0.0, %v1357
  %v1359 = vpop.f32.mrf.mxu0
  %v1360 = vpop.f32.mrf.mxu0
  %v1361 = vadd.f32 0.0, %v1360
  %v1362 = vpop.f32.mrf.mxu0
  %1363 = vmatprep.mubr.bf16.mxu0 %v804
  %1364 = vmatmul.mubr.bf16.gmra.mxu0 %v803
  %v1365 = vpop.f32.mrf.mxu0
  %v1366 = vadd.f32 0.0, %v1365
  %v1367 = vpop.f32.mrf.mxu0
  %v1368 = vpop.f32.mrf.mxu0
  %v1369 = vadd.f32 0.0, %v1368
  %v1370 = vpop.f32.mrf.mxu0
  %1371 = vmatprep.mubr.bf16.mxu0 %v808
  %1372 = vmatmul.mubr.bf16.gmra.mxu0 %v807
  %v1373 = vpop.f32.mrf.mxu0
  %v1374 = vadd.f32 0.0, %v1373
  %v1375 = vpop.f32.mrf.mxu0
  %v1376 = vpop.f32.mrf.mxu0
  %v1377 = vadd.f32 0.0, %v1376
  %v1378 = vpop.f32.mrf.mxu0
  %1379 = vmatprep.mubr.bf16.mxu0 %v812
  %1380 = vmatmul.mubr.bf16.gmra.mxu0 %v811
  %v1381 = vpop.f32.mrf.mxu0
  %v1382 = vadd.f32 0.0, %v1381
  %v1383 = vpop.f32.mrf.mxu0
  %v1384 = vpop.f32.mrf.mxu0
  %v1385 = vadd.f32 0.0, %v1384
  %v1386 = vpop.f32.mrf.mxu0
  %1387 = vmatprep.mubr.bf16.mxu0 %v816
  %1388 = vmatmul.mubr.bf16.gmra.mxu0 %v815
  %v1389 = vpop.f32.mrf.mxu0
  %v1390 = vadd.f32 0.0, %v1389
  %v1391 = vpop.f32.mrf.mxu0
  %v1392 = vpop.f32.mrf.mxu0
  %v1393 = vadd.f32 0.0, %v1392
  %v1394 = vpop.f32.mrf.mxu0
  %1395 = vmatprep.mubr.bf16.mxu0 %v820
  %1396 = vmatmul.mubr.bf16.gmra.mxu0 %v819
  %v1397 = vpop.f32.mrf.mxu0
  %v1398 = vadd.f32 0.0, %v1397
  %v1399 = vpop.f32.mrf.mxu0
  %v1400 = vpop.f32.mrf.mxu0
  %v1401 = vadd.f32 0.0, %v1400
  %v1402 = vpop.f32.mrf.mxu0
  %1403 = vmatprep.mubr.bf16.mxu0 %v824
  %1404 = vmatmul.mubr.bf16.gmra.mxu0 %v823
  %v1405 = vpop.f32.mrf.mxu0
  %v1406 = vadd.f32 0.0, %v1405
  %v1407 = vpop.f32.mrf.mxu0
  %v1408 = vpop.f32.mrf.mxu0
  %v1409 = vadd.f32 0.0, %v1408
  %v1410 = vpop.f32.mrf.mxu0
  %1411 = vmatprep.mubr.bf16.mxu0 %v828
  %1412 = vmatmul.mubr.bf16.gmra.mxu0 %v827
  %v1413 = vpop.f32.mrf.mxu0
  %v1414 = vadd.f32 0.0, %v1413
  %v1415 = vpop.f32.mrf.mxu0
  %v1416 = vpop.f32.mrf.mxu0
  %v1417 = vadd.f32 0.0, %v1416
  %v1418 = vpop.f32.mrf.mxu0
  %1419 = vmatprep.mubr.bf16.mxu0 %v832
  %1420 = vmatmul.mubr.bf16.gmra.mxu0 %v831
  %v1421 = vpop.f32.mrf.mxu0
  %v1422 = vadd.f32 0.0, %v1421
  %v1423 = vpop.f32.mrf.mxu0
  %v1424 = vpop.f32.mrf.mxu0
  %v1425 = vadd.f32 0.0, %v1424
  %v1426 = vpop.f32.mrf.mxu0
  %1427 = vmatprep.mubr.bf16.mxu0 %v836
  %1428 = vmatmul.mubr.bf16.gmra.mxu0 %v835
  %v1429 = vpop.f32.mrf.mxu0
  %v1430 = vadd.f32 0.0, %v1429
  %v1431 = vpop.f32.mrf.mxu0
  %v1432 = vpop.f32.mrf.mxu0
  %v1433 = vadd.f32 0.0, %v1432
  %v1434 = vpop.f32.mrf.mxu0
  %1435 = vmatprep.mubr.bf16.mxu0 %v840
  %1436 = vmatmul.mubr.bf16.gmra.mxu0 %v839
  %v1437 = vpop.f32.mrf.mxu0
  %v1438 = vadd.f32 0.0, %v1437
  %v1439 = vpop.f32.mrf.mxu0
  %v1440 = vpop.f32.mrf.mxu0
  %v1441 = vadd.f32 0.0, %v1440
  %v1442 = vpop.f32.mrf.mxu0
  %1443 = vmatprep.mubr.bf16.mxu0 %v844
  %1444 = vmatmul.mubr.bf16.gmra.mxu0 %v843
  %v1445 = vpop.f32.mrf.mxu0
  %v1446 = vadd.f32 0.0, %v1445
  %v1447 = vpop.f32.mrf.mxu0
  %v1448 = vpop.f32.mrf.mxu0
  %v1449 = vadd.f32 0.0, %v1448
  %v1450 = vpop.f32.mrf.mxu0
  %1451 = vmatprep.mubr.bf16.mxu0 %v848
  %1452 = vmatmul.mubr.bf16.gmra.mxu0 %v847
  %v1453 = vpop.f32.mrf.mxu0
  %v1454 = vadd.f32 0.0, %v1453
  %v1455 = vpop.f32.mrf.mxu0
  %v1456 = vpop.f32.mrf.mxu0
  %v1457 = vadd.f32 0.0, %v1456
  %v1458 = vpop.f32.mrf.mxu0
  %1459 = vdwg.mxu0
  %1460 = vmatprep.subr.bf16.mxu0 0
  %1461 = vmatpush1.bf16.msra.mxu0 %v1130
  %1462 = vmatprep.subr.bf16.mxu0 0
  %1463 = vmatpush1.bf16.msra.mxu0 %v1129
  %1464 = vmatprep.subr.bf16.mxu0 0
  %1465 = vmatpush1.bf16.msra.mxu0 %v1128
  %1466 = vmatprep.subr.bf16.mxu0 0
  %1467 = vmatpush1.bf16.msra.mxu0 %v1127
  %1468 = vmatprep.subr.bf16.mxu0 0
  %1469 = vmatpush1.bf16.msra.mxu0 %v1126
  %1470 = vmatprep.subr.bf16.mxu0 0
  %1471 = vmatpush1.bf16.msra.mxu0 %v1125
  %1472 = vmatprep.subr.bf16.mxu0 0
  %1473 = vmatpush1.bf16.msra.mxu0 %v1124
  %1474 = vmatprep.subr.bf16.mxu0 0
  %1475 = vmatpush1.bf16.msra.mxu0 %v1123
  %1476 = vmatprep.subr.bf16.mxu0 0
  %1477 = vmatpush2.bf16.msra.mxu0 %v1138
  %1478 = vmatprep.subr.bf16.mxu0 0
  %1479 = vmatpush2.bf16.msra.mxu0 %v1137
  %1480 = vmatprep.subr.bf16.mxu0 0
  %1481 = vmatpush2.bf16.msra.mxu0 %v1136
  %1482 = vmatprep.subr.bf16.mxu0 0
  %1483 = vmatpush2.bf16.msra.mxu0 %v1135
  %1484 = vmatprep.subr.bf16.mxu0 0
  %1485 = vmatpush2.bf16.msra.mxu0 %v1134
  %1486 = vmatprep.subr.bf16.mxu0 0
  %1487 = vmatpush2.bf16.msra.mxu0 %v1133
  %1488 = vmatprep.subr.bf16.mxu0 0
  %1489 = vmatpush2.bf16.msra.mxu0 %v1132
  %1490 = vmatprep.subr.bf16.mxu0 0
  %1491 = vmatpush2.bf16.msra.mxu0 %v1131
  %1492 = vmatprep.mubr.bf16.mxu0 %v726
  %1493 = vmatmul.mubr.bf16.gmra.mxu0 %v725
  %v1494 = vpop.f32.mrf.mxu0
  %v1495 = vadd.f32 %v1206, %v1494
  %v1496 = vpop.f32.mrf.mxu0
  %v1497 = vpop.f32.mrf.mxu0
  %v1498 = vadd.f32 %v1209, %v1497
  %v1499 = vpop.f32.mrf.mxu0
  %1500 = vmatprep.mubr.bf16.mxu0 %v730
  %1501 = vmatmul.mubr.bf16.gmra.mxu0 %v729
  %v1502 = vpop.f32.mrf.mxu0
  %v1503 = vadd.f32 %v1214, %v1502
  %v1504 = vpop.f32.mrf.mxu0
  %v1505 = vpop.f32.mrf.mxu0
  %v1506 = vadd.f32 %v1217, %v1505
  %v1507 = vpop.f32.mrf.mxu0
  %1508 = vmatprep.mubr.bf16.mxu0 %v734
  %1509 = vmatmul.mubr.bf16.gmra.mxu0 %v733
  %v1510 = vpop.f32.mrf.mxu0
  %v1511 = vadd.f32 %v1222, %v1510
  %v1512 = vpop.f32.mrf.mxu0
  %v1513 = vpop.f32.mrf.mxu0
  %v1514 = vadd.f32 %v1225, %v1513
  %v1515 = vpop.f32.mrf.mxu0
  %1516 = vmatprep.mubr.bf16.mxu0 %v738
  %1517 = vmatmul.mubr.bf16.gmra.mxu0 %v737
  %v1518 = vpop.f32.mrf.mxu0
  %v1519 = vadd.f32 %v1230, %v1518
  %v1520 = vpop.f32.mrf.mxu0
  %v1521 = vpop.f32.mrf.mxu0
  %v1522 = vadd.f32 %v1233, %v1521
  %v1523 = vpop.f32.mrf.mxu0
  %1524 = vmatprep.mubr.bf16.mxu0 %v742
  %1525 = vmatmul.mubr.bf16.gmra.mxu0 %v741
  %v1526 = vpop.f32.mrf.mxu0
  %v1527 = vadd.f32 %v1238, %v1526
  %v1528 = vpop.f32.mrf.mxu0
  %v1529 = vpop.f32.mrf.mxu0
  %v1530 = vadd.f32 %v1241, %v1529
  %v1531 = vpop.f32.mrf.mxu0
  %1532 = vmatprep.mubr.bf16.mxu0 %v746
  %1533 = vmatmul.mubr.bf16.gmra.mxu0 %v745
  %v1534 = vpop.f32.mrf.mxu0
  %v1535 = vadd.f32 %v1246, %v1534
  %v1536 = vpop.f32.mrf.mxu0
  %v1537 = vpop.f32.mrf.mxu0
  %v1538 = vadd.f32 %v1249, %v1537
  %v1539 = vpop.f32.mrf.mxu0
  %1540 = vmatprep.mubr.bf16.mxu0 %v750
  %1541 = vmatmul.mubr.bf16.gmra.mxu0 %v749
  %v1542 = vpop.f32.mrf.mxu0
  %v1543 = vadd.f32 %v1254, %v1542
  %v1544 = vpop.f32.mrf.mxu0
  %v1545 = vpop.f32.mrf.mxu0
  %v1546 = vadd.f32 %v1257, %v1545
  %v1547 = vpop.f32.mrf.mxu0
  %1548 = vmatprep.mubr.bf16.mxu0 %v754
  %1549 = vmatmul.mubr.bf16.gmra.mxu0 %v753
  %v1550 = vpop.f32.mrf.mxu0
  %v1551 = vadd.f32 %v1262, %v1550
  %v1552 = vpop.f32.mrf.mxu0
  %v1553 = vpop.f32.mrf.mxu0
  %v1554 = vadd.f32 %v1265, %v1553
  %v1555 = vpop.f32.mrf.mxu0
  %1556 = vmatprep.mubr.bf16.mxu0 %v758
  %1557 = vmatmul.mubr.bf16.gmra.mxu0 %v757
  %v1558 = vpop.f32.mrf.mxu0
  %v1559 = vadd.f32 %v1270, %v1558
  %v1560 = vpop.f32.mrf.mxu0
  %v1561 = vpop.f32.mrf.mxu0
  %v1562 = vadd.f32 %v1273, %v1561
  %v1563 = vpop.f32.mrf.mxu0
  %1564 = vmatprep.mubr.bf16.mxu0 %v762
  %1565 = vmatmul.mubr.bf16.gmra.mxu0 %v761
  %v1566 = vpop.f32.mrf.mxu0
  %v1567 = vadd.f32 %v1278, %v1566
  %v1568 = vpop.f32.mrf.mxu0
  %v1569 = vpop.f32.mrf.mxu0
  %v1570 = vadd.f32 %v1281, %v1569
  %v1571 = vpop.f32.mrf.mxu0
  %1572 = vmatprep.mubr.bf16.mxu0 %v766
  %1573 = vmatmul.mubr.bf16.gmra.mxu0 %v765
  %v1574 = vpop.f32.mrf.mxu0
  %v1575 = vadd.f32 %v1286, %v1574
  %v1576 = vpop.f32.mrf.mxu0
  %v1577 = vpop.f32.mrf.mxu0
  %v1578 = vadd.f32 %v1289, %v1577
  %v1579 = vpop.f32.mrf.mxu0
  %1580 = vmatprep.mubr.bf16.mxu0 %v770
  %1581 = vmatmul.mubr.bf16.gmra.mxu0 %v769
  %v1582 = vpop.f32.mrf.mxu0
  %v1583 = vadd.f32 %v1294, %v1582
  %v1584 = vpop.f32.mrf.mxu0
  %v1585 = vpop.f32.mrf.mxu0
  %v1586 = vadd.f32 %v1297, %v1585
  %v1587 = vpop.f32.mrf.mxu0
  %1588 = vmatprep.mubr.bf16.mxu0 %v774
  %1589 = vmatmul.mubr.bf16.gmra.mxu0 %v773
  %v1590 = vpop.f32.mrf.mxu0
  %v1591 = vadd.f32 %v1302, %v1590
  %v1592 = vpop.f32.mrf.mxu0
  %v1593 = vpop.f32.mrf.mxu0
  %v1594 = vadd.f32 %v1305, %v1593
  %v1595 = vpop.f32.mrf.mxu0
  %1596 = vmatprep.mubr.bf16.mxu0 %v778
  %1597 = vmatmul.mubr.bf16.gmra.mxu0 %v777
  %v1598 = vpop.f32.mrf.mxu0
  %v1599 = vadd.f32 %v1310, %v1598
  %v1600 = vpop.f32.mrf.mxu0
  %v1601 = vpop.f32.mrf.mxu0
  %v1602 = vadd.f32 %v1313, %v1601
  %v1603 = vpop.f32.mrf.mxu0
  %1604 = vmatprep.mubr.bf16.mxu0 %v782
  %1605 = vmatmul.mubr.bf16.gmra.mxu0 %v781
  %v1606 = vpop.f32.mrf.mxu0
  %v1607 = vadd.f32 %v1318, %v1606
  %v1608 = vpop.f32.mrf.mxu0
  %v1609 = vpop.f32.mrf.mxu0
  %v1610 = vadd.f32 %v1321, %v1609
  %v1611 = vpop.f32.mrf.mxu0
  %1612 = vmatprep.mubr.bf16.mxu0 %v786
  %1613 = vmatmul.mubr.bf16.gmra.mxu0 %v785
  %v1614 = vpop.f32.mrf.mxu0
  %v1615 = vadd.f32 %v1326, %v1614
  %v1616 = vpop.f32.mrf.mxu0
  %v1617 = vpop.f32.mrf.mxu0
  %v1618 = vadd.f32 %v1329, %v1617
  %v1619 = vpop.f32.mrf.mxu0
  %1620 = vmatprep.mubr.bf16.mxu0 %v790
  %1621 = vmatmul.mubr.bf16.gmra.mxu0 %v789
  %v1622 = vpop.f32.mrf.mxu0
  %v1623 = vadd.f32 %v1334, %v1622
  %v1624 = vpop.f32.mrf.mxu0
  %v1625 = vpop.f32.mrf.mxu0
  %v1626 = vadd.f32 %v1337, %v1625
  %v1627 = vpop.f32.mrf.mxu0
  %1628 = vmatprep.mubr.bf16.mxu0 %v794
  %1629 = vmatmul.mubr.bf16.gmra.mxu0 %v793
  %v1630 = vpop.f32.mrf.mxu0
  %v1631 = vadd.f32 %v1342, %v1630
  %v1632 = vpop.f32.mrf.mxu0
  %v1633 = vpop.f32.mrf.mxu0
  %v1634 = vadd.f32 %v1345, %v1633
  %v1635 = vpop.f32.mrf.mxu0
  %1636 = vmatprep.mubr.bf16.mxu0 %v798
  %1637 = vmatmul.mubr.bf16.gmra.mxu0 %v797
  %v1638 = vpop.f32.mrf.mxu0
  %v1639 = vadd.f32 %v1350, %v1638
  %v1640 = vpop.f32.mrf.mxu0
  %v1641 = vpop.f32.mrf.mxu0
  %v1642 = vadd.f32 %v1353, %v1641
  %v1643 = vpop.f32.mrf.mxu0
  %1644 = vmatprep.mubr.bf16.mxu0 %v802
  %1645 = vmatmul.mubr.bf16.gmra.mxu0 %v801
  %v1646 = vpop.f32.mrf.mxu0
  %v1647 = vadd.f32 %v1358, %v1646
  %v1648 = vpop.f32.mrf.mxu0
  %v1649 = vpop.f32.mrf.mxu0
  %v1650 = vadd.f32 %v1361, %v1649
  %v1651 = vpop.f32.mrf.mxu0
  %1652 = vmatprep.mubr.bf16.mxu0 %v806
  %1653 = vmatmul.mubr.bf16.gmra.mxu0 %v805
  %v1654 = vpop.f32.mrf.mxu0
  %v1655 = vadd.f32 %v1366, %v1654
  %v1656 = vpop.f32.mrf.mxu0
  %v1657 = vpop.f32.mrf.mxu0
  %v1658 = vadd.f32 %v1369, %v1657
  %v1659 = vpop.f32.mrf.mxu0
  %1660 = vmatprep.mubr.bf16.mxu0 %v810
  %1661 = vmatmul.mubr.bf16.gmra.mxu0 %v809
  %v1662 = vpop.f32.mrf.mxu0
  %v1663 = vadd.f32 %v1374, %v1662
  %v1664 = vpop.f32.mrf.mxu0
  %v1665 = vpop.f32.mrf.mxu0
  %v1666 = vadd.f32 %v1377, %v1665
  %v1667 = vpop.f32.mrf.mxu0
  %1668 = vmatprep.mubr.bf16.mxu0 %v814
  %1669 = vmatmul.mubr.bf16.gmra.mxu0 %v813
  %v1670 = vpop.f32.mrf.mxu0
  %v1671 = vadd.f32 %v1382, %v1670
  %v1672 = vpop.f32.mrf.mxu0
  %v1673 = vpop.f32.mrf.mxu0
  %v1674 = vadd.f32 %v1385, %v1673
  %v1675 = vpop.f32.mrf.mxu0
  %1676 = vmatprep.mubr.bf16.mxu0 %v818
  %1677 = vmatmul.mubr.bf16.gmra.mxu0 %v817
  %v1678 = vpop.f32.mrf.mxu0
  %v1679 = vadd.f32 %v1390, %v1678
  %v1680 = vpop.f32.mrf.mxu0
  %v1681 = vpop.f32.mrf.mxu0
  %v1682 = vadd.f32 %v1393, %v1681
  %v1683 = vpop.f32.mrf.mxu0
  %1684 = vmatprep.mubr.bf16.mxu0 %v822
  %1685 = vmatmul.mubr.bf16.gmra.mxu0 %v821
  %v1686 = vpop.f32.mrf.mxu0
  %v1687 = vadd.f32 %v1398, %v1686
  %v1688 = vpop.f32.mrf.mxu0
  %v1689 = vpop.f32.mrf.mxu0
  %v1690 = vadd.f32 %v1401, %v1689
  %v1691 = vpop.f32.mrf.mxu0
  %1692 = vmatprep.mubr.bf16.mxu0 %v826
  %1693 = vmatmul.mubr.bf16.gmra.mxu0 %v825
  %v1694 = vpop.f32.mrf.mxu0
  %v1695 = vadd.f32 %v1406, %v1694
  %v1696 = vpop.f32.mrf.mxu0
  %v1697 = vpop.f32.mrf.mxu0
  %v1698 = vadd.f32 %v1409, %v1697
  %v1699 = vpop.f32.mrf.mxu0
  %1700 = vmatprep.mubr.bf16.mxu0 %v830
  %1701 = vmatmul.mubr.bf16.gmra.mxu0 %v829
  %v1702 = vpop.f32.mrf.mxu0
  %v1703 = vadd.f32 %v1414, %v1702
  %v1704 = vpop.f32.mrf.mxu0
  %v1705 = vpop.f32.mrf.mxu0
  %v1706 = vadd.f32 %v1417, %v1705
  %v1707 = vpop.f32.mrf.mxu0
  %1708 = vmatprep.mubr.bf16.mxu0 %v834
  %1709 = vmatmul.mubr.bf16.gmra.mxu0 %v833
  %v1710 = vpop.f32.mrf.mxu0
  %v1711 = vadd.f32 %v1422, %v1710
  %v1712 = vpop.f32.mrf.mxu0
  %v1713 = vpop.f32.mrf.mxu0
  %v1714 = vadd.f32 %v1425, %v1713
  %v1715 = vpop.f32.mrf.mxu0
  %1716 = vmatprep.mubr.bf16.mxu0 %v838
  %1717 = vmatmul.mubr.bf16.gmra.mxu0 %v837
  %v1718 = vpop.f32.mrf.mxu0
  %v1719 = vadd.f32 %v1430, %v1718
  %v1720 = vpop.f32.mrf.mxu0
  %v1721 = vpop.f32.mrf.mxu0
  %v1722 = vadd.f32 %v1433, %v1721
  %v1723 = vpop.f32.mrf.mxu0
  %1724 = vmatprep.mubr.bf16.mxu0 %v842
  %1725 = vmatmul.mubr.bf16.gmra.mxu0 %v841
  %v1726 = vpop.f32.mrf.mxu0
  %v1727 = vadd.f32 %v1438, %v1726
  %v1728 = vpop.f32.mrf.mxu0
  %v1729 = vpop.f32.mrf.mxu0
  %v1730 = vadd.f32 %v1441, %v1729
  %v1731 = vpop.f32.mrf.mxu0
  %1732 = vmatprep.mubr.bf16.mxu0 %v846
  %1733 = vmatmul.mubr.bf16.gmra.mxu0 %v845
  %v1734 = vpop.f32.mrf.mxu0
  %v1735 = vadd.f32 %v1446, %v1734
  %v1736 = vpop.f32.mrf.mxu0
  %v1737 = vpop.f32.mrf.mxu0
  %v1738 = vadd.f32 %v1449, %v1737
  %v1739 = vpop.f32.mrf.mxu0
  %1740 = vmatprep.mubr.bf16.mxu0 %v850
  %1741 = vmatmul.mubr.bf16.gmra.mxu0 %v849
  %v1742 = vpop.f32.mrf.mxu0
  %v1743 = vadd.f32 %v1454, %v1742
  %v1744 = vpop.f32.mrf.mxu0
  %v1745 = vpop.f32.mrf.mxu0
  %v1746 = vadd.f32 %v1457, %v1745
  %v1747 = vpop.f32.mrf.mxu0
  %1748 = vdwg.mxu0
  %v1749 = vadd.f32 %v83, %v1495
  %v1750 = vadd.f32 %v84, %v1498
  %v1751 = vadd.f32 %v85, %v1503
  %v1752 = vadd.f32 %v86, %v1506
  %v1753 = vadd.f32 %v87, %v1511
  %v1754 = vadd.f32 %v88, %v1514
  %v1755 = vadd.f32 %v89, %v1519
  %v1756 = vadd.f32 %v90, %v1522
  %v1757 = vadd.f32 %v91, %v1527
  %v1758 = vadd.f32 %v92, %v1530
  %v1759 = vadd.f32 %v93, %v1535
  %v1760 = vadd.f32 %v94, %v1538
  %v1761 = vadd.f32 %v95, %v1543
  %v1762 = vadd.f32 %v96, %v1546
  %v1763 = vadd.f32 %v97, %v1551
  %v1764 = vadd.f32 %v98, %v1554
  %v1765 = vadd.f32 %v99, %v1559
  %v1766 = vadd.f32 %v100, %v1562
  %v1767 = vadd.f32 %v101, %v1567
  %v1768 = vadd.f32 %v102, %v1570
  %v1769 = vadd.f32 %v103, %v1575
  %v1770 = vadd.f32 %v104, %v1578
  %v1771 = vadd.f32 %v105, %v1583
  %v1772 = vadd.f32 %v106, %v1586
  %v1773 = vadd.f32 %v107, %v1591
  %v1774 = vadd.f32 %v108, %v1594
  %v1775 = vadd.f32 %v109, %v1599
  %v1776 = vadd.f32 %v110, %v1602
  %v1777 = vadd.f32 %v111, %v1607
  %v1778 = vadd.f32 %v112, %v1610
  %v1779 = vadd.f32 %v113, %v1615
  %v1780 = vadd.f32 %v114, %v1618
  %v1781 = vadd.f32 %v115, %v1623
  %v1782 = vadd.f32 %v116, %v1626
  %v1783 = vadd.f32 %v117, %v1631
  %v1784 = vadd.f32 %v118, %v1634
  %v1785 = vadd.f32 %v119, %v1639
  %v1786 = vadd.f32 %v120, %v1642
  %v1787 = vadd.f32 %v121, %v1647
  %v1788 = vadd.f32 %v122, %v1650
  %v1789 = vadd.f32 %v123, %v1655
  %v1790 = vadd.f32 %v124, %v1658
  %v1791 = vadd.f32 %v125, %v1663
  %v1792 = vadd.f32 %v126, %v1666
  %v1793 = vadd.f32 %v127, %v1671
  %v1794 = vadd.f32 %v128, %v1674
  %v1795 = vadd.f32 %v129, %v1679
  %v1796 = vadd.f32 %v130, %v1682
  %v1797 = vadd.f32 %v131, %v1687
  %v1798 = vadd.f32 %v132, %v1690
  %v1799 = vadd.f32 %v133, %v1695
  %v1800 = vadd.f32 %v134, %v1698
  %v1801 = vadd.f32 %v135, %v1703
  %v1802 = vadd.f32 %v136, %v1706
  %v1803 = vadd.f32 %v137, %v1711
  %v1804 = vadd.f32 %v138, %v1714
  %v1805 = vadd.f32 %v139, %v1719
  %v1806 = vadd.f32 %v140, %v1722
  %v1807 = vadd.f32 %v141, %v1727
  %v1808 = vadd.f32 %v142, %v1730
  %v1809 = vadd.f32 %v143, %v1735
  %v1810 = vadd.f32 %v144, %v1738
  %v1811 = vadd.f32 %v145, %v1743
  %v1812 = vadd.f32 %v146, %v1746
  %1813 = vst [vmem:[#allocation2] sm:$0xff] %v1749
  %1814 = vst [vmem:[#allocation2 + $0x8] sm:$0xff] %v1750
  %1815 = vst [vmem:[#allocation2 + $0x10] sm:$0xff] %v1751
  %1816 = vst [vmem:[#allocation2 + $0x18] sm:$0xff] %v1752
  %1817 = vst [vmem:[#allocation2 + $0x20] sm:$0xff] %v1753
  %1818 = vst [vmem:[#allocation2 + $0x28] sm:$0xff] %v1754
  %1819 = vst [vmem:[#allocation2 + $0x30] sm:$0xff] %v1755
  %1820 = vst [vmem:[#allocation2 + $0x38] sm:$0xff] %v1756
  %1821 = vst [vmem:[#allocation2 + $0x40] sm:$0xff] %v1757
  %1822 = vst [vmem:[#allocation2 + $0x48] sm:$0xff] %v1758
  %1823 = vst [vmem:[#allocation2 + $0x50] sm:$0xff] %v1759
  %1824 = vst [vmem:[#allocation2 + $0x58] sm:$0xff] %v1760
  %1825 = vst [vmem:[#allocation2 + $0x60] sm:$0xff] %v1761
  %1826 = vst [vmem:[#allocation2 + $0x68] sm:$0xff] %v1762
  %1827 = vst [vmem:[#allocation2 + $0x70] sm:$0xff] %v1763
  %1828 = vst [vmem:[#allocation2 + $0x78] sm:$0xff] %v1764
  %1829 = vst [vmem:[#allocation2 + $0x80] sm:$0xff] %v1765
  %1830 = vst [vmem:[#allocation2 + $0x88] sm:$0xff] %v1766
  %1831 = vst [vmem:[#allocation2 + $0x90] sm:$0xff] %v1767
  %1832 = vst [vmem:[#allocation2 + $0x98] sm:$0xff] %v1768
  %1833 = vst [vmem:[#allocation2 + $0xa0] sm:$0xff] %v1769
  %1834 = vst [vmem:[#allocation2 + $0xa8] sm:$0xff] %v1770
  %1835 = vst [vmem:[#allocation2 + $0xb0] sm:$0xff] %v1771
  %1836 = vst [vmem:[#allocation2 + $0xb8] sm:$0xff] %v1772
  %1837 = vst [vmem:[#allocation2 + $0xc0] sm:$0xff] %v1773
  %1838 = vst [vmem:[#allocation2 + $0xc8] sm:$0xff] %v1774
  %1839 = vst [vmem:[#allocation2 + $0xd0] sm:$0xff] %v1775
  %1840 = vst [vmem:[#allocation2 + $0xd8] sm:$0xff] %v1776
  %1841 = vst [vmem:[#allocation2 + $0xe0] sm:$0xff] %v1777
  %1842 = vst [vmem:[#allocation2 + $0xe8] sm:$0xff] %v1778
  %1843 = vst [vmem:[#allocation2 + $0xf0] sm:$0xff] %v1779
  %1844 = vst [vmem:[#allocation2 + $0xf8] sm:$0xff] %v1780
  %1845 = vst [vmem:[#allocation2 + $0x100] sm:$0xff] %v1781
  %1846 = vst [vmem:[#allocation2 + $0x108] sm:$0xff] %v1782
  %1847 = vst [vmem:[#allocation2 + $0x110] sm:$0xff] %v1783
  %1848 = vst [vmem:[#allocation2 + $0x118] sm:$0xff] %v1784
  %1849 = vst [vmem:[#allocation2 + $0x120] sm:$0xff] %v1785
  %1850 = vst [vmem:[#allocation2 + $0x128] sm:$0xff] %v1786
  %1851 = vst [vmem:[#allocation2 + $0x130] sm:$0xff] %v1787
  %1852 = vst [vmem:[#allocation2 + $0x138] sm:$0xff] %v1788
  %1853 = vst [vmem:[#allocation2 + $0x140] sm:$0xff] %v1789
  %1854 = vst [vmem:[#allocation2 + $0x148] sm:$0xff] %v1790
  %1855 = vst [vmem:[#allocation2 + $0x150] sm:$0xff] %v1791
  %1856 = vst [vmem:[#allocation2 + $0x158] sm:$0xff] %v1792
  %1857 = vst [vmem:[#allocation2 + $0x160] sm:$0xff] %v1793
  %1858 = vst [vmem:[#allocation2 + $0x168] sm:$0xff] %v1794
  %1859 = vst [vmem:[#allocation2 + $0x170] sm:$0xff] %v1795
  %1860 = vst [vmem:[#allocation2 + $0x178] sm:$0xff] %v1796
  %1861 = vst [vmem:[#allocation2 + $0x180] sm:$0xff] %v1797
  %1862 = vst [vmem:[#allocation2 + $0x188] sm:$0xff] %v1798
  %1863 = vst [vmem:[#allocation2 + $0x190] sm:$0xff] %v1799
  %1864 = vst [vmem:[#allocation2 + $0x198] sm:$0xff] %v1800
  %1865 = vst [vmem:[#allocation2 + $0x1a0] sm:$0xff] %v1801
  %1866 = vst [vmem:[#allocation2 + $0x1a8] sm:$0xff] %v1802
  %1867 = vst [vmem:[#allocation2 + $0x1b0] sm:$0xff] %v1803
  %1868 = vst [vmem:[#allocation2 + $0x1b8] sm:$0xff] %v1804
  %1869 = vst [vmem:[#allocation2 + $0x1c0] sm:$0xff] %v1805
  %1870 = vst [vmem:[#allocation2 + $0x1c8] sm:$0xff] %v1806
  %1871 = vst [vmem:[#allocation2 + $0x1d0] sm:$0xff] %v1807
  %1872 = vst [vmem:[#allocation2 + $0x1d8] sm:$0xff] %v1808
  %1873 = vst [vmem:[#allocation2 + $0x1e0] sm:$0xff] %v1809
  %1874 = vst [vmem:[#allocation2 + $0x1e8] sm:$0xff] %v1810
  %1875 = vst [vmem:[#allocation2 + $0x1f0] sm:$0xff] %v1811
  %1876 = vst [vmem:[#allocation2 + $0x1f8] sm:$0xff] %v1812
  // Predicated region
  $region18: #{global_generator_forward.37} parent=0 // pred_check
    %p1877 = pneg %p15
  $region19: #{global_generator_forward.37} parent=0 // pred_check_branch
    %1879 = sbr.rel (%p1877) target = $region21
  $region20: #{global_generator_forward.37} parent=0 // pred_region
    %v1880 = vld [vmem:[#allocation2] sm:$0xff]
    %v1881 = vld [vmem:[#allocation2 + $0x8] sm:$0xff]
    %v1882 = vld [vmem:[#allocation2 + $0x10] sm:$0xff]
    %v1883 = vld [vmem:[#allocation2 + $0x18] sm:$0xff]
    %v1884 = vld [vmem:[#allocation2 + $0x20] sm:$0xff]
    %v1885 = vld [vmem:[#allocation2 + $0x28] sm:$0xff]
    %v1886 = vld [vmem:[#allocation2 + $0x30] sm:$0xff]
    %v1887 = vld [vmem:[#allocation2 + $0x38] sm:$0xff]
    %v1888 = vld [vmem:[#allocation2 + $0x40] sm:$0xff]
    %v1889 = vld [vmem:[#allocation2 + $0x48] sm:$0xff]
    %v1890 = vld [vmem:[#allocation2 + $0x50] sm:$0xff]
    %v1891 = vld [vmem:[#allocation2 + $0x58] sm:$0xff]
    %v1892 = vld [vmem:[#allocation2 + $0x60] sm:$0xff]
    %v1893 = vld [vmem:[#allocation2 + $0x68] sm:$0xff]
    %v1894 = vld [vmem:[#allocation2 + $0x70] sm:$0xff]
    %v1895 = vld [vmem:[#allocation2 + $0x78] sm:$0xff]
    %v1896 = vld [vmem:[#allocation2 + $0x80] sm:$0xff]
    %v1897 = vld [vmem:[#allocation2 + $0x88] sm:$0xff]
    %v1898 = vld [vmem:[#allocation2 + $0x90] sm:$0xff]
    %v1899 = vld [vmem:[#allocation2 + $0x98] sm:$0xff]
    %v1900 = vld [vmem:[#allocation2 + $0xa0] sm:$0xff]
    %v1901 = vld [vmem:[#allocation2 + $0xa8] sm:$0xff]
    %v1902 = vld [vmem:[#allocation2 + $0xb0] sm:$0xff]
    %v1903 = vld [vmem:[#allocation2 + $0xb8] sm:$0xff]
    %v1904 = vld [vmem:[#allocation2 + $0xc0] sm:$0xff]
    %v1905 = vld [vmem:[#allocation2 + $0xc8] sm:$0xff]
    %v1906 = vld [vmem:[#allocation2 + $0xd0] sm:$0xff]
    %v1907 = vld [vmem:[#allocation2 + $0xd8] sm:$0xff]
    %v1908 = vld [vmem:[#allocation2 + $0xe0] sm:$0xff]
    %v1909 = vld [vmem:[#allocation2 + $0xe8] sm:$0xff]
    %v1910 = vld [vmem:[#allocation2 + $0xf0] sm:$0xff]
    %v1911 = vld [vmem:[#allocation2 + $0xf8] sm:$0xff]
    %v1912 = vld [vmem:[#allocation2 + $0x100] sm:$0xff]
    %v1913 = vld [vmem:[#allocation2 + $0x108] sm:$0xff]
    %v1914 = vld [vmem:[#allocation2 + $0x110] sm:$0xff]
    %v1915 = vld [vmem:[#allocation2 + $0x118] sm:$0xff]
    %v1916 = vld [vmem:[#allocation2 + $0x120] sm:$0xff]
    %v1917 = vld [vmem:[#allocation2 + $0x128] sm:$0xff]
    %v1918 = vld [vmem:[#allocation2 + $0x130] sm:$0xff]
    %v1919 = vld [vmem:[#allocation2 + $0x138] sm:$0xff]
    %v1920 = vld [vmem:[#allocation2 + $0x140] sm:$0xff]
    %v1921 = vld [vmem:[#allocation2 + $0x148] sm:$0xff]
    %v1922 = vld [vmem:[#allocation2 + $0x150] sm:$0xff]
    %v1923 = vld [vmem:[#allocation2 + $0x158] sm:$0xff]
    %v1924 = vld [vmem:[#allocation2 + $0x160] sm:$0xff]
    %v1925 = vld [vmem:[#allocation2 + $0x168] sm:$0xff]
    %v1926 = vld [vmem:[#allocation2 + $0x170] sm:$0xff]
    %v1927 = vld [vmem:[#allocation2 + $0x178] sm:$0xff]
    %v1928 = vld [vmem:[#allocation2 + $0x180] sm:$0xff]
    %v1929 = vld [vmem:[#allocation2 + $0x188] sm:$0xff]
    %v1930 = vld [vmem:[#allocation2 + $0x190] sm:$0xff]
    %v1931 = vld [vmem:[#allocation2 + $0x198] sm:$0xff]
    %v1932 = vld [vmem:[#allocation2 + $0x1a0] sm:$0xff]
    %v1933 = vld [vmem:[#allocation2 + $0x1a8] sm:$0xff]
    %v1934 = vld [vmem:[#allocation2 + $0x1b0] sm:$0xff]
    %v1935 = vld [vmem:[#allocation2 + $0x1b8] sm:$0xff]
    %v1936 = vld [vmem:[#allocation2 + $0x1c0] sm:$0xff]
    %v1937 = vld [vmem:[#allocation2 + $0x1c8] sm:$0xff]
    %v1938 = vld [vmem:[#allocation2 + $0x1d0] sm:$0xff]
    %v1939 = vld [vmem:[#allocation2 + $0x1d8] sm:$0xff]
    %v1940 = vld [vmem:[#allocation2 + $0x1e0] sm:$0xff]
    %v1941 = vld [vmem:[#allocation2 + $0x1e8] sm:$0xff]
    %v1942 = vld [vmem:[#allocation2 + $0x1f0] sm:$0xff]
    %v1943 = vld [vmem:[#allocation2 + $0x1f8] sm:$0xff]
    %v1944 = vld [vmem:[%s2] sm:$0x1]
    %v1946 = vlaneseq
    %v1947 = vshrl.u32 %v1946, 7
    %v1948 = vsub.s32 0, %v1947
    %v1949 = vrot.slane %v1944, %v1948
    %v1951 = vadd.f32 %v1880, %v1949
    %v1952 = vadd.f32 %v1881, %v1949
    %v1953 = vadd.f32 %v1882, %v1949
    %v1954 = vadd.f32 %v1883, %v1949
    %v1955 = vadd.f32 %v1884, %v1949
    %v1956 = vadd.f32 %v1885, %v1949
    %v1957 = vadd.f32 %v1886, %v1949
    %v1958 = vadd.f32 %v1887, %v1949
    %v1959 = vadd.f32 %v1888, %v1949
    %v1960 = vadd.f32 %v1889, %v1949
    %v1961 = vadd.f32 %v1890, %v1949
    %v1962 = vadd.f32 %v1891, %v1949
    %v1963 = vadd.f32 %v1892, %v1949
    %v1964 = vadd.f32 %v1893, %v1949
    %v1965 = vadd.f32 %v1894, %v1949
    %v1966 = vadd.f32 %v1895, %v1949
    %v1967 = vadd.f32 %v1896, %v1949
    %v1968 = vadd.f32 %v1897, %v1949
    %v1969 = vadd.f32 %v1898, %v1949
    %v1970 = vadd.f32 %v1899, %v1949
    %v1971 = vadd.f32 %v1900, %v1949
    %v1972 = vadd.f32 %v1901, %v1949
    %v1973 = vadd.f32 %v1902, %v1949
    %v1974 = vadd.f32 %v1903, %v1949
    %v1975 = vadd.f32 %v1904, %v1949
    %v1976 = vadd.f32 %v1905, %v1949
    %v1977 = vadd.f32 %v1906, %v1949
    %v1978 = vadd.f32 %v1907, %v1949
    %v1979 = vadd.f32 %v1908, %v1949
    %v1980 = vadd.f32 %v1909, %v1949
    %v1981 = vadd.f32 %v1910, %v1949
    %v1982 = vadd.f32 %v1911, %v1949
    %v1983 = vadd.f32 %v1912, %v1949
    %v1984 = vadd.f32 %v1913, %v1949
    %v1985 = vadd.f32 %v1914, %v1949
    %v1986 = vadd.f32 %v1915, %v1949
    %v1987 = vadd.f32 %v1916, %v1949
    %v1988 = vadd.f32 %v1917, %v1949
    %v1989 = vadd.f32 %v1918, %v1949
    %v1990 = vadd.f32 %v1919, %v1949
    %v1991 = vadd.f32 %v1920, %v1949
    %v1992 = vadd.f32 %v1921, %v1949
    %v1993 = vadd.f32 %v1922, %v1949
    %v1994 = vadd.f32 %v1923, %v1949
    %v1995 = vadd.f32 %v1924, %v1949
    %v1996 = vadd.f32 %v1925, %v1949
    %v1997 = vadd.f32 %v1926, %v1949
    %v1998 = vadd.f32 %v1927, %v1949
    %v1999 = vadd.f32 %v1928, %v1949
    %v2000 = vadd.f32 %v1929, %v1949
    %v2001 = vadd.f32 %v1930, %v1949
    %v2002 = vadd.f32 %v1931, %v1949
    %v2003 = vadd.f32 %v1932, %v1949
    %v2004 = vadd.f32 %v1933, %v1949
    %v2005 = vadd.f32 %v1934, %v1949
    %v2006 = vadd.f32 %v1935, %v1949
    %v2007 = vadd.f32 %v1936, %v1949
    %v2008 = vadd.f32 %v1937, %v1949
    %v2009 = vadd.f32 %v1938, %v1949
    %v2010 = vadd.f32 %v1939, %v1949
    %v2011 = vadd.f32 %v1940, %v1949
    %v2012 = vadd.f32 %v1941, %v1949
    %v2013 = vadd.f32 %v1942, %v1949
    %v2014 = vadd.f32 %v1943, %v1949
    %v2015 = vtanh.pop %v1951
    %v2016 = vtanh.pop %v1952
    %v2017 = vtanh.pop %v1953
    %v2018 = vtanh.pop %v1954
    %v2019 = vtanh.pop %v1955
    %v2020 = vtanh.pop %v1956
    %v2021 = vtanh.pop %v1957
    %v2022 = vtanh.pop %v1958
    %v2023 = vtanh.pop %v1959
    %v2024 = vtanh.pop %v1960
    %v2025 = vtanh.pop %v1961
    %v2026 = vtanh.pop %v1962
    %v2027 = vtanh.pop %v1963
    %v2028 = vtanh.pop %v1964
    %v2029 = vtanh.pop %v1965
    %v2030 = vtanh.pop %v1966
    %v2031 = vtanh.pop %v1967
    %v2032 = vtanh.pop %v1968
    %v2033 = vtanh.pop %v1969
    %v2034 = vtanh.pop %v1970
    %v2035 = vtanh.pop %v1971
    %v2036 = vtanh.pop %v1972
    %v2037 = vtanh.pop %v1973
    %v2038 = vtanh.pop %v1974
    %v2039 = vtanh.pop %v1975
    %v2040 = vtanh.pop %v1976
    %v2041 = vtanh.pop %v1977
    %v2042 = vtanh.pop %v1978
    %v2043 = vtanh.pop %v1979
    %v2044 = vtanh.pop %v1980
    %v2045 = vtanh.pop %v1981
    %v2046 = vtanh.pop %v1982
    %v2047 = vtanh.pop %v1983
    %v2048 = vtanh.pop %v1984
    %v2049 = vtanh.pop %v1985
    %v2050 = vtanh.pop %v1986
    %v2051 = vtanh.pop %v1987
    %v2052 = vtanh.pop %v1988
    %v2053 = vtanh.pop %v1989
    %v2054 = vtanh.pop %v1990
    %v2055 = vtanh.pop %v1991
    %v2056 = vtanh.pop %v1992
    %v2057 = vtanh.pop %v1993
    %v2058 = vtanh.pop %v1994
    %v2059 = vtanh.pop %v1995
    %v2060 = vtanh.pop %v1996
    %v2061 = vtanh.pop %v1997
    %v2062 = vtanh.pop %v1998
    %v2063 = vtanh.pop %v1999
    %v2064 = vtanh.pop %v2000
    %v2065 = vtanh.pop %v2001
    %v2066 = vtanh.pop %v2002
    %v2067 = vtanh.pop %v2003
    %v2068 = vtanh.pop %v2004
    %v2069 = vtanh.pop %v2005
    %v2070 = vtanh.pop %v2006
    %v2071 = vtanh.pop %v2007
    %v2072 = vtanh.pop %v2008
    %v2073 = vtanh.pop %v2009
    %v2074 = vtanh.pop %v2010
    %v2075 = vtanh.pop %v2011
    %v2076 = vtanh.pop %v2012
    %v2077 = vtanh.pop %v2013
    %v2078 = vtanh.pop %v2014
    %2079 = vst [vmem:[%s3] sm:$0xff] %v2015
    %2080 = vst [vmem:[%s3 + $0x8] sm:$0xff] %v2016
    %2081 = vst [vmem:[%s3 + $0x10] sm:$0xff] %v2017
    %2082 = vst [vmem:[%s3 + $0x18] sm:$0xff] %v2018
    %2083 = vst [vmem:[%s3 + $0x20] sm:$0xff] %v2019
    %2084 = vst [vmem:[%s3 + $0x28] sm:$0xff] %v2020
    %2085 = vst [vmem:[%s3 + $0x30] sm:$0xff] %v2021
    %2086 = vst [vmem:[%s3 + $0x38] sm:$0xff] %v2022
    %2087 = vst [vmem:[%s3 + $0x40] sm:$0xff] %v2023
    %2088 = vst [vmem:[%s3 + $0x48] sm:$0xff] %v2024
    %2089 = vst [vmem:[%s3 + $0x50] sm:$0xff] %v2025
    %2090 = vst [vmem:[%s3 + $0x58] sm:$0xff] %v2026
    %2091 = vst [vmem:[%s3 + $0x60] sm:$0xff] %v2027
    %2092 = vst [vmem:[%s3 + $0x68] sm:$0xff] %v2028
    %2093 = vst [vmem:[%s3 + $0x70] sm:$0xff] %v2029
    %2094 = vst [vmem:[%s3 + $0x78] sm:$0xff] %v2030
    %2095 = vst [vmem:[%s3 + $0x80] sm:$0xff] %v2031
    %2096 = vst [vmem:[%s3 + $0x88] sm:$0xff] %v2032
    %2097 = vst [vmem:[%s3 + $0x90] sm:$0xff] %v2033
    %2098 = vst [vmem:[%s3 + $0x98] sm:$0xff] %v2034
    %2099 = vst [vmem:[%s3 + $0xa0] sm:$0xff] %v2035
    %2100 = vst [vmem:[%s3 + $0xa8] sm:$0xff] %v2036
    %2101 = vst [vmem:[%s3 + $0xb0] sm:$0xff] %v2037
    %2102 = vst [vmem:[%s3 + $0xb8] sm:$0xff] %v2038
    %2103 = vst [vmem:[%s3 + $0xc0] sm:$0xff] %v2039
    %2104 = vst [vmem:[%s3 + $0xc8] sm:$0xff] %v2040
    %2105 = vst [vmem:[%s3 + $0xd0] sm:$0xff] %v2041
    %2106 = vst [vmem:[%s3 + $0xd8] sm:$0xff] %v2042
    %2107 = vst [vmem:[%s3 + $0xe0] sm:$0xff] %v2043
    %2108 = vst [vmem:[%s3 + $0xe8] sm:$0xff] %v2044
    %2109 = vst [vmem:[%s3 + $0xf0] sm:$0xff] %v2045
    %2110 = vst [vmem:[%s3 + $0xf8] sm:$0xff] %v2046
    %2111 = vst [vmem:[%s3 + $0x100] sm:$0xff] %v2047
    %2112 = vst [vmem:[%s3 + $0x108] sm:$0xff] %v2048
    %2113 = vst [vmem:[%s3 + $0x110] sm:$0xff] %v2049
    %2114 = vst [vmem:[%s3 + $0x118] sm:$0xff] %v2050
    %2115 = vst [vmem:[%s3 + $0x120] sm:$0xff] %v2051
    %2116 = vst [vmem:[%s3 + $0x128] sm:$0xff] %v2052
    %2117 = vst [vmem:[%s3 + $0x130] sm:$0xff] %v2053
    %2118 = vst [vmem:[%s3 + $0x138] sm:$0xff] %v2054
    %2119 = vst [vmem:[%s3 + $0x140] sm:$0xff] %v2055
    %2120 = vst [vmem:[%s3 + $0x148] sm:$0xff] %v2056
    %2121 = vst [vmem:[%s3 + $0x150] sm:$0xff] %v2057
    %2122 = vst [vmem:[%s3 + $0x158] sm:$0xff] %v2058
    %2123 = vst [vmem:[%s3 + $0x160] sm:$0xff] %v2059
    %2124 = vst [vmem:[%s3 + $0x168] sm:$0xff] %v2060
    %2125 = vst [vmem:[%s3 + $0x170] sm:$0xff] %v2061
    %2126 = vst [vmem:[%s3 + $0x178] sm:$0xff] %v2062
    %2127 = vst [vmem:[%s3 + $0x180] sm:$0xff] %v2063
    %2128 = vst [vmem:[%s3 + $0x188] sm:$0xff] %v2064
    %2129 = vst [vmem:[%s3 + $0x190] sm:$0xff] %v2065
    %2130 = vst [vmem:[%s3 + $0x198] sm:$0xff] %v2066
    %2131 = vst [vmem:[%s3 + $0x1a0] sm:$0xff] %v2067
    %2132 = vst [vmem:[%s3 + $0x1a8] sm:$0xff] %v2068
    %2133 = vst [vmem:[%s3 + $0x1b0] sm:$0xff] %v2069
    %2134 = vst [vmem:[%s3 + $0x1b8] sm:$0xff] %v2070
    %2135 = vst [vmem:[%s3 + $0x1c0] sm:$0xff] %v2071
    %2136 = vst [vmem:[%s3 + $0x1c8] sm:$0xff] %v2072
    %2137 = vst [vmem:[%s3 + $0x1d0] sm:$0xff] %v2073
    %2138 = vst [vmem:[%s3 + $0x1d8] sm:$0xff] %v2074
    %2139 = vst [vmem:[%s3 + $0x1e0] sm:$0xff] %v2075
    %2140 = vst [vmem:[%s3 + $0x1e8] sm:$0xff] %v2076
    %2141 = vst [vmem:[%s3 + $0x1f0] sm:$0xff] %v2077
    %2142 = vst [vmem:[%s3 + $0x1f8] sm:$0xff] %v2078
  $region21: #{global_generator_forward.37} parent=0 // pred_fallthru
    _
  // Predicated region
  $region22: #{global_generator_forward.37} parent=0 // pred_check
    _
  $region23: #{global_generator_forward.37} parent=0 // pred_check_branch
    %2144 = sbr.rel (0) target = $region25
  $region24: #{global_generator_forward.37} parent=0 // pred_region
    _
  $region25: #{global_generator_forward.37} parent=0 // pred_fallthru
    _
  // Predicated region
  $region26: #{global_generator_forward.37} parent=0 // pred_check
    _
  $region27: #{global_generator_forward.37} parent=0 // pred_check_branch
    %2146 = sbr.rel (0) target = $region29
  $region28: #{global_generator_forward.37} parent=0 // pred_region
    _
  $region29: #{global_generator_forward.37} parent=0 // pred_fallthru
    _

</llo_original>
